<compile_context>
chip_gen: v7x
topology: tpu7x:2x2x1
jax: 0.10.0
libtpu: 0.0.40
codegen_flags: <defaults>
</compile_context>

<pallas_src>
import numpy as np
import jax
import jax.numpy as jnp
from jax.experimental import pallas as pl
from jax.experimental.pallas import tpu as pltpu


# ----------------------------------------------------------------------------
# Periodic finite-difference stencils (host side, for the column operator)
# ----------------------------------------------------------------------------
def _shift_mat(n, s):
    # M[y, k] = 1 iff k == (y + s) % n   =>   (M @ u)[y] = u[(y + s) % n]
    idx = (np.arange(n) + s) % n
    return np.eye(n, dtype=np.float64)[idx]


def deriv_mat(n, dx):
    # 4th-order central 1st derivative, periodic (matches dx_op conv + periodic pad)
    return (1.0 / dx) * ((1.0 / 12) * _shift_mat(n, -2) - (8.0 / 12) * _shift_mat(n, -1)
                         + (8.0 / 12) * _shift_mat(n, 1) - (1.0 / 12) * _shift_mat(n, 2))


def lap1d_mat(n, dx):
    # 1-D half of the 5-point 4th-order Laplacian (2-D lap = row part + col part)
    return (1.0 / dx ** 2) * (-(1.0 / 12) * (_shift_mat(n, -2) + _shift_mat(n, 2))
                              + (4.0 / 3) * (_shift_mat(n, -1) + _shift_mat(n, 1))
                              - 2.5 * np.eye(n, dtype=np.float64))


# ----------------------------------------------------------------------------
# Pallas kernel: T RK4 steps per grid iteration, whole batch resident in VMEM
# ----------------------------------------------------------------------------
def _make_rcnn_kernel(dt, dx, nu, H, BCW, T):
    half = BCW // 2                 # C == 2: lanes [0, half) = u, [half, BCW) = v
    dt_half = 0.5 * float(dt)
    dt_full = float(dt)
    dt_sixth = float(dt) / 6.0
    # Row-direction (H axis) 4th-order central derivative coefficients.
    d_far = 1.0 / (12.0 * dx)       # * (S[y-2] - S[y+2])
    d_near = 8.0 / (12.0 * dx)      # * (S[y+1] - S[y-1])
    # Row-direction half of the Laplacian with nu = mu_up/Re folded in.
    l_far = -nu / (12.0 * dx * dx)  # * (S[y-2] + S[y+2])
    l_near = 4.0 * nu / (3.0 * dx * dx)
    l_ctr = -2.5 * nu / (dx * dx)

    def kernel(coef_ref, h0_ref, acol_ref, out_ref, s_ref):
        # Initialize the persistent VMEM state from the input slab on chunk 0.
        @pl.when(pl.program_id(0) == 0)
        def _():
            s_ref[...] = h0_ref[...]

        # Per-lane physics coefficients, broadcast ONCE and reused by all RK stages.
        c1 = jnp.broadcast_to(coef_ref[0:1, :], (H, BCW))   # coeff of S   * S_x
        c2 = jnp.broadcast_to(coef_ref[1:2, :], (H, BCW))   # coeff of S   * S_y
        c3 = jnp.broadcast_to(coef_ref[2:3, :], (H, BCW))   # coeff of Ssw * S_x
        c4 = jnp.broadcast_to(coef_ref[3:4, :], (H, BCW))   # coeff of Ssw * S_y
        A_col = acol_ref[...]       # (BCW, 2*BCW) bf16: [blkdiag(DcT) | blkdiag(nu*LcT)]

        def f_rhs(S):
            # Column (W direction) derivative + nu*lap via a single bf16 MXU matmul.
            Cc = jnp.dot(S.astype(jnp.bfloat16), A_col,
                         preferred_element_type=jnp.float32)        # (H, 2*BCW)
            Sy = Cc[:, :BCW]
            nu_lap = Cc[:, BCW:]
            # Row (H direction) stencil: 4 shared sublane rolls (XLU) + VPU FMAs.
            Sm1 = pltpu.roll(S, 1, 0)        # S[y-1]
            Sm2 = pltpu.roll(S, 2, 0)        # S[y-2]
            Sp1 = pltpu.roll(S, H - 1, 0)    # S[y+1]
            Sp2 = pltpu.roll(S, H - 2, 0)    # S[y+2]
            Sx = d_far * (Sm2 - Sp2) + d_near * (Sp1 - Sm1)
            nu_lap = nu_lap + (l_far * (Sm2 + Sp2) + l_near * (Sm1 + Sp1) + l_ctr * S)
            # Channel swap (u <-> v) via a half-width lane rotate on the XLU.
            Ssw = pltpu.roll(S, half, 1)
            return nu_lap + S * (c1 * Sx + c2 * Sy) + Ssw * (c3 * Sx + c4 * Sy)

        S = s_ref[...]
        for t in range(T):          # T RK4 steps per grid iteration (unrolled)
            k1 = f_rhs(S)
            acc = k1
            k2 = f_rhs(S + dt_half * k1)
            acc = acc + 2.0 * k2
            k3 = f_rhs(S + dt_half * k2)
            acc = acc + 2.0 * k3
            k4 = f_rhs(S + dt_full * k3)
            S = S + dt_sixth * (acc + k4)
            out_ref[t, :, :] = S
        s_ref[...] = S

    return kernel


def rcnn_forward_pallas(init_state_low, Re, UA, UB, VA, VB, *,
                        dt=0.5, dx=0.01, mu_up=0.001, steps=1, chunk=8):
    """RCNN.forward (rk4): `steps` RCNNCell steps, outputs concatenated on dim 0."""
    # TODO(synk): `upscaler` is not defined in the provided source; identity passthrough.
    h = jnp.asarray(init_state_low, dtype=jnp.float32)
    B, C, H, W = h.shape
    assert C == 2, "RCNNCell state has exactly 2 channels (u, v)"
    assert steps >= 1
    BCW = C * B * W
    assert BCW % 128 == 0 and H % 8 == 0, "repack so lane axis is a multiple of 128"

    T = int(min(chunk, steps))
    n_chunks = pl.cdiv(steps, T)
    padded_steps = n_chunks * T

    nu = float(mu_up) / float(Re)   # mu_up * (1/Re), folded into the Laplacian operators

    # Column (W direction) operators: block-diagonal over the B*C image blocks.
    DcT = deriv_mat(W, dx).T                      # (W, W)
    LcT = lap1d_mat(W, dx).T                      # (W, W)
    eye_bc = np.eye(B * C, dtype=np.float64)
    A_col_np = np.concatenate([np.kron(eye_bc, DcT),
                               np.kron(eye_bc, nu * LcT)], axis=1)   # (BCW, 2*BCW)
    A_col = jnp.asarray(A_col_np, dtype=jnp.bfloat16)                # bf16 MXU operand

    # Per-lane coefficient table: lanes [0, B*W) = channel u, [B*W, BCW) = channel v.
    half = B * W
    u_mask = np.concatenate([np.ones((half,), np.float32), np.zeros((half,), np.float32)])
    v_mask = 1.0 - u_mask
    coef = jnp.asarray(np.stack([float(UA) * u_mask,      # S   * S_x
                                 float(VB) * v_mask,      # S   * S_y
                                 float(VA) * v_mask,      # Ssw * S_x
                                 float(UB) * u_mask],     # Ssw * S_y
                                axis=0), dtype=jnp.float32)          # (4, BCW)

    # Lane-dense repack: (B, C, H, W) -> (H, C, B, W) -> (H, C*B*W).
    h_slab = jnp.transpose(h, (2, 1, 0, 3)).reshape(H, BCW)

    kernel = _make_rcnn_kernel(dt, dx, nu, H, BCW, T)
    out_slabs = pl.pallas_call(
        kernel,
        out_shape=jax.ShapeDtypeStruct((padded_steps, H, BCW), jnp.float32),
        grid=(n_chunks,),
        in_specs=[
            pl.BlockSpec((4, BCW), lambda s: (0, 0)),              # coefficient table
            pl.BlockSpec((H, BCW), lambda s: (0, 0)),              # initial state slab
            pl.BlockSpec((BCW, 2 * BCW), lambda s: (0, 0)),        # column operator (bf16)
        ],
        out_specs=pl.BlockSpec((T, H, BCW), lambda s: (s, 0, 0)),  # T steps per chunk
        scratch_shapes=[pltpu.VMEM((H, BCW), jnp.float32)],        # persistent state
        compiler_params=pltpu.CompilerParams(dimension_semantics=("arbitrary",)),
    )(coef, h_slab, A_col)

    # Unpack slabs back to (steps, B, C, H, W) and concatenate like torch.cat(dim=0).
    states = out_slabs[:steps].reshape(steps, H, C, B, W).transpose(0, 3, 2, 1, 4)
    return jnp.concatenate([h, states.reshape(steps * B, C, H, W)], axis=0)


# ----------------------------------------------------------------------------
# Pure-JAX reference (literal periodic-pad stencil, mirrors the PyTorch math)
# ----------------------------------------------------------------------------
def _ref_d(x, dx, axis):
    return (1.0 / dx) * ((1.0 / 12) * jnp.roll(x, 2, axis) - (8.0 / 12) * jnp.roll(x, 1, axis)
                         + (8.0 / 12) * jnp.roll(x, -1, axis) - (1.0 / 12) * jnp.roll(x, -2, axis))


def _ref_lap(x, dx):
    r = jnp.roll
    return (1.0 / dx ** 2) * (-(1.0 / 12) * (r(x, 2, -2) + r(x, -2, -2) + r(x, 2, -1) + r(x, -2, -1))
                              + (4.0 / 3) * (r(x, 1, -2) + r(x, -1, -2) + r(x, 1, -1) + r(x, -1, -1))
                              - 5.0 * x)


def ref_forward(h0, Re, UA, UB, VA, VB, dt, dx, mu_up, steps=1):
    def f_rhs(u, v):
        u_x, u_y = _ref_d(u, dx, -2), _ref_d(u, dx, -1)
        v_x, v_y = _ref_d(v, dx, -2), _ref_d(v, dx, -1)
        f_u = mu_up * (1.0 / Re) * _ref_lap(u, dx) + UA * u * u_x + UB * v * u_y
        f_v = mu_up * (1.0 / Re) * _ref_lap(v, dx) + VA * u * v_x + VB * v * v_y
        return f_u, f_v

    def step(h):
        u0, v0 = h[:, 0], h[:, 1]
        k1u, k1v = f_rhs(u0, v0)
        k2u, k2v = f_rhs(u0 + k1u * dt / 2.0, v0 + k1v * dt / 2.0)
        k3u, k3v = f_rhs(u0 + k2u * dt / 2.0, v0 + k2v * dt / 2.0)
        k4u, k4v = f_rhs(u0 + k3u * dt, v0 + k3v * dt)
        u_next = u0 + dt * (k1u + 2 * k2u + 2 * k3u + k4u) / 6.0
        v_next = v0 + dt * (k1v + 2 * k2v + 2 * k3v + k4v) / 6.0
        return jnp.stack([u_next, v_next], axis=1)

    h = h0
    outs = [h]
    for _ in range(steps):
        h = step(h)
        outs.append(h)
    return jnp.concatenate(outs, axis=0)


# ----------------------------------------------------------------------------
if __name__ == "__main__":
    B, C, H, W = 2, 2, 32, 32
    # dt chosen small enough that the stiff (1/dx^2) diffusion stays RK4-stable
    # over multiple steps in float32 (the PyTorch default dt=0.5 blows up any
    # random initial condition within ~3 steps even in float64).
    dt, dx, mu_up, steps = 0.001, 0.01, 0.001, 16

    key = jax.random.PRNGKey(0)
    k_state, k_param = jax.random.split(key)

    init_state_low = (0.05 * jax.random.normal(k_state, (B, C, H, W))).astype(jnp.float32)

    # deterministic stand-ins for the np.random.rand() learnable scalar parameters
    pvals = jax.random.uniform(k_param, (5,), dtype=jnp.float32, minval=0.1, maxval=1.0)
    Re, UA, UB, VA, VB = (float(pvals[i]) for i in range(5))

    out = rcnn_forward_pallas(init_state_low, Re, UA, UB, VA, VB,
                              dt=dt, dx=dx, mu_up=mu_up, steps=steps, chunk=8)
    out = jax.block_until_ready(out)

    ref = ref_forward(init_state_low, Re, UA, UB, VA, VB, dt, dx, mu_up, steps=steps)

    assert out.shape == (B * (steps + 1), C, H, W), out.shape
    assert bool(jnp.all(jnp.isfinite(out))), "non-finite kernel output"
    rel_err = float(jnp.max(jnp.abs(out - ref)) / (jnp.max(jnp.abs(ref)) + 1e-30))
    assert rel_err < 2e-2, f"kernel/reference mismatch, rel max err = {rel_err}"

    print("KERNEL_OK")
</pallas_src>

<mosaic_0001>
module attributes {stable_mosaic.version = 11 : i64} {
  func.func @kernel(%arg0: i32, %arg1: memref<4x128xf32, #tpu.memory_space<vmem>>, %arg2: memref<32x128xf32, #tpu.memory_space<vmem>>, %arg3: memref<128x256xbf16, #tpu.memory_space<vmem>>, %arg4: memref<8x32x128xf32, #tpu.memory_space<vmem>>, %arg5: memref<32x128xf32, #tpu.memory_space<vmem>>) attributes {dimension_semantics = [#tpu.dimension_semantics<arbitrary>], iteration_bounds = array<i64: 2>, scalar_prefetch = 0 : i64, scratch_operands = 1 : i64, tpu.core_type = #tpu.core_type<tc>, window_params = [{pipeline_mode = #tpu.pipeline_mode<synchronous>, transform_indices = @transform_0, window_bounds = array<i64: 4, 128>}, {pipeline_mode = #tpu.pipeline_mode<synchronous>, transform_indices = @transform_1, window_bounds = array<i64: 32, 128>}, {pipeline_mode = #tpu.pipeline_mode<synchronous>, transform_indices = @transform_2, window_bounds = array<i64: 128, 256>}, {transform_indices = @transform_3, window_bounds = array<i64: 8, 32, 128>}]} {
    %c0_i32 = arith.constant 0 : i32
    %0 = arith.cmpi eq, %arg0, %c0_i32 : i32
    %1 = arith.extui %0 : i1 to i32
    %c0_i32_0 = arith.constant 0 : i32
    %2 = arith.cmpi ne, %1, %c0_i32_0 : i32
    scf.if %2 {
      %c0_425 = arith.constant 0 : index
      %c0_426 = arith.constant 0 : index
      %1378 = vector.load %arg2[%c0_425, %c0_426] : memref<32x128xf32, #tpu.memory_space<vmem>>, vector<32x128xf32>
      %c0_427 = arith.constant 0 : index
      %c0_428 = arith.constant 0 : index
      %1379 = vector.load %arg5[%c0_427, %c0_428] : memref<32x128xf32, #tpu.memory_space<vmem>>, vector<32x128xf32>
      tpu.vector_store %arg5[%c0_427, %c0_428], %1378 {strides = array<i32>} : memref<32x128xf32, #tpu.memory_space<vmem>>, vector<32x128xf32>,
    } else {
    }
    %c0 = arith.constant 0 : index
    %c0_1 = arith.constant 0 : index
    %3 = vector.load %arg1[%c0, %c0_1] : memref<4x128xf32, #tpu.memory_space<vmem>>, vector<1x128xf32>
    %4 = vector.shape_cast %3 : vector<1x128xf32> to vector<1x128xf32>
    %5 = vector.broadcast %4 : vector<1x128xf32> to vector<32x128xf32>
    %c1 = arith.constant 1 : index
    %c0_2 = arith.constant 0 : index
    %6 = vector.load %arg1[%c1, %c0_2] : memref<4x128xf32, #tpu.memory_space<vmem>>, vector<1x128xf32>
    %7 = vector.shape_cast %6 : vector<1x128xf32> to vector<1x128xf32>
    %8 = vector.broadcast %7 : vector<1x128xf32> to vector<32x128xf32>
    %c2 = arith.constant 2 : index
    %c0_3 = arith.constant 0 : index
    %9 = vector.load %arg1[%c2, %c0_3] : memref<4x128xf32, #tpu.memory_space<vmem>>, vector<1x128xf32>
    %10 = vector.shape_cast %9 : vector<1x128xf32> to vector<1x128xf32>
    %11 = vector.broadcast %10 : vector<1x128xf32> to vector<32x128xf32>
    %c3 = arith.constant 3 : index
    %c0_4 = arith.constant 0 : index
    %12 = vector.load %arg1[%c3, %c0_4] : memref<4x128xf32, #tpu.memory_space<vmem>>, vector<1x128xf32>
    %13 = vector.shape_cast %12 : vector<1x128xf32> to vector<1x128xf32>
    %14 = vector.broadcast %13 : vector<1x128xf32> to vector<32x128xf32>
    %c0_5 = arith.constant 0 : index
    %c0_6 = arith.constant 0 : index
    %15 = vector.load %arg3[%c0_5, %c0_6] : memref<128x256xbf16, #tpu.memory_space<vmem>>, vector<128x256xbf16>
    %c0_7 = arith.constant 0 : index
    %c0_8 = arith.constant 0 : index
    %16 = vector.load %arg5[%c0_7, %c0_8] : memref<32x128xf32, #tpu.memory_space<vmem>>, vector<32x128xf32>
    %17 = arith.truncf %16 : vector<32x128xf32> to vector<32x128xbf16>
    %cst = arith.constant dense<0.000000e+00> : vector<32x256xf32>
    %18 = tpu.matmul %17, %15, %cst {dimension_numbers = #tpu.dot_dimension_numbers<[1], [0], [0], [1], [0, 0, 1, 1], [], []>} : vector<32x128xbf16>, vector<128x256xbf16>, vector<32x256xf32> -> vector<32x256xf32>
    %19 = vector.extract_strided_slice %18 {offsets = [0, 0], sizes = [32, 128], strides = [1, 1]} : vector<32x256xf32> to vector<32x128xf32>
    %20 = vector.extract_strided_slice %18 {offsets = [0, 128], sizes = [32, 128], strides = [1, 1]} : vector<32x256xf32> to vector<32x128xf32>
    %c1_i32 = arith.constant 1 : i32
    %21 = tpu.dynamic_rotate %16 by %c1_i32 dim 0 : vector<32x128xf32>, i32 -> vector<32x128xf32>
    %c2_i32 = arith.constant 2 : i32
    %22 = tpu.dynamic_rotate %16 by %c2_i32 dim 0 : vector<32x128xf32>, i32 -> vector<32x128xf32>
    %c31_i32 = arith.constant 31 : i32
    %23 = tpu.dynamic_rotate %16 by %c31_i32 dim 0 : vector<32x128xf32>, i32 -> vector<32x128xf32>
    %c30_i32 = arith.constant 30 : i32
    %24 = tpu.dynamic_rotate %16 by %c30_i32 dim 0 : vector<32x128xf32>, i32 -> vector<32x128xf32>
    %25 = arith.subf %22, %24 : vector<32x128xf32>
    %cst_9 = arith.constant 8.33333301 : f32
    %26 = vector.broadcast %cst_9 : f32 to vector<32x128xf32>
    %27 = arith.mulf %26, %25 : vector<32x128xf32>
    %28 = arith.subf %23, %21 : vector<32x128xf32>
    %cst_10 = arith.constant 66.6666641 : f32
    %29 = vector.broadcast %cst_10 : f32 to vector<32x128xf32>
    %30 = arith.mulf %29, %28 : vector<32x128xf32>
    %31 = arith.addf %27, %30 : vector<32x128xf32>
    %32 = arith.addf %22, %24 : vector<32x128xf32>
    %cst_11 = arith.constant -7.81999445 : f32
    %33 = vector.broadcast %cst_11 : f32 to vector<32x128xf32>
    %34 = arith.mulf %33, %32 : vector<32x128xf32>
    %35 = arith.addf %21, %23 : vector<32x128xf32>
    %cst_12 = arith.constant 125.119911 : f32
    %36 = vector.broadcast %cst_12 : f32 to vector<32x128xf32>
    %37 = arith.mulf %36, %35 : vector<32x128xf32>
    %38 = arith.addf %34, %37 : vector<32x128xf32>
    %cst_13 = arith.constant -234.599838 : f32
    %39 = vector.broadcast %cst_13 : f32 to vector<32x128xf32>
    %40 = arith.mulf %39, %16 : vector<32x128xf32>
    %41 = arith.addf %38, %40 : vector<32x128xf32>
    %42 = arith.addf %20, %41 : vector<32x128xf32>
    %c64_i32 = arith.constant 64 : i32
    %43 = tpu.dynamic_rotate %16 by %c64_i32 dim 1 : vector<32x128xf32>, i32 -> vector<32x128xf32>
    %44 = arith.mulf %5, %31 : vector<32x128xf32>
    %45 = arith.mulf %8, %19 : vector<32x128xf32>
    %46 = arith.addf %44, %45 : vector<32x128xf32>
    %47 = arith.mulf %16, %46 : vector<32x128xf32>
    %48 = arith.addf %42, %47 : vector<32x128xf32>
    %49 = arith.mulf %11, %31 : vector<32x128xf32>
    %50 = arith.mulf %14, %19 : vector<32x128xf32>
    %51 = arith.addf %49, %50 : vector<32x128xf32>
    %52 = arith.mulf %43, %51 : vector<32x128xf32>
    %53 = arith.addf %48, %52 : vector<32x128xf32>
    %cst_14 = arith.constant 5.000000e-04 : f32
    %54 = vector.broadcast %cst_14 : f32 to vector<32x128xf32>
    %55 = arith.mulf %54, %53 : vector<32x128xf32>
    %56 = arith.addf %16, %55 : vector<32x128xf32>
    %57 = arith.truncf %56 : vector<32x128xf32> to vector<32x128xbf16>
    %cst_15 = arith.constant dense<0.000000e+00> : vector<32x256xf32>
    %58 = tpu.matmul %57, %15, %cst_15 {dimension_numbers = #tpu.dot_dimension_numbers<[1], [0], [0], [1], [0, 0, 1, 1], [], []>} : vector<32x128xbf16>, vector<128x256xbf16>, vector<32x256xf32> -> vector<32x256xf32>
    %59 = vector.extract_strided_slice %58 {offsets = [0, 0], sizes = [32, 128], strides = [1, 1]} : vector<32x256xf32> to vector<32x128xf32>
    %60 = vector.extract_strided_slice %58 {offsets = [0, 128], sizes = [32, 128], strides = [1, 1]} : vector<32x256xf32> to vector<32x128xf32>
    %c1_i32_16 = arith.constant 1 : i32
    %61 = tpu.dynamic_rotate %56 by %c1_i32_16 dim 0 : vector<32x128xf32>, i32 -> vector<32x128xf32>
    %c2_i32_17 = arith.constant 2 : i32
    %62 = tpu.dynamic_rotate %56 by %c2_i32_17 dim 0 : vector<32x128xf32>, i32 -> vector<32x128xf32>
    %c31_i32_18 = arith.constant 31 : i32
    %63 = tpu.dynamic_rotate %56 by %c31_i32_18 dim 0 : vector<32x128xf32>, i32 -> vector<32x128xf32>
    %c30_i32_19 = arith.constant 30 : i32
    %64 = tpu.dynamic_rotate %56 by %c30_i32_19 dim 0 : vector<32x128xf32>, i32 -> vector<32x128xf32>
    %65 = arith.subf %62, %64 : vector<32x128xf32>
    %cst_20 = arith.constant 8.33333301 : f32
    %66 = vector.broadcast %cst_20 : f32 to vector<32x128xf32>
    %67 = arith.mulf %66, %65 : vector<32x128xf32>
    %68 = arith.subf %63, %61 : vector<32x128xf32>
    %cst_21 = arith.constant 66.6666641 : f32
    %69 = vector.broadcast %cst_21 : f32 to vector<32x128xf32>
    %70 = arith.mulf %69, %68 : vector<32x128xf32>
    %71 = arith.addf %67, %70 : vector<32x128xf32>
    %72 = arith.addf %62, %64 : vector<32x128xf32>
    %cst_22 = arith.constant -7.81999445 : f32
    %73 = vector.broadcast %cst_22 : f32 to vector<32x128xf32>
    %74 = arith.mulf %73, %72 : vector<32x128xf32>
    %75 = arith.addf %61, %63 : vector<32x128xf32>
    %cst_23 = arith.constant 125.119911 : f32
    %76 = vector.broadcast %cst_23 : f32 to vector<32x128xf32>
    %77 = arith.mulf %76, %75 : vector<32x128xf32>
    %78 = arith.addf %74, %77 : vector<32x128xf32>
    %cst_24 = arith.constant -234.599838 : f32
    %79 = vector.broadcast %cst_24 : f32 to vector<32x128xf32>
    %80 = arith.mulf %79, %56 : vector<32x128xf32>
    %81 = arith.addf %78, %80 : vector<32x128xf32>
    %82 = arith.addf %60, %81 : vector<32x128xf32>
    %c64_i32_25 = arith.constant 64 : i32
    %83 = tpu.dynamic_rotate %56 by %c64_i32_25 dim 1 : vector<32x128xf32>, i32 -> vector<32x128xf32>
    %84 = arith.mulf %5, %71 : vector<32x128xf32>
    %85 = arith.mulf %8, %59 : vector<32x128xf32>
    %86 = arith.addf %84, %85 : vector<32x128xf32>
    %87 = arith.mulf %56, %86 : vector<32x128xf32>
    %88 = arith.addf %82, %87 : vector<32x128xf32>
    %89 = arith.mulf %11, %71 : vector<32x128xf32>
    %90 = arith.mulf %14, %59 : vector<32x128xf32>
    %91 = arith.addf %89, %90 : vector<32x128xf32>
    %92 = arith.mulf %83, %91 : vector<32x128xf32>
    %93 = arith.addf %88, %92 : vector<32x128xf32>
    %cst_26 = arith.constant 2.000000e+00 : f32
    %94 = vector.broadcast %cst_26 : f32 to vector<32x128xf32>
    %95 = arith.mulf %94, %93 : vector<32x128xf32>
    %96 = arith.addf %53, %95 : vector<32x128xf32>
    %cst_27 = arith.constant 5.000000e-04 : f32
    %97 = vector.broadcast %cst_27 : f32 to vector<32x128xf32>
    %98 = arith.mulf %97, %93 : vector<32x128xf32>
    %99 = arith.addf %16, %98 : vector<32x128xf32>
    %100 = arith.truncf %99 : vector<32x128xf32> to vector<32x128xbf16>
    %cst_28 = arith.constant dense<0.000000e+00> : vector<32x256xf32>
    %101 = tpu.matmul %100, %15, %cst_28 {dimension_numbers = #tpu.dot_dimension_numbers<[1], [0], [0], [1], [0, 0, 1, 1], [], []>} : vector<32x128xbf16>, vector<128x256xbf16>, vector<32x256xf32> -> vector<32x256xf32>
    %102 = vector.extract_strided_slice %101 {offsets = [0, 0], sizes = [32, 128], strides = [1, 1]} : vector<32x256xf32> to vector<32x128xf32>
    %103 = vector.extract_strided_slice %101 {offsets = [0, 128], sizes = [32, 128], strides = [1, 1]} : vector<32x256xf32> to vector<32x128xf32>
    %c1_i32_29 = arith.constant 1 : i32
    %104 = tpu.dynamic_rotate %99 by %c1_i32_29 dim 0 : vector<32x128xf32>, i32 -> vector<32x128xf32>
    %c2_i32_30 = arith.constant 2 : i32
    %105 = tpu.dynamic_rotate %99 by %c2_i32_30 dim 0 : vector<32x128xf32>, i32 -> vector<32x128xf32>
    %c31_i32_31 = arith.constant 31 : i32
    %106 = tpu.dynamic_rotate %99 by %c31_i32_31 dim 0 : vector<32x128xf32>, i32 -> vector<32x128xf32>
    %c30_i32_32 = arith.constant 30 : i32
    %107 = tpu.dynamic_rotate %99 by %c30_i32_32 dim 0 : vector<32x128xf32>, i32 -> vector<32x128xf32>
    %108 = arith.subf %105, %107 : vector<32x128xf32>
    %cst_33 = arith.constant 8.33333301 : f32
    %109 = vector.broadcast %cst_33 : f32 to vector<32x128xf32>
    %110 = arith.mulf %109, %108 : vector<32x128xf32>
    %111 = arith.subf %106, %104 : vector<32x128xf32>
    %cst_34 = arith.constant 66.6666641 : f32
    %112 = vector.broadcast %cst_34 : f32 to vector<32x128xf32>
    %113 = arith.mulf %112, %111 : vector<32x128xf32>
    %114 = arith.addf %110, %113 : vector<32x128xf32>
    %115 = arith.addf %105, %107 : vector<32x128xf32>
    %cst_35 = arith.constant -7.81999445 : f32
    %116 = vector.broadcast %cst_35 : f32 to vector<32x128xf32>
    %117 = arith.mulf %116, %115 : vector<32x128xf32>
    %118 = arith.addf %104, %106 : vector<32x128xf32>
    %cst_36 = arith.constant 125.119911 : f32
    %119 = vector.broadcast %cst_36 : f32 to vector<32x128xf32>
    %120 = arith.mulf %119, %118 : vector<32x128xf32>
    %121 = arith.addf %117, %120 : vector<32x128xf32>
    %cst_37 = arith.constant -234.599838 : f32
    %122 = vector.broadcast %cst_37 : f32 to vector<32x128xf32>
    %123 = arith.mulf %122, %99 : vector<32x128xf32>
    %124 = arith.addf %121, %123 : vector<32x128xf32>
    %125 = arith.addf %103, %124 : vector<32x128xf32>
    %c64_i32_38 = arith.constant 64 : i32
    %126 = tpu.dynamic_rotate %99 by %c64_i32_38 dim 1 : vector<32x128xf32>, i32 -> vector<32x128xf32>
    %127 = arith.mulf %5, %114 : vector<32x128xf32>
    %128 = arith.mulf %8, %102 : vector<32x128xf32>
    %129 = arith.addf %127, %128 : vector<32x128xf32>
    %130 = arith.mulf %99, %129 : vector<32x128xf32>
    %131 = arith.addf %125, %130 : vector<32x128xf32>
    %132 = arith.mulf %11, %114 : vector<32x128xf32>
    %133 = arith.mulf %14, %102 : vector<32x128xf32>
    %134 = arith.addf %132, %133 : vector<32x128xf32>
    %135 = arith.mulf %126, %134 : vector<32x128xf32>
    %136 = arith.addf %131, %135 : vector<32x128xf32>
    %cst_39 = arith.constant 2.000000e+00 : f32
    %137 = vector.broadcast %cst_39 : f32 to vector<32x128xf32>
    %138 = arith.mulf %137, %136 : vector<32x128xf32>
    %139 = arith.addf %96, %138 : vector<32x128xf32>
    %cst_40 = arith.constant 1.000000e-03 : f32
    %140 = vector.broadcast %cst_40 : f32 to vector<32x128xf32>
    %141 = arith.mulf %140, %136 : vector<32x128xf32>
    %142 = arith.addf %16, %141 : vector<32x128xf32>
    %143 = arith.truncf %142 : vector<32x128xf32> to vector<32x128xbf16>
    %cst_41 = arith.constant dense<0.000000e+00> : vector<32x256xf32>
    %144 = tpu.matmul %143, %15, %cst_41 {dimension_numbers = #tpu.dot_dimension_numbers<[1], [0], [0], [1], [0, 0, 1, 1], [], []>} : vector<32x128xbf16>, vector<128x256xbf16>, vector<32x256xf32> -> vector<32x256xf32>
    %145 = vector.extract_strided_slice %144 {offsets = [0, 0], sizes = [32, 128], strides = [1, 1]} : vector<32x256xf32> to vector<32x128xf32>
    %146 = vector.extract_strided_slice %144 {offsets = [0, 128], sizes = [32, 128], strides = [1, 1]} : vector<32x256xf32> to vector<32x128xf32>
    %c1_i32_42 = arith.constant 1 : i32
    %147 = tpu.dynamic_rotate %142 by %c1_i32_42 dim 0 : vector<32x128xf32>, i32 -> vector<32x128xf32>
    %c2_i32_43 = arith.constant 2 : i32
    %148 = tpu.dynamic_rotate %142 by %c2_i32_43 dim 0 : vector<32x128xf32>, i32 -> vector<32x128xf32>
    %c31_i32_44 = arith.constant 31 : i32
    %149 = tpu.dynamic_rotate %142 by %c31_i32_44 dim 0 : vector<32x128xf32>, i32 -> vector<32x128xf32>
    %c30_i32_45 = arith.constant 30 : i32
    %150 = tpu.dynamic_rotate %142 by %c30_i32_45 dim 0 : vector<32x128xf32>, i32 -> vector<32x128xf32>
    %151 = arith.subf %148, %150 : vector<32x128xf32>
    %cst_46 = arith.constant 8.33333301 : f32
    %152 = vector.broadcast %cst_46 : f32 to vector<32x128xf32>
    %153 = arith.mulf %152, %151 : vector<32x128xf32>
    %154 = arith.subf %149, %147 : vector<32x128xf32>
    %cst_47 = arith.constant 66.6666641 : f32
    %155 = vector.broadcast %cst_47 : f32 to vector<32x128xf32>
    %156 = arith.mulf %155, %154 : vector<32x128xf32>
    %157 = arith.addf %153, %156 : vector<32x128xf32>
    %158 = arith.addf %148, %150 : vector<32x128xf32>
    %cst_48 = arith.constant -7.81999445 : f32
    %159 = vector.broadcast %cst_48 : f32 to vector<32x128xf32>
    %160 = arith.mulf %159, %158 : vector<32x128xf32>
    %161 = arith.addf %147, %149 : vector<32x128xf32>
    %cst_49 = arith.constant 125.119911 : f32
    %162 = vector.broadcast %cst_49 : f32 to vector<32x128xf32>
    %163 = arith.mulf %162, %161 : vector<32x128xf32>
    %164 = arith.addf %160, %163 : vector<32x128xf32>
    %cst_50 = arith.constant -234.599838 : f32
    %165 = vector.broadcast %cst_50 : f32 to vector<32x128xf32>
    %166 = arith.mulf %165, %142 : vector<32x128xf32>
    %167 = arith.addf %164, %166 : vector<32x128xf32>
    %168 = arith.addf %146, %167 : vector<32x128xf32>
    %c64_i32_51 = arith.constant 64 : i32
    %169 = tpu.dynamic_rotate %142 by %c64_i32_51 dim 1 : vector<32x128xf32>, i32 -> vector<32x128xf32>
    %170 = arith.mulf %5, %157 : vector<32x128xf32>
    %171 = arith.mulf %8, %145 : vector<32x128xf32>
    %172 = arith.addf %170, %171 : vector<32x128xf32>
    %173 = arith.mulf %142, %172 : vector<32x128xf32>
    %174 = arith.addf %168, %173 : vector<32x128xf32>
    %175 = arith.mulf %11, %157 : vector<32x128xf32>
    %176 = arith.mulf %14, %145 : vector<32x128xf32>
    %177 = arith.addf %175, %176 : vector<32x128xf32>
    %178 = arith.mulf %169, %177 : vector<32x128xf32>
    %179 = arith.addf %174, %178 : vector<32x128xf32>
    %180 = arith.addf %139, %179 : vector<32x128xf32>
    %cst_52 = arith.constant 1.66666665E-4 : f32
    %181 = vector.broadcast %cst_52 : f32 to vector<32x128xf32>
    %182 = arith.mulf %181, %180 : vector<32x128xf32>
    %183 = arith.addf %16, %182 : vector<32x128xf32>
    %c0_53 = arith.constant 0 : index
    %c0_54 = arith.constant 0 : index
    %c0_55 = arith.constant 0 : index
    %184 = vector.load %arg4[%c0_53, %c0_54, %c0_55] : memref<8x32x128xf32, #tpu.memory_space<vmem>>, vector<1x32x128xf32>
    %185 = vector.shape_cast %184 : vector<1x32x128xf32> to vector<32x128xf32>
    %186 = vector.shape_cast %183 : vector<32x128xf32> to vector<1x32x128xf32>
    tpu.vector_store %arg4[%c0_53, %c0_54, %c0_55], %186 {strides = array<i32>} : memref<8x32x128xf32, #tpu.memory_space<vmem>>, vector<1x32x128xf32>,
    %187 = arith.truncf %183 : vector<32x128xf32> to vector<32x128xbf16>
    %cst_56 = arith.constant dense<0.000000e+00> : vector<32x256xf32>
    %188 = tpu.matmul %187, %15, %cst_56 {dimension_numbers = #tpu.dot_dimension_numbers<[1], [0], [0], [1], [0, 0, 1, 1], [], []>} : vector<32x128xbf16>, vector<128x256xbf16>, vector<32x256xf32> -> vector<32x256xf32>
    %189 = vector.extract_strided_slice %188 {offsets = [0, 0], sizes = [32, 128], strides = [1, 1]} : vector<32x256xf32> to vector<32x128xf32>
    %190 = vector.extract_strided_slice %188 {offsets = [0, 128], sizes = [32, 128], strides = [1, 1]} : vector<32x256xf32> to vector<32x128xf32>
    %c1_i32_57 = arith.constant 1 : i32
    %191 = tpu.dynamic_rotate %183 by %c1_i32_57 dim 0 : vector<32x128xf32>, i32 -> vector<32x128xf32>
    %c2_i32_58 = arith.constant 2 : i32
    %192 = tpu.dynamic_rotate %183 by %c2_i32_58 dim 0 : vector<32x128xf32>, i32 -> vector<32x128xf32>
    %c31_i32_59 = arith.constant 31 : i32
    %193 = tpu.dynamic_rotate %183 by %c31_i32_59 dim 0 : vector<32x128xf32>, i32 -> vector<32x128xf32>
    %c30_i32_60 = arith.constant 30 : i32
    %194 = tpu.dynamic_rotate %183 by %c30_i32_60 dim 0 : vector<32x128xf32>, i32 -> vector<32x128xf32>
    %195 = arith.subf %192, %194 : vector<32x128xf32>
    %cst_61 = arith.constant 8.33333301 : f32
    %196 = vector.broadcast %cst_61 : f32 to vector<32x128xf32>
    %197 = arith.mulf %196, %195 : vector<32x128xf32>
    %198 = arith.subf %193, %191 : vector<32x128xf32>
    %cst_62 = arith.constant 66.6666641 : f32
    %199 = vector.broadcast %cst_62 : f32 to vector<32x128xf32>
    %200 = arith.mulf %199, %198 : vector<32x128xf32>
    %201 = arith.addf %197, %200 : vector<32x128xf32>
    %202 = arith.addf %192, %194 : vector<32x128xf32>
    %cst_63 = arith.constant -7.81999445 : f32
    %203 = vector.broadcast %cst_63 : f32 to vector<32x128xf32>
    %204 = arith.mulf %203, %202 : vector<32x128xf32>
    %205 = arith.addf %191, %193 : vector<32x128xf32>
    %cst_64 = arith.constant 125.119911 : f32
    %206 = vector.broadcast %cst_64 : f32 to vector<32x128xf32>
    %207 = arith.mulf %206, %205 : vector<32x128xf32>
    %208 = arith.addf %204, %207 : vector<32x128xf32>
    %cst_65 = arith.constant -234.599838 : f32
    %209 = vector.broadcast %cst_65 : f32 to vector<32x128xf32>
    %210 = arith.mulf %209, %183 : vector<32x128xf32>
    %211 = arith.addf %208, %210 : vector<32x128xf32>
    %212 = arith.addf %190, %211 : vector<32x128xf32>
    %c64_i32_66 = arith.constant 64 : i32
    %213 = tpu.dynamic_rotate %183 by %c64_i32_66 dim 1 : vector<32x128xf32>, i32 -> vector<32x128xf32>
    %214 = arith.mulf %5, %201 : vector<32x128xf32>
    %215 = arith.mulf %8, %189 : vector<32x128xf32>
    %216 = arith.addf %214, %215 : vector<32x128xf32>
    %217 = arith.mulf %183, %216 : vector<32x128xf32>
    %218 = arith.addf %212, %217 : vector<32x128xf32>
    %219 = arith.mulf %11, %201 : vector<32x128xf32>
    %220 = arith.mulf %14, %189 : vector<32x128xf32>
    %221 = arith.addf %219, %220 : vector<32x128xf32>
    %222 = arith.mulf %213, %221 : vector<32x128xf32>
    %223 = arith.addf %218, %222 : vector<32x128xf32>
    %cst_67 = arith.constant 5.000000e-04 : f32
    %224 = vector.broadcast %cst_67 : f32 to vector<32x128xf32>
    %225 = arith.mulf %224, %223 : vector<32x128xf32>
    %226 = arith.addf %183, %225 : vector<32x128xf32>
    %227 = arith.truncf %226 : vector<32x128xf32> to vector<32x128xbf16>
    %cst_68 = arith.constant dense<0.000000e+00> : vector<32x256xf32>
    %228 = tpu.matmul %227, %15, %cst_68 {dimension_numbers = #tpu.dot_dimension_numbers<[1], [0], [0], [1], [0, 0, 1, 1], [], []>} : vector<32x128xbf16>, vector<128x256xbf16>, vector<32x256xf32> -> vector<32x256xf32>
    %229 = vector.extract_strided_slice %228 {offsets = [0, 0], sizes = [32, 128], strides = [1, 1]} : vector<32x256xf32> to vector<32x128xf32>
    %230 = vector.extract_strided_slice %228 {offsets = [0, 128], sizes = [32, 128], strides = [1, 1]} : vector<32x256xf32> to vector<32x128xf32>
    %c1_i32_69 = arith.constant 1 : i32
    %231 = tpu.dynamic_rotate %226 by %c1_i32_69 dim 0 : vector<32x128xf32>, i32 -> vector<32x128xf32>
    %c2_i32_70 = arith.constant 2 : i32
    %232 = tpu.dynamic_rotate %226 by %c2_i32_70 dim 0 : vector<32x128xf32>, i32 -> vector<32x128xf32>
    %c31_i32_71 = arith.constant 31 : i32
    %233 = tpu.dynamic_rotate %226 by %c31_i32_71 dim 0 : vector<32x128xf32>, i32 -> vector<32x128xf32>
    %c30_i32_72 = arith.constant 30 : i32
    %234 = tpu.dynamic_rotate %226 by %c30_i32_72 dim 0 : vector<32x128xf32>, i32 -> vector<32x128xf32>
    %235 = arith.subf %232, %234 : vector<32x128xf32>
    %cst_73 = arith.constant 8.33333301 : f32
    %236 = vector.broadcast %cst_73 : f32 to vector<32x128xf32>
    %237 = arith.mulf %236, %235 : vector<32x128xf32>
    %238 = arith.subf %233, %231 : vector<32x128xf32>
    %cst_74 = arith.constant 66.6666641 : f32
    %239 = vector.broadcast %cst_74 : f32 to vector<32x128xf32>
    %240 = arith.mulf %239, %238 : vector<32x128xf32>
    %241 = arith.addf %237, %240 : vector<32x128xf32>
    %242 = arith.addf %232, %234 : vector<32x128xf32>
    %cst_75 = arith.constant -7.81999445 : f32
    %243 = vector.broadcast %cst_75 : f32 to vector<32x128xf32>
    %244 = arith.mulf %243, %242 : vector<32x128xf32>
    %245 = arith.addf %231, %233 : vector<32x128xf32>
    %cst_76 = arith.constant 125.119911 : f32
    %246 = vector.broadcast %cst_76 : f32 to vector<32x128xf32>
    %247 = arith.mulf %246, %245 : vector<32x128xf32>
    %248 = arith.addf %244, %247 : vector<32x128xf32>
    %cst_77 = arith.constant -234.599838 : f32
    %249 = vector.broadcast %cst_77 : f32 to vector<32x128xf32>
    %250 = arith.mulf %249, %226 : vector<32x128xf32>
    %251 = arith.addf %248, %250 : vector<32x128xf32>
    %252 = arith.addf %230, %251 : vector<32x128xf32>
    %c64_i32_78 = arith.constant 64 : i32
    %253 = tpu.dynamic_rotate %226 by %c64_i32_78 dim 1 : vector<32x128xf32>, i32 -> vector<32x128xf32>
    %254 = arith.mulf %5, %241 : vector<32x128xf32>
    %255 = arith.mulf %8, %229 : vector<32x128xf32>
    %256 = arith.addf %254, %255 : vector<32x128xf32>
    %257 = arith.mulf %226, %256 : vector<32x128xf32>
    %258 = arith.addf %252, %257 : vector<32x128xf32>
    %259 = arith.mulf %11, %241 : vector<32x128xf32>
    %260 = arith.mulf %14, %229 : vector<32x128xf32>
    %261 = arith.addf %259, %260 : vector<32x128xf32>
    %262 = arith.mulf %253, %261 : vector<32x128xf32>
    %263 = arith.addf %258, %262 : vector<32x128xf32>
    %cst_79 = arith.constant 2.000000e+00 : f32
    %264 = vector.broadcast %cst_79 : f32 to vector<32x128xf32>
    %265 = arith.mulf %264, %263 : vector<32x128xf32>
    %266 = arith.addf %223, %265 : vector<32x128xf32>
    %cst_80 = arith.constant 5.000000e-04 : f32
    %267 = vector.broadcast %cst_80 : f32 to vector<32x128xf32>
    %268 = arith.mulf %267, %263 : vector<32x128xf32>
    %269 = arith.addf %183, %268 : vector<32x128xf32>
    %270 = arith.truncf %269 : vector<32x128xf32> to vector<32x128xbf16>
    %cst_81 = arith.constant dense<0.000000e+00> : vector<32x256xf32>
    %271 = tpu.matmul %270, %15, %cst_81 {dimension_numbers = #tpu.dot_dimension_numbers<[1], [0], [0], [1], [0, 0, 1, 1], [], []>} : vector<32x128xbf16>, vector<128x256xbf16>, vector<32x256xf32> -> vector<32x256xf32>
    %272 = vector.extract_strided_slice %271 {offsets = [0, 0], sizes = [32, 128], strides = [1, 1]} : vector<32x256xf32> to vector<32x128xf32>
    %273 = vector.extract_strided_slice %271 {offsets = [0, 128], sizes = [32, 128], strides = [1, 1]} : vector<32x256xf32> to vector<32x128xf32>
    %c1_i32_82 = arith.constant 1 : i32
    %274 = tpu.dynamic_rotate %269 by %c1_i32_82 dim 0 : vector<32x128xf32>, i32 -> vector<32x128xf32>
    %c2_i32_83 = arith.constant 2 : i32
    %275 = tpu.dynamic_rotate %269 by %c2_i32_83 dim 0 : vector<32x128xf32>, i32 -> vector<32x128xf32>
    %c31_i32_84 = arith.constant 31 : i32
    %276 = tpu.dynamic_rotate %269 by %c31_i32_84 dim 0 : vector<32x128xf32>, i32 -> vector<32x128xf32>
    %c30_i32_85 = arith.constant 30 : i32
    %277 = tpu.dynamic_rotate %269 by %c30_i32_85 dim 0 : vector<32x128xf32>, i32 -> vector<32x128xf32>
    %278 = arith.subf %275, %277 : vector<32x128xf32>
    %cst_86 = arith.constant 8.33333301 : f32
    %279 = vector.broadcast %cst_86 : f32 to vector<32x128xf32>
    %280 = arith.mulf %279, %278 : vector<32x128xf32>
    %281 = arith.subf %276, %274 : vector<32x128xf32>
    %cst_87 = arith.constant 66.6666641 : f32
    %282 = vector.broadcast %cst_87 : f32 to vector<32x128xf32>
    %283 = arith.mulf %282, %281 : vector<32x128xf32>
    %284 = arith.addf %280, %283 : vector<32x128xf32>
    %285 = arith.addf %275, %277 : vector<32x128xf32>
    %cst_88 = arith.constant -7.81999445 : f32
    %286 = vector.broadcast %cst_88 : f32 to vector<32x128xf32>
    %287 = arith.mulf %286, %285 : vector<32x128xf32>
    %288 = arith.addf %274, %276 : vector<32x128xf32>
    %cst_89 = arith.constant 125.119911 : f32
    %289 = vector.broadcast %cst_89 : f32 to vector<32x128xf32>
    %290 = arith.mulf %289, %288 : vector<32x128xf32>
    %291 = arith.addf %287, %290 : vector<32x128xf32>
    %cst_90 = arith.constant -234.599838 : f32
    %292 = vector.broadcast %cst_90 : f32 to vector<32x128xf32>
    %293 = arith.mulf %292, %269 : vector<32x128xf32>
    %294 = arith.addf %291, %293 : vector<32x128xf32>
    %295 = arith.addf %273, %294 : vector<32x128xf32>
    %c64_i32_91 = arith.constant 64 : i32
    %296 = tpu.dynamic_rotate %269 by %c64_i32_91 dim 1 : vector<32x128xf32>, i32 -> vector<32x128xf32>
    %297 = arith.mulf %5, %284 : vector<32x128xf32>
    %298 = arith.mulf %8, %272 : vector<32x128xf32>
    %299 = arith.addf %297, %298 : vector<32x128xf32>
    %300 = arith.mulf %269, %299 : vector<32x128xf32>
    %301 = arith.addf %295, %300 : vector<32x128xf32>
    %302 = arith.mulf %11, %284 : vector<32x128xf32>
    %303 = arith.mulf %14, %272 : vector<32x128xf32>
    %304 = arith.addf %302, %303 : vector<32x128xf32>
    %305 = arith.mulf %296, %304 : vector<32x128xf32>
    %306 = arith.addf %301, %305 : vector<32x128xf32>
    %cst_92 = arith.constant 2.000000e+00 : f32
    %307 = vector.broadcast %cst_92 : f32 to vector<32x128xf32>
    %308 = arith.mulf %307, %306 : vector<32x128xf32>
    %309 = arith.addf %266, %308 : vector<32x128xf32>
    %cst_93 = arith.constant 1.000000e-03 : f32
    %310 = vector.broadcast %cst_93 : f32 to vector<32x128xf32>
    %311 = arith.mulf %310, %306 : vector<32x128xf32>
    %312 = arith.addf %183, %311 : vector<32x128xf32>
    %313 = arith.truncf %312 : vector<32x128xf32> to vector<32x128xbf16>
    %cst_94 = arith.constant dense<0.000000e+00> : vector<32x256xf32>
    %314 = tpu.matmul %313, %15, %cst_94 {dimension_numbers = #tpu.dot_dimension_numbers<[1], [0], [0], [1], [0, 0, 1, 1], [], []>} : vector<32x128xbf16>, vector<128x256xbf16>, vector<32x256xf32> -> vector<32x256xf32>
    %315 = vector.extract_strided_slice %314 {offsets = [0, 0], sizes = [32, 128], strides = [1, 1]} : vector<32x256xf32> to vector<32x128xf32>
    %316 = vector.extract_strided_slice %314 {offsets = [0, 128], sizes = [32, 128], strides = [1, 1]} : vector<32x256xf32> to vector<32x128xf32>
    %c1_i32_95 = arith.constant 1 : i32
    %317 = tpu.dynamic_rotate %312 by %c1_i32_95 dim 0 : vector<32x128xf32>, i32 -> vector<32x128xf32>
    %c2_i32_96 = arith.constant 2 : i32
    %318 = tpu.dynamic_rotate %312 by %c2_i32_96 dim 0 : vector<32x128xf32>, i32 -> vector<32x128xf32>
    %c31_i32_97 = arith.constant 31 : i32
    %319 = tpu.dynamic_rotate %312 by %c31_i32_97 dim 0 : vector<32x128xf32>, i32 -> vector<32x128xf32>
    %c30_i32_98 = arith.constant 30 : i32
    %320 = tpu.dynamic_rotate %312 by %c30_i32_98 dim 0 : vector<32x128xf32>, i32 -> vector<32x128xf32>
    %321 = arith.subf %318, %320 : vector<32x128xf32>
    %cst_99 = arith.constant 8.33333301 : f32
    %322 = vector.broadcast %cst_99 : f32 to vector<32x128xf32>
    %323 = arith.mulf %322, %321 : vector<32x128xf32>
    %324 = arith.subf %319, %317 : vector<32x128xf32>
    %cst_100 = arith.constant 66.6666641 : f32
    %325 = vector.broadcast %cst_100 : f32 to vector<32x128xf32>
    %326 = arith.mulf %325, %324 : vector<32x128xf32>
    %327 = arith.addf %323, %326 : vector<32x128xf32>
    %328 = arith.addf %318, %320 : vector<32x128xf32>
    %cst_101 = arith.constant -7.81999445 : f32
    %329 = vector.broadcast %cst_101 : f32 to vector<32x128xf32>
    %330 = arith.mulf %329, %328 : vector<32x128xf32>
    %331 = arith.addf %317, %319 : vector<32x128xf32>
    %cst_102 = arith.constant 125.119911 : f32
    %332 = vector.broadcast %cst_102 : f32 to vector<32x128xf32>
    %333 = arith.mulf %332, %331 : vector<32x128xf32>
    %334 = arith.addf %330, %333 : vector<32x128xf32>
    %cst_103 = arith.constant -234.599838 : f32
    %335 = vector.broadcast %cst_103 : f32 to vector<32x128xf32>
    %336 = arith.mulf %335, %312 : vector<32x128xf32>
    %337 = arith.addf %334, %336 : vector<32x128xf32>
    %338 = arith.addf %316, %337 : vector<32x128xf32>
    %c64_i32_104 = arith.constant 64 : i32
    %339 = tpu.dynamic_rotate %312 by %c64_i32_104 dim 1 : vector<32x128xf32>, i32 -> vector<32x128xf32>
    %340 = arith.mulf %5, %327 : vector<32x128xf32>
    %341 = arith.mulf %8, %315 : vector<32x128xf32>
    %342 = arith.addf %340, %341 : vector<32x128xf32>
    %343 = arith.mulf %312, %342 : vector<32x128xf32>
    %344 = arith.addf %338, %343 : vector<32x128xf32>
    %345 = arith.mulf %11, %327 : vector<32x128xf32>
    %346 = arith.mulf %14, %315 : vector<32x128xf32>
    %347 = arith.addf %345, %346 : vector<32x128xf32>
    %348 = arith.mulf %339, %347 : vector<32x128xf32>
    %349 = arith.addf %344, %348 : vector<32x128xf32>
    %350 = arith.addf %309, %349 : vector<32x128xf32>
    %cst_105 = arith.constant 1.66666665E-4 : f32
    %351 = vector.broadcast %cst_105 : f32 to vector<32x128xf32>
    %352 = arith.mulf %351, %350 : vector<32x128xf32>
    %353 = arith.addf %183, %352 : vector<32x128xf32>
    %c1_106 = arith.constant 1 : index
    %c0_107 = arith.constant 0 : index
    %c0_108 = arith.constant 0 : index
    %354 = vector.load %arg4[%c1_106, %c0_107, %c0_108] : memref<8x32x128xf32, #tpu.memory_space<vmem>>, vector<1x32x128xf32>
    %355 = vector.shape_cast %354 : vector<1x32x128xf32> to vector<32x128xf32>
    %356 = vector.shape_cast %353 : vector<32x128xf32> to vector<1x32x128xf32>
    tpu.vector_store %arg4[%c1_106, %c0_107, %c0_108], %356 {strides = array<i32>} : memref<8x32x128xf32, #tpu.memory_space<vmem>>, vector<1x32x128xf32>,
    %357 = arith.truncf %353 : vector<32x128xf32> to vector<32x128xbf16>
    %cst_109 = arith.constant dense<0.000000e+00> : vector<32x256xf32>
    %358 = tpu.matmul %357, %15, %cst_109 {dimension_numbers = #tpu.dot_dimension_numbers<[1], [0], [0], [1], [0, 0, 1, 1], [], []>} : vector<32x128xbf16>, vector<128x256xbf16>, vector<32x256xf32> -> vector<32x256xf32>
    %359 = vector.extract_strided_slice %358 {offsets = [0, 0], sizes = [32, 128], strides = [1, 1]} : vector<32x256xf32> to vector<32x128xf32>
    %360 = vector.extract_strided_slice %358 {offsets = [0, 128], sizes = [32, 128], strides = [1, 1]} : vector<32x256xf32> to vector<32x128xf32>
    %c1_i32_110 = arith.constant 1 : i32
    %361 = tpu.dynamic_rotate %353 by %c1_i32_110 dim 0 : vector<32x128xf32>, i32 -> vector<32x128xf32>
    %c2_i32_111 = arith.constant 2 : i32
    %362 = tpu.dynamic_rotate %353 by %c2_i32_111 dim 0 : vector<32x128xf32>, i32 -> vector<32x128xf32>
    %c31_i32_112 = arith.constant 31 : i32
    %363 = tpu.dynamic_rotate %353 by %c31_i32_112 dim 0 : vector<32x128xf32>, i32 -> vector<32x128xf32>
    %c30_i32_113 = arith.constant 30 : i32
    %364 = tpu.dynamic_rotate %353 by %c30_i32_113 dim 0 : vector<32x128xf32>, i32 -> vector<32x128xf32>
    %365 = arith.subf %362, %364 : vector<32x128xf32>
    %cst_114 = arith.constant 8.33333301 : f32
    %366 = vector.broadcast %cst_114 : f32 to vector<32x128xf32>
    %367 = arith.mulf %366, %365 : vector<32x128xf32>
    %368 = arith.subf %363, %361 : vector<32x128xf32>
    %cst_115 = arith.constant 66.6666641 : f32
    %369 = vector.broadcast %cst_115 : f32 to vector<32x128xf32>
    %370 = arith.mulf %369, %368 : vector<32x128xf32>
    %371 = arith.addf %367, %370 : vector<32x128xf32>
    %372 = arith.addf %362, %364 : vector<32x128xf32>
    %cst_116 = arith.constant -7.81999445 : f32
    %373 = vector.broadcast %cst_116 : f32 to vector<32x128xf32>
    %374 = arith.mulf %373, %372 : vector<32x128xf32>
    %375 = arith.addf %361, %363 : vector<32x128xf32>
    %cst_117 = arith.constant 125.119911 : f32
    %376 = vector.broadcast %cst_117 : f32 to vector<32x128xf32>
    %377 = arith.mulf %376, %375 : vector<32x128xf32>
    %378 = arith.addf %374, %377 : vector<32x128xf32>
    %cst_118 = arith.constant -234.599838 : f32
    %379 = vector.broadcast %cst_118 : f32 to vector<32x128xf32>
    %380 = arith.mulf %379, %353 : vector<32x128xf32>
    %381 = arith.addf %378, %380 : vector<32x128xf32>
    %382 = arith.addf %360, %381 : vector<32x128xf32>
    %c64_i32_119 = arith.constant 64 : i32
    %383 = tpu.dynamic_rotate %353 by %c64_i32_119 dim 1 : vector<32x128xf32>, i32 -> vector<32x128xf32>
    %384 = arith.mulf %5, %371 : vector<32x128xf32>
    %385 = arith.mulf %8, %359 : vector<32x128xf32>
    %386 = arith.addf %384, %385 : vector<32x128xf32>
    %387 = arith.mulf %353, %386 : vector<32x128xf32>
    %388 = arith.addf %382, %387 : vector<32x128xf32>
    %389 = arith.mulf %11, %371 : vector<32x128xf32>
    %390 = arith.mulf %14, %359 : vector<32x128xf32>
    %391 = arith.addf %389, %390 : vector<32x128xf32>
    %392 = arith.mulf %383, %391 : vector<32x128xf32>
    %393 = arith.addf %388, %392 : vector<32x128xf32>
    %cst_120 = arith.constant 5.000000e-04 : f32
    %394 = vector.broadcast %cst_120 : f32 to vector<32x128xf32>
    %395 = arith.mulf %394, %393 : vector<32x128xf32>
    %396 = arith.addf %353, %395 : vector<32x128xf32>
    %397 = arith.truncf %396 : vector<32x128xf32> to vector<32x128xbf16>
    %cst_121 = arith.constant dense<0.000000e+00> : vector<32x256xf32>
    %398 = tpu.matmul %397, %15, %cst_121 {dimension_numbers = #tpu.dot_dimension_numbers<[1], [0], [0], [1], [0, 0, 1, 1], [], []>} : vector<32x128xbf16>, vector<128x256xbf16>, vector<32x256xf32> -> vector<32x256xf32>
    %399 = vector.extract_strided_slice %398 {offsets = [0, 0], sizes = [32, 128], strides = [1, 1]} : vector<32x256xf32> to vector<32x128xf32>
    %400 = vector.extract_strided_slice %398 {offsets = [0, 128], sizes = [32, 128], strides = [1, 1]} : vector<32x256xf32> to vector<32x128xf32>
    %c1_i32_122 = arith.constant 1 : i32
    %401 = tpu.dynamic_rotate %396 by %c1_i32_122 dim 0 : vector<32x128xf32>, i32 -> vector<32x128xf32>
    %c2_i32_123 = arith.constant 2 : i32
    %402 = tpu.dynamic_rotate %396 by %c2_i32_123 dim 0 : vector<32x128xf32>, i32 -> vector<32x128xf32>
    %c31_i32_124 = arith.constant 31 : i32
    %403 = tpu.dynamic_rotate %396 by %c31_i32_124 dim 0 : vector<32x128xf32>, i32 -> vector<32x128xf32>
    %c30_i32_125 = arith.constant 30 : i32
    %404 = tpu.dynamic_rotate %396 by %c30_i32_125 dim 0 : vector<32x128xf32>, i32 -> vector<32x128xf32>
    %405 = arith.subf %402, %404 : vector<32x128xf32>
    %cst_126 = arith.constant 8.33333301 : f32
    %406 = vector.broadcast %cst_126 : f32 to vector<32x128xf32>
    %407 = arith.mulf %406, %405 : vector<32x128xf32>
    %408 = arith.subf %403, %401 : vector<32x128xf32>
    %cst_127 = arith.constant 66.6666641 : f32
    %409 = vector.broadcast %cst_127 : f32 to vector<32x128xf32>
    %410 = arith.mulf %409, %408 : vector<32x128xf32>
    %411 = arith.addf %407, %410 : vector<32x128xf32>
    %412 = arith.addf %402, %404 : vector<32x128xf32>
    %cst_128 = arith.constant -7.81999445 : f32
    %413 = vector.broadcast %cst_128 : f32 to vector<32x128xf32>
    %414 = arith.mulf %413, %412 : vector<32x128xf32>
    %415 = arith.addf %401, %403 : vector<32x128xf32>
    %cst_129 = arith.constant 125.119911 : f32
    %416 = vector.broadcast %cst_129 : f32 to vector<32x128xf32>
    %417 = arith.mulf %416, %415 : vector<32x128xf32>
    %418 = arith.addf %414, %417 : vector<32x128xf32>
    %cst_130 = arith.constant -234.599838 : f32
    %419 = vector.broadcast %cst_130 : f32 to vector<32x128xf32>
    %420 = arith.mulf %419, %396 : vector<32x128xf32>
    %421 = arith.addf %418, %420 : vector<32x128xf32>
    %422 = arith.addf %400, %421 : vector<32x128xf32>
    %c64_i32_131 = arith.constant 64 : i32
    %423 = tpu.dynamic_rotate %396 by %c64_i32_131 dim 1 : vector<32x128xf32>, i32 -> vector<32x128xf32>
    %424 = arith.mulf %5, %411 : vector<32x128xf32>
    %425 = arith.mulf %8, %399 : vector<32x128xf32>
    %426 = arith.addf %424, %425 : vector<32x128xf32>
    %427 = arith.mulf %396, %426 : vector<32x128xf32>
    %428 = arith.addf %422, %427 : vector<32x128xf32>
    %429 = arith.mulf %11, %411 : vector<32x128xf32>
    %430 = arith.mulf %14, %399 : vector<32x128xf32>
    %431 = arith.addf %429, %430 : vector<32x128xf32>
    %432 = arith.mulf %423, %431 : vector<32x128xf32>
    %433 = arith.addf %428, %432 : vector<32x128xf32>
    %cst_132 = arith.constant 2.000000e+00 : f32
    %434 = vector.broadcast %cst_132 : f32 to vector<32x128xf32>
    %435 = arith.mulf %434, %433 : vector<32x128xf32>
    %436 = arith.addf %393, %435 : vector<32x128xf32>
    %cst_133 = arith.constant 5.000000e-04 : f32
    %437 = vector.broadcast %cst_133 : f32 to vector<32x128xf32>
    %438 = arith.mulf %437, %433 : vector<32x128xf32>
    %439 = arith.addf %353, %438 : vector<32x128xf32>
    %440 = arith.truncf %439 : vector<32x128xf32> to vector<32x128xbf16>
    %cst_134 = arith.constant dense<0.000000e+00> : vector<32x256xf32>
    %441 = tpu.matmul %440, %15, %cst_134 {dimension_numbers = #tpu.dot_dimension_numbers<[1], [0], [0], [1], [0, 0, 1, 1], [], []>} : vector<32x128xbf16>, vector<128x256xbf16>, vector<32x256xf32> -> vector<32x256xf32>
    %442 = vector.extract_strided_slice %441 {offsets = [0, 0], sizes = [32, 128], strides = [1, 1]} : vector<32x256xf32> to vector<32x128xf32>
    %443 = vector.extract_strided_slice %441 {offsets = [0, 128], sizes = [32, 128], strides = [1, 1]} : vector<32x256xf32> to vector<32x128xf32>
    %c1_i32_135 = arith.constant 1 : i32
    %444 = tpu.dynamic_rotate %439 by %c1_i32_135 dim 0 : vector<32x128xf32>, i32 -> vector<32x128xf32>
    %c2_i32_136 = arith.constant 2 : i32
    %445 = tpu.dynamic_rotate %439 by %c2_i32_136 dim 0 : vector<32x128xf32>, i32 -> vector<32x128xf32>
    %c31_i32_137 = arith.constant 31 : i32
    %446 = tpu.dynamic_rotate %439 by %c31_i32_137 dim 0 : vector<32x128xf32>, i32 -> vector<32x128xf32>
    %c30_i32_138 = arith.constant 30 : i32
    %447 = tpu.dynamic_rotate %439 by %c30_i32_138 dim 0 : vector<32x128xf32>, i32 -> vector<32x128xf32>
    %448 = arith.subf %445, %447 : vector<32x128xf32>
    %cst_139 = arith.constant 8.33333301 : f32
    %449 = vector.broadcast %cst_139 : f32 to vector<32x128xf32>
    %450 = arith.mulf %449, %448 : vector<32x128xf32>
    %451 = arith.subf %446, %444 : vector<32x128xf32>
    %cst_140 = arith.constant 66.6666641 : f32
    %452 = vector.broadcast %cst_140 : f32 to vector<32x128xf32>
    %453 = arith.mulf %452, %451 : vector<32x128xf32>
    %454 = arith.addf %450, %453 : vector<32x128xf32>
    %455 = arith.addf %445, %447 : vector<32x128xf32>
    %cst_141 = arith.constant -7.81999445 : f32
    %456 = vector.broadcast %cst_141 : f32 to vector<32x128xf32>
    %457 = arith.mulf %456, %455 : vector<32x128xf32>
    %458 = arith.addf %444, %446 : vector<32x128xf32>
    %cst_142 = arith.constant 125.119911 : f32
    %459 = vector.broadcast %cst_142 : f32 to vector<32x128xf32>
    %460 = arith.mulf %459, %458 : vector<32x128xf32>
    %461 = arith.addf %457, %460 : vector<32x128xf32>
    %cst_143 = arith.constant -234.599838 : f32
    %462 = vector.broadcast %cst_143 : f32 to vector<32x128xf32>
    %463 = arith.mulf %462, %439 : vector<32x128xf32>
    %464 = arith.addf %461, %463 : vector<32x128xf32>
    %465 = arith.addf %443, %464 : vector<32x128xf32>
    %c64_i32_144 = arith.constant 64 : i32
    %466 = tpu.dynamic_rotate %439 by %c64_i32_144 dim 1 : vector<32x128xf32>, i32 -> vector<32x128xf32>
    %467 = arith.mulf %5, %454 : vector<32x128xf32>
    %468 = arith.mulf %8, %442 : vector<32x128xf32>
    %469 = arith.addf %467, %468 : vector<32x128xf32>
    %470 = arith.mulf %439, %469 : vector<32x128xf32>
    %471 = arith.addf %465, %470 : vector<32x128xf32>
    %472 = arith.mulf %11, %454 : vector<32x128xf32>
    %473 = arith.mulf %14, %442 : vector<32x128xf32>
    %474 = arith.addf %472, %473 : vector<32x128xf32>
    %475 = arith.mulf %466, %474 : vector<32x128xf32>
    %476 = arith.addf %471, %475 : vector<32x128xf32>
    %cst_145 = arith.constant 2.000000e+00 : f32
    %477 = vector.broadcast %cst_145 : f32 to vector<32x128xf32>
    %478 = arith.mulf %477, %476 : vector<32x128xf32>
    %479 = arith.addf %436, %478 : vector<32x128xf32>
    %cst_146 = arith.constant 1.000000e-03 : f32
    %480 = vector.broadcast %cst_146 : f32 to vector<32x128xf32>
    %481 = arith.mulf %480, %476 : vector<32x128xf32>
    %482 = arith.addf %353, %481 : vector<32x128xf32>
    %483 = arith.truncf %482 : vector<32x128xf32> to vector<32x128xbf16>
    %cst_147 = arith.constant dense<0.000000e+00> : vector<32x256xf32>
    %484 = tpu.matmul %483, %15, %cst_147 {dimension_numbers = #tpu.dot_dimension_numbers<[1], [0], [0], [1], [0, 0, 1, 1], [], []>} : vector<32x128xbf16>, vector<128x256xbf16>, vector<32x256xf32> -> vector<32x256xf32>
    %485 = vector.extract_strided_slice %484 {offsets = [0, 0], sizes = [32, 128], strides = [1, 1]} : vector<32x256xf32> to vector<32x128xf32>
    %486 = vector.extract_strided_slice %484 {offsets = [0, 128], sizes = [32, 128], strides = [1, 1]} : vector<32x256xf32> to vector<32x128xf32>
    %c1_i32_148 = arith.constant 1 : i32
    %487 = tpu.dynamic_rotate %482 by %c1_i32_148 dim 0 : vector<32x128xf32>, i32 -> vector<32x128xf32>
    %c2_i32_149 = arith.constant 2 : i32
    %488 = tpu.dynamic_rotate %482 by %c2_i32_149 dim 0 : vector<32x128xf32>, i32 -> vector<32x128xf32>
    %c31_i32_150 = arith.constant 31 : i32
    %489 = tpu.dynamic_rotate %482 by %c31_i32_150 dim 0 : vector<32x128xf32>, i32 -> vector<32x128xf32>
    %c30_i32_151 = arith.constant 30 : i32
    %490 = tpu.dynamic_rotate %482 by %c30_i32_151 dim 0 : vector<32x128xf32>, i32 -> vector<32x128xf32>
    %491 = arith.subf %488, %490 : vector<32x128xf32>
    %cst_152 = arith.constant 8.33333301 : f32
    %492 = vector.broadcast %cst_152 : f32 to vector<32x128xf32>
    %493 = arith.mulf %492, %491 : vector<32x128xf32>
    %494 = arith.subf %489, %487 : vector<32x128xf32>
    %cst_153 = arith.constant 66.6666641 : f32
    %495 = vector.broadcast %cst_153 : f32 to vector<32x128xf32>
    %496 = arith.mulf %495, %494 : vector<32x128xf32>
    %497 = arith.addf %493, %496 : vector<32x128xf32>
    %498 = arith.addf %488, %490 : vector<32x128xf32>
    %cst_154 = arith.constant -7.81999445 : f32
    %499 = vector.broadcast %cst_154 : f32 to vector<32x128xf32>
    %500 = arith.mulf %499, %498 : vector<32x128xf32>
    %501 = arith.addf %487, %489 : vector<32x128xf32>
    %cst_155 = arith.constant 125.119911 : f32
    %502 = vector.broadcast %cst_155 : f32 to vector<32x128xf32>
    %503 = arith.mulf %502, %501 : vector<32x128xf32>
    %504 = arith.addf %500, %503 : vector<32x128xf32>
    %cst_156 = arith.constant -234.599838 : f32
    %505 = vector.broadcast %cst_156 : f32 to vector<32x128xf32>
    %506 = arith.mulf %505, %482 : vector<32x128xf32>
    %507 = arith.addf %504, %506 : vector<32x128xf32>
    %508 = arith.addf %486, %507 : vector<32x128xf32>
    %c64_i32_157 = arith.constant 64 : i32
    %509 = tpu.dynamic_rotate %482 by %c64_i32_157 dim 1 : vector<32x128xf32>, i32 -> vector<32x128xf32>
    %510 = arith.mulf %5, %497 : vector<32x128xf32>
    %511 = arith.mulf %8, %485 : vector<32x128xf32>
    %512 = arith.addf %510, %511 : vector<32x128xf32>
    %513 = arith.mulf %482, %512 : vector<32x128xf32>
    %514 = arith.addf %508, %513 : vector<32x128xf32>
    %515 = arith.mulf %11, %497 : vector<32x128xf32>
    %516 = arith.mulf %14, %485 : vector<32x128xf32>
    %517 = arith.addf %515, %516 : vector<32x128xf32>
    %518 = arith.mulf %509, %517 : vector<32x128xf32>
    %519 = arith.addf %514, %518 : vector<32x128xf32>
    %520 = arith.addf %479, %519 : vector<32x128xf32>
    %cst_158 = arith.constant 1.66666665E-4 : f32
    %521 = vector.broadcast %cst_158 : f32 to vector<32x128xf32>
    %522 = arith.mulf %521, %520 : vector<32x128xf32>
    %523 = arith.addf %353, %522 : vector<32x128xf32>
    %c2_159 = arith.constant 2 : index
    %c0_160 = arith.constant 0 : index
    %c0_161 = arith.constant 0 : index
    %524 = vector.load %arg4[%c2_159, %c0_160, %c0_161] : memref<8x32x128xf32, #tpu.memory_space<vmem>>, vector<1x32x128xf32>
    %525 = vector.shape_cast %524 : vector<1x32x128xf32> to vector<32x128xf32>
    %526 = vector.shape_cast %523 : vector<32x128xf32> to vector<1x32x128xf32>
    tpu.vector_store %arg4[%c2_159, %c0_160, %c0_161], %526 {strides = array<i32>} : memref<8x32x128xf32, #tpu.memory_space<vmem>>, vector<1x32x128xf32>,
    %527 = arith.truncf %523 : vector<32x128xf32> to vector<32x128xbf16>
    %cst_162 = arith.constant dense<0.000000e+00> : vector<32x256xf32>
    %528 = tpu.matmul %527, %15, %cst_162 {dimension_numbers = #tpu.dot_dimension_numbers<[1], [0], [0], [1], [0, 0, 1, 1], [], []>} : vector<32x128xbf16>, vector<128x256xbf16>, vector<32x256xf32> -> vector<32x256xf32>
    %529 = vector.extract_strided_slice %528 {offsets = [0, 0], sizes = [32, 128], strides = [1, 1]} : vector<32x256xf32> to vector<32x128xf32>
    %530 = vector.extract_strided_slice %528 {offsets = [0, 128], sizes = [32, 128], strides = [1, 1]} : vector<32x256xf32> to vector<32x128xf32>
    %c1_i32_163 = arith.constant 1 : i32
    %531 = tpu.dynamic_rotate %523 by %c1_i32_163 dim 0 : vector<32x128xf32>, i32 -> vector<32x128xf32>
    %c2_i32_164 = arith.constant 2 : i32
    %532 = tpu.dynamic_rotate %523 by %c2_i32_164 dim 0 : vector<32x128xf32>, i32 -> vector<32x128xf32>
    %c31_i32_165 = arith.constant 31 : i32
    %533 = tpu.dynamic_rotate %523 by %c31_i32_165 dim 0 : vector<32x128xf32>, i32 -> vector<32x128xf32>
    %c30_i32_166 = arith.constant 30 : i32
    %534 = tpu.dynamic_rotate %523 by %c30_i32_166 dim 0 : vector<32x128xf32>, i32 -> vector<32x128xf32>
    %535 = arith.subf %532, %534 : vector<32x128xf32>
    %cst_167 = arith.constant 8.33333301 : f32
    %536 = vector.broadcast %cst_167 : f32 to vector<32x128xf32>
    %537 = arith.mulf %536, %535 : vector<32x128xf32>
    %538 = arith.subf %533, %531 : vector<32x128xf32>
    %cst_168 = arith.constant 66.6666641 : f32
    %539 = vector.broadcast %cst_168 : f32 to vector<32x128xf32>
    %540 = arith.mulf %539, %538 : vector<32x128xf32>
    %541 = arith.addf %537, %540 : vector<32x128xf32>
    %542 = arith.addf %532, %534 : vector<32x128xf32>
    %cst_169 = arith.constant -7.81999445 : f32
    %543 = vector.broadcast %cst_169 : f32 to vector<32x128xf32>
    %544 = arith.mulf %543, %542 : vector<32x128xf32>
    %545 = arith.addf %531, %533 : vector<32x128xf32>
    %cst_170 = arith.constant 125.119911 : f32
    %546 = vector.broadcast %cst_170 : f32 to vector<32x128xf32>
    %547 = arith.mulf %546, %545 : vector<32x128xf32>
    %548 = arith.addf %544, %547 : vector<32x128xf32>
    %cst_171 = arith.constant -234.599838 : f32
    %549 = vector.broadcast %cst_171 : f32 to vector<32x128xf32>
    %550 = arith.mulf %549, %523 : vector<32x128xf32>
    %551 = arith.addf %548, %550 : vector<32x128xf32>
    %552 = arith.addf %530, %551 : vector<32x128xf32>
    %c64_i32_172 = arith.constant 64 : i32
    %553 = tpu.dynamic_rotate %523 by %c64_i32_172 dim 1 : vector<32x128xf32>, i32 -> vector<32x128xf32>
    %554 = arith.mulf %5, %541 : vector<32x128xf32>
    %555 = arith.mulf %8, %529 : vector<32x128xf32>
    %556 = arith.addf %554, %555 : vector<32x128xf32>
    %557 = arith.mulf %523, %556 : vector<32x128xf32>
    %558 = arith.addf %552, %557 : vector<32x128xf32>
    %559 = arith.mulf %11, %541 : vector<32x128xf32>
    %560 = arith.mulf %14, %529 : vector<32x128xf32>
    %561 = arith.addf %559, %560 : vector<32x128xf32>
    %562 = arith.mulf %553, %561 : vector<32x128xf32>
    %563 = arith.addf %558, %562 : vector<32x128xf32>
    %cst_173 = arith.constant 5.000000e-04 : f32
    %564 = vector.broadcast %cst_173 : f32 to vector<32x128xf32>
    %565 = arith.mulf %564, %563 : vector<32x128xf32>
    %566 = arith.addf %523, %565 : vector<32x128xf32>
    %567 = arith.truncf %566 : vector<32x128xf32> to vector<32x128xbf16>
    %cst_174 = arith.constant dense<0.000000e+00> : vector<32x256xf32>
    %568 = tpu.matmul %567, %15, %cst_174 {dimension_numbers = #tpu.dot_dimension_numbers<[1], [0], [0], [1], [0, 0, 1, 1], [], []>} : vector<32x128xbf16>, vector<128x256xbf16>, vector<32x256xf32> -> vector<32x256xf32>
    %569 = vector.extract_strided_slice %568 {offsets = [0, 0], sizes = [32, 128], strides = [1, 1]} : vector<32x256xf32> to vector<32x128xf32>
    %570 = vector.extract_strided_slice %568 {offsets = [0, 128], sizes = [32, 128], strides = [1, 1]} : vector<32x256xf32> to vector<32x128xf32>
    %c1_i32_175 = arith.constant 1 : i32
    %571 = tpu.dynamic_rotate %566 by %c1_i32_175 dim 0 : vector<32x128xf32>, i32 -> vector<32x128xf32>
    %c2_i32_176 = arith.constant 2 : i32
    %572 = tpu.dynamic_rotate %566 by %c2_i32_176 dim 0 : vector<32x128xf32>, i32 -> vector<32x128xf32>
    %c31_i32_177 = arith.constant 31 : i32
    %573 = tpu.dynamic_rotate %566 by %c31_i32_177 dim 0 : vector<32x128xf32>, i32 -> vector<32x128xf32>
    %c30_i32_178 = arith.constant 30 : i32
    %574 = tpu.dynamic_rotate %566 by %c30_i32_178 dim 0 : vector<32x128xf32>, i32 -> vector<32x128xf32>
    %575 = arith.subf %572, %574 : vector<32x128xf32>
    %cst_179 = arith.constant 8.33333301 : f32
    %576 = vector.broadcast %cst_179 : f32 to vector<32x128xf32>
    %577 = arith.mulf %576, %575 : vector<32x128xf32>
    %578 = arith.subf %573, %571 : vector<32x128xf32>
    %cst_180 = arith.constant 66.6666641 : f32
    %579 = vector.broadcast %cst_180 : f32 to vector<32x128xf32>
    %580 = arith.mulf %579, %578 : vector<32x128xf32>
    %581 = arith.addf %577, %580 : vector<32x128xf32>
    %582 = arith.addf %572, %574 : vector<32x128xf32>
    %cst_181 = arith.constant -7.81999445 : f32
    %583 = vector.broadcast %cst_181 : f32 to vector<32x128xf32>
    %584 = arith.mulf %583, %582 : vector<32x128xf32>
    %585 = arith.addf %571, %573 : vector<32x128xf32>
    %cst_182 = arith.constant 125.119911 : f32
    %586 = vector.broadcast %cst_182 : f32 to vector<32x128xf32>
    %587 = arith.mulf %586, %585 : vector<32x128xf32>
    %588 = arith.addf %584, %587 : vector<32x128xf32>
    %cst_183 = arith.constant -234.599838 : f32
    %589 = vector.broadcast %cst_183 : f32 to vector<32x128xf32>
    %590 = arith.mulf %589, %566 : vector<32x128xf32>
    %591 = arith.addf %588, %590 : vector<32x128xf32>
    %592 = arith.addf %570, %591 : vector<32x128xf32>
    %c64_i32_184 = arith.constant 64 : i32
    %593 = tpu.dynamic_rotate %566 by %c64_i32_184 dim 1 : vector<32x128xf32>, i32 -> vector<32x128xf32>
    %594 = arith.mulf %5, %581 : vector<32x128xf32>
    %595 = arith.mulf %8, %569 : vector<32x128xf32>
    %596 = arith.addf %594, %595 : vector<32x128xf32>
    %597 = arith.mulf %566, %596 : vector<32x128xf32>
    %598 = arith.addf %592, %597 : vector<32x128xf32>
    %599 = arith.mulf %11, %581 : vector<32x128xf32>
    %600 = arith.mulf %14, %569 : vector<32x128xf32>
    %601 = arith.addf %599, %600 : vector<32x128xf32>
    %602 = arith.mulf %593, %601 : vector<32x128xf32>
    %603 = arith.addf %598, %602 : vector<32x128xf32>
    %cst_185 = arith.constant 2.000000e+00 : f32
    %604 = vector.broadcast %cst_185 : f32 to vector<32x128xf32>
    %605 = arith.mulf %604, %603 : vector<32x128xf32>
    %606 = arith.addf %563, %605 : vector<32x128xf32>
    %cst_186 = arith.constant 5.000000e-04 : f32
    %607 = vector.broadcast %cst_186 : f32 to vector<32x128xf32>
    %608 = arith.mulf %607, %603 : vector<32x128xf32>
    %609 = arith.addf %523, %608 : vector<32x128xf32>
    %610 = arith.truncf %609 : vector<32x128xf32> to vector<32x128xbf16>
    %cst_187 = arith.constant dense<0.000000e+00> : vector<32x256xf32>
    %611 = tpu.matmul %610, %15, %cst_187 {dimension_numbers = #tpu.dot_dimension_numbers<[1], [0], [0], [1], [0, 0, 1, 1], [], []>} : vector<32x128xbf16>, vector<128x256xbf16>, vector<32x256xf32> -> vector<32x256xf32>
    %612 = vector.extract_strided_slice %611 {offsets = [0, 0], sizes = [32, 128], strides = [1, 1]} : vector<32x256xf32> to vector<32x128xf32>
    %613 = vector.extract_strided_slice %611 {offsets = [0, 128], sizes = [32, 128], strides = [1, 1]} : vector<32x256xf32> to vector<32x128xf32>
    %c1_i32_188 = arith.constant 1 : i32
    %614 = tpu.dynamic_rotate %609 by %c1_i32_188 dim 0 : vector<32x128xf32>, i32 -> vector<32x128xf32>
    %c2_i32_189 = arith.constant 2 : i32
    %615 = tpu.dynamic_rotate %609 by %c2_i32_189 dim 0 : vector<32x128xf32>, i32 -> vector<32x128xf32>
    %c31_i32_190 = arith.constant 31 : i32
    %616 = tpu.dynamic_rotate %609 by %c31_i32_190 dim 0 : vector<32x128xf32>, i32 -> vector<32x128xf32>
    %c30_i32_191 = arith.constant 30 : i32
    %617 = tpu.dynamic_rotate %609 by %c30_i32_191 dim 0 : vector<32x128xf32>, i32 -> vector<32x128xf32>
    %618 = arith.subf %615, %617 : vector<32x128xf32>
    %cst_192 = arith.constant 8.33333301 : f32
    %619 = vector.broadcast %cst_192 : f32 to vector<32x128xf32>
    %620 = arith.mulf %619, %618 : vector<32x128xf32>
    %621 = arith.subf %616, %614 : vector<32x128xf32>
    %cst_193 = arith.constant 66.6666641 : f32
    %622 = vector.broadcast %cst_193 : f32 to vector<32x128xf32>
    %623 = arith.mulf %622, %621 : vector<32x128xf32>
    %624 = arith.addf %620, %623 : vector<32x128xf32>
    %625 = arith.addf %615, %617 : vector<32x128xf32>
    %cst_194 = arith.constant -7.81999445 : f32
    %626 = vector.broadcast %cst_194 : f32 to vector<32x128xf32>
    %627 = arith.mulf %626, %625 : vector<32x128xf32>
    %628 = arith.addf %614, %616 : vector<32x128xf32>
    %cst_195 = arith.constant 125.119911 : f32
    %629 = vector.broadcast %cst_195 : f32 to vector<32x128xf32>
    %630 = arith.mulf %629, %628 : vector<32x128xf32>
    %631 = arith.addf %627, %630 : vector<32x128xf32>
    %cst_196 = arith.constant -234.599838 : f32
    %632 = vector.broadcast %cst_196 : f32 to vector<32x128xf32>
    %633 = arith.mulf %632, %609 : vector<32x128xf32>
    %634 = arith.addf %631, %633 : vector<32x128xf32>
    %635 = arith.addf %613, %634 : vector<32x128xf32>
    %c64_i32_197 = arith.constant 64 : i32
    %636 = tpu.dynamic_rotate %609 by %c64_i32_197 dim 1 : vector<32x128xf32>, i32 -> vector<32x128xf32>
    %637 = arith.mulf %5, %624 : vector<32x128xf32>
    %638 = arith.mulf %8, %612 : vector<32x128xf32>
    %639 = arith.addf %637, %638 : vector<32x128xf32>
    %640 = arith.mulf %609, %639 : vector<32x128xf32>
    %641 = arith.addf %635, %640 : vector<32x128xf32>
    %642 = arith.mulf %11, %624 : vector<32x128xf32>
    %643 = arith.mulf %14, %612 : vector<32x128xf32>
    %644 = arith.addf %642, %643 : vector<32x128xf32>
    %645 = arith.mulf %636, %644 : vector<32x128xf32>
    %646 = arith.addf %641, %645 : vector<32x128xf32>
    %cst_198 = arith.constant 2.000000e+00 : f32
    %647 = vector.broadcast %cst_198 : f32 to vector<32x128xf32>
    %648 = arith.mulf %647, %646 : vector<32x128xf32>
    %649 = arith.addf %606, %648 : vector<32x128xf32>
    %cst_199 = arith.constant 1.000000e-03 : f32
    %650 = vector.broadcast %cst_199 : f32 to vector<32x128xf32>
    %651 = arith.mulf %650, %646 : vector<32x128xf32>
    %652 = arith.addf %523, %651 : vector<32x128xf32>
    %653 = arith.truncf %652 : vector<32x128xf32> to vector<32x128xbf16>
    %cst_200 = arith.constant dense<0.000000e+00> : vector<32x256xf32>
    %654 = tpu.matmul %653, %15, %cst_200 {dimension_numbers = #tpu.dot_dimension_numbers<[1], [0], [0], [1], [0, 0, 1, 1], [], []>} : vector<32x128xbf16>, vector<128x256xbf16>, vector<32x256xf32> -> vector<32x256xf32>
    %655 = vector.extract_strided_slice %654 {offsets = [0, 0], sizes = [32, 128], strides = [1, 1]} : vector<32x256xf32> to vector<32x128xf32>
    %656 = vector.extract_strided_slice %654 {offsets = [0, 128], sizes = [32, 128], strides = [1, 1]} : vector<32x256xf32> to vector<32x128xf32>
    %c1_i32_201 = arith.constant 1 : i32
    %657 = tpu.dynamic_rotate %652 by %c1_i32_201 dim 0 : vector<32x128xf32>, i32 -> vector<32x128xf32>
    %c2_i32_202 = arith.constant 2 : i32
    %658 = tpu.dynamic_rotate %652 by %c2_i32_202 dim 0 : vector<32x128xf32>, i32 -> vector<32x128xf32>
    %c31_i32_203 = arith.constant 31 : i32
    %659 = tpu.dynamic_rotate %652 by %c31_i32_203 dim 0 : vector<32x128xf32>, i32 -> vector<32x128xf32>
    %c30_i32_204 = arith.constant 30 : i32
    %660 = tpu.dynamic_rotate %652 by %c30_i32_204 dim 0 : vector<32x128xf32>, i32 -> vector<32x128xf32>
    %661 = arith.subf %658, %660 : vector<32x128xf32>
    %cst_205 = arith.constant 8.33333301 : f32
    %662 = vector.broadcast %cst_205 : f32 to vector<32x128xf32>
    %663 = arith.mulf %662, %661 : vector<32x128xf32>
    %664 = arith.subf %659, %657 : vector<32x128xf32>
    %cst_206 = arith.constant 66.6666641 : f32
    %665 = vector.broadcast %cst_206 : f32 to vector<32x128xf32>
    %666 = arith.mulf %665, %664 : vector<32x128xf32>
    %667 = arith.addf %663, %666 : vector<32x128xf32>
    %668 = arith.addf %658, %660 : vector<32x128xf32>
    %cst_207 = arith.constant -7.81999445 : f32
    %669 = vector.broadcast %cst_207 : f32 to vector<32x128xf32>
    %670 = arith.mulf %669, %668 : vector<32x128xf32>
    %671 = arith.addf %657, %659 : vector<32x128xf32>
    %cst_208 = arith.constant 125.119911 : f32
    %672 = vector.broadcast %cst_208 : f32 to vector<32x128xf32>
    %673 = arith.mulf %672, %671 : vector<32x128xf32>
    %674 = arith.addf %670, %673 : vector<32x128xf32>
    %cst_209 = arith.constant -234.599838 : f32
    %675 = vector.broadcast %cst_209 : f32 to vector<32x128xf32>
    %676 = arith.mulf %675, %652 : vector<32x128xf32>
    %677 = arith.addf %674, %676 : vector<32x128xf32>
    %678 = arith.addf %656, %677 : vector<32x128xf32>
    %c64_i32_210 = arith.constant 64 : i32
    %679 = tpu.dynamic_rotate %652 by %c64_i32_210 dim 1 : vector<32x128xf32>, i32 -> vector<32x128xf32>
    %680 = arith.mulf %5, %667 : vector<32x128xf32>
    %681 = arith.mulf %8, %655 : vector<32x128xf32>
    %682 = arith.addf %680, %681 : vector<32x128xf32>
    %683 = arith.mulf %652, %682 : vector<32x128xf32>
    %684 = arith.addf %678, %683 : vector<32x128xf32>
    %685 = arith.mulf %11, %667 : vector<32x128xf32>
    %686 = arith.mulf %14, %655 : vector<32x128xf32>
    %687 = arith.addf %685, %686 : vector<32x128xf32>
    %688 = arith.mulf %679, %687 : vector<32x128xf32>
    %689 = arith.addf %684, %688 : vector<32x128xf32>
    %690 = arith.addf %649, %689 : vector<32x128xf32>
    %cst_211 = arith.constant 1.66666665E-4 : f32
    %691 = vector.broadcast %cst_211 : f32 to vector<32x128xf32>
    %692 = arith.mulf %691, %690 : vector<32x128xf32>
    %693 = arith.addf %523, %692 : vector<32x128xf32>
    %c3_212 = arith.constant 3 : index
    %c0_213 = arith.constant 0 : index
    %c0_214 = arith.constant 0 : index
    %694 = vector.load %arg4[%c3_212, %c0_213, %c0_214] : memref<8x32x128xf32, #tpu.memory_space<vmem>>, vector<1x32x128xf32>
    %695 = vector.shape_cast %694 : vector<1x32x128xf32> to vector<32x128xf32>
    %696 = vector.shape_cast %693 : vector<32x128xf32> to vector<1x32x128xf32>
    tpu.vector_store %arg4[%c3_212, %c0_213, %c0_214], %696 {strides = array<i32>} : memref<8x32x128xf32, #tpu.memory_space<vmem>>, vector<1x32x128xf32>,
    %697 = arith.truncf %693 : vector<32x128xf32> to vector<32x128xbf16>
    %cst_215 = arith.constant dense<0.000000e+00> : vector<32x256xf32>
    %698 = tpu.matmul %697, %15, %cst_215 {dimension_numbers = #tpu.dot_dimension_numbers<[1], [0], [0], [1], [0, 0, 1, 1], [], []>} : vector<32x128xbf16>, vector<128x256xbf16>, vector<32x256xf32> -> vector<32x256xf32>
    %699 = vector.extract_strided_slice %698 {offsets = [0, 0], sizes = [32, 128], strides = [1, 1]} : vector<32x256xf32> to vector<32x128xf32>
    %700 = vector.extract_strided_slice %698 {offsets = [0, 128], sizes = [32, 128], strides = [1, 1]} : vector<32x256xf32> to vector<32x128xf32>
    %c1_i32_216 = arith.constant 1 : i32
    %701 = tpu.dynamic_rotate %693 by %c1_i32_216 dim 0 : vector<32x128xf32>, i32 -> vector<32x128xf32>
    %c2_i32_217 = arith.constant 2 : i32
    %702 = tpu.dynamic_rotate %693 by %c2_i32_217 dim 0 : vector<32x128xf32>, i32 -> vector<32x128xf32>
    %c31_i32_218 = arith.constant 31 : i32
    %703 = tpu.dynamic_rotate %693 by %c31_i32_218 dim 0 : vector<32x128xf32>, i32 -> vector<32x128xf32>
    %c30_i32_219 = arith.constant 30 : i32
    %704 = tpu.dynamic_rotate %693 by %c30_i32_219 dim 0 : vector<32x128xf32>, i32 -> vector<32x128xf32>
    %705 = arith.subf %702, %704 : vector<32x128xf32>
    %cst_220 = arith.constant 8.33333301 : f32
    %706 = vector.broadcast %cst_220 : f32 to vector<32x128xf32>
    %707 = arith.mulf %706, %705 : vector<32x128xf32>
    %708 = arith.subf %703, %701 : vector<32x128xf32>
    %cst_221 = arith.constant 66.6666641 : f32
    %709 = vector.broadcast %cst_221 : f32 to vector<32x128xf32>
    %710 = arith.mulf %709, %708 : vector<32x128xf32>
    %711 = arith.addf %707, %710 : vector<32x128xf32>
    %712 = arith.addf %702, %704 : vector<32x128xf32>
    %cst_222 = arith.constant -7.81999445 : f32
    %713 = vector.broadcast %cst_222 : f32 to vector<32x128xf32>
    %714 = arith.mulf %713, %712 : vector<32x128xf32>
    %715 = arith.addf %701, %703 : vector<32x128xf32>
    %cst_223 = arith.constant 125.119911 : f32
    %716 = vector.broadcast %cst_223 : f32 to vector<32x128xf32>
    %717 = arith.mulf %716, %715 : vector<32x128xf32>
    %718 = arith.addf %714, %717 : vector<32x128xf32>
    %cst_224 = arith.constant -234.599838 : f32
    %719 = vector.broadcast %cst_224 : f32 to vector<32x128xf32>
    %720 = arith.mulf %719, %693 : vector<32x128xf32>
    %721 = arith.addf %718, %720 : vector<32x128xf32>
    %722 = arith.addf %700, %721 : vector<32x128xf32>
    %c64_i32_225 = arith.constant 64 : i32
    %723 = tpu.dynamic_rotate %693 by %c64_i32_225 dim 1 : vector<32x128xf32>, i32 -> vector<32x128xf32>
    %724 = arith.mulf %5, %711 : vector<32x128xf32>
    %725 = arith.mulf %8, %699 : vector<32x128xf32>
    %726 = arith.addf %724, %725 : vector<32x128xf32>
    %727 = arith.mulf %693, %726 : vector<32x128xf32>
    %728 = arith.addf %722, %727 : vector<32x128xf32>
    %729 = arith.mulf %11, %711 : vector<32x128xf32>
    %730 = arith.mulf %14, %699 : vector<32x128xf32>
    %731 = arith.addf %729, %730 : vector<32x128xf32>
    %732 = arith.mulf %723, %731 : vector<32x128xf32>
    %733 = arith.addf %728, %732 : vector<32x128xf32>
    %cst_226 = arith.constant 5.000000e-04 : f32
    %734 = vector.broadcast %cst_226 : f32 to vector<32x128xf32>
    %735 = arith.mulf %734, %733 : vector<32x128xf32>
    %736 = arith.addf %693, %735 : vector<32x128xf32>
    %737 = arith.truncf %736 : vector<32x128xf32> to vector<32x128xbf16>
    %cst_227 = arith.constant dense<0.000000e+00> : vector<32x256xf32>
    %738 = tpu.matmul %737, %15, %cst_227 {dimension_numbers = #tpu.dot_dimension_numbers<[1], [0], [0], [1], [0, 0, 1, 1], [], []>} : vector<32x128xbf16>, vector<128x256xbf16>, vector<32x256xf32> -> vector<32x256xf32>
    %739 = vector.extract_strided_slice %738 {offsets = [0, 0], sizes = [32, 128], strides = [1, 1]} : vector<32x256xf32> to vector<32x128xf32>
    %740 = vector.extract_strided_slice %738 {offsets = [0, 128], sizes = [32, 128], strides = [1, 1]} : vector<32x256xf32> to vector<32x128xf32>
    %c1_i32_228 = arith.constant 1 : i32
    %741 = tpu.dynamic_rotate %736 by %c1_i32_228 dim 0 : vector<32x128xf32>, i32 -> vector<32x128xf32>
    %c2_i32_229 = arith.constant 2 : i32
    %742 = tpu.dynamic_rotate %736 by %c2_i32_229 dim 0 : vector<32x128xf32>, i32 -> vector<32x128xf32>
    %c31_i32_230 = arith.constant 31 : i32
    %743 = tpu.dynamic_rotate %736 by %c31_i32_230 dim 0 : vector<32x128xf32>, i32 -> vector<32x128xf32>
    %c30_i32_231 = arith.constant 30 : i32
    %744 = tpu.dynamic_rotate %736 by %c30_i32_231 dim 0 : vector<32x128xf32>, i32 -> vector<32x128xf32>
    %745 = arith.subf %742, %744 : vector<32x128xf32>
    %cst_232 = arith.constant 8.33333301 : f32
    %746 = vector.broadcast %cst_232 : f32 to vector<32x128xf32>
    %747 = arith.mulf %746, %745 : vector<32x128xf32>
    %748 = arith.subf %743, %741 : vector<32x128xf32>
    %cst_233 = arith.constant 66.6666641 : f32
    %749 = vector.broadcast %cst_233 : f32 to vector<32x128xf32>
    %750 = arith.mulf %749, %748 : vector<32x128xf32>
    %751 = arith.addf %747, %750 : vector<32x128xf32>
    %752 = arith.addf %742, %744 : vector<32x128xf32>
    %cst_234 = arith.constant -7.81999445 : f32
    %753 = vector.broadcast %cst_234 : f32 to vector<32x128xf32>
    %754 = arith.mulf %753, %752 : vector<32x128xf32>
    %755 = arith.addf %741, %743 : vector<32x128xf32>
    %cst_235 = arith.constant 125.119911 : f32
    %756 = vector.broadcast %cst_235 : f32 to vector<32x128xf32>
    %757 = arith.mulf %756, %755 : vector<32x128xf32>
    %758 = arith.addf %754, %757 : vector<32x128xf32>
    %cst_236 = arith.constant -234.599838 : f32
    %759 = vector.broadcast %cst_236 : f32 to vector<32x128xf32>
    %760 = arith.mulf %759, %736 : vector<32x128xf32>
    %761 = arith.addf %758, %760 : vector<32x128xf32>
    %762 = arith.addf %740, %761 : vector<32x128xf32>
    %c64_i32_237 = arith.constant 64 : i32
    %763 = tpu.dynamic_rotate %736 by %c64_i32_237 dim 1 : vector<32x128xf32>, i32 -> vector<32x128xf32>
    %764 = arith.mulf %5, %751 : vector<32x128xf32>
    %765 = arith.mulf %8, %739 : vector<32x128xf32>
    %766 = arith.addf %764, %765 : vector<32x128xf32>
    %767 = arith.mulf %736, %766 : vector<32x128xf32>
    %768 = arith.addf %762, %767 : vector<32x128xf32>
    %769 = arith.mulf %11, %751 : vector<32x128xf32>
    %770 = arith.mulf %14, %739 : vector<32x128xf32>
    %771 = arith.addf %769, %770 : vector<32x128xf32>
    %772 = arith.mulf %763, %771 : vector<32x128xf32>
    %773 = arith.addf %768, %772 : vector<32x128xf32>
    %cst_238 = arith.constant 2.000000e+00 : f32
    %774 = vector.broadcast %cst_238 : f32 to vector<32x128xf32>
    %775 = arith.mulf %774, %773 : vector<32x128xf32>
    %776 = arith.addf %733, %775 : vector<32x128xf32>
    %cst_239 = arith.constant 5.000000e-04 : f32
    %777 = vector.broadcast %cst_239 : f32 to vector<32x128xf32>
    %778 = arith.mulf %777, %773 : vector<32x128xf32>
    %779 = arith.addf %693, %778 : vector<32x128xf32>
    %780 = arith.truncf %779 : vector<32x128xf32> to vector<32x128xbf16>
    %cst_240 = arith.constant dense<0.000000e+00> : vector<32x256xf32>
    %781 = tpu.matmul %780, %15, %cst_240 {dimension_numbers = #tpu.dot_dimension_numbers<[1], [0], [0], [1], [0, 0, 1, 1], [], []>} : vector<32x128xbf16>, vector<128x256xbf16>, vector<32x256xf32> -> vector<32x256xf32>
    %782 = vector.extract_strided_slice %781 {offsets = [0, 0], sizes = [32, 128], strides = [1, 1]} : vector<32x256xf32> to vector<32x128xf32>
    %783 = vector.extract_strided_slice %781 {offsets = [0, 128], sizes = [32, 128], strides = [1, 1]} : vector<32x256xf32> to vector<32x128xf32>
    %c1_i32_241 = arith.constant 1 : i32
    %784 = tpu.dynamic_rotate %779 by %c1_i32_241 dim 0 : vector<32x128xf32>, i32 -> vector<32x128xf32>
    %c2_i32_242 = arith.constant 2 : i32
    %785 = tpu.dynamic_rotate %779 by %c2_i32_242 dim 0 : vector<32x128xf32>, i32 -> vector<32x128xf32>
    %c31_i32_243 = arith.constant 31 : i32
    %786 = tpu.dynamic_rotate %779 by %c31_i32_243 dim 0 : vector<32x128xf32>, i32 -> vector<32x128xf32>
    %c30_i32_244 = arith.constant 30 : i32
    %787 = tpu.dynamic_rotate %779 by %c30_i32_244 dim 0 : vector<32x128xf32>, i32 -> vector<32x128xf32>
    %788 = arith.subf %785, %787 : vector<32x128xf32>
    %cst_245 = arith.constant 8.33333301 : f32
    %789 = vector.broadcast %cst_245 : f32 to vector<32x128xf32>
    %790 = arith.mulf %789, %788 : vector<32x128xf32>
    %791 = arith.subf %786, %784 : vector<32x128xf32>
    %cst_246 = arith.constant 66.6666641 : f32
    %792 = vector.broadcast %cst_246 : f32 to vector<32x128xf32>
    %793 = arith.mulf %792, %791 : vector<32x128xf32>
    %794 = arith.addf %790, %793 : vector<32x128xf32>
    %795 = arith.addf %785, %787 : vector<32x128xf32>
    %cst_247 = arith.constant -7.81999445 : f32
    %796 = vector.broadcast %cst_247 : f32 to vector<32x128xf32>
    %797 = arith.mulf %796, %795 : vector<32x128xf32>
    %798 = arith.addf %784, %786 : vector<32x128xf32>
    %cst_248 = arith.constant 125.119911 : f32
    %799 = vector.broadcast %cst_248 : f32 to vector<32x128xf32>
    %800 = arith.mulf %799, %798 : vector<32x128xf32>
    %801 = arith.addf %797, %800 : vector<32x128xf32>
    %cst_249 = arith.constant -234.599838 : f32
    %802 = vector.broadcast %cst_249 : f32 to vector<32x128xf32>
    %803 = arith.mulf %802, %779 : vector<32x128xf32>
    %804 = arith.addf %801, %803 : vector<32x128xf32>
    %805 = arith.addf %783, %804 : vector<32x128xf32>
    %c64_i32_250 = arith.constant 64 : i32
    %806 = tpu.dynamic_rotate %779 by %c64_i32_250 dim 1 : vector<32x128xf32>, i32 -> vector<32x128xf32>
    %807 = arith.mulf %5, %794 : vector<32x128xf32>
    %808 = arith.mulf %8, %782 : vector<32x128xf32>
    %809 = arith.addf %807, %808 : vector<32x128xf32>
    %810 = arith.mulf %779, %809 : vector<32x128xf32>
    %811 = arith.addf %805, %810 : vector<32x128xf32>
    %812 = arith.mulf %11, %794 : vector<32x128xf32>
    %813 = arith.mulf %14, %782 : vector<32x128xf32>
    %814 = arith.addf %812, %813 : vector<32x128xf32>
    %815 = arith.mulf %806, %814 : vector<32x128xf32>
    %816 = arith.addf %811, %815 : vector<32x128xf32>
    %cst_251 = arith.constant 2.000000e+00 : f32
    %817 = vector.broadcast %cst_251 : f32 to vector<32x128xf32>
    %818 = arith.mulf %817, %816 : vector<32x128xf32>
    %819 = arith.addf %776, %818 : vector<32x128xf32>
    %cst_252 = arith.constant 1.000000e-03 : f32
    %820 = vector.broadcast %cst_252 : f32 to vector<32x128xf32>
    %821 = arith.mulf %820, %816 : vector<32x128xf32>
    %822 = arith.addf %693, %821 : vector<32x128xf32>
    %823 = arith.truncf %822 : vector<32x128xf32> to vector<32x128xbf16>
    %cst_253 = arith.constant dense<0.000000e+00> : vector<32x256xf32>
    %824 = tpu.matmul %823, %15, %cst_253 {dimension_numbers = #tpu.dot_dimension_numbers<[1], [0], [0], [1], [0, 0, 1, 1], [], []>} : vector<32x128xbf16>, vector<128x256xbf16>, vector<32x256xf32> -> vector<32x256xf32>
    %825 = vector.extract_strided_slice %824 {offsets = [0, 0], sizes = [32, 128], strides = [1, 1]} : vector<32x256xf32> to vector<32x128xf32>
    %826 = vector.extract_strided_slice %824 {offsets = [0, 128], sizes = [32, 128], strides = [1, 1]} : vector<32x256xf32> to vector<32x128xf32>
    %c1_i32_254 = arith.constant 1 : i32
    %827 = tpu.dynamic_rotate %822 by %c1_i32_254 dim 0 : vector<32x128xf32>, i32 -> vector<32x128xf32>
    %c2_i32_255 = arith.constant 2 : i32
    %828 = tpu.dynamic_rotate %822 by %c2_i32_255 dim 0 : vector<32x128xf32>, i32 -> vector<32x128xf32>
    %c31_i32_256 = arith.constant 31 : i32
    %829 = tpu.dynamic_rotate %822 by %c31_i32_256 dim 0 : vector<32x128xf32>, i32 -> vector<32x128xf32>
    %c30_i32_257 = arith.constant 30 : i32
    %830 = tpu.dynamic_rotate %822 by %c30_i32_257 dim 0 : vector<32x128xf32>, i32 -> vector<32x128xf32>
    %831 = arith.subf %828, %830 : vector<32x128xf32>
    %cst_258 = arith.constant 8.33333301 : f32
    %832 = vector.broadcast %cst_258 : f32 to vector<32x128xf32>
    %833 = arith.mulf %832, %831 : vector<32x128xf32>
    %834 = arith.subf %829, %827 : vector<32x128xf32>
    %cst_259 = arith.constant 66.6666641 : f32
    %835 = vector.broadcast %cst_259 : f32 to vector<32x128xf32>
    %836 = arith.mulf %835, %834 : vector<32x128xf32>
    %837 = arith.addf %833, %836 : vector<32x128xf32>
    %838 = arith.addf %828, %830 : vector<32x128xf32>
    %cst_260 = arith.constant -7.81999445 : f32
    %839 = vector.broadcast %cst_260 : f32 to vector<32x128xf32>
    %840 = arith.mulf %839, %838 : vector<32x128xf32>
    %841 = arith.addf %827, %829 : vector<32x128xf32>
    %cst_261 = arith.constant 125.119911 : f32
    %842 = vector.broadcast %cst_261 : f32 to vector<32x128xf32>
    %843 = arith.mulf %842, %841 : vector<32x128xf32>
    %844 = arith.addf %840, %843 : vector<32x128xf32>
    %cst_262 = arith.constant -234.599838 : f32
    %845 = vector.broadcast %cst_262 : f32 to vector<32x128xf32>
    %846 = arith.mulf %845, %822 : vector<32x128xf32>
    %847 = arith.addf %844, %846 : vector<32x128xf32>
    %848 = arith.addf %826, %847 : vector<32x128xf32>
    %c64_i32_263 = arith.constant 64 : i32
    %849 = tpu.dynamic_rotate %822 by %c64_i32_263 dim 1 : vector<32x128xf32>, i32 -> vector<32x128xf32>
    %850 = arith.mulf %5, %837 : vector<32x128xf32>
    %851 = arith.mulf %8, %825 : vector<32x128xf32>
    %852 = arith.addf %850, %851 : vector<32x128xf32>
    %853 = arith.mulf %822, %852 : vector<32x128xf32>
    %854 = arith.addf %848, %853 : vector<32x128xf32>
    %855 = arith.mulf %11, %837 : vector<32x128xf32>
    %856 = arith.mulf %14, %825 : vector<32x128xf32>
    %857 = arith.addf %855, %856 : vector<32x128xf32>
    %858 = arith.mulf %849, %857 : vector<32x128xf32>
    %859 = arith.addf %854, %858 : vector<32x128xf32>
    %860 = arith.addf %819, %859 : vector<32x128xf32>
    %cst_264 = arith.constant 1.66666665E-4 : f32
    %861 = vector.broadcast %cst_264 : f32 to vector<32x128xf32>
    %862 = arith.mulf %861, %860 : vector<32x128xf32>
    %863 = arith.addf %693, %862 : vector<32x128xf32>
    %c4 = arith.constant 4 : index
    %c0_265 = arith.constant 0 : index
    %c0_266 = arith.constant 0 : index
    %864 = vector.load %arg4[%c4, %c0_265, %c0_266] : memref<8x32x128xf32, #tpu.memory_space<vmem>>, vector<1x32x128xf32>
    %865 = vector.shape_cast %864 : vector<1x32x128xf32> to vector<32x128xf32>
    %866 = vector.shape_cast %863 : vector<32x128xf32> to vector<1x32x128xf32>
    tpu.vector_store %arg4[%c4, %c0_265, %c0_266], %866 {strides = array<i32>} : memref<8x32x128xf32, #tpu.memory_space<vmem>>, vector<1x32x128xf32>,
    %867 = arith.truncf %863 : vector<32x128xf32> to vector<32x128xbf16>
    %cst_267 = arith.constant dense<0.000000e+00> : vector<32x256xf32>
    %868 = tpu.matmul %867, %15, %cst_267 {dimension_numbers = #tpu.dot_dimension_numbers<[1], [0], [0], [1], [0, 0, 1, 1], [], []>} : vector<32x128xbf16>, vector<128x256xbf16>, vector<32x256xf32> -> vector<32x256xf32>
    %869 = vector.extract_strided_slice %868 {offsets = [0, 0], sizes = [32, 128], strides = [1, 1]} : vector<32x256xf32> to vector<32x128xf32>
    %870 = vector.extract_strided_slice %868 {offsets = [0, 128], sizes = [32, 128], strides = [1, 1]} : vector<32x256xf32> to vector<32x128xf32>
    %c1_i32_268 = arith.constant 1 : i32
    %871 = tpu.dynamic_rotate %863 by %c1_i32_268 dim 0 : vector<32x128xf32>, i32 -> vector<32x128xf32>
    %c2_i32_269 = arith.constant 2 : i32
    %872 = tpu.dynamic_rotate %863 by %c2_i32_269 dim 0 : vector<32x128xf32>, i32 -> vector<32x128xf32>
    %c31_i32_270 = arith.constant 31 : i32
    %873 = tpu.dynamic_rotate %863 by %c31_i32_270 dim 0 : vector<32x128xf32>, i32 -> vector<32x128xf32>
    %c30_i32_271 = arith.constant 30 : i32
    %874 = tpu.dynamic_rotate %863 by %c30_i32_271 dim 0 : vector<32x128xf32>, i32 -> vector<32x128xf32>
    %875 = arith.subf %872, %874 : vector<32x128xf32>
    %cst_272 = arith.constant 8.33333301 : f32
    %876 = vector.broadcast %cst_272 : f32 to vector<32x128xf32>
    %877 = arith.mulf %876, %875 : vector<32x128xf32>
    %878 = arith.subf %873, %871 : vector<32x128xf32>
    %cst_273 = arith.constant 66.6666641 : f32
    %879 = vector.broadcast %cst_273 : f32 to vector<32x128xf32>
    %880 = arith.mulf %879, %878 : vector<32x128xf32>
    %881 = arith.addf %877, %880 : vector<32x128xf32>
    %882 = arith.addf %872, %874 : vector<32x128xf32>
    %cst_274 = arith.constant -7.81999445 : f32
    %883 = vector.broadcast %cst_274 : f32 to vector<32x128xf32>
    %884 = arith.mulf %883, %882 : vector<32x128xf32>
    %885 = arith.addf %871, %873 : vector<32x128xf32>
    %cst_275 = arith.constant 125.119911 : f32
    %886 = vector.broadcast %cst_275 : f32 to vector<32x128xf32>
    %887 = arith.mulf %886, %885 : vector<32x128xf32>
    %888 = arith.addf %884, %887 : vector<32x128xf32>
    %cst_276 = arith.constant -234.599838 : f32
    %889 = vector.broadcast %cst_276 : f32 to vector<32x128xf32>
    %890 = arith.mulf %889, %863 : vector<32x128xf32>
    %891 = arith.addf %888, %890 : vector<32x128xf32>
    %892 = arith.addf %870, %891 : vector<32x128xf32>
    %c64_i32_277 = arith.constant 64 : i32
    %893 = tpu.dynamic_rotate %863 by %c64_i32_277 dim 1 : vector<32x128xf32>, i32 -> vector<32x128xf32>
    %894 = arith.mulf %5, %881 : vector<32x128xf32>
    %895 = arith.mulf %8, %869 : vector<32x128xf32>
    %896 = arith.addf %894, %895 : vector<32x128xf32>
    %897 = arith.mulf %863, %896 : vector<32x128xf32>
    %898 = arith.addf %892, %897 : vector<32x128xf32>
    %899 = arith.mulf %11, %881 : vector<32x128xf32>
    %900 = arith.mulf %14, %869 : vector<32x128xf32>
    %901 = arith.addf %899, %900 : vector<32x128xf32>
    %902 = arith.mulf %893, %901 : vector<32x128xf32>
    %903 = arith.addf %898, %902 : vector<32x128xf32>
    %cst_278 = arith.constant 5.000000e-04 : f32
    %904 = vector.broadcast %cst_278 : f32 to vector<32x128xf32>
    %905 = arith.mulf %904, %903 : vector<32x128xf32>
    %906 = arith.addf %863, %905 : vector<32x128xf32>
    %907 = arith.truncf %906 : vector<32x128xf32> to vector<32x128xbf16>
    %cst_279 = arith.constant dense<0.000000e+00> : vector<32x256xf32>
    %908 = tpu.matmul %907, %15, %cst_279 {dimension_numbers = #tpu.dot_dimension_numbers<[1], [0], [0], [1], [0, 0, 1, 1], [], []>} : vector<32x128xbf16>, vector<128x256xbf16>, vector<32x256xf32> -> vector<32x256xf32>
    %909 = vector.extract_strided_slice %908 {offsets = [0, 0], sizes = [32, 128], strides = [1, 1]} : vector<32x256xf32> to vector<32x128xf32>
    %910 = vector.extract_strided_slice %908 {offsets = [0, 128], sizes = [32, 128], strides = [1, 1]} : vector<32x256xf32> to vector<32x128xf32>
    %c1_i32_280 = arith.constant 1 : i32
    %911 = tpu.dynamic_rotate %906 by %c1_i32_280 dim 0 : vector<32x128xf32>, i32 -> vector<32x128xf32>
    %c2_i32_281 = arith.constant 2 : i32
    %912 = tpu.dynamic_rotate %906 by %c2_i32_281 dim 0 : vector<32x128xf32>, i32 -> vector<32x128xf32>
    %c31_i32_282 = arith.constant 31 : i32
    %913 = tpu.dynamic_rotate %906 by %c31_i32_282 dim 0 : vector<32x128xf32>, i32 -> vector<32x128xf32>
    %c30_i32_283 = arith.constant 30 : i32
    %914 = tpu.dynamic_rotate %906 by %c30_i32_283 dim 0 : vector<32x128xf32>, i32 -> vector<32x128xf32>
    %915 = arith.subf %912, %914 : vector<32x128xf32>
    %cst_284 = arith.constant 8.33333301 : f32
    %916 = vector.broadcast %cst_284 : f32 to vector<32x128xf32>
    %917 = arith.mulf %916, %915 : vector<32x128xf32>
    %918 = arith.subf %913, %911 : vector<32x128xf32>
    %cst_285 = arith.constant 66.6666641 : f32
    %919 = vector.broadcast %cst_285 : f32 to vector<32x128xf32>
    %920 = arith.mulf %919, %918 : vector<32x128xf32>
    %921 = arith.addf %917, %920 : vector<32x128xf32>
    %922 = arith.addf %912, %914 : vector<32x128xf32>
    %cst_286 = arith.constant -7.81999445 : f32
    %923 = vector.broadcast %cst_286 : f32 to vector<32x128xf32>
    %924 = arith.mulf %923, %922 : vector<32x128xf32>
    %925 = arith.addf %911, %913 : vector<32x128xf32>
    %cst_287 = arith.constant 125.119911 : f32
    %926 = vector.broadcast %cst_287 : f32 to vector<32x128xf32>
    %927 = arith.mulf %926, %925 : vector<32x128xf32>
    %928 = arith.addf %924, %927 : vector<32x128xf32>
    %cst_288 = arith.constant -234.599838 : f32
    %929 = vector.broadcast %cst_288 : f32 to vector<32x128xf32>
    %930 = arith.mulf %929, %906 : vector<32x128xf32>
    %931 = arith.addf %928, %930 : vector<32x128xf32>
    %932 = arith.addf %910, %931 : vector<32x128xf32>
    %c64_i32_289 = arith.constant 64 : i32
    %933 = tpu.dynamic_rotate %906 by %c64_i32_289 dim 1 : vector<32x128xf32>, i32 -> vector<32x128xf32>
    %934 = arith.mulf %5, %921 : vector<32x128xf32>
    %935 = arith.mulf %8, %909 : vector<32x128xf32>
    %936 = arith.addf %934, %935 : vector<32x128xf32>
    %937 = arith.mulf %906, %936 : vector<32x128xf32>
    %938 = arith.addf %932, %937 : vector<32x128xf32>
    %939 = arith.mulf %11, %921 : vector<32x128xf32>
    %940 = arith.mulf %14, %909 : vector<32x128xf32>
    %941 = arith.addf %939, %940 : vector<32x128xf32>
    %942 = arith.mulf %933, %941 : vector<32x128xf32>
    %943 = arith.addf %938, %942 : vector<32x128xf32>
    %cst_290 = arith.constant 2.000000e+00 : f32
    %944 = vector.broadcast %cst_290 : f32 to vector<32x128xf32>
    %945 = arith.mulf %944, %943 : vector<32x128xf32>
    %946 = arith.addf %903, %945 : vector<32x128xf32>
    %cst_291 = arith.constant 5.000000e-04 : f32
    %947 = vector.broadcast %cst_291 : f32 to vector<32x128xf32>
    %948 = arith.mulf %947, %943 : vector<32x128xf32>
    %949 = arith.addf %863, %948 : vector<32x128xf32>
    %950 = arith.truncf %949 : vector<32x128xf32> to vector<32x128xbf16>
    %cst_292 = arith.constant dense<0.000000e+00> : vector<32x256xf32>
    %951 = tpu.matmul %950, %15, %cst_292 {dimension_numbers = #tpu.dot_dimension_numbers<[1], [0], [0], [1], [0, 0, 1, 1], [], []>} : vector<32x128xbf16>, vector<128x256xbf16>, vector<32x256xf32> -> vector<32x256xf32>
    %952 = vector.extract_strided_slice %951 {offsets = [0, 0], sizes = [32, 128], strides = [1, 1]} : vector<32x256xf32> to vector<32x128xf32>
    %953 = vector.extract_strided_slice %951 {offsets = [0, 128], sizes = [32, 128], strides = [1, 1]} : vector<32x256xf32> to vector<32x128xf32>
    %c1_i32_293 = arith.constant 1 : i32
    %954 = tpu.dynamic_rotate %949 by %c1_i32_293 dim 0 : vector<32x128xf32>, i32 -> vector<32x128xf32>
    %c2_i32_294 = arith.constant 2 : i32
    %955 = tpu.dynamic_rotate %949 by %c2_i32_294 dim 0 : vector<32x128xf32>, i32 -> vector<32x128xf32>
    %c31_i32_295 = arith.constant 31 : i32
    %956 = tpu.dynamic_rotate %949 by %c31_i32_295 dim 0 : vector<32x128xf32>, i32 -> vector<32x128xf32>
    %c30_i32_296 = arith.constant 30 : i32
    %957 = tpu.dynamic_rotate %949 by %c30_i32_296 dim 0 : vector<32x128xf32>, i32 -> vector<32x128xf32>
    %958 = arith.subf %955, %957 : vector<32x128xf32>
    %cst_297 = arith.constant 8.33333301 : f32
    %959 = vector.broadcast %cst_297 : f32 to vector<32x128xf32>
    %960 = arith.mulf %959, %958 : vector<32x128xf32>
    %961 = arith.subf %956, %954 : vector<32x128xf32>
    %cst_298 = arith.constant 66.6666641 : f32
    %962 = vector.broadcast %cst_298 : f32 to vector<32x128xf32>
    %963 = arith.mulf %962, %961 : vector<32x128xf32>
    %964 = arith.addf %960, %963 : vector<32x128xf32>
    %965 = arith.addf %955, %957 : vector<32x128xf32>
    %cst_299 = arith.constant -7.81999445 : f32
    %966 = vector.broadcast %cst_299 : f32 to vector<32x128xf32>
    %967 = arith.mulf %966, %965 : vector<32x128xf32>
    %968 = arith.addf %954, %956 : vector<32x128xf32>
    %cst_300 = arith.constant 125.119911 : f32
    %969 = vector.broadcast %cst_300 : f32 to vector<32x128xf32>
    %970 = arith.mulf %969, %968 : vector<32x128xf32>
    %971 = arith.addf %967, %970 : vector<32x128xf32>
    %cst_301 = arith.constant -234.599838 : f32
    %972 = vector.broadcast %cst_301 : f32 to vector<32x128xf32>
    %973 = arith.mulf %972, %949 : vector<32x128xf32>
    %974 = arith.addf %971, %973 : vector<32x128xf32>
    %975 = arith.addf %953, %974 : vector<32x128xf32>
    %c64_i32_302 = arith.constant 64 : i32
    %976 = tpu.dynamic_rotate %949 by %c64_i32_302 dim 1 : vector<32x128xf32>, i32 -> vector<32x128xf32>
    %977 = arith.mulf %5, %964 : vector<32x128xf32>
    %978 = arith.mulf %8, %952 : vector<32x128xf32>
    %979 = arith.addf %977, %978 : vector<32x128xf32>
    %980 = arith.mulf %949, %979 : vector<32x128xf32>
    %981 = arith.addf %975, %980 : vector<32x128xf32>
    %982 = arith.mulf %11, %964 : vector<32x128xf32>
    %983 = arith.mulf %14, %952 : vector<32x128xf32>
    %984 = arith.addf %982, %983 : vector<32x128xf32>
    %985 = arith.mulf %976, %984 : vector<32x128xf32>
    %986 = arith.addf %981, %985 : vector<32x128xf32>
    %cst_303 = arith.constant 2.000000e+00 : f32
    %987 = vector.broadcast %cst_303 : f32 to vector<32x128xf32>
    %988 = arith.mulf %987, %986 : vector<32x128xf32>
    %989 = arith.addf %946, %988 : vector<32x128xf32>
    %cst_304 = arith.constant 1.000000e-03 : f32
    %990 = vector.broadcast %cst_304 : f32 to vector<32x128xf32>
    %991 = arith.mulf %990, %986 : vector<32x128xf32>
    %992 = arith.addf %863, %991 : vector<32x128xf32>
    %993 = arith.truncf %992 : vector<32x128xf32> to vector<32x128xbf16>
    %cst_305 = arith.constant dense<0.000000e+00> : vector<32x256xf32>
    %994 = tpu.matmul %993, %15, %cst_305 {dimension_numbers = #tpu.dot_dimension_numbers<[1], [0], [0], [1], [0, 0, 1, 1], [], []>} : vector<32x128xbf16>, vector<128x256xbf16>, vector<32x256xf32> -> vector<32x256xf32>
    %995 = vector.extract_strided_slice %994 {offsets = [0, 0], sizes = [32, 128], strides = [1, 1]} : vector<32x256xf32> to vector<32x128xf32>
    %996 = vector.extract_strided_slice %994 {offsets = [0, 128], sizes = [32, 128], strides = [1, 1]} : vector<32x256xf32> to vector<32x128xf32>
    %c1_i32_306 = arith.constant 1 : i32
    %997 = tpu.dynamic_rotate %992 by %c1_i32_306 dim 0 : vector<32x128xf32>, i32 -> vector<32x128xf32>
    %c2_i32_307 = arith.constant 2 : i32
    %998 = tpu.dynamic_rotate %992 by %c2_i32_307 dim 0 : vector<32x128xf32>, i32 -> vector<32x128xf32>
    %c31_i32_308 = arith.constant 31 : i32
    %999 = tpu.dynamic_rotate %992 by %c31_i32_308 dim 0 : vector<32x128xf32>, i32 -> vector<32x128xf32>
    %c30_i32_309 = arith.constant 30 : i32
    %1000 = tpu.dynamic_rotate %992 by %c30_i32_309 dim 0 : vector<32x128xf32>, i32 -> vector<32x128xf32>
    %1001 = arith.subf %998, %1000 : vector<32x128xf32>
    %cst_310 = arith.constant 8.33333301 : f32
    %1002 = vector.broadcast %cst_310 : f32 to vector<32x128xf32>
    %1003 = arith.mulf %1002, %1001 : vector<32x128xf32>
    %1004 = arith.subf %999, %997 : vector<32x128xf32>
    %cst_311 = arith.constant 66.6666641 : f32
    %1005 = vector.broadcast %cst_311 : f32 to vector<32x128xf32>
    %1006 = arith.mulf %1005, %1004 : vector<32x128xf32>
    %1007 = arith.addf %1003, %1006 : vector<32x128xf32>
    %1008 = arith.addf %998, %1000 : vector<32x128xf32>
    %cst_312 = arith.constant -7.81999445 : f32
    %1009 = vector.broadcast %cst_312 : f32 to vector<32x128xf32>
    %1010 = arith.mulf %1009, %1008 : vector<32x128xf32>
    %1011 = arith.addf %997, %999 : vector<32x128xf32>
    %cst_313 = arith.constant 125.119911 : f32
    %1012 = vector.broadcast %cst_313 : f32 to vector<32x128xf32>
    %1013 = arith.mulf %1012, %1011 : vector<32x128xf32>
    %1014 = arith.addf %1010, %1013 : vector<32x128xf32>
    %cst_314 = arith.constant -234.599838 : f32
    %1015 = vector.broadcast %cst_314 : f32 to vector<32x128xf32>
    %1016 = arith.mulf %1015, %992 : vector<32x128xf32>
    %1017 = arith.addf %1014, %1016 : vector<32x128xf32>
    %1018 = arith.addf %996, %1017 : vector<32x128xf32>
    %c64_i32_315 = arith.constant 64 : i32
    %1019 = tpu.dynamic_rotate %992 by %c64_i32_315 dim 1 : vector<32x128xf32>, i32 -> vector<32x128xf32>
    %1020 = arith.mulf %5, %1007 : vector<32x128xf32>
    %1021 = arith.mulf %8, %995 : vector<32x128xf32>
    %1022 = arith.addf %1020, %1021 : vector<32x128xf32>
    %1023 = arith.mulf %992, %1022 : vector<32x128xf32>
    %1024 = arith.addf %1018, %1023 : vector<32x128xf32>
    %1025 = arith.mulf %11, %1007 : vector<32x128xf32>
    %1026 = arith.mulf %14, %995 : vector<32x128xf32>
    %1027 = arith.addf %1025, %1026 : vector<32x128xf32>
    %1028 = arith.mulf %1019, %1027 : vector<32x128xf32>
    %1029 = arith.addf %1024, %1028 : vector<32x128xf32>
    %1030 = arith.addf %989, %1029 : vector<32x128xf32>
    %cst_316 = arith.constant 1.66666665E-4 : f32
    %1031 = vector.broadcast %cst_316 : f32 to vector<32x128xf32>
    %1032 = arith.mulf %1031, %1030 : vector<32x128xf32>
    %1033 = arith.addf %863, %1032 : vector<32x128xf32>
    %c5 = arith.constant 5 : index
    %c0_317 = arith.constant 0 : index
    %c0_318 = arith.constant 0 : index
    %1034 = vector.load %arg4[%c5, %c0_317, %c0_318] : memref<8x32x128xf32, #tpu.memory_space<vmem>>, vector<1x32x128xf32>
    %1035 = vector.shape_cast %1034 : vector<1x32x128xf32> to vector<32x128xf32>
    %1036 = vector.shape_cast %1033 : vector<32x128xf32> to vector<1x32x128xf32>
    tpu.vector_store %arg4[%c5, %c0_317, %c0_318], %1036 {strides = array<i32>} : memref<8x32x128xf32, #tpu.memory_space<vmem>>, vector<1x32x128xf32>,
    %1037 = arith.truncf %1033 : vector<32x128xf32> to vector<32x128xbf16>
    %cst_319 = arith.constant dense<0.000000e+00> : vector<32x256xf32>
    %1038 = tpu.matmul %1037, %15, %cst_319 {dimension_numbers = #tpu.dot_dimension_numbers<[1], [0], [0], [1], [0, 0, 1, 1], [], []>} : vector<32x128xbf16>, vector<128x256xbf16>, vector<32x256xf32> -> vector<32x256xf32>
    %1039 = vector.extract_strided_slice %1038 {offsets = [0, 0], sizes = [32, 128], strides = [1, 1]} : vector<32x256xf32> to vector<32x128xf32>
    %1040 = vector.extract_strided_slice %1038 {offsets = [0, 128], sizes = [32, 128], strides = [1, 1]} : vector<32x256xf32> to vector<32x128xf32>
    %c1_i32_320 = arith.constant 1 : i32
    %1041 = tpu.dynamic_rotate %1033 by %c1_i32_320 dim 0 : vector<32x128xf32>, i32 -> vector<32x128xf32>
    %c2_i32_321 = arith.constant 2 : i32
    %1042 = tpu.dynamic_rotate %1033 by %c2_i32_321 dim 0 : vector<32x128xf32>, i32 -> vector<32x128xf32>
    %c31_i32_322 = arith.constant 31 : i32
    %1043 = tpu.dynamic_rotate %1033 by %c31_i32_322 dim 0 : vector<32x128xf32>, i32 -> vector<32x128xf32>
    %c30_i32_323 = arith.constant 30 : i32
    %1044 = tpu.dynamic_rotate %1033 by %c30_i32_323 dim 0 : vector<32x128xf32>, i32 -> vector<32x128xf32>
    %1045 = arith.subf %1042, %1044 : vector<32x128xf32>
    %cst_324 = arith.constant 8.33333301 : f32
    %1046 = vector.broadcast %cst_324 : f32 to vector<32x128xf32>
    %1047 = arith.mulf %1046, %1045 : vector<32x128xf32>
    %1048 = arith.subf %1043, %1041 : vector<32x128xf32>
    %cst_325 = arith.constant 66.6666641 : f32
    %1049 = vector.broadcast %cst_325 : f32 to vector<32x128xf32>
    %1050 = arith.mulf %1049, %1048 : vector<32x128xf32>
    %1051 = arith.addf %1047, %1050 : vector<32x128xf32>
    %1052 = arith.addf %1042, %1044 : vector<32x128xf32>
    %cst_326 = arith.constant -7.81999445 : f32
    %1053 = vector.broadcast %cst_326 : f32 to vector<32x128xf32>
    %1054 = arith.mulf %1053, %1052 : vector<32x128xf32>
    %1055 = arith.addf %1041, %1043 : vector<32x128xf32>
    %cst_327 = arith.constant 125.119911 : f32
    %1056 = vector.broadcast %cst_327 : f32 to vector<32x128xf32>
    %1057 = arith.mulf %1056, %1055 : vector<32x128xf32>
    %1058 = arith.addf %1054, %1057 : vector<32x128xf32>
    %cst_328 = arith.constant -234.599838 : f32
    %1059 = vector.broadcast %cst_328 : f32 to vector<32x128xf32>
    %1060 = arith.mulf %1059, %1033 : vector<32x128xf32>
    %1061 = arith.addf %1058, %1060 : vector<32x128xf32>
    %1062 = arith.addf %1040, %1061 : vector<32x128xf32>
    %c64_i32_329 = arith.constant 64 : i32
    %1063 = tpu.dynamic_rotate %1033 by %c64_i32_329 dim 1 : vector<32x128xf32>, i32 -> vector<32x128xf32>
    %1064 = arith.mulf %5, %1051 : vector<32x128xf32>
    %1065 = arith.mulf %8, %1039 : vector<32x128xf32>
    %1066 = arith.addf %1064, %1065 : vector<32x128xf32>
    %1067 = arith.mulf %1033, %1066 : vector<32x128xf32>
    %1068 = arith.addf %1062, %1067 : vector<32x128xf32>
    %1069 = arith.mulf %11, %1051 : vector<32x128xf32>
    %1070 = arith.mulf %14, %1039 : vector<32x128xf32>
    %1071 = arith.addf %1069, %1070 : vector<32x128xf32>
    %1072 = arith.mulf %1063, %1071 : vector<32x128xf32>
    %1073 = arith.addf %1068, %1072 : vector<32x128xf32>
    %cst_330 = arith.constant 5.000000e-04 : f32
    %1074 = vector.broadcast %cst_330 : f32 to vector<32x128xf32>
    %1075 = arith.mulf %1074, %1073 : vector<32x128xf32>
    %1076 = arith.addf %1033, %1075 : vector<32x128xf32>
    %1077 = arith.truncf %1076 : vector<32x128xf32> to vector<32x128xbf16>
    %cst_331 = arith.constant dense<0.000000e+00> : vector<32x256xf32>
    %1078 = tpu.matmul %1077, %15, %cst_331 {dimension_numbers = #tpu.dot_dimension_numbers<[1], [0], [0], [1], [0, 0, 1, 1], [], []>} : vector<32x128xbf16>, vector<128x256xbf16>, vector<32x256xf32> -> vector<32x256xf32>
    %1079 = vector.extract_strided_slice %1078 {offsets = [0, 0], sizes = [32, 128], strides = [1, 1]} : vector<32x256xf32> to vector<32x128xf32>
    %1080 = vector.extract_strided_slice %1078 {offsets = [0, 128], sizes = [32, 128], strides = [1, 1]} : vector<32x256xf32> to vector<32x128xf32>
    %c1_i32_332 = arith.constant 1 : i32
    %1081 = tpu.dynamic_rotate %1076 by %c1_i32_332 dim 0 : vector<32x128xf32>, i32 -> vector<32x128xf32>
    %c2_i32_333 = arith.constant 2 : i32
    %1082 = tpu.dynamic_rotate %1076 by %c2_i32_333 dim 0 : vector<32x128xf32>, i32 -> vector<32x128xf32>
    %c31_i32_334 = arith.constant 31 : i32
    %1083 = tpu.dynamic_rotate %1076 by %c31_i32_334 dim 0 : vector<32x128xf32>, i32 -> vector<32x128xf32>
    %c30_i32_335 = arith.constant 30 : i32
    %1084 = tpu.dynamic_rotate %1076 by %c30_i32_335 dim 0 : vector<32x128xf32>, i32 -> vector<32x128xf32>
    %1085 = arith.subf %1082, %1084 : vector<32x128xf32>
    %cst_336 = arith.constant 8.33333301 : f32
    %1086 = vector.broadcast %cst_336 : f32 to vector<32x128xf32>
    %1087 = arith.mulf %1086, %1085 : vector<32x128xf32>
    %1088 = arith.subf %1083, %1081 : vector<32x128xf32>
    %cst_337 = arith.constant 66.6666641 : f32
    %1089 = vector.broadcast %cst_337 : f32 to vector<32x128xf32>
    %1090 = arith.mulf %1089, %1088 : vector<32x128xf32>
    %1091 = arith.addf %1087, %1090 : vector<32x128xf32>
    %1092 = arith.addf %1082, %1084 : vector<32x128xf32>
    %cst_338 = arith.constant -7.81999445 : f32
    %1093 = vector.broadcast %cst_338 : f32 to vector<32x128xf32>
    %1094 = arith.mulf %1093, %1092 : vector<32x128xf32>
    %1095 = arith.addf %1081, %1083 : vector<32x128xf32>
    %cst_339 = arith.constant 125.119911 : f32
    %1096 = vector.broadcast %cst_339 : f32 to vector<32x128xf32>
    %1097 = arith.mulf %1096, %1095 : vector<32x128xf32>
    %1098 = arith.addf %1094, %1097 : vector<32x128xf32>
    %cst_340 = arith.constant -234.599838 : f32
    %1099 = vector.broadcast %cst_340 : f32 to vector<32x128xf32>
    %1100 = arith.mulf %1099, %1076 : vector<32x128xf32>
    %1101 = arith.addf %1098, %1100 : vector<32x128xf32>
    %1102 = arith.addf %1080, %1101 : vector<32x128xf32>
    %c64_i32_341 = arith.constant 64 : i32
    %1103 = tpu.dynamic_rotate %1076 by %c64_i32_341 dim 1 : vector<32x128xf32>, i32 -> vector<32x128xf32>
    %1104 = arith.mulf %5, %1091 : vector<32x128xf32>
    %1105 = arith.mulf %8, %1079 : vector<32x128xf32>
    %1106 = arith.addf %1104, %1105 : vector<32x128xf32>
    %1107 = arith.mulf %1076, %1106 : vector<32x128xf32>
    %1108 = arith.addf %1102, %1107 : vector<32x128xf32>
    %1109 = arith.mulf %11, %1091 : vector<32x128xf32>
    %1110 = arith.mulf %14, %1079 : vector<32x128xf32>
    %1111 = arith.addf %1109, %1110 : vector<32x128xf32>
    %1112 = arith.mulf %1103, %1111 : vector<32x128xf32>
    %1113 = arith.addf %1108, %1112 : vector<32x128xf32>
    %cst_342 = arith.constant 2.000000e+00 : f32
    %1114 = vector.broadcast %cst_342 : f32 to vector<32x128xf32>
    %1115 = arith.mulf %1114, %1113 : vector<32x128xf32>
    %1116 = arith.addf %1073, %1115 : vector<32x128xf32>
    %cst_343 = arith.constant 5.000000e-04 : f32
    %1117 = vector.broadcast %cst_343 : f32 to vector<32x128xf32>
    %1118 = arith.mulf %1117, %1113 : vector<32x128xf32>
    %1119 = arith.addf %1033, %1118 : vector<32x128xf32>
    %1120 = arith.truncf %1119 : vector<32x128xf32> to vector<32x128xbf16>
    %cst_344 = arith.constant dense<0.000000e+00> : vector<32x256xf32>
    %1121 = tpu.matmul %1120, %15, %cst_344 {dimension_numbers = #tpu.dot_dimension_numbers<[1], [0], [0], [1], [0, 0, 1, 1], [], []>} : vector<32x128xbf16>, vector<128x256xbf16>, vector<32x256xf32> -> vector<32x256xf32>
    %1122 = vector.extract_strided_slice %1121 {offsets = [0, 0], sizes = [32, 128], strides = [1, 1]} : vector<32x256xf32> to vector<32x128xf32>
    %1123 = vector.extract_strided_slice %1121 {offsets = [0, 128], sizes = [32, 128], strides = [1, 1]} : vector<32x256xf32> to vector<32x128xf32>
    %c1_i32_345 = arith.constant 1 : i32
    %1124 = tpu.dynamic_rotate %1119 by %c1_i32_345 dim 0 : vector<32x128xf32>, i32 -> vector<32x128xf32>
    %c2_i32_346 = arith.constant 2 : i32
    %1125 = tpu.dynamic_rotate %1119 by %c2_i32_346 dim 0 : vector<32x128xf32>, i32 -> vector<32x128xf32>
    %c31_i32_347 = arith.constant 31 : i32
    %1126 = tpu.dynamic_rotate %1119 by %c31_i32_347 dim 0 : vector<32x128xf32>, i32 -> vector<32x128xf32>
    %c30_i32_348 = arith.constant 30 : i32
    %1127 = tpu.dynamic_rotate %1119 by %c30_i32_348 dim 0 : vector<32x128xf32>, i32 -> vector<32x128xf32>
    %1128 = arith.subf %1125, %1127 : vector<32x128xf32>
    %cst_349 = arith.constant 8.33333301 : f32
    %1129 = vector.broadcast %cst_349 : f32 to vector<32x128xf32>
    %1130 = arith.mulf %1129, %1128 : vector<32x128xf32>
    %1131 = arith.subf %1126, %1124 : vector<32x128xf32>
    %cst_350 = arith.constant 66.6666641 : f32
    %1132 = vector.broadcast %cst_350 : f32 to vector<32x128xf32>
    %1133 = arith.mulf %1132, %1131 : vector<32x128xf32>
    %1134 = arith.addf %1130, %1133 : vector<32x128xf32>
    %1135 = arith.addf %1125, %1127 : vector<32x128xf32>
    %cst_351 = arith.constant -7.81999445 : f32
    %1136 = vector.broadcast %cst_351 : f32 to vector<32x128xf32>
    %1137 = arith.mulf %1136, %1135 : vector<32x128xf32>
    %1138 = arith.addf %1124, %1126 : vector<32x128xf32>
    %cst_352 = arith.constant 125.119911 : f32
    %1139 = vector.broadcast %cst_352 : f32 to vector<32x128xf32>
    %1140 = arith.mulf %1139, %1138 : vector<32x128xf32>
    %1141 = arith.addf %1137, %1140 : vector<32x128xf32>
    %cst_353 = arith.constant -234.599838 : f32
    %1142 = vector.broadcast %cst_353 : f32 to vector<32x128xf32>
    %1143 = arith.mulf %1142, %1119 : vector<32x128xf32>
    %1144 = arith.addf %1141, %1143 : vector<32x128xf32>
    %1145 = arith.addf %1123, %1144 : vector<32x128xf32>
    %c64_i32_354 = arith.constant 64 : i32
    %1146 = tpu.dynamic_rotate %1119 by %c64_i32_354 dim 1 : vector<32x128xf32>, i32 -> vector<32x128xf32>
    %1147 = arith.mulf %5, %1134 : vector<32x128xf32>
    %1148 = arith.mulf %8, %1122 : vector<32x128xf32>
    %1149 = arith.addf %1147, %1148 : vector<32x128xf32>
    %1150 = arith.mulf %1119, %1149 : vector<32x128xf32>
    %1151 = arith.addf %1145, %1150 : vector<32x128xf32>
    %1152 = arith.mulf %11, %1134 : vector<32x128xf32>
    %1153 = arith.mulf %14, %1122 : vector<32x128xf32>
    %1154 = arith.addf %1152, %1153 : vector<32x128xf32>
    %1155 = arith.mulf %1146, %1154 : vector<32x128xf32>
    %1156 = arith.addf %1151, %1155 : vector<32x128xf32>
    %cst_355 = arith.constant 2.000000e+00 : f32
    %1157 = vector.broadcast %cst_355 : f32 to vector<32x128xf32>
    %1158 = arith.mulf %1157, %1156 : vector<32x128xf32>
    %1159 = arith.addf %1116, %1158 : vector<32x128xf32>
    %cst_356 = arith.constant 1.000000e-03 : f32
    %1160 = vector.broadcast %cst_356 : f32 to vector<32x128xf32>
    %1161 = arith.mulf %1160, %1156 : vector<32x128xf32>
    %1162 = arith.addf %1033, %1161 : vector<32x128xf32>
    %1163 = arith.truncf %1162 : vector<32x128xf32> to vector<32x128xbf16>
    %cst_357 = arith.constant dense<0.000000e+00> : vector<32x256xf32>
    %1164 = tpu.matmul %1163, %15, %cst_357 {dimension_numbers = #tpu.dot_dimension_numbers<[1], [0], [0], [1], [0, 0, 1, 1], [], []>} : vector<32x128xbf16>, vector<128x256xbf16>, vector<32x256xf32> -> vector<32x256xf32>
    %1165 = vector.extract_strided_slice %1164 {offsets = [0, 0], sizes = [32, 128], strides = [1, 1]} : vector<32x256xf32> to vector<32x128xf32>
    %1166 = vector.extract_strided_slice %1164 {offsets = [0, 128], sizes = [32, 128], strides = [1, 1]} : vector<32x256xf32> to vector<32x128xf32>
    %c1_i32_358 = arith.constant 1 : i32
    %1167 = tpu.dynamic_rotate %1162 by %c1_i32_358 dim 0 : vector<32x128xf32>, i32 -> vector<32x128xf32>
    %c2_i32_359 = arith.constant 2 : i32
    %1168 = tpu.dynamic_rotate %1162 by %c2_i32_359 dim 0 : vector<32x128xf32>, i32 -> vector<32x128xf32>
    %c31_i32_360 = arith.constant 31 : i32
    %1169 = tpu.dynamic_rotate %1162 by %c31_i32_360 dim 0 : vector<32x128xf32>, i32 -> vector<32x128xf32>
    %c30_i32_361 = arith.constant 30 : i32
    %1170 = tpu.dynamic_rotate %1162 by %c30_i32_361 dim 0 : vector<32x128xf32>, i32 -> vector<32x128xf32>
    %1171 = arith.subf %1168, %1170 : vector<32x128xf32>
    %cst_362 = arith.constant 8.33333301 : f32
    %1172 = vector.broadcast %cst_362 : f32 to vector<32x128xf32>
    %1173 = arith.mulf %1172, %1171 : vector<32x128xf32>
    %1174 = arith.subf %1169, %1167 : vector<32x128xf32>
    %cst_363 = arith.constant 66.6666641 : f32
    %1175 = vector.broadcast %cst_363 : f32 to vector<32x128xf32>
    %1176 = arith.mulf %1175, %1174 : vector<32x128xf32>
    %1177 = arith.addf %1173, %1176 : vector<32x128xf32>
    %1178 = arith.addf %1168, %1170 : vector<32x128xf32>
    %cst_364 = arith.constant -7.81999445 : f32
    %1179 = vector.broadcast %cst_364 : f32 to vector<32x128xf32>
    %1180 = arith.mulf %1179, %1178 : vector<32x128xf32>
    %1181 = arith.addf %1167, %1169 : vector<32x128xf32>
    %cst_365 = arith.constant 125.119911 : f32
    %1182 = vector.broadcast %cst_365 : f32 to vector<32x128xf32>
    %1183 = arith.mulf %1182, %1181 : vector<32x128xf32>
    %1184 = arith.addf %1180, %1183 : vector<32x128xf32>
    %cst_366 = arith.constant -234.599838 : f32
    %1185 = vector.broadcast %cst_366 : f32 to vector<32x128xf32>
    %1186 = arith.mulf %1185, %1162 : vector<32x128xf32>
    %1187 = arith.addf %1184, %1186 : vector<32x128xf32>
    %1188 = arith.addf %1166, %1187 : vector<32x128xf32>
    %c64_i32_367 = arith.constant 64 : i32
    %1189 = tpu.dynamic_rotate %1162 by %c64_i32_367 dim 1 : vector<32x128xf32>, i32 -> vector<32x128xf32>
    %1190 = arith.mulf %5, %1177 : vector<32x128xf32>
    %1191 = arith.mulf %8, %1165 : vector<32x128xf32>
    %1192 = arith.addf %1190, %1191 : vector<32x128xf32>
    %1193 = arith.mulf %1162, %1192 : vector<32x128xf32>
    %1194 = arith.addf %1188, %1193 : vector<32x128xf32>
    %1195 = arith.mulf %11, %1177 : vector<32x128xf32>
    %1196 = arith.mulf %14, %1165 : vector<32x128xf32>
    %1197 = arith.addf %1195, %1196 : vector<32x128xf32>
    %1198 = arith.mulf %1189, %1197 : vector<32x128xf32>
    %1199 = arith.addf %1194, %1198 : vector<32x128xf32>
    %1200 = arith.addf %1159, %1199 : vector<32x128xf32>
    %cst_368 = arith.constant 1.66666665E-4 : f32
    %1201 = vector.broadcast %cst_368 : f32 to vector<32x128xf32>
    %1202 = arith.mulf %1201, %1200 : vector<32x128xf32>
    %1203 = arith.addf %1033, %1202 : vector<32x128xf32>
    %c6 = arith.constant 6 : index
    %c0_369 = arith.constant 0 : index
    %c0_370 = arith.constant 0 : index
    %1204 = vector.load %arg4[%c6, %c0_369, %c0_370] : memref<8x32x128xf32, #tpu.memory_space<vmem>>, vector<1x32x128xf32>
    %1205 = vector.shape_cast %1204 : vector<1x32x128xf32> to vector<32x128xf32>
    %1206 = vector.shape_cast %1203 : vector<32x128xf32> to vector<1x32x128xf32>
    tpu.vector_store %arg4[%c6, %c0_369, %c0_370], %1206 {strides = array<i32>} : memref<8x32x128xf32, #tpu.memory_space<vmem>>, vector<1x32x128xf32>,
    %1207 = arith.truncf %1203 : vector<32x128xf32> to vector<32x128xbf16>
    %cst_371 = arith.constant dense<0.000000e+00> : vector<32x256xf32>
    %1208 = tpu.matmul %1207, %15, %cst_371 {dimension_numbers = #tpu.dot_dimension_numbers<[1], [0], [0], [1], [0, 0, 1, 1], [], []>} : vector<32x128xbf16>, vector<128x256xbf16>, vector<32x256xf32> -> vector<32x256xf32>
    %1209 = vector.extract_strided_slice %1208 {offsets = [0, 0], sizes = [32, 128], strides = [1, 1]} : vector<32x256xf32> to vector<32x128xf32>
    %1210 = vector.extract_strided_slice %1208 {offsets = [0, 128], sizes = [32, 128], strides = [1, 1]} : vector<32x256xf32> to vector<32x128xf32>
    %c1_i32_372 = arith.constant 1 : i32
    %1211 = tpu.dynamic_rotate %1203 by %c1_i32_372 dim 0 : vector<32x128xf32>, i32 -> vector<32x128xf32>
    %c2_i32_373 = arith.constant 2 : i32
    %1212 = tpu.dynamic_rotate %1203 by %c2_i32_373 dim 0 : vector<32x128xf32>, i32 -> vector<32x128xf32>
    %c31_i32_374 = arith.constant 31 : i32
    %1213 = tpu.dynamic_rotate %1203 by %c31_i32_374 dim 0 : vector<32x128xf32>, i32 -> vector<32x128xf32>
    %c30_i32_375 = arith.constant 30 : i32
    %1214 = tpu.dynamic_rotate %1203 by %c30_i32_375 dim 0 : vector<32x128xf32>, i32 -> vector<32x128xf32>
    %1215 = arith.subf %1212, %1214 : vector<32x128xf32>
    %cst_376 = arith.constant 8.33333301 : f32
    %1216 = vector.broadcast %cst_376 : f32 to vector<32x128xf32>
    %1217 = arith.mulf %1216, %1215 : vector<32x128xf32>
    %1218 = arith.subf %1213, %1211 : vector<32x128xf32>
    %cst_377 = arith.constant 66.6666641 : f32
    %1219 = vector.broadcast %cst_377 : f32 to vector<32x128xf32>
    %1220 = arith.mulf %1219, %1218 : vector<32x128xf32>
    %1221 = arith.addf %1217, %1220 : vector<32x128xf32>
    %1222 = arith.addf %1212, %1214 : vector<32x128xf32>
    %cst_378 = arith.constant -7.81999445 : f32
    %1223 = vector.broadcast %cst_378 : f32 to vector<32x128xf32>
    %1224 = arith.mulf %1223, %1222 : vector<32x128xf32>
    %1225 = arith.addf %1211, %1213 : vector<32x128xf32>
    %cst_379 = arith.constant 125.119911 : f32
    %1226 = vector.broadcast %cst_379 : f32 to vector<32x128xf32>
    %1227 = arith.mulf %1226, %1225 : vector<32x128xf32>
    %1228 = arith.addf %1224, %1227 : vector<32x128xf32>
    %cst_380 = arith.constant -234.599838 : f32
    %1229 = vector.broadcast %cst_380 : f32 to vector<32x128xf32>
    %1230 = arith.mulf %1229, %1203 : vector<32x128xf32>
    %1231 = arith.addf %1228, %1230 : vector<32x128xf32>
    %1232 = arith.addf %1210, %1231 : vector<32x128xf32>
    %c64_i32_381 = arith.constant 64 : i32
    %1233 = tpu.dynamic_rotate %1203 by %c64_i32_381 dim 1 : vector<32x128xf32>, i32 -> vector<32x128xf32>
    %1234 = arith.mulf %5, %1221 : vector<32x128xf32>
    %1235 = arith.mulf %8, %1209 : vector<32x128xf32>
    %1236 = arith.addf %1234, %1235 : vector<32x128xf32>
    %1237 = arith.mulf %1203, %1236 : vector<32x128xf32>
    %1238 = arith.addf %1232, %1237 : vector<32x128xf32>
    %1239 = arith.mulf %11, %1221 : vector<32x128xf32>
    %1240 = arith.mulf %14, %1209 : vector<32x128xf32>
    %1241 = arith.addf %1239, %1240 : vector<32x128xf32>
    %1242 = arith.mulf %1233, %1241 : vector<32x128xf32>
    %1243 = arith.addf %1238, %1242 : vector<32x128xf32>
    %cst_382 = arith.constant 5.000000e-04 : f32
    %1244 = vector.broadcast %cst_382 : f32 to vector<32x128xf32>
    %1245 = arith.mulf %1244, %1243 : vector<32x128xf32>
    %1246 = arith.addf %1203, %1245 : vector<32x128xf32>
    %1247 = arith.truncf %1246 : vector<32x128xf32> to vector<32x128xbf16>
    %cst_383 = arith.constant dense<0.000000e+00> : vector<32x256xf32>
    %1248 = tpu.matmul %1247, %15, %cst_383 {dimension_numbers = #tpu.dot_dimension_numbers<[1], [0], [0], [1], [0, 0, 1, 1], [], []>} : vector<32x128xbf16>, vector<128x256xbf16>, vector<32x256xf32> -> vector<32x256xf32>
    %1249 = vector.extract_strided_slice %1248 {offsets = [0, 0], sizes = [32, 128], strides = [1, 1]} : vector<32x256xf32> to vector<32x128xf32>
    %1250 = vector.extract_strided_slice %1248 {offsets = [0, 128], sizes = [32, 128], strides = [1, 1]} : vector<32x256xf32> to vector<32x128xf32>
    %c1_i32_384 = arith.constant 1 : i32
    %1251 = tpu.dynamic_rotate %1246 by %c1_i32_384 dim 0 : vector<32x128xf32>, i32 -> vector<32x128xf32>
    %c2_i32_385 = arith.constant 2 : i32
    %1252 = tpu.dynamic_rotate %1246 by %c2_i32_385 dim 0 : vector<32x128xf32>, i32 -> vector<32x128xf32>
    %c31_i32_386 = arith.constant 31 : i32
    %1253 = tpu.dynamic_rotate %1246 by %c31_i32_386 dim 0 : vector<32x128xf32>, i32 -> vector<32x128xf32>
    %c30_i32_387 = arith.constant 30 : i32
    %1254 = tpu.dynamic_rotate %1246 by %c30_i32_387 dim 0 : vector<32x128xf32>, i32 -> vector<32x128xf32>
    %1255 = arith.subf %1252, %1254 : vector<32x128xf32>
    %cst_388 = arith.constant 8.33333301 : f32
    %1256 = vector.broadcast %cst_388 : f32 to vector<32x128xf32>
    %1257 = arith.mulf %1256, %1255 : vector<32x128xf32>
    %1258 = arith.subf %1253, %1251 : vector<32x128xf32>
    %cst_389 = arith.constant 66.6666641 : f32
    %1259 = vector.broadcast %cst_389 : f32 to vector<32x128xf32>
    %1260 = arith.mulf %1259, %1258 : vector<32x128xf32>
    %1261 = arith.addf %1257, %1260 : vector<32x128xf32>
    %1262 = arith.addf %1252, %1254 : vector<32x128xf32>
    %cst_390 = arith.constant -7.81999445 : f32
    %1263 = vector.broadcast %cst_390 : f32 to vector<32x128xf32>
    %1264 = arith.mulf %1263, %1262 : vector<32x128xf32>
    %1265 = arith.addf %1251, %1253 : vector<32x128xf32>
    %cst_391 = arith.constant 125.119911 : f32
    %1266 = vector.broadcast %cst_391 : f32 to vector<32x128xf32>
    %1267 = arith.mulf %1266, %1265 : vector<32x128xf32>
    %1268 = arith.addf %1264, %1267 : vector<32x128xf32>
    %cst_392 = arith.constant -234.599838 : f32
    %1269 = vector.broadcast %cst_392 : f32 to vector<32x128xf32>
    %1270 = arith.mulf %1269, %1246 : vector<32x128xf32>
    %1271 = arith.addf %1268, %1270 : vector<32x128xf32>
    %1272 = arith.addf %1250, %1271 : vector<32x128xf32>
    %c64_i32_393 = arith.constant 64 : i32
    %1273 = tpu.dynamic_rotate %1246 by %c64_i32_393 dim 1 : vector<32x128xf32>, i32 -> vector<32x128xf32>
    %1274 = arith.mulf %5, %1261 : vector<32x128xf32>
    %1275 = arith.mulf %8, %1249 : vector<32x128xf32>
    %1276 = arith.addf %1274, %1275 : vector<32x128xf32>
    %1277 = arith.mulf %1246, %1276 : vector<32x128xf32>
    %1278 = arith.addf %1272, %1277 : vector<32x128xf32>
    %1279 = arith.mulf %11, %1261 : vector<32x128xf32>
    %1280 = arith.mulf %14, %1249 : vector<32x128xf32>
    %1281 = arith.addf %1279, %1280 : vector<32x128xf32>
    %1282 = arith.mulf %1273, %1281 : vector<32x128xf32>
    %1283 = arith.addf %1278, %1282 : vector<32x128xf32>
    %cst_394 = arith.constant 2.000000e+00 : f32
    %1284 = vector.broadcast %cst_394 : f32 to vector<32x128xf32>
    %1285 = arith.mulf %1284, %1283 : vector<32x128xf32>
    %1286 = arith.addf %1243, %1285 : vector<32x128xf32>
    %cst_395 = arith.constant 5.000000e-04 : f32
    %1287 = vector.broadcast %cst_395 : f32 to vector<32x128xf32>
    %1288 = arith.mulf %1287, %1283 : vector<32x128xf32>
    %1289 = arith.addf %1203, %1288 : vector<32x128xf32>
    %1290 = arith.truncf %1289 : vector<32x128xf32> to vector<32x128xbf16>
    %cst_396 = arith.constant dense<0.000000e+00> : vector<32x256xf32>
    %1291 = tpu.matmul %1290, %15, %cst_396 {dimension_numbers = #tpu.dot_dimension_numbers<[1], [0], [0], [1], [0, 0, 1, 1], [], []>} : vector<32x128xbf16>, vector<128x256xbf16>, vector<32x256xf32> -> vector<32x256xf32>
    %1292 = vector.extract_strided_slice %1291 {offsets = [0, 0], sizes = [32, 128], strides = [1, 1]} : vector<32x256xf32> to vector<32x128xf32>
    %1293 = vector.extract_strided_slice %1291 {offsets = [0, 128], sizes = [32, 128], strides = [1, 1]} : vector<32x256xf32> to vector<32x128xf32>
    %c1_i32_397 = arith.constant 1 : i32
    %1294 = tpu.dynamic_rotate %1289 by %c1_i32_397 dim 0 : vector<32x128xf32>, i32 -> vector<32x128xf32>
    %c2_i32_398 = arith.constant 2 : i32
    %1295 = tpu.dynamic_rotate %1289 by %c2_i32_398 dim 0 : vector<32x128xf32>, i32 -> vector<32x128xf32>
    %c31_i32_399 = arith.constant 31 : i32
    %1296 = tpu.dynamic_rotate %1289 by %c31_i32_399 dim 0 : vector<32x128xf32>, i32 -> vector<32x128xf32>
    %c30_i32_400 = arith.constant 30 : i32
    %1297 = tpu.dynamic_rotate %1289 by %c30_i32_400 dim 0 : vector<32x128xf32>, i32 -> vector<32x128xf32>
    %1298 = arith.subf %1295, %1297 : vector<32x128xf32>
    %cst_401 = arith.constant 8.33333301 : f32
    %1299 = vector.broadcast %cst_401 : f32 to vector<32x128xf32>
    %1300 = arith.mulf %1299, %1298 : vector<32x128xf32>
    %1301 = arith.subf %1296, %1294 : vector<32x128xf32>
    %cst_402 = arith.constant 66.6666641 : f32
    %1302 = vector.broadcast %cst_402 : f32 to vector<32x128xf32>
    %1303 = arith.mulf %1302, %1301 : vector<32x128xf32>
    %1304 = arith.addf %1300, %1303 : vector<32x128xf32>
    %1305 = arith.addf %1295, %1297 : vector<32x128xf32>
    %cst_403 = arith.constant -7.81999445 : f32
    %1306 = vector.broadcast %cst_403 : f32 to vector<32x128xf32>
    %1307 = arith.mulf %1306, %1305 : vector<32x128xf32>
    %1308 = arith.addf %1294, %1296 : vector<32x128xf32>
    %cst_404 = arith.constant 125.119911 : f32
    %1309 = vector.broadcast %cst_404 : f32 to vector<32x128xf32>
    %1310 = arith.mulf %1309, %1308 : vector<32x128xf32>
    %1311 = arith.addf %1307, %1310 : vector<32x128xf32>
    %cst_405 = arith.constant -234.599838 : f32
    %1312 = vector.broadcast %cst_405 : f32 to vector<32x128xf32>
    %1313 = arith.mulf %1312, %1289 : vector<32x128xf32>
    %1314 = arith.addf %1311, %1313 : vector<32x128xf32>
    %1315 = arith.addf %1293, %1314 : vector<32x128xf32>
    %c64_i32_406 = arith.constant 64 : i32
    %1316 = tpu.dynamic_rotate %1289 by %c64_i32_406 dim 1 : vector<32x128xf32>, i32 -> vector<32x128xf32>
    %1317 = arith.mulf %5, %1304 : vector<32x128xf32>
    %1318 = arith.mulf %8, %1292 : vector<32x128xf32>
    %1319 = arith.addf %1317, %1318 : vector<32x128xf32>
    %1320 = arith.mulf %1289, %1319 : vector<32x128xf32>
    %1321 = arith.addf %1315, %1320 : vector<32x128xf32>
    %1322 = arith.mulf %11, %1304 : vector<32x128xf32>
    %1323 = arith.mulf %14, %1292 : vector<32x128xf32>
    %1324 = arith.addf %1322, %1323 : vector<32x128xf32>
    %1325 = arith.mulf %1316, %1324 : vector<32x128xf32>
    %1326 = arith.addf %1321, %1325 : vector<32x128xf32>
    %cst_407 = arith.constant 2.000000e+00 : f32
    %1327 = vector.broadcast %cst_407 : f32 to vector<32x128xf32>
    %1328 = arith.mulf %1327, %1326 : vector<32x128xf32>
    %1329 = arith.addf %1286, %1328 : vector<32x128xf32>
    %cst_408 = arith.constant 1.000000e-03 : f32
    %1330 = vector.broadcast %cst_408 : f32 to vector<32x128xf32>
    %1331 = arith.mulf %1330, %1326 : vector<32x128xf32>
    %1332 = arith.addf %1203, %1331 : vector<32x128xf32>
    %1333 = arith.truncf %1332 : vector<32x128xf32> to vector<32x128xbf16>
    %cst_409 = arith.constant dense<0.000000e+00> : vector<32x256xf32>
    %1334 = tpu.matmul %1333, %15, %cst_409 {dimension_numbers = #tpu.dot_dimension_numbers<[1], [0], [0], [1], [0, 0, 1, 1], [], []>} : vector<32x128xbf16>, vector<128x256xbf16>, vector<32x256xf32> -> vector<32x256xf32>
    %1335 = vector.extract_strided_slice %1334 {offsets = [0, 0], sizes = [32, 128], strides = [1, 1]} : vector<32x256xf32> to vector<32x128xf32>
    %1336 = vector.extract_strided_slice %1334 {offsets = [0, 128], sizes = [32, 128], strides = [1, 1]} : vector<32x256xf32> to vector<32x128xf32>
    %c1_i32_410 = arith.constant 1 : i32
    %1337 = tpu.dynamic_rotate %1332 by %c1_i32_410 dim 0 : vector<32x128xf32>, i32 -> vector<32x128xf32>
    %c2_i32_411 = arith.constant 2 : i32
    %1338 = tpu.dynamic_rotate %1332 by %c2_i32_411 dim 0 : vector<32x128xf32>, i32 -> vector<32x128xf32>
    %c31_i32_412 = arith.constant 31 : i32
    %1339 = tpu.dynamic_rotate %1332 by %c31_i32_412 dim 0 : vector<32x128xf32>, i32 -> vector<32x128xf32>
    %c30_i32_413 = arith.constant 30 : i32
    %1340 = tpu.dynamic_rotate %1332 by %c30_i32_413 dim 0 : vector<32x128xf32>, i32 -> vector<32x128xf32>
    %1341 = arith.subf %1338, %1340 : vector<32x128xf32>
    %cst_414 = arith.constant 8.33333301 : f32
    %1342 = vector.broadcast %cst_414 : f32 to vector<32x128xf32>
    %1343 = arith.mulf %1342, %1341 : vector<32x128xf32>
    %1344 = arith.subf %1339, %1337 : vector<32x128xf32>
    %cst_415 = arith.constant 66.6666641 : f32
    %1345 = vector.broadcast %cst_415 : f32 to vector<32x128xf32>
    %1346 = arith.mulf %1345, %1344 : vector<32x128xf32>
    %1347 = arith.addf %1343, %1346 : vector<32x128xf32>
    %1348 = arith.addf %1338, %1340 : vector<32x128xf32>
    %cst_416 = arith.constant -7.81999445 : f32
    %1349 = vector.broadcast %cst_416 : f32 to vector<32x128xf32>
    %1350 = arith.mulf %1349, %1348 : vector<32x128xf32>
    %1351 = arith.addf %1337, %1339 : vector<32x128xf32>
    %cst_417 = arith.constant 125.119911 : f32
    %1352 = vector.broadcast %cst_417 : f32 to vector<32x128xf32>
    %1353 = arith.mulf %1352, %1351 : vector<32x128xf32>
    %1354 = arith.addf %1350, %1353 : vector<32x128xf32>
    %cst_418 = arith.constant -234.599838 : f32
    %1355 = vector.broadcast %cst_418 : f32 to vector<32x128xf32>
    %1356 = arith.mulf %1355, %1332 : vector<32x128xf32>
    %1357 = arith.addf %1354, %1356 : vector<32x128xf32>
    %1358 = arith.addf %1336, %1357 : vector<32x128xf32>
    %c64_i32_419 = arith.constant 64 : i32
    %1359 = tpu.dynamic_rotate %1332 by %c64_i32_419 dim 1 : vector<32x128xf32>, i32 -> vector<32x128xf32>
    %1360 = arith.mulf %5, %1347 : vector<32x128xf32>
    %1361 = arith.mulf %8, %1335 : vector<32x128xf32>
    %1362 = arith.addf %1360, %1361 : vector<32x128xf32>
    %1363 = arith.mulf %1332, %1362 : vector<32x128xf32>
    %1364 = arith.addf %1358, %1363 : vector<32x128xf32>
    %1365 = arith.mulf %11, %1347 : vector<32x128xf32>
    %1366 = arith.mulf %14, %1335 : vector<32x128xf32>
    %1367 = arith.addf %1365, %1366 : vector<32x128xf32>
    %1368 = arith.mulf %1359, %1367 : vector<32x128xf32>
    %1369 = arith.addf %1364, %1368 : vector<32x128xf32>
    %1370 = arith.addf %1329, %1369 : vector<32x128xf32>
    %cst_420 = arith.constant 1.66666665E-4 : f32
    %1371 = vector.broadcast %cst_420 : f32 to vector<32x128xf32>
    %1372 = arith.mulf %1371, %1370 : vector<32x128xf32>
    %1373 = arith.addf %1203, %1372 : vector<32x128xf32>
    %c7 = arith.constant 7 : index
    %c0_421 = arith.constant 0 : index
    %c0_422 = arith.constant 0 : index
    %1374 = vector.load %arg4[%c7, %c0_421, %c0_422] : memref<8x32x128xf32, #tpu.memory_space<vmem>>, vector<1x32x128xf32>
    %1375 = vector.shape_cast %1374 : vector<1x32x128xf32> to vector<32x128xf32>
    %1376 = vector.shape_cast %1373 : vector<32x128xf32> to vector<1x32x128xf32>
    tpu.vector_store %arg4[%c7, %c0_421, %c0_422], %1376 {strides = array<i32>} : memref<8x32x128xf32, #tpu.memory_space<vmem>>, vector<1x32x128xf32>,
    %c0_423 = arith.constant 0 : index
    %c0_424 = arith.constant 0 : index
    %1377 = vector.load %arg5[%c0_423, %c0_424] : memref<32x128xf32, #tpu.memory_space<vmem>>, vector<32x128xf32>
    tpu.vector_store %arg5[%c0_423, %c0_424], %1373 {strides = array<i32>} : memref<32x128xf32, #tpu.memory_space<vmem>>, vector<32x128xf32>,
    return
  }
  func.func @transform_0(%arg0: i32) -> (i32, i32) {
    %c0_i32 = arith.constant 0 : i32
    %c0_i32_0 = arith.constant 0 : i32
    %c0_i32_1 = arith.constant 0 : i32
    return %c0_i32, %c0_i32_0 : i32, i32
  }
  func.func @transform_1(%arg0: i32) -> (i32, i32) {
    %c0_i32 = arith.constant 0 : i32
    %c0_i32_0 = arith.constant 0 : i32
    %c0_i32_1 = arith.constant 0 : i32
    return %c0_i32, %c0_i32_0 : i32, i32
  }
  func.func @transform_2(%arg0: i32) -> (i32, i32) {
    %c0_i32 = arith.constant 0 : i32
    %c0_i32_0 = arith.constant 0 : i32
    %c0_i32_1 = arith.constant 0 : i32
    return %c0_i32, %c0_i32_0 : i32, i32
  }
  func.func @transform_3(%arg0: i32) -> (i32, i32, i32) {
    %c0_i32 = arith.constant 0 : i32
    %c0_i32_0 = arith.constant 0 : i32
    %c0_i32_1 = arith.constant 0 : i32
    return %arg0, %c0_i32, %c0_i32_0 : i32, i32, i32
  }
}

</mosaic_0001>

<llo_original>
// kernel: tpu_custom_call.1
$region0: #{tpu_custom_call.1}
  #allocation0 [shape = 'u32[]', space=smem, size = 0x4, offset = 0x4, fixed_abs, tag = 'smem constant byte address 0x4 - core index']
  #allocation1 [shape = 'u32[144,128]{1,0:T(1,128)}', space=vmem, size = 0x12000, scoped, tag = 'internal scratch']
  #allocation2 [shape = 'f32[32,128]{1,0:T(8,128)}', space=vmem, size = 0x4000, scoped, tag = 'scratch operand']
  %s0 = inlined_call_operand.hbm [shape: f32[4,128], index: 0, kind: input, shape index: {}]
  %s1 = inlined_call_operand.hbm [shape: f32[32,128], index: 1, kind: input, shape index: {}]
  %s2 = inlined_call_operand.hbm [shape: bf16[128,256], index: 2, kind: input, shape index: {}]
  %s3 = inlined_call_operand.hbm [shape: f32[16,32,128], index: 3, kind: output, shape index: {}]
  %s4 = sld [smem:[#allocation0]]
  $region61: #{tpu_custom_call.1} parent=0
    _
  %s6 = ssub.s32 1, %s4
  %s7 = scalar_select 0, %s6, %s4
  $region1: #{tpu_custom_call.1} parent=0
    #allocation3 [shape = 'u8[2048]{0}', space=vmem, size = 0x800, scoped, tag = 'input window, operand 0, single buffered']
    #allocation4 [shape = 's32[2]{0}', space=sflag, size = 0x8, scoped, tag = 'scoped memory for tpu_custom_call.1']
    #allocation5 [shape = 's32[2]{0}', space=sflag, size = 0x8, scoped, tag = 'scoped memory for tpu_custom_call.1']
    #allocation6 [shape = 'u8[16384]{0}', space=vmem, size = 0x4000, scoped, tag = 'input window, operand 1, single buffered']
    #allocation7 [shape = 's32[1]{0}', space=sflag, size = 0x4, scoped, tag = 'scoped memory for tpu_custom_call.1']
    #allocation8 [shape = 'u8[65536]{0}', space=vmem, size = 0x10000, scoped, tag = 'input window, operand 2, single buffered']
    #allocation9 [shape = 'u8[262144]{0}', space=vmem, size = 0x40000, scoped, tag = 'output window, operand 0']
    %8 = vsyncpa [#allocation4], 0
    %9 = vsyncpa [#allocation7], 0
    %10 = vsyncpa [#allocation5], 0
    %s11 = scalar_lea.sflag [#allocation5], 1
    %12 = vsyncpa %s11, 0
    loop: start=0, step=1, limit=4
    $region2: #{tpu_custom_call.1} parent=1 // loop_pre_header
      _
    $region3: #{tpu_custom_call.1} parent=1 // loop_header
      %s14 = sphi 0, %s18
      %p15 = scmp.ge.s32.totalorder %s14, 4
      %s22 = sphi 0, %s22
      %s24 = sphi 0, %s22
      %s25 = sphi 0, %s24
      %s39 = sphi 0, %s25
      %s43 = sphi 0, %s43
      %s45 = sphi 0, %s43
      %s46 = sphi 0, %s45
      %s60 = sphi 0, %s46
      %s64 = sphi 0, %s64
      %s66 = sphi 0, %s64
      %s67 = sphi 0, %s66
      %s81 = sphi 0, %s67
      %s87 = sphi 0, %s89
      %s90 = sphi 0, %s87
      %s91 = sphi 0, %s90
      %s107 = sphi 0, %s91
    $region4: #{tpu_custom_call.1} parent=1 // loop_header_branch
      %17 = sbr.rel (%p15) target = $region8
    $region5: #{tpu_custom_call.1} parent=1 // loop_body
      %s19 = ssub.s32 %s14, 1
      %s20 = ssub.s32 %s14, 2
      %s21 = sadd.s32 %s14, 1
      %s23 = sadd.s32 %s22, 1
      %p26 = scmp.eq.s32.totalorder %s14, 1
      %p27 = scmp.ne.s32.totalorder %s22, %s24
      %p28 = scmp.eq.s32.totalorder %s14, 0
      %p29 = por %p27, %p28
      %p30 = scmp.ne.s32.totalorder %s22, %s24
      %p31 = scmp.eq.s32.totalorder %s19, 1
      %p32 = por %p30, %p31
      %p33 = scmp.ne.s32.totalorder %s24, %s25
      %p34 = scmp.eq.s32.totalorder %s19, 0
      %p35 = por %p33, %p34
      %p36 = scmp.ne.s32.totalorder %s24, %s25
      %p37 = scmp.eq.s32.totalorder %s20, 1
      %p38 = por %p36, %p37
      %p40 = scmp.ne.s32.totalorder %s25, %s39
      %p41 = scmp.eq.s32.totalorder %s20, 0
      %p42 = por %p40, %p41
      %s44 = sadd.s32 %s43, 1
      %p47 = scmp.eq.s32.totalorder %s14, 1
      %p48 = scmp.ne.s32.totalorder %s43, %s45
      %p49 = scmp.eq.s32.totalorder %s14, 0
      %p50 = por %p48, %p49
      %p51 = scmp.ne.s32.totalorder %s43, %s45
      %p52 = scmp.eq.s32.totalorder %s19, 1
      %p53 = por %p51, %p52
      %p54 = scmp.ne.s32.totalorder %s45, %s46
      %p55 = scmp.eq.s32.totalorder %s19, 0
      %p56 = por %p54, %p55
      %p57 = scmp.ne.s32.totalorder %s45, %s46
      %p58 = scmp.eq.s32.totalorder %s20, 1
      %p59 = por %p57, %p58
      %p61 = scmp.ne.s32.totalorder %s46, %s60
      %p62 = scmp.eq.s32.totalorder %s20, 0
      %p63 = por %p61, %p62
      %s65 = sadd.s32 %s64, 1
      %p68 = scmp.eq.s32.totalorder %s14, 1
      %p69 = scmp.ne.s32.totalorder %s64, %s66
      %p70 = scmp.eq.s32.totalorder %s14, 0
      %p71 = por %p69, %p70
      %p72 = scmp.ne.s32.totalorder %s64, %s66
      %p73 = scmp.eq.s32.totalorder %s19, 1
      %p74 = por %p72, %p73
      %p75 = scmp.ne.s32.totalorder %s66, %s67
      %p76 = scmp.eq.s32.totalorder %s19, 0
      %p77 = por %p75, %p76
      %p78 = scmp.ne.s32.totalorder %s66, %s67
      %p79 = scmp.eq.s32.totalorder %s20, 1
      %p80 = por %p78, %p79
      %p82 = scmp.ne.s32.totalorder %s67, %s81
      %p83 = scmp.eq.s32.totalorder %s20, 0
      %p84 = por %p82, %p83
      %s85 = ssub.s32 %s14, %s21
      %p86 = scmp.eq.s32.totalorder %s85, 0
      %s88 = sadd.s32 %s87, 1
      %s89 = scalar_select %p86, %s87, %s88
      %p92 = pneg %p86
      %p93 = scmp.eq.s32.totalorder %s14, 1
      %p94 = por %p92, %p93
      %p95 = scmp.ne.s32.totalorder %s87, %s90
      %p96 = scmp.eq.s32.totalorder %s14, 0
      %p97 = por %p95, %p96
      %p98 = scmp.ne.s32.totalorder %s87, %s90
      %p99 = scmp.eq.s32.totalorder %s19, 1
      %p100 = por %p98, %p99
      %p101 = scmp.ne.s32.totalorder %s90, %s91
      %p102 = scmp.eq.s32.totalorder %s19, 0
      %p103 = por %p101, %p102
      %p104 = scmp.ne.s32.totalorder %s90, %s91
      %p105 = scmp.eq.s32.totalorder %s20, 1
      %p106 = por %p104, %p105
      %p108 = scmp.ne.s32.totalorder %s91, %s107
      %p109 = scmp.eq.s32.totalorder %s20, 0
      %p110 = por %p108, %p109
      %p111 = scmp.le.s32.totalorder 1, %s14
      %p112 = scmp.lt.s32.totalorder %s14, 3
      %p113 = pnand %p111, %p112
      %p114 = pneg %p113
      // Predicated region
      $region9: #{tpu_custom_call.1} parent=5 // pred_check
        _
      $region10: #{tpu_custom_call.1} parent=5 // pred_check_branch
        %116 = sbr.rel (%p113) target = $region12
      $region11: #{tpu_custom_call.1} parent=5 // pred_region
        %s117 = ssub.s32 %s14, 1
        // Predicated region
        $region13: #{tpu_custom_call.1} parent=11 // pred_check
          %p118 = pneg %p35
        $region14: #{tpu_custom_call.1} parent=11 // pred_check_branch
          %120 = sbr.rel (%p118) target = $region16
        $region15: #{tpu_custom_call.1} parent=11 // pred_region
          %s122 = ssub.s32 64, 64
          %123 = vsyncadd [#allocation4], %s122
          %s125 = sshll.u32 [#allocation3], 4
          %s126 = int_to_ptr.vmem [resolvable:$true] %s125
          %128 = dma.hbm_to_vmem [thread:$0]  %s0, 64, %s126, [#allocation4]
        $region16: #{tpu_custom_call.1} parent=11 // pred_fallthru
          _
        // Predicated region
        $region17: #{tpu_custom_call.1} parent=11 // pred_check
          %p129 = pneg %p56
        $region18: #{tpu_custom_call.1} parent=11 // pred_check_branch
          %131 = sbr.rel (%p129) target = $region20
        $region19: #{tpu_custom_call.1} parent=11 // pred_region
          %s133 = ssub.s32 512, 512
          %134 = vsyncadd [#allocation7], %s133
          %s135 = sshll.u32 [#allocation6], 4
          %s136 = int_to_ptr.vmem [resolvable:$true] %s135
          %141 = dma.hbm_to_vmem [thread:$0]  %s1, 512, %s136, [#allocation7], 128, 128, 8
        $region20: #{tpu_custom_call.1} parent=11 // pred_fallthru
          _
        // Predicated region
        $region21: #{tpu_custom_call.1} parent=11 // pred_check
          %p142 = pneg %p77
        $region22: #{tpu_custom_call.1} parent=11 // pred_check_branch
          %144 = sbr.rel (%p142) target = $region24
        $region23: #{tpu_custom_call.1} parent=11 // pred_region
          %s146 = ssub.s32 2048, 2048
          %147 = vsyncadd [#allocation7], %s146
          %s148 = sshll.u32 [#allocation8], 4
          %s149 = int_to_ptr.vmem [resolvable:$true] %s148
          %154 = dma.hbm_to_vmem [thread:$0]  %s2, 2048, %s149, [#allocation7], 128, 128, 8
        $region24: #{tpu_custom_call.1} parent=11 // pred_fallthru
          _
      $region12: #{tpu_custom_call.1} parent=5 // pred_fallthru
        _
      %p155 = scmp.lt.s32.totalorder %s14, 2
      // Predicated region
      $region25: #{tpu_custom_call.1} parent=5 // pred_check
        %p156 = pneg %p155
      $region26: #{tpu_custom_call.1} parent=5 // pred_check_branch
        %158 = sbr.rel (%p156) target = $region28
      $region27: #{tpu_custom_call.1} parent=5 // pred_region
        _
      $region28: #{tpu_custom_call.1} parent=5 // pred_fallthru
        _
      %p159 = scmp.le.s32.totalorder 1, %s14
      %p160 = scmp.lt.s32.totalorder %s14, 3
      %p161 = pnand %p159, %p160
      %p162 = pneg %p161
      // Predicated region
      $region29: #{tpu_custom_call.1} parent=5 // pred_check
        _
      $region30: #{tpu_custom_call.1} parent=5 // pred_check_branch
        %164 = sbr.rel (%p161) target = $region32
      $region31: #{tpu_custom_call.1} parent=5 // pred_region
        %s165 = ssub.s32 %s14, 1
        // Predicated region
        $region33: #{tpu_custom_call.1} parent=31 // pred_check
          %p166 = pneg %p35
        $region34: #{tpu_custom_call.1} parent=31 // pred_check_branch
          %168 = sbr.rel (%p166) target = $region36
        $region35: #{tpu_custom_call.1} parent=31 // pred_region
          %169 = dma.done [#allocation4], 64
        $region36: #{tpu_custom_call.1} parent=31 // pred_fallthru
          _
        // Predicated region
        $region37: #{tpu_custom_call.1} parent=31 // pred_check
          %p170 = pneg %p56
        $region38: #{tpu_custom_call.1} parent=31 // pred_check_branch
          %172 = sbr.rel (%p170) target = $region40
        $region39: #{tpu_custom_call.1} parent=31 // pred_region
          %173 = dma.done [#allocation7], 512
        $region40: #{tpu_custom_call.1} parent=31 // pred_fallthru
          _
        // Predicated region
        $region41: #{tpu_custom_call.1} parent=31 // pred_check
          %p174 = pneg %p77
        $region42: #{tpu_custom_call.1} parent=31 // pred_check_branch
          %176 = sbr.rel (%p174) target = $region44
        $region43: #{tpu_custom_call.1} parent=31 // pred_region
          %177 = dma.done [#allocation7], 2048
        $region44: #{tpu_custom_call.1} parent=31 // pred_fallthru
          _
        %p178 = pneg %p35
        %p179 = pneg %p32
        %p180 = pneg %p56
        %p181 = pneg %p53
        %p182 = pneg %p77
        %p183 = pneg %p74
        %p184 = pneg %p103
        %p185 = pneg %p100
        %s186 = sand.u32 %s90, 1
        %s187 = scalar_lea.sflag [#allocation5], %s186
        %s188 = sand.u32 %s90, 1
        %s189 = smul.addr %s188, 256
        %s190 = scalar_lea.vmem [#allocation9], %s189
        %s191 = smul.u32 8, %s19
        %p193 = scmp.eq.s32.totalorder %s19, 0
        // Predicated region
        $region45: #{tpu_custom_call.1} parent=31 // pred_check
          %p194 = pneg %p193
        $region46: #{tpu_custom_call.1} parent=31 // pred_check_branch
          %196 = sbr.rel (%p194) target = $region48
        $region47: #{tpu_custom_call.1} parent=31 // pred_region
          %v197 = vld [vmem:[#allocation6] sm:$0xff]
          %v198 = vld [vmem:[#allocation6 + $0x8] sm:$0xff]
          %v199 = vld [vmem:[#allocation6 + $0x10] sm:$0xff]
          %v200 = vld [vmem:[#allocation6 + $0x18] sm:$0xff]
          %201 = vst [vmem:[#allocation2] sm:$0xff] %v197
          %202 = vst [vmem:[#allocation2 + $0x8] sm:$0xff] %v198
          %203 = vst [vmem:[#allocation2 + $0x10] sm:$0xff] %v199
          %204 = vst [vmem:[#allocation2 + $0x18] sm:$0xff] %v200
        $region48: #{tpu_custom_call.1} parent=31 // pred_fallthru
          _
        %v205 = vld [vmem:[#allocation3] sm:$0x1]
        %v206 = vlaneseq
        %v207 = vshrl.u32 %v206, 7
        %v208 = vsub.s32 0, %v207
        %v209 = vrot.slane %v205, %v208
        %v210 = vld [vmem:[#allocation3 + $0x1] sm:$0x1]
        %v211 = vlaneseq
        %v212 = vshrl.u32 %v211, 7
        %v213 = vsub.s32 0, %v212
        %v214 = vrot.slane %v210, %v213
        %v215 = vld [vmem:[#allocation3 + $0x2] sm:$0x1]
        %v216 = vlaneseq
        %v217 = vshrl.u32 %v216, 7
        %v218 = vsub.s32 0, %v217
        %v219 = vrot.slane %v215, %v218
        %v220 = vld [vmem:[#allocation3 + $0x3] sm:$0x1]
        %v221 = vlaneseq
        %v222 = vshrl.u32 %v221, 7
        %v223 = vsub.s32 0, %v222
        %v224 = vrot.slane %v220, %v223
        %v225 = vld [vmem:[#allocation8] sm:$0xff]
        %v226 = vld [vmem:[#allocation8 + $0x8] sm:$0xff]
        %v227 = vld [vmem:[#allocation8 + $0x10] sm:$0xff]
        %v228 = vld [vmem:[#allocation8 + $0x18] sm:$0xff]
        %v229 = vld [vmem:[#allocation8 + $0x20] sm:$0xff]
        %v230 = vld [vmem:[#allocation8 + $0x28] sm:$0xff]
        %v231 = vld [vmem:[#allocation8 + $0x30] sm:$0xff]
        %v232 = vld [vmem:[#allocation8 + $0x38] sm:$0xff]
        %v233 = vld [vmem:[#allocation8 + $0x40] sm:$0xff]
        %v234 = vld [vmem:[#allocation8 + $0x48] sm:$0xff]
        %v235 = vld [vmem:[#allocation8 + $0x50] sm:$0xff]
        %v236 = vld [vmem:[#allocation8 + $0x58] sm:$0xff]
        %v237 = vld [vmem:[#allocation8 + $0x60] sm:$0xff]
        %v238 = vld [vmem:[#allocation8 + $0x68] sm:$0xff]
        %v239 = vld [vmem:[#allocation8 + $0x70] sm:$0xff]
        %v240 = vld [vmem:[#allocation8 + $0x78] sm:$0xff]
        %v241 = vld [vmem:[#allocation2] sm:$0xff]
        %v242 = vld [vmem:[#allocation2 + $0x8] sm:$0xff]
        %v243 = vld [vmem:[#allocation2 + $0x10] sm:$0xff]
        %v244 = vld [vmem:[#allocation2 + $0x18] sm:$0xff]
        %v245 = vpack.c.bf16 %v242, %v241
        %v246 = vpack.c.bf16 %v244, %v243
        %v263 = vunpack.c.l.b16 %v225
        %v264 = vunpack.c.h.b16 %v225
        %v265 = vunpack.c.l.b16 %v226
        %v266 = vunpack.c.h.b16 %v226
        %v267 = vunpack.c.l.b16 %v227
        %v268 = vunpack.c.h.b16 %v227
        %v269 = vunpack.c.l.b16 %v228
        %v270 = vunpack.c.h.b16 %v228
        %v271 = vunpack.c.l.b16 %v229
        %v272 = vunpack.c.h.b16 %v229
        %v273 = vunpack.c.l.b16 %v230
        %v274 = vunpack.c.h.b16 %v230
        %v275 = vunpack.c.l.b16 %v231
        %v276 = vunpack.c.h.b16 %v231
        %v277 = vunpack.c.l.b16 %v232
        %v278 = vunpack.c.h.b16 %v232
        %v279 = vunpack.c.l.b16 %v233
        %v280 = vunpack.c.h.b16 %v233
        %v281 = vunpack.c.l.b16 %v234
        %v282 = vunpack.c.h.b16 %v234
        %v283 = vunpack.c.l.b16 %v235
        %v284 = vunpack.c.h.b16 %v235
        %v285 = vunpack.c.l.b16 %v236
        %v286 = vunpack.c.h.b16 %v236
        %v287 = vunpack.c.l.b16 %v237
        %v288 = vunpack.c.h.b16 %v237
        %v289 = vunpack.c.l.b16 %v238
        %v290 = vunpack.c.h.b16 %v238
        %v291 = vunpack.c.l.b16 %v239
        %v292 = vunpack.c.h.b16 %v239
        %v293 = vunpack.c.l.b16 %v240
        %v294 = vunpack.c.h.b16 %v240
        %v295 = vpack.c.b16 %v265, %v263
        %v296 = vpack.c.b16 %v266, %v264
        %v297 = vpack.c.b16 %v269, %v267
        %v298 = vpack.c.b16 %v270, %v268
        %v299 = vpack.c.b16 %v273, %v271
        %v300 = vpack.c.b16 %v274, %v272
        %v301 = vpack.c.b16 %v277, %v275
        %v302 = vpack.c.b16 %v278, %v276
        %v303 = vpack.c.b16 %v281, %v279
        %v304 = vpack.c.b16 %v282, %v280
        %v305 = vpack.c.b16 %v285, %v283
        %v306 = vpack.c.b16 %v286, %v284
        %v307 = vpack.c.b16 %v289, %v287
        %v308 = vpack.c.b16 %v290, %v288
        %v309 = vpack.c.b16 %v293, %v291
        %v310 = vpack.c.b16 %v294, %v292
        %327 = vmatprep.subr.bf16.mxu0 %v296
        %328 = vmatpush1.bf16.msra.mxu0 %v295
        %329 = vmatprep.subr.bf16.mxu0 %v298
        %330 = vmatpush1.bf16.msra.mxu0 %v297
        %331 = vmatprep.subr.bf16.mxu0 %v300
        %332 = vmatpush1.bf16.msra.mxu0 %v299
        %333 = vmatprep.subr.bf16.mxu0 %v302
        %334 = vmatpush1.bf16.msra.mxu0 %v301
        %335 = vmatprep.subr.bf16.mxu0 %v304
        %336 = vmatpush1.bf16.msra.mxu0 %v303
        %337 = vmatprep.subr.bf16.mxu0 %v306
        %338 = vmatpush1.bf16.msra.mxu0 %v305
        %339 = vmatprep.subr.bf16.mxu0 %v308
        %340 = vmatpush1.bf16.msra.mxu0 %v307
        %341 = vmatprep.subr.bf16.mxu0 %v310
        %342 = vmatpush1.bf16.msra.mxu0 %v309
        %343 = vmatprep.subr.bf16.mxu0 0
        %344 = vmatpush1.bf16.msra.mxu0 0
        %345 = vmatprep.subr.bf16.mxu0 0
        %346 = vmatpush1.bf16.msra.mxu0 0
        %347 = vmatprep.subr.bf16.mxu0 0
        %348 = vmatpush1.bf16.msra.mxu0 0
        %349 = vmatprep.subr.bf16.mxu0 0
        %350 = vmatpush1.bf16.msra.mxu0 0
        %351 = vmatprep.subr.bf16.mxu0 0
        %352 = vmatpush1.bf16.msra.mxu0 0
        %353 = vmatprep.subr.bf16.mxu0 0
        %354 = vmatpush1.bf16.msra.mxu0 0
        %355 = vmatprep.subr.bf16.mxu0 0
        %356 = vmatpush1.bf16.msra.mxu0 0
        %357 = vmatprep.subr.bf16.mxu0 0
        %358 = vmatpush1.bf16.msra.mxu0 0
        %359 = vmatprep.mubr.bf16.mxu0 0
        %360 = vmatmul.mubr.bf16.gmra.mrb[0].mxu0 %v245
        %v361 = vpop.f32.mrb[0].mxu0
        %v362 = vadd.f32 0.0, %v361
        %v363 = vpop.f32.mrb[0].mxu0
        %v364 = vadd.f32 0.0, %v363
        %v365 = vpop.f32.mrb[0].mxu0
        %v366 = vadd.f32 0.0, %v365
        %v367 = vpop.f32.mrb[0].mxu0
        %v368 = vadd.f32 0.0, %v367
        %369 = vmatprep.mubr.bf16.mxu0 0
        %370 = vmatmul.mubr.bf16.gmra.mrb[0].mxu0 %v246
        %v371 = vpop.f32.mrb[0].mxu0
        %v372 = vadd.f32 0.0, %v371
        %v373 = vpop.f32.mrb[0].mxu0
        %v374 = vadd.f32 0.0, %v373
        %v375 = vpop.f32.mrb[0].mxu0
        %v376 = vadd.f32 0.0, %v375
        %v377 = vpop.f32.mrb[0].mxu0
        %v378 = vadd.f32 0.0, %v377
        %379 = vdwg.mxu0
        %v380 = vrot.slane %v241, 7
        %v381 = vrot.slane %v242, 7
        %v382 = vrot.slane %v243, 7
        %v383 = vrot.slane %v244, 7
        %v384 = vlaneseq
        %v385 = vshrl.u32 %v384, 7
        %vm386 = vcmp.lt.s32.totalorder %v385, 1
        %v387 = vsel %vm386, %v382, %v383
        %v388 = vsel %vm386, %v381, %v382
        %v389 = vsel %vm386, %v380, %v381
        %v390 = vsel %vm386, %v383, %v380
        %v391 = vrot.slane %v241, 6
        %v392 = vrot.slane %v242, 6
        %v393 = vrot.slane %v243, 6
        %v394 = vrot.slane %v244, 6
        %vm395 = vcmp.lt.s32.totalorder %v385, 2
        %v396 = vsel %vm395, %v393, %v394
        %v397 = vsel %vm395, %v392, %v393
        %v398 = vsel %vm395, %v391, %v392
        %v399 = vsel %vm395, %v394, %v391
        %v400 = vrot.slane %v241, 1
        %v401 = vrot.slane %v242, 1
        %v402 = vrot.slane %v243, 1
        %v403 = vrot.slane %v244, 1
        %vm404 = vcmp.lt.s32.totalorder %v385, 7
        %v405 = vsel %vm404, %v402, %v403
        %v406 = vsel %vm404, %v401, %v402
        %v407 = vsel %vm404, %v400, %v401
        %v408 = vsel %vm404, %v403, %v400
        %v409 = vrot.slane %v241, 2
        %v410 = vrot.slane %v242, 2
        %v411 = vrot.slane %v243, 2
        %v412 = vrot.slane %v244, 2
        %vm413 = vcmp.lt.s32.totalorder %v385, 6
        %v414 = vsel %vm413, %v411, %v412
        %v415 = vsel %vm413, %v410, %v411
        %v416 = vsel %vm413, %v409, %v410
        %v417 = vsel %vm413, %v412, %v409
        %v418 = vsub.f32 %v399, %v416
        %v419 = vsub.f32 %v398, %v415
        %v420 = vsub.f32 %v397, %v414
        %v421 = vsub.f32 %v396, %v417
        %v422 = vmul.f32 %v418, 8.333333
        %v423 = vmul.f32 %v419, 8.333333
        %v424 = vmul.f32 %v420, 8.333333
        %v425 = vmul.f32 %v421, 8.333333
        %v426 = vsub.f32 %v407, %v390
        %v427 = vsub.f32 %v406, %v389
        %v428 = vsub.f32 %v405, %v388
        %v429 = vsub.f32 %v408, %v387
        %v430 = vmul.f32 %v426, 66.666664
        %v431 = vmul.f32 %v427, 66.666664
        %v432 = vmul.f32 %v428, 66.666664
        %v433 = vmul.f32 %v429, 66.666664
        %v434 = vadd.f32 %v422, %v430
        %v435 = vadd.f32 %v423, %v431
        %v436 = vadd.f32 %v424, %v432
        %v437 = vadd.f32 %v425, %v433
        %v438 = vadd.f32 %v399, %v416
        %v439 = vadd.f32 %v398, %v415
        %v440 = vadd.f32 %v397, %v414
        %v441 = vadd.f32 %v396, %v417
        %v442 = vmul.f32 %v438, -7.8199944
        %v443 = vmul.f32 %v439, -7.8199944
        %v444 = vmul.f32 %v440, -7.8199944
        %v445 = vmul.f32 %v441, -7.8199944
        %v446 = vadd.f32 %v390, %v407
        %v447 = vadd.f32 %v389, %v406
        %v448 = vadd.f32 %v388, %v405
        %v449 = vadd.f32 %v387, %v408
        %v450 = vmul.f32 %v446, 125.11991
        %v451 = vmul.f32 %v447, 125.11991
        %v452 = vmul.f32 %v448, 125.11991
        %v453 = vmul.f32 %v449, 125.11991
        %v454 = vadd.f32 %v442, %v450
        %v455 = vadd.f32 %v443, %v451
        %v456 = vadd.f32 %v444, %v452
        %v457 = vadd.f32 %v445, %v453
        %v458 = vmul.f32 %v241, -234.59984
        %v459 = vmul.f32 %v242, -234.59984
        %v460 = vmul.f32 %v243, -234.59984
        %v461 = vmul.f32 %v244, -234.59984
        %v462 = vadd.f32 %v454, %v458
        %v463 = vadd.f32 %v455, %v459
        %v464 = vadd.f32 %v456, %v460
        %v465 = vadd.f32 %v457, %v461
        %v466 = vadd.f32 %v364, %v462
        %v467 = vadd.f32 %v368, %v463
        %v468 = vadd.f32 %v374, %v464
        %v469 = vadd.f32 %v378, %v465
        %470 = vrot.lane.b32.xlu0 %v241, 64
        %v471 = vpop.permute.xlu0 %470
        %472 = vrot.lane.b32.xlu0 %v242, 64
        %v473 = vpop.permute.xlu0 %472
        %474 = vrot.lane.b32.xlu0 %v243, 64
        %v475 = vpop.permute.xlu0 %474
        %476 = vrot.lane.b32.xlu0 %v244, 64
        %v477 = vpop.permute.xlu0 %476
        %v478 = vmul.f32 %v209, %v434
        %v479 = vmul.f32 %v209, %v435
        %v480 = vmul.f32 %v209, %v436
        %v481 = vmul.f32 %v209, %v437
        %v482 = vmul.f32 %v214, %v362
        %v483 = vmul.f32 %v214, %v366
        %v484 = vmul.f32 %v214, %v372
        %v485 = vmul.f32 %v214, %v376
        %v486 = vadd.f32 %v478, %v482
        %v487 = vadd.f32 %v479, %v483
        %v488 = vadd.f32 %v480, %v484
        %v489 = vadd.f32 %v481, %v485
        %v490 = vmul.f32 %v241, %v486
        %v491 = vmul.f32 %v242, %v487
        %v492 = vmul.f32 %v243, %v488
        %v493 = vmul.f32 %v244, %v489
        %v494 = vadd.f32 %v466, %v490
        %v495 = vadd.f32 %v467, %v491
        %v496 = vadd.f32 %v468, %v492
        %v497 = vadd.f32 %v469, %v493
        %v498 = vmul.f32 %v219, %v434
        %v499 = vmul.f32 %v219, %v435
        %v500 = vmul.f32 %v219, %v436
        %v501 = vmul.f32 %v219, %v437
        %v502 = vmul.f32 %v224, %v362
        %v503 = vmul.f32 %v224, %v366
        %v504 = vmul.f32 %v224, %v372
        %v505 = vmul.f32 %v224, %v376
        %v506 = vadd.f32 %v498, %v502
        %v507 = vadd.f32 %v499, %v503
        %v508 = vadd.f32 %v500, %v504
        %v509 = vadd.f32 %v501, %v505
        %v510 = vmul.f32 %v471, %v506
        %v511 = vmul.f32 %v473, %v507
        %v512 = vmul.f32 %v475, %v508
        %v513 = vmul.f32 %v477, %v509
        %v514 = vadd.f32 %v494, %v510
        %v515 = vadd.f32 %v495, %v511
        %v516 = vadd.f32 %v496, %v512
        %v517 = vadd.f32 %v497, %v513
        %v518 = vmul.f32 %v514, 0.0005
        %v519 = vmul.f32 %v515, 0.0005
        %v520 = vmul.f32 %v516, 0.0005
        %v521 = vmul.f32 %v517, 0.0005
        %v522 = vadd.f32 %v241, %v518
        %v523 = vadd.f32 %v242, %v519
        %v524 = vadd.f32 %v243, %v520
        %v525 = vadd.f32 %v244, %v521
        %v526 = vpack.c.bf16 %v523, %v522
        %v527 = vpack.c.bf16 %v525, %v524
        %528 = vmatprep.subr.bf16.mxu0 %v296
        %529 = vmatpush1.bf16.msra.mxu0 %v295
        %530 = vmatprep.subr.bf16.mxu0 %v298
        %531 = vmatpush1.bf16.msra.mxu0 %v297
        %532 = vmatprep.subr.bf16.mxu0 %v300
        %533 = vmatpush1.bf16.msra.mxu0 %v299
        %534 = vmatprep.subr.bf16.mxu0 %v302
        %535 = vmatpush1.bf16.msra.mxu0 %v301
        %536 = vmatprep.subr.bf16.mxu0 %v304
        %537 = vmatpush1.bf16.msra.mxu0 %v303
        %538 = vmatprep.subr.bf16.mxu0 %v306
        %539 = vmatpush1.bf16.msra.mxu0 %v305
        %540 = vmatprep.subr.bf16.mxu0 %v308
        %541 = vmatpush1.bf16.msra.mxu0 %v307
        %542 = vmatprep.subr.bf16.mxu0 %v310
        %543 = vmatpush1.bf16.msra.mxu0 %v309
        %544 = vmatprep.subr.bf16.mxu0 0
        %545 = vmatpush1.bf16.msra.mxu0 0
        %546 = vmatprep.subr.bf16.mxu0 0
        %547 = vmatpush1.bf16.msra.mxu0 0
        %548 = vmatprep.subr.bf16.mxu0 0
        %549 = vmatpush1.bf16.msra.mxu0 0
        %550 = vmatprep.subr.bf16.mxu0 0
        %551 = vmatpush1.bf16.msra.mxu0 0
        %552 = vmatprep.subr.bf16.mxu0 0
        %553 = vmatpush1.bf16.msra.mxu0 0
        %554 = vmatprep.subr.bf16.mxu0 0
        %555 = vmatpush1.bf16.msra.mxu0 0
        %556 = vmatprep.subr.bf16.mxu0 0
        %557 = vmatpush1.bf16.msra.mxu0 0
        %558 = vmatprep.subr.bf16.mxu0 0
        %559 = vmatpush1.bf16.msra.mxu0 0
        %560 = vmatprep.mubr.bf16.mxu0 0
        %561 = vmatmul.mubr.bf16.gmra.mrb[0].mxu0 %v526
        %v562 = vpop.f32.mrb[0].mxu0
        %v563 = vadd.f32 0.0, %v562
        %v564 = vpop.f32.mrb[0].mxu0
        %v565 = vadd.f32 0.0, %v564
        %v566 = vpop.f32.mrb[0].mxu0
        %v567 = vadd.f32 0.0, %v566
        %v568 = vpop.f32.mrb[0].mxu0
        %v569 = vadd.f32 0.0, %v568
        %570 = vmatprep.mubr.bf16.mxu0 0
        %571 = vmatmul.mubr.bf16.gmra.mrb[0].mxu0 %v527
        %v572 = vpop.f32.mrb[0].mxu0
        %v573 = vadd.f32 0.0, %v572
        %v574 = vpop.f32.mrb[0].mxu0
        %v575 = vadd.f32 0.0, %v574
        %v576 = vpop.f32.mrb[0].mxu0
        %v577 = vadd.f32 0.0, %v576
        %v578 = vpop.f32.mrb[0].mxu0
        %v579 = vadd.f32 0.0, %v578
        %580 = vdwg.mxu0
        %v581 = vrot.slane %v522, 7
        %v582 = vrot.slane %v523, 7
        %v583 = vrot.slane %v524, 7
        %v584 = vrot.slane %v525, 7
        %v585 = vsel %vm386, %v583, %v584
        %v586 = vsel %vm386, %v582, %v583
        %v587 = vsel %vm386, %v581, %v582
        %v588 = vsel %vm386, %v584, %v581
        %v589 = vrot.slane %v522, 6
        %v590 = vrot.slane %v523, 6
        %v591 = vrot.slane %v524, 6
        %v592 = vrot.slane %v525, 6
        %v593 = vsel %vm395, %v591, %v592
        %v594 = vsel %vm395, %v590, %v591
        %v595 = vsel %vm395, %v589, %v590
        %v596 = vsel %vm395, %v592, %v589
        %v597 = vrot.slane %v522, 1
        %v598 = vrot.slane %v523, 1
        %v599 = vrot.slane %v524, 1
        %v600 = vrot.slane %v525, 1
        %v601 = vsel %vm404, %v599, %v600
        %v602 = vsel %vm404, %v598, %v599
        %v603 = vsel %vm404, %v597, %v598
        %v604 = vsel %vm404, %v600, %v597
        %v605 = vrot.slane %v522, 2
        %v606 = vrot.slane %v523, 2
        %v607 = vrot.slane %v524, 2
        %v608 = vrot.slane %v525, 2
        %v609 = vsel %vm413, %v607, %v608
        %v610 = vsel %vm413, %v606, %v607
        %v611 = vsel %vm413, %v605, %v606
        %v612 = vsel %vm413, %v608, %v605
        %v613 = vsub.f32 %v596, %v611
        %v614 = vsub.f32 %v595, %v610
        %v615 = vsub.f32 %v594, %v609
        %v616 = vsub.f32 %v593, %v612
        %v617 = vmul.f32 %v613, 8.333333
        %v618 = vmul.f32 %v614, 8.333333
        %v619 = vmul.f32 %v615, 8.333333
        %v620 = vmul.f32 %v616, 8.333333
        %v621 = vsub.f32 %v603, %v588
        %v622 = vsub.f32 %v602, %v587
        %v623 = vsub.f32 %v601, %v586
        %v624 = vsub.f32 %v604, %v585
        %v625 = vmul.f32 %v621, 66.666664
        %v626 = vmul.f32 %v622, 66.666664
        %v627 = vmul.f32 %v623, 66.666664
        %v628 = vmul.f32 %v624, 66.666664
        %v629 = vadd.f32 %v617, %v625
        %v630 = vadd.f32 %v618, %v626
        %v631 = vadd.f32 %v619, %v627
        %v632 = vadd.f32 %v620, %v628
        %v633 = vadd.f32 %v596, %v611
        %v634 = vadd.f32 %v595, %v610
        %v635 = vadd.f32 %v594, %v609
        %v636 = vadd.f32 %v593, %v612
        %v637 = vmul.f32 %v633, -7.8199944
        %v638 = vmul.f32 %v634, -7.8199944
        %v639 = vmul.f32 %v635, -7.8199944
        %v640 = vmul.f32 %v636, -7.8199944
        %v641 = vadd.f32 %v588, %v603
        %v642 = vadd.f32 %v587, %v602
        %v643 = vadd.f32 %v586, %v601
        %v644 = vadd.f32 %v585, %v604
        %v645 = vmul.f32 %v641, 125.11991
        %v646 = vmul.f32 %v642, 125.11991
        %v647 = vmul.f32 %v643, 125.11991
        %v648 = vmul.f32 %v644, 125.11991
        %v649 = vadd.f32 %v637, %v645
        %v650 = vadd.f32 %v638, %v646
        %v651 = vadd.f32 %v639, %v647
        %v652 = vadd.f32 %v640, %v648
        %v653 = vmul.f32 %v522, -234.59984
        %v654 = vmul.f32 %v523, -234.59984
        %v655 = vmul.f32 %v524, -234.59984
        %v656 = vmul.f32 %v525, -234.59984
        %v657 = vadd.f32 %v649, %v653
        %v658 = vadd.f32 %v650, %v654
        %v659 = vadd.f32 %v651, %v655
        %v660 = vadd.f32 %v652, %v656
        %v661 = vadd.f32 %v565, %v657
        %v662 = vadd.f32 %v569, %v658
        %v663 = vadd.f32 %v575, %v659
        %v664 = vadd.f32 %v579, %v660
        %665 = vrot.lane.b32.xlu0 %v522, 64
        %v666 = vpop.permute.xlu0 %665
        %667 = vrot.lane.b32.xlu0 %v523, 64
        %v668 = vpop.permute.xlu0 %667
        %669 = vrot.lane.b32.xlu0 %v524, 64
        %v670 = vpop.permute.xlu0 %669
        %671 = vrot.lane.b32.xlu0 %v525, 64
        %v672 = vpop.permute.xlu0 %671
        %v673 = vmul.f32 %v209, %v629
        %v674 = vmul.f32 %v209, %v630
        %v675 = vmul.f32 %v209, %v631
        %v676 = vmul.f32 %v209, %v632
        %v677 = vmul.f32 %v214, %v563
        %v678 = vmul.f32 %v214, %v567
        %v679 = vmul.f32 %v214, %v573
        %v680 = vmul.f32 %v214, %v577
        %v681 = vadd.f32 %v673, %v677
        %v682 = vadd.f32 %v674, %v678
        %v683 = vadd.f32 %v675, %v679
        %v684 = vadd.f32 %v676, %v680
        %v685 = vmul.f32 %v522, %v681
        %v686 = vmul.f32 %v523, %v682
        %v687 = vmul.f32 %v524, %v683
        %v688 = vmul.f32 %v525, %v684
        %v689 = vadd.f32 %v661, %v685
        %v690 = vadd.f32 %v662, %v686
        %v691 = vadd.f32 %v663, %v687
        %v692 = vadd.f32 %v664, %v688
        %v693 = vmul.f32 %v219, %v629
        %v694 = vmul.f32 %v219, %v630
        %v695 = vmul.f32 %v219, %v631
        %v696 = vmul.f32 %v219, %v632
        %v697 = vmul.f32 %v224, %v563
        %v698 = vmul.f32 %v224, %v567
        %v699 = vmul.f32 %v224, %v573
        %v700 = vmul.f32 %v224, %v577
        %v701 = vadd.f32 %v693, %v697
        %v702 = vadd.f32 %v694, %v698
        %v703 = vadd.f32 %v695, %v699
        %v704 = vadd.f32 %v696, %v700
        %v705 = vmul.f32 %v666, %v701
        %v706 = vmul.f32 %v668, %v702
        %v707 = vmul.f32 %v670, %v703
        %v708 = vmul.f32 %v672, %v704
        %v709 = vadd.f32 %v689, %v705
        %v710 = vadd.f32 %v690, %v706
        %v711 = vadd.f32 %v691, %v707
        %v712 = vadd.f32 %v692, %v708
        %v713 = vmul.f32 %v709, 2.0
        %v714 = vmul.f32 %v710, 2.0
        %v715 = vmul.f32 %v711, 2.0
        %v716 = vmul.f32 %v712, 2.0
        %v717 = vadd.f32 %v514, %v713
        %v718 = vadd.f32 %v515, %v714
        %v719 = vadd.f32 %v516, %v715
        %v720 = vadd.f32 %v517, %v716
        %v721 = vmul.f32 %v709, 0.0005
        %v722 = vmul.f32 %v710, 0.0005
        %v723 = vmul.f32 %v711, 0.0005
        %v724 = vmul.f32 %v712, 0.0005
        %v725 = vadd.f32 %v241, %v721
        %v726 = vadd.f32 %v242, %v722
        %v727 = vadd.f32 %v243, %v723
        %v728 = vadd.f32 %v244, %v724
        %v729 = vpack.c.bf16 %v726, %v725
        %v730 = vpack.c.bf16 %v728, %v727
        %731 = vmatprep.subr.bf16.mxu0 %v296
        %732 = vmatpush1.bf16.msra.mxu0 %v295
        %733 = vmatprep.subr.bf16.mxu0 %v298
        %734 = vmatpush1.bf16.msra.mxu0 %v297
        %735 = vmatprep.subr.bf16.mxu0 %v300
        %736 = vmatpush1.bf16.msra.mxu0 %v299
        %737 = vmatprep.subr.bf16.mxu0 %v302
        %738 = vmatpush1.bf16.msra.mxu0 %v301
        %739 = vmatprep.subr.bf16.mxu0 %v304
        %740 = vmatpush1.bf16.msra.mxu0 %v303
        %741 = vmatprep.subr.bf16.mxu0 %v306
        %742 = vmatpush1.bf16.msra.mxu0 %v305
        %743 = vmatprep.subr.bf16.mxu0 %v308
        %744 = vmatpush1.bf16.msra.mxu0 %v307
        %745 = vmatprep.subr.bf16.mxu0 %v310
        %746 = vmatpush1.bf16.msra.mxu0 %v309
        %747 = vmatprep.subr.bf16.mxu0 0
        %748 = vmatpush1.bf16.msra.mxu0 0
        %749 = vmatprep.subr.bf16.mxu0 0
        %750 = vmatpush1.bf16.msra.mxu0 0
        %751 = vmatprep.subr.bf16.mxu0 0
        %752 = vmatpush1.bf16.msra.mxu0 0
        %753 = vmatprep.subr.bf16.mxu0 0
        %754 = vmatpush1.bf16.msra.mxu0 0
        %755 = vmatprep.subr.bf16.mxu0 0
        %756 = vmatpush1.bf16.msra.mxu0 0
        %757 = vmatprep.subr.bf16.mxu0 0
        %758 = vmatpush1.bf16.msra.mxu0 0
        %759 = vmatprep.subr.bf16.mxu0 0
        %760 = vmatpush1.bf16.msra.mxu0 0
        %761 = vmatprep.subr.bf16.mxu0 0
        %762 = vmatpush1.bf16.msra.mxu0 0
        %763 = vmatprep.mubr.bf16.mxu0 0
        %764 = vmatmul.mubr.bf16.gmra.mrb[0].mxu0 %v729
        %v765 = vpop.f32.mrb[0].mxu0
        %v766 = vadd.f32 0.0, %v765
        %v767 = vpop.f32.mrb[0].mxu0
        %v768 = vadd.f32 0.0, %v767
        %v769 = vpop.f32.mrb[0].mxu0
        %v770 = vadd.f32 0.0, %v769
        %v771 = vpop.f32.mrb[0].mxu0
        %v772 = vadd.f32 0.0, %v771
        %773 = vmatprep.mubr.bf16.mxu0 0
        %774 = vmatmul.mubr.bf16.gmra.mrb[0].mxu0 %v730
        %v775 = vpop.f32.mrb[0].mxu0
        %v776 = vadd.f32 0.0, %v775
        %v777 = vpop.f32.mrb[0].mxu0
        %v778 = vadd.f32 0.0, %v777
        %v779 = vpop.f32.mrb[0].mxu0
        %v780 = vadd.f32 0.0, %v779
        %v781 = vpop.f32.mrb[0].mxu0
        %v782 = vadd.f32 0.0, %v781
        %783 = vdwg.mxu0
        %v784 = vrot.slane %v725, 7
        %v785 = vrot.slane %v726, 7
        %v786 = vrot.slane %v727, 7
        %v787 = vrot.slane %v728, 7
        %v788 = vsel %vm386, %v786, %v787
        %v789 = vsel %vm386, %v785, %v786
        %v790 = vsel %vm386, %v784, %v785
        %v791 = vsel %vm386, %v787, %v784
        %v792 = vrot.slane %v725, 6
        %v793 = vrot.slane %v726, 6
        %v794 = vrot.slane %v727, 6
        %v795 = vrot.slane %v728, 6
        %v796 = vsel %vm395, %v794, %v795
        %v797 = vsel %vm395, %v793, %v794
        %v798 = vsel %vm395, %v792, %v793
        %v799 = vsel %vm395, %v795, %v792
        %v800 = vrot.slane %v725, 1
        %v801 = vrot.slane %v726, 1
        %v802 = vrot.slane %v727, 1
        %v803 = vrot.slane %v728, 1
        %v804 = vsel %vm404, %v802, %v803
        %v805 = vsel %vm404, %v801, %v802
        %v806 = vsel %vm404, %v800, %v801
        %v807 = vsel %vm404, %v803, %v800
        %v808 = vrot.slane %v725, 2
        %v809 = vrot.slane %v726, 2
        %v810 = vrot.slane %v727, 2
        %v811 = vrot.slane %v728, 2
        %v812 = vsel %vm413, %v810, %v811
        %v813 = vsel %vm413, %v809, %v810
        %v814 = vsel %vm413, %v808, %v809
        %v815 = vsel %vm413, %v811, %v808
        %v816 = vsub.f32 %v799, %v814
        %v817 = vsub.f32 %v798, %v813
        %v818 = vsub.f32 %v797, %v812
        %v819 = vsub.f32 %v796, %v815
        %v820 = vmul.f32 %v816, 8.333333
        %v821 = vmul.f32 %v817, 8.333333
        %v822 = vmul.f32 %v818, 8.333333
        %v823 = vmul.f32 %v819, 8.333333
        %v824 = vsub.f32 %v806, %v791
        %v825 = vsub.f32 %v805, %v790
        %v826 = vsub.f32 %v804, %v789
        %v827 = vsub.f32 %v807, %v788
        %v828 = vmul.f32 %v824, 66.666664
        %v829 = vmul.f32 %v825, 66.666664
        %v830 = vmul.f32 %v826, 66.666664
        %v831 = vmul.f32 %v827, 66.666664
        %v832 = vadd.f32 %v820, %v828
        %v833 = vadd.f32 %v821, %v829
        %v834 = vadd.f32 %v822, %v830
        %v835 = vadd.f32 %v823, %v831
        %v836 = vadd.f32 %v799, %v814
        %v837 = vadd.f32 %v798, %v813
        %v838 = vadd.f32 %v797, %v812
        %v839 = vadd.f32 %v796, %v815
        %v840 = vmul.f32 %v836, -7.8199944
        %v841 = vmul.f32 %v837, -7.8199944
        %v842 = vmul.f32 %v838, -7.8199944
        %v843 = vmul.f32 %v839, -7.8199944
        %v844 = vadd.f32 %v791, %v806
        %v845 = vadd.f32 %v790, %v805
        %v846 = vadd.f32 %v789, %v804
        %v847 = vadd.f32 %v788, %v807
        %v848 = vmul.f32 %v844, 125.11991
        %v849 = vmul.f32 %v845, 125.11991
        %v850 = vmul.f32 %v846, 125.11991
        %v851 = vmul.f32 %v847, 125.11991
        %v852 = vadd.f32 %v840, %v848
        %v853 = vadd.f32 %v841, %v849
        %v854 = vadd.f32 %v842, %v850
        %v855 = vadd.f32 %v843, %v851
        %v856 = vmul.f32 %v725, -234.59984
        %v857 = vmul.f32 %v726, -234.59984
        %v858 = vmul.f32 %v727, -234.59984
        %v859 = vmul.f32 %v728, -234.59984
        %v860 = vadd.f32 %v852, %v856
        %v861 = vadd.f32 %v853, %v857
        %v862 = vadd.f32 %v854, %v858
        %v863 = vadd.f32 %v855, %v859
        %v864 = vadd.f32 %v768, %v860
        %v865 = vadd.f32 %v772, %v861
        %v866 = vadd.f32 %v778, %v862
        %v867 = vadd.f32 %v782, %v863
        %868 = vrot.lane.b32.xlu0 %v725, 64
        %v869 = vpop.permute.xlu0 %868
        %870 = vrot.lane.b32.xlu0 %v726, 64
        %v871 = vpop.permute.xlu0 %870
        %872 = vrot.lane.b32.xlu0 %v727, 64
        %v873 = vpop.permute.xlu0 %872
        %874 = vrot.lane.b32.xlu0 %v728, 64
        %v875 = vpop.permute.xlu0 %874
        %v876 = vmul.f32 %v209, %v832
        %v877 = vmul.f32 %v209, %v833
        %v878 = vmul.f32 %v209, %v834
        %v879 = vmul.f32 %v209, %v835
        %v880 = vmul.f32 %v214, %v766
        %v881 = vmul.f32 %v214, %v770
        %v882 = vmul.f32 %v214, %v776
        %v883 = vmul.f32 %v214, %v780
        %v884 = vadd.f32 %v876, %v880
        %v885 = vadd.f32 %v877, %v881
        %v886 = vadd.f32 %v878, %v882
        %v887 = vadd.f32 %v879, %v883
        %v888 = vmul.f32 %v725, %v884
        %v889 = vmul.f32 %v726, %v885
        %v890 = vmul.f32 %v727, %v886
        %v891 = vmul.f32 %v728, %v887
        %v892 = vadd.f32 %v864, %v888
        %v893 = vadd.f32 %v865, %v889
        %v894 = vadd.f32 %v866, %v890
        %v895 = vadd.f32 %v867, %v891
        %v896 = vmul.f32 %v219, %v832
        %v897 = vmul.f32 %v219, %v833
        %v898 = vmul.f32 %v219, %v834
        %v899 = vmul.f32 %v219, %v835
        %v900 = vmul.f32 %v224, %v766
        %v901 = vmul.f32 %v224, %v770
        %v902 = vmul.f32 %v224, %v776
        %v903 = vmul.f32 %v224, %v780
        %v904 = vadd.f32 %v896, %v900
        %v905 = vadd.f32 %v897, %v901
        %v906 = vadd.f32 %v898, %v902
        %v907 = vadd.f32 %v899, %v903
        %v908 = vmul.f32 %v869, %v904
        %v909 = vmul.f32 %v871, %v905
        %v910 = vmul.f32 %v873, %v906
        %v911 = vmul.f32 %v875, %v907
        %v912 = vadd.f32 %v892, %v908
        %v913 = vadd.f32 %v893, %v909
        %v914 = vadd.f32 %v894, %v910
        %v915 = vadd.f32 %v895, %v911
        %v916 = vmul.f32 %v912, 2.0
        %v917 = vmul.f32 %v913, 2.0
        %v918 = vmul.f32 %v914, 2.0
        %v919 = vmul.f32 %v915, 2.0
        %v920 = vadd.f32 %v717, %v916
        %v921 = vadd.f32 %v718, %v917
        %v922 = vadd.f32 %v719, %v918
        %v923 = vadd.f32 %v720, %v919
        %v924 = vmul.f32 %v912, 0.001
        %v925 = vmul.f32 %v913, 0.001
        %v926 = vmul.f32 %v914, 0.001
        %v927 = vmul.f32 %v915, 0.001
        %v928 = vadd.f32 %v241, %v924
        %v929 = vadd.f32 %v242, %v925
        %v930 = vadd.f32 %v243, %v926
        %v931 = vadd.f32 %v244, %v927
        %v932 = vpack.c.bf16 %v929, %v928
        %v933 = vpack.c.bf16 %v931, %v930
        %934 = vmatprep.subr.bf16.mxu0 %v296
        %935 = vmatpush1.bf16.msra.mxu0 %v295
        %936 = vmatprep.subr.bf16.mxu0 %v298
        %937 = vmatpush1.bf16.msra.mxu0 %v297
        %938 = vmatprep.subr.bf16.mxu0 %v300
        %939 = vmatpush1.bf16.msra.mxu0 %v299
        %940 = vmatprep.subr.bf16.mxu0 %v302
        %941 = vmatpush1.bf16.msra.mxu0 %v301
        %942 = vmatprep.subr.bf16.mxu0 %v304
        %943 = vmatpush1.bf16.msra.mxu0 %v303
        %944 = vmatprep.subr.bf16.mxu0 %v306
        %945 = vmatpush1.bf16.msra.mxu0 %v305
        %946 = vmatprep.subr.bf16.mxu0 %v308
        %947 = vmatpush1.bf16.msra.mxu0 %v307
        %948 = vmatprep.subr.bf16.mxu0 %v310
        %949 = vmatpush1.bf16.msra.mxu0 %v309
        %950 = vmatprep.subr.bf16.mxu0 0
        %951 = vmatpush1.bf16.msra.mxu0 0
        %952 = vmatprep.subr.bf16.mxu0 0
        %953 = vmatpush1.bf16.msra.mxu0 0
        %954 = vmatprep.subr.bf16.mxu0 0
        %955 = vmatpush1.bf16.msra.mxu0 0
        %956 = vmatprep.subr.bf16.mxu0 0
        %957 = vmatpush1.bf16.msra.mxu0 0
        %958 = vmatprep.subr.bf16.mxu0 0
        %959 = vmatpush1.bf16.msra.mxu0 0
        %960 = vmatprep.subr.bf16.mxu0 0
        %961 = vmatpush1.bf16.msra.mxu0 0
        %962 = vmatprep.subr.bf16.mxu0 0
        %963 = vmatpush1.bf16.msra.mxu0 0
        %964 = vmatprep.subr.bf16.mxu0 0
        %965 = vmatpush1.bf16.msra.mxu0 0
        %966 = vmatprep.mubr.bf16.mxu0 0
        %967 = vmatmul.mubr.bf16.gmra.mrb[0].mxu0 %v932
        %v968 = vpop.f32.mrb[0].mxu0
        %v969 = vadd.f32 0.0, %v968
        %v970 = vpop.f32.mrb[0].mxu0
        %v971 = vadd.f32 0.0, %v970
        %v972 = vpop.f32.mrb[0].mxu0
        %v973 = vadd.f32 0.0, %v972
        %v974 = vpop.f32.mrb[0].mxu0
        %v975 = vadd.f32 0.0, %v974
        %976 = vmatprep.mubr.bf16.mxu0 0
        %977 = vmatmul.mubr.bf16.gmra.mrb[0].mxu0 %v933
        %v978 = vpop.f32.mrb[0].mxu0
        %v979 = vadd.f32 0.0, %v978
        %v980 = vpop.f32.mrb[0].mxu0
        %v981 = vadd.f32 0.0, %v980
        %v982 = vpop.f32.mrb[0].mxu0
        %v983 = vadd.f32 0.0, %v982
        %v984 = vpop.f32.mrb[0].mxu0
        %v985 = vadd.f32 0.0, %v984
        %986 = vdwg.mxu0
        %v987 = vrot.slane %v928, 7
        %v988 = vrot.slane %v929, 7
        %v989 = vrot.slane %v930, 7
        %v990 = vrot.slane %v931, 7
        %v991 = vsel %vm386, %v989, %v990
        %v992 = vsel %vm386, %v988, %v989
        %v993 = vsel %vm386, %v987, %v988
        %v994 = vsel %vm386, %v990, %v987
        %v995 = vrot.slane %v928, 6
        %v996 = vrot.slane %v929, 6
        %v997 = vrot.slane %v930, 6
        %v998 = vrot.slane %v931, 6
        %v999 = vsel %vm395, %v997, %v998
        %v1000 = vsel %vm395, %v996, %v997
        %v1001 = vsel %vm395, %v995, %v996
        %v1002 = vsel %vm395, %v998, %v995
        %v1003 = vrot.slane %v928, 1
        %v1004 = vrot.slane %v929, 1
        %v1005 = vrot.slane %v930, 1
        %v1006 = vrot.slane %v931, 1
        %v1007 = vsel %vm404, %v1005, %v1006
        %v1008 = vsel %vm404, %v1004, %v1005
        %v1009 = vsel %vm404, %v1003, %v1004
        %v1010 = vsel %vm404, %v1006, %v1003
        %v1011 = vrot.slane %v928, 2
        %v1012 = vrot.slane %v929, 2
        %v1013 = vrot.slane %v930, 2
        %v1014 = vrot.slane %v931, 2
        %v1015 = vsel %vm413, %v1013, %v1014
        %v1016 = vsel %vm413, %v1012, %v1013
        %v1017 = vsel %vm413, %v1011, %v1012
        %v1018 = vsel %vm413, %v1014, %v1011
        %v1019 = vsub.f32 %v1002, %v1017
        %v1020 = vsub.f32 %v1001, %v1016
        %v1021 = vsub.f32 %v1000, %v1015
        %v1022 = vsub.f32 %v999, %v1018
        %v1023 = vmul.f32 %v1019, 8.333333
        %v1024 = vmul.f32 %v1020, 8.333333
        %v1025 = vmul.f32 %v1021, 8.333333
        %v1026 = vmul.f32 %v1022, 8.333333
        %v1027 = vsub.f32 %v1009, %v994
        %v1028 = vsub.f32 %v1008, %v993
        %v1029 = vsub.f32 %v1007, %v992
        %v1030 = vsub.f32 %v1010, %v991
        %v1031 = vmul.f32 %v1027, 66.666664
        %v1032 = vmul.f32 %v1028, 66.666664
        %v1033 = vmul.f32 %v1029, 66.666664
        %v1034 = vmul.f32 %v1030, 66.666664
        %v1035 = vadd.f32 %v1023, %v1031
        %v1036 = vadd.f32 %v1024, %v1032
        %v1037 = vadd.f32 %v1025, %v1033
        %v1038 = vadd.f32 %v1026, %v1034
        %v1039 = vadd.f32 %v1002, %v1017
        %v1040 = vadd.f32 %v1001, %v1016
        %v1041 = vadd.f32 %v1000, %v1015
        %v1042 = vadd.f32 %v999, %v1018
        %v1043 = vmul.f32 %v1039, -7.8199944
        %v1044 = vmul.f32 %v1040, -7.8199944
        %v1045 = vmul.f32 %v1041, -7.8199944
        %v1046 = vmul.f32 %v1042, -7.8199944
        %v1047 = vadd.f32 %v994, %v1009
        %v1048 = vadd.f32 %v993, %v1008
        %v1049 = vadd.f32 %v992, %v1007
        %v1050 = vadd.f32 %v991, %v1010
        %v1051 = vmul.f32 %v1047, 125.11991
        %v1052 = vmul.f32 %v1048, 125.11991
        %v1053 = vmul.f32 %v1049, 125.11991
        %v1054 = vmul.f32 %v1050, 125.11991
        %v1055 = vadd.f32 %v1043, %v1051
        %v1056 = vadd.f32 %v1044, %v1052
        %v1057 = vadd.f32 %v1045, %v1053
        %v1058 = vadd.f32 %v1046, %v1054
        %v1059 = vmul.f32 %v928, -234.59984
        %v1060 = vmul.f32 %v929, -234.59984
        %v1061 = vmul.f32 %v930, -234.59984
        %v1062 = vmul.f32 %v931, -234.59984
        %v1063 = vadd.f32 %v1055, %v1059
        %v1064 = vadd.f32 %v1056, %v1060
        %v1065 = vadd.f32 %v1057, %v1061
        %v1066 = vadd.f32 %v1058, %v1062
        %v1067 = vadd.f32 %v971, %v1063
        %v1068 = vadd.f32 %v975, %v1064
        %v1069 = vadd.f32 %v981, %v1065
        %v1070 = vadd.f32 %v985, %v1066
        %1071 = vrot.lane.b32.xlu0 %v928, 64
        %v1072 = vpop.permute.xlu0 %1071
        %1073 = vrot.lane.b32.xlu0 %v929, 64
        %v1074 = vpop.permute.xlu0 %1073
        %1075 = vrot.lane.b32.xlu0 %v930, 64
        %v1076 = vpop.permute.xlu0 %1075
        %1077 = vrot.lane.b32.xlu0 %v931, 64
        %v1078 = vpop.permute.xlu0 %1077
        %v1079 = vmul.f32 %v209, %v1035
        %v1080 = vmul.f32 %v209, %v1036
        %v1081 = vmul.f32 %v209, %v1037
        %v1082 = vmul.f32 %v209, %v1038
        %v1083 = vmul.f32 %v214, %v969
        %v1084 = vmul.f32 %v214, %v973
        %v1085 = vmul.f32 %v214, %v979
        %v1086 = vmul.f32 %v214, %v983
        %v1087 = vadd.f32 %v1079, %v1083
        %v1088 = vadd.f32 %v1080, %v1084
        %v1089 = vadd.f32 %v1081, %v1085
        %v1090 = vadd.f32 %v1082, %v1086
        %v1091 = vmul.f32 %v928, %v1087
        %v1092 = vmul.f32 %v929, %v1088
        %v1093 = vmul.f32 %v930, %v1089
        %v1094 = vmul.f32 %v931, %v1090
        %v1095 = vadd.f32 %v1067, %v1091
        %v1096 = vadd.f32 %v1068, %v1092
        %v1097 = vadd.f32 %v1069, %v1093
        %v1098 = vadd.f32 %v1070, %v1094
        %v1099 = vmul.f32 %v219, %v1035
        %v1100 = vmul.f32 %v219, %v1036
        %v1101 = vmul.f32 %v219, %v1037
        %v1102 = vmul.f32 %v219, %v1038
        %v1103 = vmul.f32 %v224, %v969
        %v1104 = vmul.f32 %v224, %v973
        %v1105 = vmul.f32 %v224, %v979
        %v1106 = vmul.f32 %v224, %v983
        %v1107 = vadd.f32 %v1099, %v1103
        %v1108 = vadd.f32 %v1100, %v1104
        %v1109 = vadd.f32 %v1101, %v1105
        %v1110 = vadd.f32 %v1102, %v1106
        %v1111 = vmul.f32 %v1072, %v1107
        %v1112 = vmul.f32 %v1074, %v1108
        %v1113 = vmul.f32 %v1076, %v1109
        %v1114 = vmul.f32 %v1078, %v1110
        %v1115 = vadd.f32 %v1095, %v1111
        %v1116 = vadd.f32 %v1096, %v1112
        %v1117 = vadd.f32 %v1097, %v1113
        %v1118 = vadd.f32 %v1098, %v1114
        %v1119 = vadd.f32 %v920, %v1115
        %v1120 = vadd.f32 %v921, %v1116
        %v1121 = vadd.f32 %v922, %v1117
        %v1122 = vadd.f32 %v923, %v1118
        %v1123 = vmul.f32 %v1119, 0.00016666666
        %v1124 = vmul.f32 %v1120, 0.00016666666
        %v1125 = vmul.f32 %v1121, 0.00016666666
        %v1126 = vmul.f32 %v1122, 0.00016666666
        %v1127 = vadd.f32 %v241, %v1123
        %v1128 = vadd.f32 %v242, %v1124
        %v1129 = vadd.f32 %v243, %v1125
        %v1130 = vadd.f32 %v244, %v1126
        %1131 = vst [vmem:[%s190] sm:$0xff] %v1127
        %1132 = vst [vmem:[%s190 + $0x8] sm:$0xff] %v1128
        %1133 = vst [vmem:[%s190 + $0x10] sm:$0xff] %v1129
        %1134 = vst [vmem:[%s190 + $0x18] sm:$0xff] %v1130
        %v1135 = vpack.c.bf16 %v1128, %v1127
        %v1136 = vpack.c.bf16 %v1130, %v1129
        %1137 = vmatprep.subr.bf16.mxu0 %v296
        %1138 = vmatpush1.bf16.msra.mxu0 %v295
        %1139 = vmatprep.subr.bf16.mxu0 %v298
        %1140 = vmatpush1.bf16.msra.mxu0 %v297
        %1141 = vmatprep.subr.bf16.mxu0 %v300
        %1142 = vmatpush1.bf16.msra.mxu0 %v299
        %1143 = vmatprep.subr.bf16.mxu0 %v302
        %1144 = vmatpush1.bf16.msra.mxu0 %v301
        %1145 = vmatprep.subr.bf16.mxu0 %v304
        %1146 = vmatpush1.bf16.msra.mxu0 %v303
        %1147 = vmatprep.subr.bf16.mxu0 %v306
        %1148 = vmatpush1.bf16.msra.mxu0 %v305
        %1149 = vmatprep.subr.bf16.mxu0 %v308
        %1150 = vmatpush1.bf16.msra.mxu0 %v307
        %1151 = vmatprep.subr.bf16.mxu0 %v310
        %1152 = vmatpush1.bf16.msra.mxu0 %v309
        %1153 = vmatprep.subr.bf16.mxu0 0
        %1154 = vmatpush1.bf16.msra.mxu0 0
        %1155 = vmatprep.subr.bf16.mxu0 0
        %1156 = vmatpush1.bf16.msra.mxu0 0
        %1157 = vmatprep.subr.bf16.mxu0 0
        %1158 = vmatpush1.bf16.msra.mxu0 0
        %1159 = vmatprep.subr.bf16.mxu0 0
        %1160 = vmatpush1.bf16.msra.mxu0 0
        %1161 = vmatprep.subr.bf16.mxu0 0
        %1162 = vmatpush1.bf16.msra.mxu0 0
        %1163 = vmatprep.subr.bf16.mxu0 0
        %1164 = vmatpush1.bf16.msra.mxu0 0
        %1165 = vmatprep.subr.bf16.mxu0 0
        %1166 = vmatpush1.bf16.msra.mxu0 0
        %1167 = vmatprep.subr.bf16.mxu0 0
        %1168 = vmatpush1.bf16.msra.mxu0 0
        %1169 = vmatprep.mubr.bf16.mxu0 0
        %1170 = vmatmul.mubr.bf16.gmra.mrb[0].mxu0 %v1135
        %v1171 = vpop.f32.mrb[0].mxu0
        %v1172 = vadd.f32 0.0, %v1171
        %v1173 = vpop.f32.mrb[0].mxu0
        %v1174 = vadd.f32 0.0, %v1173
        %v1175 = vpop.f32.mrb[0].mxu0
        %v1176 = vadd.f32 0.0, %v1175
        %v1177 = vpop.f32.mrb[0].mxu0
        %v1178 = vadd.f32 0.0, %v1177
        %1179 = vmatprep.mubr.bf16.mxu0 0
        %1180 = vmatmul.mubr.bf16.gmra.mrb[0].mxu0 %v1136
        %v1181 = vpop.f32.mrb[0].mxu0
        %v1182 = vadd.f32 0.0, %v1181
        %v1183 = vpop.f32.mrb[0].mxu0
        %v1184 = vadd.f32 0.0, %v1183
        %v1185 = vpop.f32.mrb[0].mxu0
        %v1186 = vadd.f32 0.0, %v1185
        %v1187 = vpop.f32.mrb[0].mxu0
        %v1188 = vadd.f32 0.0, %v1187
        %1189 = vdwg.mxu0
        %v1190 = vrot.slane %v1127, 7
        %v1191 = vrot.slane %v1128, 7
        %v1192 = vrot.slane %v1129, 7
        %v1193 = vrot.slane %v1130, 7
        %v1194 = vsel %vm386, %v1192, %v1193
        %v1195 = vsel %vm386, %v1191, %v1192
        %v1196 = vsel %vm386, %v1190, %v1191
        %v1197 = vsel %vm386, %v1193, %v1190
        %v1198 = vrot.slane %v1127, 6
        %v1199 = vrot.slane %v1128, 6
        %v1200 = vrot.slane %v1129, 6
        %v1201 = vrot.slane %v1130, 6
        %v1202 = vsel %vm395, %v1200, %v1201
        %v1203 = vsel %vm395, %v1199, %v1200
        %v1204 = vsel %vm395, %v1198, %v1199
        %v1205 = vsel %vm395, %v1201, %v1198
        %v1206 = vrot.slane %v1127, 1
        %v1207 = vrot.slane %v1128, 1
        %v1208 = vrot.slane %v1129, 1
        %v1209 = vrot.slane %v1130, 1
        %v1210 = vsel %vm404, %v1208, %v1209
        %v1211 = vsel %vm404, %v1207, %v1208
        %v1212 = vsel %vm404, %v1206, %v1207
        %v1213 = vsel %vm404, %v1209, %v1206
        %v1214 = vrot.slane %v1127, 2
        %v1215 = vrot.slane %v1128, 2
        %v1216 = vrot.slane %v1129, 2
        %v1217 = vrot.slane %v1130, 2
        %v1218 = vsel %vm413, %v1216, %v1217
        %v1219 = vsel %vm413, %v1215, %v1216
        %v1220 = vsel %vm413, %v1214, %v1215
        %v1221 = vsel %vm413, %v1217, %v1214
        %v1222 = vsub.f32 %v1205, %v1220
        %v1223 = vsub.f32 %v1204, %v1219
        %v1224 = vsub.f32 %v1203, %v1218
        %v1225 = vsub.f32 %v1202, %v1221
        %v1226 = vmul.f32 %v1222, 8.333333
        %v1227 = vmul.f32 %v1223, 8.333333
        %v1228 = vmul.f32 %v1224, 8.333333
        %v1229 = vmul.f32 %v1225, 8.333333
        %v1230 = vsub.f32 %v1212, %v1197
        %v1231 = vsub.f32 %v1211, %v1196
        %v1232 = vsub.f32 %v1210, %v1195
        %v1233 = vsub.f32 %v1213, %v1194
        %v1234 = vmul.f32 %v1230, 66.666664
        %v1235 = vmul.f32 %v1231, 66.666664
        %v1236 = vmul.f32 %v1232, 66.666664
        %v1237 = vmul.f32 %v1233, 66.666664
        %v1238 = vadd.f32 %v1226, %v1234
        %v1239 = vadd.f32 %v1227, %v1235
        %v1240 = vadd.f32 %v1228, %v1236
        %v1241 = vadd.f32 %v1229, %v1237
        %v1242 = vadd.f32 %v1205, %v1220
        %v1243 = vadd.f32 %v1204, %v1219
        %v1244 = vadd.f32 %v1203, %v1218
        %v1245 = vadd.f32 %v1202, %v1221
        %v1246 = vmul.f32 %v1242, -7.8199944
        %v1247 = vmul.f32 %v1243, -7.8199944
        %v1248 = vmul.f32 %v1244, -7.8199944
        %v1249 = vmul.f32 %v1245, -7.8199944
        %v1250 = vadd.f32 %v1197, %v1212
        %v1251 = vadd.f32 %v1196, %v1211
        %v1252 = vadd.f32 %v1195, %v1210
        %v1253 = vadd.f32 %v1194, %v1213
        %v1254 = vmul.f32 %v1250, 125.11991
        %v1255 = vmul.f32 %v1251, 125.11991
        %v1256 = vmul.f32 %v1252, 125.11991
        %v1257 = vmul.f32 %v1253, 125.11991
        %v1258 = vadd.f32 %v1246, %v1254
        %v1259 = vadd.f32 %v1247, %v1255
        %v1260 = vadd.f32 %v1248, %v1256
        %v1261 = vadd.f32 %v1249, %v1257
        %v1262 = vmul.f32 %v1127, -234.59984
        %v1263 = vmul.f32 %v1128, -234.59984
        %v1264 = vmul.f32 %v1129, -234.59984
        %v1265 = vmul.f32 %v1130, -234.59984
        %v1266 = vadd.f32 %v1258, %v1262
        %v1267 = vadd.f32 %v1259, %v1263
        %v1268 = vadd.f32 %v1260, %v1264
        %v1269 = vadd.f32 %v1261, %v1265
        %v1270 = vadd.f32 %v1174, %v1266
        %v1271 = vadd.f32 %v1178, %v1267
        %v1272 = vadd.f32 %v1184, %v1268
        %v1273 = vadd.f32 %v1188, %v1269
        %1274 = vrot.lane.b32.xlu0 %v1127, 64
        %v1275 = vpop.permute.xlu0 %1274
        %1276 = vrot.lane.b32.xlu0 %v1128, 64
        %v1277 = vpop.permute.xlu0 %1276
        %1278 = vrot.lane.b32.xlu0 %v1129, 64
        %v1279 = vpop.permute.xlu0 %1278
        %1280 = vrot.lane.b32.xlu0 %v1130, 64
        %v1281 = vpop.permute.xlu0 %1280
        %v1282 = vmul.f32 %v209, %v1238
        %v1283 = vmul.f32 %v209, %v1239
        %v1284 = vmul.f32 %v209, %v1240
        %v1285 = vmul.f32 %v209, %v1241
        %v1286 = vmul.f32 %v214, %v1172
        %v1287 = vmul.f32 %v214, %v1176
        %v1288 = vmul.f32 %v214, %v1182
        %v1289 = vmul.f32 %v214, %v1186
        %v1290 = vadd.f32 %v1282, %v1286
        %v1291 = vadd.f32 %v1283, %v1287
        %v1292 = vadd.f32 %v1284, %v1288
        %v1293 = vadd.f32 %v1285, %v1289
        %v1294 = vmul.f32 %v1127, %v1290
        %v1295 = vmul.f32 %v1128, %v1291
        %v1296 = vmul.f32 %v1129, %v1292
        %v1297 = vmul.f32 %v1130, %v1293
        %v1298 = vadd.f32 %v1270, %v1294
        %v1299 = vadd.f32 %v1271, %v1295
        %v1300 = vadd.f32 %v1272, %v1296
        %v1301 = vadd.f32 %v1273, %v1297
        %v1302 = vmul.f32 %v219, %v1238
        %v1303 = vmul.f32 %v219, %v1239
        %v1304 = vmul.f32 %v219, %v1240
        %v1305 = vmul.f32 %v219, %v1241
        %v1306 = vmul.f32 %v224, %v1172
        %v1307 = vmul.f32 %v224, %v1176
        %v1308 = vmul.f32 %v224, %v1182
        %v1309 = vmul.f32 %v224, %v1186
        %v1310 = vadd.f32 %v1302, %v1306
        %v1311 = vadd.f32 %v1303, %v1307
        %v1312 = vadd.f32 %v1304, %v1308
        %v1313 = vadd.f32 %v1305, %v1309
        %v1314 = vmul.f32 %v1275, %v1310
        %v1315 = vmul.f32 %v1277, %v1311
        %v1316 = vmul.f32 %v1279, %v1312
        %v1317 = vmul.f32 %v1281, %v1313
        %v1318 = vadd.f32 %v1298, %v1314
        %v1319 = vadd.f32 %v1299, %v1315
        %v1320 = vadd.f32 %v1300, %v1316
        %v1321 = vadd.f32 %v1301, %v1317
        %v1322 = vmul.f32 %v1318, 0.0005
        %v1323 = vmul.f32 %v1319, 0.0005
        %v1324 = vmul.f32 %v1320, 0.0005
        %v1325 = vmul.f32 %v1321, 0.0005
        %v1326 = vadd.f32 %v1127, %v1322
        %v1327 = vadd.f32 %v1128, %v1323
        %v1328 = vadd.f32 %v1129, %v1324
        %v1329 = vadd.f32 %v1130, %v1325
        %v1330 = vpack.c.bf16 %v1327, %v1326
        %v1331 = vpack.c.bf16 %v1329, %v1328
        %1332 = vmatprep.subr.bf16.mxu0 %v296
        %1333 = vmatpush1.bf16.msra.mxu0 %v295
        %1334 = vmatprep.subr.bf16.mxu0 %v298
        %1335 = vmatpush1.bf16.msra.mxu0 %v297
        %1336 = vmatprep.subr.bf16.mxu0 %v300
        %1337 = vmatpush1.bf16.msra.mxu0 %v299
        %1338 = vmatprep.subr.bf16.mxu0 %v302
        %1339 = vmatpush1.bf16.msra.mxu0 %v301
        %1340 = vmatprep.subr.bf16.mxu0 %v304
        %1341 = vmatpush1.bf16.msra.mxu0 %v303
        %1342 = vmatprep.subr.bf16.mxu0 %v306
        %1343 = vmatpush1.bf16.msra.mxu0 %v305
        %1344 = vmatprep.subr.bf16.mxu0 %v308
        %1345 = vmatpush1.bf16.msra.mxu0 %v307
        %1346 = vmatprep.subr.bf16.mxu0 %v310
        %1347 = vmatpush1.bf16.msra.mxu0 %v309
        %1348 = vmatprep.subr.bf16.mxu0 0
        %1349 = vmatpush1.bf16.msra.mxu0 0
        %1350 = vmatprep.subr.bf16.mxu0 0
        %1351 = vmatpush1.bf16.msra.mxu0 0
        %1352 = vmatprep.subr.bf16.mxu0 0
        %1353 = vmatpush1.bf16.msra.mxu0 0
        %1354 = vmatprep.subr.bf16.mxu0 0
        %1355 = vmatpush1.bf16.msra.mxu0 0
        %1356 = vmatprep.subr.bf16.mxu0 0
        %1357 = vmatpush1.bf16.msra.mxu0 0
        %1358 = vmatprep.subr.bf16.mxu0 0
        %1359 = vmatpush1.bf16.msra.mxu0 0
        %1360 = vmatprep.subr.bf16.mxu0 0
        %1361 = vmatpush1.bf16.msra.mxu0 0
        %1362 = vmatprep.subr.bf16.mxu0 0
        %1363 = vmatpush1.bf16.msra.mxu0 0
        %1364 = vmatprep.mubr.bf16.mxu0 0
        %1365 = vmatmul.mubr.bf16.gmra.mrb[0].mxu0 %v1330
        %v1366 = vpop.f32.mrb[0].mxu0
        %v1367 = vadd.f32 0.0, %v1366
        %v1368 = vpop.f32.mrb[0].mxu0
        %v1369 = vadd.f32 0.0, %v1368
        %v1370 = vpop.f32.mrb[0].mxu0
        %v1371 = vadd.f32 0.0, %v1370
        %v1372 = vpop.f32.mrb[0].mxu0
        %v1373 = vadd.f32 0.0, %v1372
        %1374 = vmatprep.mubr.bf16.mxu0 0
        %1375 = vmatmul.mubr.bf16.gmra.mrb[0].mxu0 %v1331
        %v1376 = vpop.f32.mrb[0].mxu0
        %v1377 = vadd.f32 0.0, %v1376
        %v1378 = vpop.f32.mrb[0].mxu0
        %v1379 = vadd.f32 0.0, %v1378
        %v1380 = vpop.f32.mrb[0].mxu0
        %v1381 = vadd.f32 0.0, %v1380
        %v1382 = vpop.f32.mrb[0].mxu0
        %v1383 = vadd.f32 0.0, %v1382
        %1384 = vdwg.mxu0
        %v1385 = vrot.slane %v1326, 7
        %v1386 = vrot.slane %v1327, 7
        %v1387 = vrot.slane %v1328, 7
        %v1388 = vrot.slane %v1329, 7
        %v1389 = vsel %vm386, %v1387, %v1388
        %v1390 = vsel %vm386, %v1386, %v1387
        %v1391 = vsel %vm386, %v1385, %v1386
        %v1392 = vsel %vm386, %v1388, %v1385
        %v1393 = vrot.slane %v1326, 6
        %v1394 = vrot.slane %v1327, 6
        %v1395 = vrot.slane %v1328, 6
        %v1396 = vrot.slane %v1329, 6
        %v1397 = vsel %vm395, %v1395, %v1396
        %v1398 = vsel %vm395, %v1394, %v1395
        %v1399 = vsel %vm395, %v1393, %v1394
        %v1400 = vsel %vm395, %v1396, %v1393
        %v1401 = vrot.slane %v1326, 1
        %v1402 = vrot.slane %v1327, 1
        %v1403 = vrot.slane %v1328, 1
        %v1404 = vrot.slane %v1329, 1
        %v1405 = vsel %vm404, %v1403, %v1404
        %v1406 = vsel %vm404, %v1402, %v1403
        %v1407 = vsel %vm404, %v1401, %v1402
        %v1408 = vsel %vm404, %v1404, %v1401
        %v1409 = vrot.slane %v1326, 2
        %v1410 = vrot.slane %v1327, 2
        %v1411 = vrot.slane %v1328, 2
        %v1412 = vrot.slane %v1329, 2
        %v1413 = vsel %vm413, %v1411, %v1412
        %v1414 = vsel %vm413, %v1410, %v1411
        %v1415 = vsel %vm413, %v1409, %v1410
        %v1416 = vsel %vm413, %v1412, %v1409
        %v1417 = vsub.f32 %v1400, %v1415
        %v1418 = vsub.f32 %v1399, %v1414
        %v1419 = vsub.f32 %v1398, %v1413
        %v1420 = vsub.f32 %v1397, %v1416
        %v1421 = vmul.f32 %v1417, 8.333333
        %v1422 = vmul.f32 %v1418, 8.333333
        %v1423 = vmul.f32 %v1419, 8.333333
        %v1424 = vmul.f32 %v1420, 8.333333
        %v1425 = vsub.f32 %v1407, %v1392
        %v1426 = vsub.f32 %v1406, %v1391
        %v1427 = vsub.f32 %v1405, %v1390
        %v1428 = vsub.f32 %v1408, %v1389
        %v1429 = vmul.f32 %v1425, 66.666664
        %v1430 = vmul.f32 %v1426, 66.666664
        %v1431 = vmul.f32 %v1427, 66.666664
        %v1432 = vmul.f32 %v1428, 66.666664
        %v1433 = vadd.f32 %v1421, %v1429
        %v1434 = vadd.f32 %v1422, %v1430
        %v1435 = vadd.f32 %v1423, %v1431
        %v1436 = vadd.f32 %v1424, %v1432
        %v1437 = vadd.f32 %v1400, %v1415
        %v1438 = vadd.f32 %v1399, %v1414
        %v1439 = vadd.f32 %v1398, %v1413
        %v1440 = vadd.f32 %v1397, %v1416
        %v1441 = vmul.f32 %v1437, -7.8199944
        %v1442 = vmul.f32 %v1438, -7.8199944
        %v1443 = vmul.f32 %v1439, -7.8199944
        %v1444 = vmul.f32 %v1440, -7.8199944
        %v1445 = vadd.f32 %v1392, %v1407
        %v1446 = vadd.f32 %v1391, %v1406
        %v1447 = vadd.f32 %v1390, %v1405
        %v1448 = vadd.f32 %v1389, %v1408
        %v1449 = vmul.f32 %v1445, 125.11991
        %v1450 = vmul.f32 %v1446, 125.11991
        %v1451 = vmul.f32 %v1447, 125.11991
        %v1452 = vmul.f32 %v1448, 125.11991
        %v1453 = vadd.f32 %v1441, %v1449
        %v1454 = vadd.f32 %v1442, %v1450
        %v1455 = vadd.f32 %v1443, %v1451
        %v1456 = vadd.f32 %v1444, %v1452
        %v1457 = vmul.f32 %v1326, -234.59984
        %v1458 = vmul.f32 %v1327, -234.59984
        %v1459 = vmul.f32 %v1328, -234.59984
        %v1460 = vmul.f32 %v1329, -234.59984
        %v1461 = vadd.f32 %v1453, %v1457
        %v1462 = vadd.f32 %v1454, %v1458
        %v1463 = vadd.f32 %v1455, %v1459
        %v1464 = vadd.f32 %v1456, %v1460
        %v1465 = vadd.f32 %v1369, %v1461
        %v1466 = vadd.f32 %v1373, %v1462
        %v1467 = vadd.f32 %v1379, %v1463
        %v1468 = vadd.f32 %v1383, %v1464
        %1469 = vrot.lane.b32.xlu0 %v1326, 64
        %v1470 = vpop.permute.xlu0 %1469
        %1471 = vrot.lane.b32.xlu0 %v1327, 64
        %v1472 = vpop.permute.xlu0 %1471
        %1473 = vrot.lane.b32.xlu0 %v1328, 64
        %v1474 = vpop.permute.xlu0 %1473
        %1475 = vrot.lane.b32.xlu0 %v1329, 64
        %v1476 = vpop.permute.xlu0 %1475
        %v1477 = vmul.f32 %v209, %v1433
        %v1478 = vmul.f32 %v209, %v1434
        %v1479 = vmul.f32 %v209, %v1435
        %v1480 = vmul.f32 %v209, %v1436
        %v1481 = vmul.f32 %v214, %v1367
        %v1482 = vmul.f32 %v214, %v1371
        %v1483 = vmul.f32 %v214, %v1377
        %v1484 = vmul.f32 %v214, %v1381
        %v1485 = vadd.f32 %v1477, %v1481
        %v1486 = vadd.f32 %v1478, %v1482
        %v1487 = vadd.f32 %v1479, %v1483
        %v1488 = vadd.f32 %v1480, %v1484
        %v1489 = vmul.f32 %v1326, %v1485
        %v1490 = vmul.f32 %v1327, %v1486
        %v1491 = vmul.f32 %v1328, %v1487
        %v1492 = vmul.f32 %v1329, %v1488
        %v1493 = vadd.f32 %v1465, %v1489
        %v1494 = vadd.f32 %v1466, %v1490
        %v1495 = vadd.f32 %v1467, %v1491
        %v1496 = vadd.f32 %v1468, %v1492
        %v1497 = vmul.f32 %v219, %v1433
        %v1498 = vmul.f32 %v219, %v1434
        %v1499 = vmul.f32 %v219, %v1435
        %v1500 = vmul.f32 %v219, %v1436
        %v1501 = vmul.f32 %v224, %v1367
        %v1502 = vmul.f32 %v224, %v1371
        %v1503 = vmul.f32 %v224, %v1377
        %v1504 = vmul.f32 %v224, %v1381
        %v1505 = vadd.f32 %v1497, %v1501
        %v1506 = vadd.f32 %v1498, %v1502
        %v1507 = vadd.f32 %v1499, %v1503
        %v1508 = vadd.f32 %v1500, %v1504
        %v1509 = vmul.f32 %v1470, %v1505
        %v1510 = vmul.f32 %v1472, %v1506
        %v1511 = vmul.f32 %v1474, %v1507
        %v1512 = vmul.f32 %v1476, %v1508
        %v1513 = vadd.f32 %v1493, %v1509
        %v1514 = vadd.f32 %v1494, %v1510
        %v1515 = vadd.f32 %v1495, %v1511
        %v1516 = vadd.f32 %v1496, %v1512
        %v1517 = vmul.f32 %v1513, 2.0
        %v1518 = vmul.f32 %v1514, 2.0
        %v1519 = vmul.f32 %v1515, 2.0
        %v1520 = vmul.f32 %v1516, 2.0
        %v1521 = vadd.f32 %v1318, %v1517
        %v1522 = vadd.f32 %v1319, %v1518
        %v1523 = vadd.f32 %v1320, %v1519
        %v1524 = vadd.f32 %v1321, %v1520
        %v1525 = vmul.f32 %v1513, 0.0005
        %v1526 = vmul.f32 %v1514, 0.0005
        %v1527 = vmul.f32 %v1515, 0.0005
        %v1528 = vmul.f32 %v1516, 0.0005
        %v1529 = vadd.f32 %v1127, %v1525
        %v1530 = vadd.f32 %v1128, %v1526
        %v1531 = vadd.f32 %v1129, %v1527
        %v1532 = vadd.f32 %v1130, %v1528
        %v1533 = vpack.c.bf16 %v1530, %v1529
        %v1534 = vpack.c.bf16 %v1532, %v1531
        %1535 = vmatprep.subr.bf16.mxu0 %v296
        %1536 = vmatpush1.bf16.msra.mxu0 %v295
        %1537 = vmatprep.subr.bf16.mxu0 %v298
        %1538 = vmatpush1.bf16.msra.mxu0 %v297
        %1539 = vmatprep.subr.bf16.mxu0 %v300
        %1540 = vmatpush1.bf16.msra.mxu0 %v299
        %1541 = vmatprep.subr.bf16.mxu0 %v302
        %1542 = vmatpush1.bf16.msra.mxu0 %v301
        %1543 = vmatprep.subr.bf16.mxu0 %v304
        %1544 = vmatpush1.bf16.msra.mxu0 %v303
        %1545 = vmatprep.subr.bf16.mxu0 %v306
        %1546 = vmatpush1.bf16.msra.mxu0 %v305
        %1547 = vmatprep.subr.bf16.mxu0 %v308
        %1548 = vmatpush1.bf16.msra.mxu0 %v307
        %1549 = vmatprep.subr.bf16.mxu0 %v310
        %1550 = vmatpush1.bf16.msra.mxu0 %v309
        %1551 = vmatprep.subr.bf16.mxu0 0
        %1552 = vmatpush1.bf16.msra.mxu0 0
        %1553 = vmatprep.subr.bf16.mxu0 0
        %1554 = vmatpush1.bf16.msra.mxu0 0
        %1555 = vmatprep.subr.bf16.mxu0 0
        %1556 = vmatpush1.bf16.msra.mxu0 0
        %1557 = vmatprep.subr.bf16.mxu0 0
        %1558 = vmatpush1.bf16.msra.mxu0 0
        %1559 = vmatprep.subr.bf16.mxu0 0
        %1560 = vmatpush1.bf16.msra.mxu0 0
        %1561 = vmatprep.subr.bf16.mxu0 0
        %1562 = vmatpush1.bf16.msra.mxu0 0
        %1563 = vmatprep.subr.bf16.mxu0 0
        %1564 = vmatpush1.bf16.msra.mxu0 0
        %1565 = vmatprep.subr.bf16.mxu0 0
        %1566 = vmatpush1.bf16.msra.mxu0 0
        %1567 = vmatprep.mubr.bf16.mxu0 0
        %1568 = vmatmul.mubr.bf16.gmra.mrb[0].mxu0 %v1533
        %v1569 = vpop.f32.mrb[0].mxu0
        %v1570 = vadd.f32 0.0, %v1569
        %v1571 = vpop.f32.mrb[0].mxu0
        %v1572 = vadd.f32 0.0, %v1571
        %v1573 = vpop.f32.mrb[0].mxu0
        %v1574 = vadd.f32 0.0, %v1573
        %v1575 = vpop.f32.mrb[0].mxu0
        %v1576 = vadd.f32 0.0, %v1575
        %1577 = vmatprep.mubr.bf16.mxu0 0
        %1578 = vmatmul.mubr.bf16.gmra.mrb[0].mxu0 %v1534
        %v1579 = vpop.f32.mrb[0].mxu0
        %v1580 = vadd.f32 0.0, %v1579
        %v1581 = vpop.f32.mrb[0].mxu0
        %v1582 = vadd.f32 0.0, %v1581
        %v1583 = vpop.f32.mrb[0].mxu0
        %v1584 = vadd.f32 0.0, %v1583
        %v1585 = vpop.f32.mrb[0].mxu0
        %v1586 = vadd.f32 0.0, %v1585
        %1587 = vdwg.mxu0
        %v1588 = vrot.slane %v1529, 7
        %v1589 = vrot.slane %v1530, 7
        %v1590 = vrot.slane %v1531, 7
        %v1591 = vrot.slane %v1532, 7
        %v1592 = vsel %vm386, %v1590, %v1591
        %v1593 = vsel %vm386, %v1589, %v1590
        %v1594 = vsel %vm386, %v1588, %v1589
        %v1595 = vsel %vm386, %v1591, %v1588
        %v1596 = vrot.slane %v1529, 6
        %v1597 = vrot.slane %v1530, 6
        %v1598 = vrot.slane %v1531, 6
        %v1599 = vrot.slane %v1532, 6
        %v1600 = vsel %vm395, %v1598, %v1599
        %v1601 = vsel %vm395, %v1597, %v1598
        %v1602 = vsel %vm395, %v1596, %v1597
        %v1603 = vsel %vm395, %v1599, %v1596
        %v1604 = vrot.slane %v1529, 1
        %v1605 = vrot.slane %v1530, 1
        %v1606 = vrot.slane %v1531, 1
        %v1607 = vrot.slane %v1532, 1
        %v1608 = vsel %vm404, %v1606, %v1607
        %v1609 = vsel %vm404, %v1605, %v1606
        %v1610 = vsel %vm404, %v1604, %v1605
        %v1611 = vsel %vm404, %v1607, %v1604
        %v1612 = vrot.slane %v1529, 2
        %v1613 = vrot.slane %v1530, 2
        %v1614 = vrot.slane %v1531, 2
        %v1615 = vrot.slane %v1532, 2
        %v1616 = vsel %vm413, %v1614, %v1615
        %v1617 = vsel %vm413, %v1613, %v1614
        %v1618 = vsel %vm413, %v1612, %v1613
        %v1619 = vsel %vm413, %v1615, %v1612
        %v1620 = vsub.f32 %v1603, %v1618
        %v1621 = vsub.f32 %v1602, %v1617
        %v1622 = vsub.f32 %v1601, %v1616
        %v1623 = vsub.f32 %v1600, %v1619
        %v1624 = vmul.f32 %v1620, 8.333333
        %v1625 = vmul.f32 %v1621, 8.333333
        %v1626 = vmul.f32 %v1622, 8.333333
        %v1627 = vmul.f32 %v1623, 8.333333
        %v1628 = vsub.f32 %v1610, %v1595
        %v1629 = vsub.f32 %v1609, %v1594
        %v1630 = vsub.f32 %v1608, %v1593
        %v1631 = vsub.f32 %v1611, %v1592
        %v1632 = vmul.f32 %v1628, 66.666664
        %v1633 = vmul.f32 %v1629, 66.666664
        %v1634 = vmul.f32 %v1630, 66.666664
        %v1635 = vmul.f32 %v1631, 66.666664
        %v1636 = vadd.f32 %v1624, %v1632
        %v1637 = vadd.f32 %v1625, %v1633
        %v1638 = vadd.f32 %v1626, %v1634
        %v1639 = vadd.f32 %v1627, %v1635
        %v1640 = vadd.f32 %v1603, %v1618
        %v1641 = vadd.f32 %v1602, %v1617
        %v1642 = vadd.f32 %v1601, %v1616
        %v1643 = vadd.f32 %v1600, %v1619
        %v1644 = vmul.f32 %v1640, -7.8199944
        %v1645 = vmul.f32 %v1641, -7.8199944
        %v1646 = vmul.f32 %v1642, -7.8199944
        %v1647 = vmul.f32 %v1643, -7.8199944
        %v1648 = vadd.f32 %v1595, %v1610
        %v1649 = vadd.f32 %v1594, %v1609
        %v1650 = vadd.f32 %v1593, %v1608
        %v1651 = vadd.f32 %v1592, %v1611
        %v1652 = vmul.f32 %v1648, 125.11991
        %v1653 = vmul.f32 %v1649, 125.11991
        %v1654 = vmul.f32 %v1650, 125.11991
        %v1655 = vmul.f32 %v1651, 125.11991
        %v1656 = vadd.f32 %v1644, %v1652
        %v1657 = vadd.f32 %v1645, %v1653
        %v1658 = vadd.f32 %v1646, %v1654
        %v1659 = vadd.f32 %v1647, %v1655
        %v1660 = vmul.f32 %v1529, -234.59984
        %v1661 = vmul.f32 %v1530, -234.59984
        %v1662 = vmul.f32 %v1531, -234.59984
        %v1663 = vmul.f32 %v1532, -234.59984
        %v1664 = vadd.f32 %v1656, %v1660
        %v1665 = vadd.f32 %v1657, %v1661
        %v1666 = vadd.f32 %v1658, %v1662
        %v1667 = vadd.f32 %v1659, %v1663
        %v1668 = vadd.f32 %v1572, %v1664
        %v1669 = vadd.f32 %v1576, %v1665
        %v1670 = vadd.f32 %v1582, %v1666
        %v1671 = vadd.f32 %v1586, %v1667
        %1672 = vrot.lane.b32.xlu0 %v1529, 64
        %v1673 = vpop.permute.xlu0 %1672
        %1674 = vrot.lane.b32.xlu0 %v1530, 64
        %v1675 = vpop.permute.xlu0 %1674
        %1676 = vrot.lane.b32.xlu0 %v1531, 64
        %v1677 = vpop.permute.xlu0 %1676
        %1678 = vrot.lane.b32.xlu0 %v1532, 64
        %v1679 = vpop.permute.xlu0 %1678
        %v1680 = vmul.f32 %v209, %v1636
        %v1681 = vmul.f32 %v209, %v1637
        %v1682 = vmul.f32 %v209, %v1638
        %v1683 = vmul.f32 %v209, %v1639
        %v1684 = vmul.f32 %v214, %v1570
        %v1685 = vmul.f32 %v214, %v1574
        %v1686 = vmul.f32 %v214, %v1580
        %v1687 = vmul.f32 %v214, %v1584
        %v1688 = vadd.f32 %v1680, %v1684
        %v1689 = vadd.f32 %v1681, %v1685
        %v1690 = vadd.f32 %v1682, %v1686
        %v1691 = vadd.f32 %v1683, %v1687
        %v1692 = vmul.f32 %v1529, %v1688
        %v1693 = vmul.f32 %v1530, %v1689
        %v1694 = vmul.f32 %v1531, %v1690
        %v1695 = vmul.f32 %v1532, %v1691
        %v1696 = vadd.f32 %v1668, %v1692
        %v1697 = vadd.f32 %v1669, %v1693
        %v1698 = vadd.f32 %v1670, %v1694
        %v1699 = vadd.f32 %v1671, %v1695
        %v1700 = vmul.f32 %v219, %v1636
        %v1701 = vmul.f32 %v219, %v1637
        %v1702 = vmul.f32 %v219, %v1638
        %v1703 = vmul.f32 %v219, %v1639
        %v1704 = vmul.f32 %v224, %v1570
        %v1705 = vmul.f32 %v224, %v1574
        %v1706 = vmul.f32 %v224, %v1580
        %v1707 = vmul.f32 %v224, %v1584
        %v1708 = vadd.f32 %v1700, %v1704
        %v1709 = vadd.f32 %v1701, %v1705
        %v1710 = vadd.f32 %v1702, %v1706
        %v1711 = vadd.f32 %v1703, %v1707
        %v1712 = vmul.f32 %v1673, %v1708
        %v1713 = vmul.f32 %v1675, %v1709
        %v1714 = vmul.f32 %v1677, %v1710
        %v1715 = vmul.f32 %v1679, %v1711
        %v1716 = vadd.f32 %v1696, %v1712
        %v1717 = vadd.f32 %v1697, %v1713
        %v1718 = vadd.f32 %v1698, %v1714
        %v1719 = vadd.f32 %v1699, %v1715
        %v1720 = vmul.f32 %v1716, 2.0
        %v1721 = vmul.f32 %v1717, 2.0
        %v1722 = vmul.f32 %v1718, 2.0
        %v1723 = vmul.f32 %v1719, 2.0
        %v1724 = vadd.f32 %v1521, %v1720
        %v1725 = vadd.f32 %v1522, %v1721
        %v1726 = vadd.f32 %v1523, %v1722
        %v1727 = vadd.f32 %v1524, %v1723
        %v1728 = vmul.f32 %v1716, 0.001
        %v1729 = vmul.f32 %v1717, 0.001
        %v1730 = vmul.f32 %v1718, 0.001
        %v1731 = vmul.f32 %v1719, 0.001
        %v1732 = vadd.f32 %v1127, %v1728
        %v1733 = vadd.f32 %v1128, %v1729
        %v1734 = vadd.f32 %v1129, %v1730
        %v1735 = vadd.f32 %v1130, %v1731
        %v1736 = vpack.c.bf16 %v1733, %v1732
        %v1737 = vpack.c.bf16 %v1735, %v1734
        %1738 = vmatprep.subr.bf16.mxu0 %v296
        %1739 = vmatpush1.bf16.msra.mxu0 %v295
        %1740 = vmatprep.subr.bf16.mxu0 %v298
        %1741 = vmatpush1.bf16.msra.mxu0 %v297
        %1742 = vmatprep.subr.bf16.mxu0 %v300
        %1743 = vmatpush1.bf16.msra.mxu0 %v299
        %1744 = vmatprep.subr.bf16.mxu0 %v302
        %1745 = vmatpush1.bf16.msra.mxu0 %v301
        %1746 = vmatprep.subr.bf16.mxu0 %v304
        %1747 = vmatpush1.bf16.msra.mxu0 %v303
        %1748 = vmatprep.subr.bf16.mxu0 %v306
        %1749 = vmatpush1.bf16.msra.mxu0 %v305
        %1750 = vmatprep.subr.bf16.mxu0 %v308
        %1751 = vmatpush1.bf16.msra.mxu0 %v307
        %1752 = vmatprep.subr.bf16.mxu0 %v310
        %1753 = vmatpush1.bf16.msra.mxu0 %v309
        %1754 = vmatprep.subr.bf16.mxu0 0
        %1755 = vmatpush1.bf16.msra.mxu0 0
        %1756 = vmatprep.subr.bf16.mxu0 0
        %1757 = vmatpush1.bf16.msra.mxu0 0
        %1758 = vmatprep.subr.bf16.mxu0 0
        %1759 = vmatpush1.bf16.msra.mxu0 0
        %1760 = vmatprep.subr.bf16.mxu0 0
        %1761 = vmatpush1.bf16.msra.mxu0 0
        %1762 = vmatprep.subr.bf16.mxu0 0
        %1763 = vmatpush1.bf16.msra.mxu0 0
        %1764 = vmatprep.subr.bf16.mxu0 0
        %1765 = vmatpush1.bf16.msra.mxu0 0
        %1766 = vmatprep.subr.bf16.mxu0 0
        %1767 = vmatpush1.bf16.msra.mxu0 0
        %1768 = vmatprep.subr.bf16.mxu0 0
        %1769 = vmatpush1.bf16.msra.mxu0 0
        %1770 = vmatprep.mubr.bf16.mxu0 0
        %1771 = vmatmul.mubr.bf16.gmra.mrb[0].mxu0 %v1736
        %v1772 = vpop.f32.mrb[0].mxu0
        %v1773 = vadd.f32 0.0, %v1772
        %v1774 = vpop.f32.mrb[0].mxu0
        %v1775 = vadd.f32 0.0, %v1774
        %v1776 = vpop.f32.mrb[0].mxu0
        %v1777 = vadd.f32 0.0, %v1776
        %v1778 = vpop.f32.mrb[0].mxu0
        %v1779 = vadd.f32 0.0, %v1778
        %1780 = vmatprep.mubr.bf16.mxu0 0
        %1781 = vmatmul.mubr.bf16.gmra.mrb[0].mxu0 %v1737
        %v1782 = vpop.f32.mrb[0].mxu0
        %v1783 = vadd.f32 0.0, %v1782
        %v1784 = vpop.f32.mrb[0].mxu0
        %v1785 = vadd.f32 0.0, %v1784
        %v1786 = vpop.f32.mrb[0].mxu0
        %v1787 = vadd.f32 0.0, %v1786
        %v1788 = vpop.f32.mrb[0].mxu0
        %v1789 = vadd.f32 0.0, %v1788
        %1790 = vdwg.mxu0
        %v1791 = vrot.slane %v1732, 7
        %v1792 = vrot.slane %v1733, 7
        %v1793 = vrot.slane %v1734, 7
        %v1794 = vrot.slane %v1735, 7
        %v1795 = vsel %vm386, %v1793, %v1794
        %v1796 = vsel %vm386, %v1792, %v1793
        %v1797 = vsel %vm386, %v1791, %v1792
        %v1798 = vsel %vm386, %v1794, %v1791
        %v1799 = vrot.slane %v1732, 6
        %v1800 = vrot.slane %v1733, 6
        %v1801 = vrot.slane %v1734, 6
        %v1802 = vrot.slane %v1735, 6
        %v1803 = vsel %vm395, %v1801, %v1802
        %v1804 = vsel %vm395, %v1800, %v1801
        %v1805 = vsel %vm395, %v1799, %v1800
        %v1806 = vsel %vm395, %v1802, %v1799
        %v1807 = vrot.slane %v1732, 1
        %v1808 = vrot.slane %v1733, 1
        %v1809 = vrot.slane %v1734, 1
        %v1810 = vrot.slane %v1735, 1
        %v1811 = vsel %vm404, %v1809, %v1810
        %v1812 = vsel %vm404, %v1808, %v1809
        %v1813 = vsel %vm404, %v1807, %v1808
        %v1814 = vsel %vm404, %v1810, %v1807
        %v1815 = vrot.slane %v1732, 2
        %v1816 = vrot.slane %v1733, 2
        %v1817 = vrot.slane %v1734, 2
        %v1818 = vrot.slane %v1735, 2
        %v1819 = vsel %vm413, %v1817, %v1818
        %v1820 = vsel %vm413, %v1816, %v1817
        %v1821 = vsel %vm413, %v1815, %v1816
        %v1822 = vsel %vm413, %v1818, %v1815
        %v1823 = vsub.f32 %v1806, %v1821
        %v1824 = vsub.f32 %v1805, %v1820
        %v1825 = vsub.f32 %v1804, %v1819
        %v1826 = vsub.f32 %v1803, %v1822
        %v1827 = vmul.f32 %v1823, 8.333333
        %v1828 = vmul.f32 %v1824, 8.333333
        %v1829 = vmul.f32 %v1825, 8.333333
        %v1830 = vmul.f32 %v1826, 8.333333
        %v1831 = vsub.f32 %v1813, %v1798
        %v1832 = vsub.f32 %v1812, %v1797
        %v1833 = vsub.f32 %v1811, %v1796
        %v1834 = vsub.f32 %v1814, %v1795
        %v1835 = vmul.f32 %v1831, 66.666664
        %v1836 = vmul.f32 %v1832, 66.666664
        %v1837 = vmul.f32 %v1833, 66.666664
        %v1838 = vmul.f32 %v1834, 66.666664
        %v1839 = vadd.f32 %v1827, %v1835
        %v1840 = vadd.f32 %v1828, %v1836
        %v1841 = vadd.f32 %v1829, %v1837
        %v1842 = vadd.f32 %v1830, %v1838
        %v1843 = vadd.f32 %v1806, %v1821
        %v1844 = vadd.f32 %v1805, %v1820
        %v1845 = vadd.f32 %v1804, %v1819
        %v1846 = vadd.f32 %v1803, %v1822
        %v1847 = vmul.f32 %v1843, -7.8199944
        %v1848 = vmul.f32 %v1844, -7.8199944
        %v1849 = vmul.f32 %v1845, -7.8199944
        %v1850 = vmul.f32 %v1846, -7.8199944
        %v1851 = vadd.f32 %v1798, %v1813
        %v1852 = vadd.f32 %v1797, %v1812
        %v1853 = vadd.f32 %v1796, %v1811
        %v1854 = vadd.f32 %v1795, %v1814
        %v1855 = vmul.f32 %v1851, 125.11991
        %v1856 = vmul.f32 %v1852, 125.11991
        %v1857 = vmul.f32 %v1853, 125.11991
        %v1858 = vmul.f32 %v1854, 125.11991
        %v1859 = vadd.f32 %v1847, %v1855
        %v1860 = vadd.f32 %v1848, %v1856
        %v1861 = vadd.f32 %v1849, %v1857
        %v1862 = vadd.f32 %v1850, %v1858
        %v1863 = vmul.f32 %v1732, -234.59984
        %v1864 = vmul.f32 %v1733, -234.59984
        %v1865 = vmul.f32 %v1734, -234.59984
        %v1866 = vmul.f32 %v1735, -234.59984
        %v1867 = vadd.f32 %v1859, %v1863
        %v1868 = vadd.f32 %v1860, %v1864
        %v1869 = vadd.f32 %v1861, %v1865
        %v1870 = vadd.f32 %v1862, %v1866
        %v1871 = vadd.f32 %v1775, %v1867
        %v1872 = vadd.f32 %v1779, %v1868
        %v1873 = vadd.f32 %v1785, %v1869
        %v1874 = vadd.f32 %v1789, %v1870
        %1875 = vrot.lane.b32.xlu0 %v1732, 64
        %v1876 = vpop.permute.xlu0 %1875
        %1877 = vrot.lane.b32.xlu0 %v1733, 64
        %v1878 = vpop.permute.xlu0 %1877
        %1879 = vrot.lane.b32.xlu0 %v1734, 64
        %v1880 = vpop.permute.xlu0 %1879
        %1881 = vrot.lane.b32.xlu0 %v1735, 64
        %v1882 = vpop.permute.xlu0 %1881
        %v1883 = vmul.f32 %v209, %v1839
        %v1884 = vmul.f32 %v209, %v1840
        %v1885 = vmul.f32 %v209, %v1841
        %v1886 = vmul.f32 %v209, %v1842
        %v1887 = vmul.f32 %v214, %v1773
        %v1888 = vmul.f32 %v214, %v1777
        %v1889 = vmul.f32 %v214, %v1783
        %v1890 = vmul.f32 %v214, %v1787
        %v1891 = vadd.f32 %v1883, %v1887
        %v1892 = vadd.f32 %v1884, %v1888
        %v1893 = vadd.f32 %v1885, %v1889
        %v1894 = vadd.f32 %v1886, %v1890
        %v1895 = vmul.f32 %v1732, %v1891
        %v1896 = vmul.f32 %v1733, %v1892
        %v1897 = vmul.f32 %v1734, %v1893
        %v1898 = vmul.f32 %v1735, %v1894
        %v1899 = vadd.f32 %v1871, %v1895
        %v1900 = vadd.f32 %v1872, %v1896
        %v1901 = vadd.f32 %v1873, %v1897
        %v1902 = vadd.f32 %v1874, %v1898
        %v1903 = vmul.f32 %v219, %v1839
        %v1904 = vmul.f32 %v219, %v1840
        %v1905 = vmul.f32 %v219, %v1841
        %v1906 = vmul.f32 %v219, %v1842
        %v1907 = vmul.f32 %v224, %v1773
        %v1908 = vmul.f32 %v224, %v1777
        %v1909 = vmul.f32 %v224, %v1783
        %v1910 = vmul.f32 %v224, %v1787
        %v1911 = vadd.f32 %v1903, %v1907
        %v1912 = vadd.f32 %v1904, %v1908
        %v1913 = vadd.f32 %v1905, %v1909
        %v1914 = vadd.f32 %v1906, %v1910
        %v1915 = vmul.f32 %v1876, %v1911
        %v1916 = vmul.f32 %v1878, %v1912
        %v1917 = vmul.f32 %v1880, %v1913
        %v1918 = vmul.f32 %v1882, %v1914
        %v1919 = vadd.f32 %v1899, %v1915
        %v1920 = vadd.f32 %v1900, %v1916
        %v1921 = vadd.f32 %v1901, %v1917
        %v1922 = vadd.f32 %v1902, %v1918
        %v1923 = vadd.f32 %v1724, %v1919
        %v1924 = vadd.f32 %v1725, %v1920
        %v1925 = vadd.f32 %v1726, %v1921
        %v1926 = vadd.f32 %v1727, %v1922
        %v1927 = vmul.f32 %v1923, 0.00016666666
        %v1928 = vmul.f32 %v1924, 0.00016666666
        %v1929 = vmul.f32 %v1925, 0.00016666666
        %v1930 = vmul.f32 %v1926, 0.00016666666
        %v1931 = vadd.f32 %v1127, %v1927
        %v1932 = vadd.f32 %v1128, %v1928
        %v1933 = vadd.f32 %v1129, %v1929
        %v1934 = vadd.f32 %v1130, %v1930
        %s1935 = scalar_lea.vmem %s190, 32 [#allocation9]
        %1936 = vst [vmem:[%s1935] sm:$0xff] %v1931
        %1937 = vst [vmem:[%s1935 + $0x8] sm:$0xff] %v1932
        %1938 = vst [vmem:[%s1935 + $0x10] sm:$0xff] %v1933
        %1939 = vst [vmem:[%s1935 + $0x18] sm:$0xff] %v1934
        %v1940 = vpack.c.bf16 %v1932, %v1931
        %v1941 = vpack.c.bf16 %v1934, %v1933
        %1942 = vmatprep.subr.bf16.mxu0 %v296
        %1943 = vmatpush1.bf16.msra.mxu0 %v295
        %1944 = vmatprep.subr.bf16.mxu0 %v298
        %1945 = vmatpush1.bf16.msra.mxu0 %v297
        %1946 = vmatprep.subr.bf16.mxu0 %v300
        %1947 = vmatpush1.bf16.msra.mxu0 %v299
        %1948 = vmatprep.subr.bf16.mxu0 %v302
        %1949 = vmatpush1.bf16.msra.mxu0 %v301
        %1950 = vmatprep.subr.bf16.mxu0 %v304
        %1951 = vmatpush1.bf16.msra.mxu0 %v303
        %1952 = vmatprep.subr.bf16.mxu0 %v306
        %1953 = vmatpush1.bf16.msra.mxu0 %v305
        %1954 = vmatprep.subr.bf16.mxu0 %v308
        %1955 = vmatpush1.bf16.msra.mxu0 %v307
        %1956 = vmatprep.subr.bf16.mxu0 %v310
        %1957 = vmatpush1.bf16.msra.mxu0 %v309
        %1958 = vmatprep.subr.bf16.mxu0 0
        %1959 = vmatpush1.bf16.msra.mxu0 0
        %1960 = vmatprep.subr.bf16.mxu0 0
        %1961 = vmatpush1.bf16.msra.mxu0 0
        %1962 = vmatprep.subr.bf16.mxu0 0
        %1963 = vmatpush1.bf16.msra.mxu0 0
        %1964 = vmatprep.subr.bf16.mxu0 0
        %1965 = vmatpush1.bf16.msra.mxu0 0
        %1966 = vmatprep.subr.bf16.mxu0 0
        %1967 = vmatpush1.bf16.msra.mxu0 0
        %1968 = vmatprep.subr.bf16.mxu0 0
        %1969 = vmatpush1.bf16.msra.mxu0 0
        %1970 = vmatprep.subr.bf16.mxu0 0
        %1971 = vmatpush1.bf16.msra.mxu0 0
        %1972 = vmatprep.subr.bf16.mxu0 0
        %1973 = vmatpush1.bf16.msra.mxu0 0
        %1974 = vmatprep.mubr.bf16.mxu0 0
        %1975 = vmatmul.mubr.bf16.gmra.mrb[0].mxu0 %v1940
        %v1976 = vpop.f32.mrb[0].mxu0
        %v1977 = vadd.f32 0.0, %v1976
        %v1978 = vpop.f32.mrb[0].mxu0
        %v1979 = vadd.f32 0.0, %v1978
        %v1980 = vpop.f32.mrb[0].mxu0
        %v1981 = vadd.f32 0.0, %v1980
        %v1982 = vpop.f32.mrb[0].mxu0
        %v1983 = vadd.f32 0.0, %v1982
        %1984 = vmatprep.mubr.bf16.mxu0 0
        %1985 = vmatmul.mubr.bf16.gmra.mrb[0].mxu0 %v1941
        %v1986 = vpop.f32.mrb[0].mxu0
        %v1987 = vadd.f32 0.0, %v1986
        %v1988 = vpop.f32.mrb[0].mxu0
        %v1989 = vadd.f32 0.0, %v1988
        %v1990 = vpop.f32.mrb[0].mxu0
        %v1991 = vadd.f32 0.0, %v1990
        %v1992 = vpop.f32.mrb[0].mxu0
        %v1993 = vadd.f32 0.0, %v1992
        %1994 = vdwg.mxu0
        %v1995 = vrot.slane %v1931, 7
        %v1996 = vrot.slane %v1932, 7
        %v1997 = vrot.slane %v1933, 7
        %v1998 = vrot.slane %v1934, 7
        %v1999 = vsel %vm386, %v1997, %v1998
        %v2000 = vsel %vm386, %v1996, %v1997
        %v2001 = vsel %vm386, %v1995, %v1996
        %v2002 = vsel %vm386, %v1998, %v1995
        %v2003 = vrot.slane %v1931, 6
        %v2004 = vrot.slane %v1932, 6
        %v2005 = vrot.slane %v1933, 6
        %v2006 = vrot.slane %v1934, 6
        %v2007 = vsel %vm395, %v2005, %v2006
        %v2008 = vsel %vm395, %v2004, %v2005
        %v2009 = vsel %vm395, %v2003, %v2004
        %v2010 = vsel %vm395, %v2006, %v2003
        %v2011 = vrot.slane %v1931, 1
        %v2012 = vrot.slane %v1932, 1
        %v2013 = vrot.slane %v1933, 1
        %v2014 = vrot.slane %v1934, 1
        %v2015 = vsel %vm404, %v2013, %v2014
        %v2016 = vsel %vm404, %v2012, %v2013
        %v2017 = vsel %vm404, %v2011, %v2012
        %v2018 = vsel %vm404, %v2014, %v2011
        %v2019 = vrot.slane %v1931, 2
        %v2020 = vrot.slane %v1932, 2
        %v2021 = vrot.slane %v1933, 2
        %v2022 = vrot.slane %v1934, 2
        %v2023 = vsel %vm413, %v2021, %v2022
        %v2024 = vsel %vm413, %v2020, %v2021
        %v2025 = vsel %vm413, %v2019, %v2020
        %v2026 = vsel %vm413, %v2022, %v2019
        %v2027 = vsub.f32 %v2010, %v2025
        %v2028 = vsub.f32 %v2009, %v2024
        %v2029 = vsub.f32 %v2008, %v2023
        %v2030 = vsub.f32 %v2007, %v2026
        %v2031 = vmul.f32 %v2027, 8.333333
        %v2032 = vmul.f32 %v2028, 8.333333
        %v2033 = vmul.f32 %v2029, 8.333333
        %v2034 = vmul.f32 %v2030, 8.333333
        %v2035 = vsub.f32 %v2017, %v2002
        %v2036 = vsub.f32 %v2016, %v2001
        %v2037 = vsub.f32 %v2015, %v2000
        %v2038 = vsub.f32 %v2018, %v1999
        %v2039 = vmul.f32 %v2035, 66.666664
        %v2040 = vmul.f32 %v2036, 66.666664
        %v2041 = vmul.f32 %v2037, 66.666664
        %v2042 = vmul.f32 %v2038, 66.666664
        %v2043 = vadd.f32 %v2031, %v2039
        %v2044 = vadd.f32 %v2032, %v2040
        %v2045 = vadd.f32 %v2033, %v2041
        %v2046 = vadd.f32 %v2034, %v2042
        %v2047 = vadd.f32 %v2010, %v2025
        %v2048 = vadd.f32 %v2009, %v2024
        %v2049 = vadd.f32 %v2008, %v2023
        %v2050 = vadd.f32 %v2007, %v2026
        %v2051 = vmul.f32 %v2047, -7.8199944
        %v2052 = vmul.f32 %v2048, -7.8199944
        %v2053 = vmul.f32 %v2049, -7.8199944
        %v2054 = vmul.f32 %v2050, -7.8199944
        %v2055 = vadd.f32 %v2002, %v2017
        %v2056 = vadd.f32 %v2001, %v2016
        %v2057 = vadd.f32 %v2000, %v2015
        %v2058 = vadd.f32 %v1999, %v2018
        %v2059 = vmul.f32 %v2055, 125.11991
        %v2060 = vmul.f32 %v2056, 125.11991
        %v2061 = vmul.f32 %v2057, 125.11991
        %v2062 = vmul.f32 %v2058, 125.11991
        %v2063 = vadd.f32 %v2051, %v2059
        %v2064 = vadd.f32 %v2052, %v2060
        %v2065 = vadd.f32 %v2053, %v2061
        %v2066 = vadd.f32 %v2054, %v2062
        %v2067 = vmul.f32 %v1931, -234.59984
        %v2068 = vmul.f32 %v1932, -234.59984
        %v2069 = vmul.f32 %v1933, -234.59984
        %v2070 = vmul.f32 %v1934, -234.59984
        %v2071 = vadd.f32 %v2063, %v2067
        %v2072 = vadd.f32 %v2064, %v2068
        %v2073 = vadd.f32 %v2065, %v2069
        %v2074 = vadd.f32 %v2066, %v2070
        %v2075 = vadd.f32 %v1979, %v2071
        %v2076 = vadd.f32 %v1983, %v2072
        %v2077 = vadd.f32 %v1989, %v2073
        %v2078 = vadd.f32 %v1993, %v2074
        %2079 = vrot.lane.b32.xlu0 %v1931, 64
        %v2080 = vpop.permute.xlu0 %2079
        %2081 = vrot.lane.b32.xlu0 %v1932, 64
        %v2082 = vpop.permute.xlu0 %2081
        %2083 = vrot.lane.b32.xlu0 %v1933, 64
        %v2084 = vpop.permute.xlu0 %2083
        %2085 = vrot.lane.b32.xlu0 %v1934, 64
        %v2086 = vpop.permute.xlu0 %2085
        %v2087 = vmul.f32 %v209, %v2043
        %v2088 = vmul.f32 %v209, %v2044
        %v2089 = vmul.f32 %v209, %v2045
        %v2090 = vmul.f32 %v209, %v2046
        %v2091 = vmul.f32 %v214, %v1977
        %v2092 = vmul.f32 %v214, %v1981
        %v2093 = vmul.f32 %v214, %v1987
        %v2094 = vmul.f32 %v214, %v1991
        %v2095 = vadd.f32 %v2087, %v2091
        %v2096 = vadd.f32 %v2088, %v2092
        %v2097 = vadd.f32 %v2089, %v2093
        %v2098 = vadd.f32 %v2090, %v2094
        %v2099 = vmul.f32 %v1931, %v2095
        %v2100 = vmul.f32 %v1932, %v2096
        %v2101 = vmul.f32 %v1933, %v2097
        %v2102 = vmul.f32 %v1934, %v2098
        %v2103 = vadd.f32 %v2075, %v2099
        %v2104 = vadd.f32 %v2076, %v2100
        %v2105 = vadd.f32 %v2077, %v2101
        %v2106 = vadd.f32 %v2078, %v2102
        %v2107 = vmul.f32 %v219, %v2043
        %v2108 = vmul.f32 %v219, %v2044
        %v2109 = vmul.f32 %v219, %v2045
        %v2110 = vmul.f32 %v219, %v2046
        %v2111 = vmul.f32 %v224, %v1977
        %v2112 = vmul.f32 %v224, %v1981
        %v2113 = vmul.f32 %v224, %v1987
        %v2114 = vmul.f32 %v224, %v1991
        %v2115 = vadd.f32 %v2107, %v2111
        %v2116 = vadd.f32 %v2108, %v2112
        %v2117 = vadd.f32 %v2109, %v2113
        %v2118 = vadd.f32 %v2110, %v2114
        %v2119 = vmul.f32 %v2080, %v2115
        %v2120 = vmul.f32 %v2082, %v2116
        %v2121 = vmul.f32 %v2084, %v2117
        %v2122 = vmul.f32 %v2086, %v2118
        %v2123 = vadd.f32 %v2103, %v2119
        %v2124 = vadd.f32 %v2104, %v2120
        %v2125 = vadd.f32 %v2105, %v2121
        %v2126 = vadd.f32 %v2106, %v2122
        %v2127 = vmul.f32 %v2123, 0.0005
        %v2128 = vmul.f32 %v2124, 0.0005
        %v2129 = vmul.f32 %v2125, 0.0005
        %v2130 = vmul.f32 %v2126, 0.0005
        %v2131 = vadd.f32 %v1931, %v2127
        %v2132 = vadd.f32 %v1932, %v2128
        %v2133 = vadd.f32 %v1933, %v2129
        %v2134 = vadd.f32 %v1934, %v2130
        %v2135 = vpack.c.bf16 %v2132, %v2131
        %v2136 = vpack.c.bf16 %v2134, %v2133
        %2137 = vmatprep.subr.bf16.mxu0 %v296
        %2138 = vmatpush1.bf16.msra.mxu0 %v295
        %2139 = vmatprep.subr.bf16.mxu0 %v298
        %2140 = vmatpush1.bf16.msra.mxu0 %v297
        %2141 = vmatprep.subr.bf16.mxu0 %v300
        %2142 = vmatpush1.bf16.msra.mxu0 %v299
        %2143 = vmatprep.subr.bf16.mxu0 %v302
        %2144 = vmatpush1.bf16.msra.mxu0 %v301
        %2145 = vmatprep.subr.bf16.mxu0 %v304
        %2146 = vmatpush1.bf16.msra.mxu0 %v303
        %2147 = vmatprep.subr.bf16.mxu0 %v306
        %2148 = vmatpush1.bf16.msra.mxu0 %v305
        %2149 = vmatprep.subr.bf16.mxu0 %v308
        %2150 = vmatpush1.bf16.msra.mxu0 %v307
        %2151 = vmatprep.subr.bf16.mxu0 %v310
        %2152 = vmatpush1.bf16.msra.mxu0 %v309
        %2153 = vmatprep.subr.bf16.mxu0 0
        %2154 = vmatpush1.bf16.msra.mxu0 0
        %2155 = vmatprep.subr.bf16.mxu0 0
        %2156 = vmatpush1.bf16.msra.mxu0 0
        %2157 = vmatprep.subr.bf16.mxu0 0
        %2158 = vmatpush1.bf16.msra.mxu0 0
        %2159 = vmatprep.subr.bf16.mxu0 0
        %2160 = vmatpush1.bf16.msra.mxu0 0
        %2161 = vmatprep.subr.bf16.mxu0 0
        %2162 = vmatpush1.bf16.msra.mxu0 0
        %2163 = vmatprep.subr.bf16.mxu0 0
        %2164 = vmatpush1.bf16.msra.mxu0 0
        %2165 = vmatprep.subr.bf16.mxu0 0
        %2166 = vmatpush1.bf16.msra.mxu0 0
        %2167 = vmatprep.subr.bf16.mxu0 0
        %2168 = vmatpush1.bf16.msra.mxu0 0
        %2169 = vmatprep.mubr.bf16.mxu0 0
        %2170 = vmatmul.mubr.bf16.gmra.mrb[0].mxu0 %v2135
        %v2171 = vpop.f32.mrb[0].mxu0
        %v2172 = vadd.f32 0.0, %v2171
        %v2173 = vpop.f32.mrb[0].mxu0
        %v2174 = vadd.f32 0.0, %v2173
        %v2175 = vpop.f32.mrb[0].mxu0
        %v2176 = vadd.f32 0.0, %v2175
        %v2177 = vpop.f32.mrb[0].mxu0
        %v2178 = vadd.f32 0.0, %v2177
        %2179 = vmatprep.mubr.bf16.mxu0 0
        %2180 = vmatmul.mubr.bf16.gmra.mrb[0].mxu0 %v2136
        %v2181 = vpop.f32.mrb[0].mxu0
        %v2182 = vadd.f32 0.0, %v2181
        %v2183 = vpop.f32.mrb[0].mxu0
        %v2184 = vadd.f32 0.0, %v2183
        %v2185 = vpop.f32.mrb[0].mxu0
        %v2186 = vadd.f32 0.0, %v2185
        %v2187 = vpop.f32.mrb[0].mxu0
        %v2188 = vadd.f32 0.0, %v2187
        %2189 = vdwg.mxu0
        %v2190 = vrot.slane %v2131, 7
        %v2191 = vrot.slane %v2132, 7
        %v2192 = vrot.slane %v2133, 7
        %v2193 = vrot.slane %v2134, 7
        %v2194 = vsel %vm386, %v2192, %v2193
        %v2195 = vsel %vm386, %v2191, %v2192
        %v2196 = vsel %vm386, %v2190, %v2191
        %v2197 = vsel %vm386, %v2193, %v2190
        %v2198 = vrot.slane %v2131, 6
        %v2199 = vrot.slane %v2132, 6
        %v2200 = vrot.slane %v2133, 6
        %v2201 = vrot.slane %v2134, 6
        %v2202 = vsel %vm395, %v2200, %v2201
        %v2203 = vsel %vm395, %v2199, %v2200
        %v2204 = vsel %vm395, %v2198, %v2199
        %v2205 = vsel %vm395, %v2201, %v2198
        %v2206 = vrot.slane %v2131, 1
        %v2207 = vrot.slane %v2132, 1
        %v2208 = vrot.slane %v2133, 1
        %v2209 = vrot.slane %v2134, 1
        %v2210 = vsel %vm404, %v2208, %v2209
        %v2211 = vsel %vm404, %v2207, %v2208
        %v2212 = vsel %vm404, %v2206, %v2207
        %v2213 = vsel %vm404, %v2209, %v2206
        %v2214 = vrot.slane %v2131, 2
        %v2215 = vrot.slane %v2132, 2
        %v2216 = vrot.slane %v2133, 2
        %v2217 = vrot.slane %v2134, 2
        %v2218 = vsel %vm413, %v2216, %v2217
        %v2219 = vsel %vm413, %v2215, %v2216
        %v2220 = vsel %vm413, %v2214, %v2215
        %v2221 = vsel %vm413, %v2217, %v2214
        %v2222 = vsub.f32 %v2205, %v2220
        %v2223 = vsub.f32 %v2204, %v2219
        %v2224 = vsub.f32 %v2203, %v2218
        %v2225 = vsub.f32 %v2202, %v2221
        %v2226 = vmul.f32 %v2222, 8.333333
        %v2227 = vmul.f32 %v2223, 8.333333
        %v2228 = vmul.f32 %v2224, 8.333333
        %v2229 = vmul.f32 %v2225, 8.333333
        %v2230 = vsub.f32 %v2212, %v2197
        %v2231 = vsub.f32 %v2211, %v2196
        %v2232 = vsub.f32 %v2210, %v2195
        %v2233 = vsub.f32 %v2213, %v2194
        %v2234 = vmul.f32 %v2230, 66.666664
        %v2235 = vmul.f32 %v2231, 66.666664
        %v2236 = vmul.f32 %v2232, 66.666664
        %v2237 = vmul.f32 %v2233, 66.666664
        %v2238 = vadd.f32 %v2226, %v2234
        %v2239 = vadd.f32 %v2227, %v2235
        %v2240 = vadd.f32 %v2228, %v2236
        %v2241 = vadd.f32 %v2229, %v2237
        %v2242 = vadd.f32 %v2205, %v2220
        %v2243 = vadd.f32 %v2204, %v2219
        %v2244 = vadd.f32 %v2203, %v2218
        %v2245 = vadd.f32 %v2202, %v2221
        %v2246 = vmul.f32 %v2242, -7.8199944
        %v2247 = vmul.f32 %v2243, -7.8199944
        %v2248 = vmul.f32 %v2244, -7.8199944
        %v2249 = vmul.f32 %v2245, -7.8199944
        %v2250 = vadd.f32 %v2197, %v2212
        %v2251 = vadd.f32 %v2196, %v2211
        %v2252 = vadd.f32 %v2195, %v2210
        %v2253 = vadd.f32 %v2194, %v2213
        %v2254 = vmul.f32 %v2250, 125.11991
        %v2255 = vmul.f32 %v2251, 125.11991
        %v2256 = vmul.f32 %v2252, 125.11991
        %v2257 = vmul.f32 %v2253, 125.11991
        %v2258 = vadd.f32 %v2246, %v2254
        %v2259 = vadd.f32 %v2247, %v2255
        %v2260 = vadd.f32 %v2248, %v2256
        %v2261 = vadd.f32 %v2249, %v2257
        %v2262 = vmul.f32 %v2131, -234.59984
        %v2263 = vmul.f32 %v2132, -234.59984
        %v2264 = vmul.f32 %v2133, -234.59984
        %v2265 = vmul.f32 %v2134, -234.59984
        %v2266 = vadd.f32 %v2258, %v2262
        %v2267 = vadd.f32 %v2259, %v2263
        %v2268 = vadd.f32 %v2260, %v2264
        %v2269 = vadd.f32 %v2261, %v2265
        %v2270 = vadd.f32 %v2174, %v2266
        %v2271 = vadd.f32 %v2178, %v2267
        %v2272 = vadd.f32 %v2184, %v2268
        %v2273 = vadd.f32 %v2188, %v2269
        %2274 = vrot.lane.b32.xlu0 %v2131, 64
        %v2275 = vpop.permute.xlu0 %2274
        %2276 = vrot.lane.b32.xlu0 %v2132, 64
        %v2277 = vpop.permute.xlu0 %2276
        %2278 = vrot.lane.b32.xlu0 %v2133, 64
        %v2279 = vpop.permute.xlu0 %2278
        %2280 = vrot.lane.b32.xlu0 %v2134, 64
        %v2281 = vpop.permute.xlu0 %2280
        %v2282 = vmul.f32 %v209, %v2238
        %v2283 = vmul.f32 %v209, %v2239
        %v2284 = vmul.f32 %v209, %v2240
        %v2285 = vmul.f32 %v209, %v2241
        %v2286 = vmul.f32 %v214, %v2172
        %v2287 = vmul.f32 %v214, %v2176
        %v2288 = vmul.f32 %v214, %v2182
        %v2289 = vmul.f32 %v214, %v2186
        %v2290 = vadd.f32 %v2282, %v2286
        %v2291 = vadd.f32 %v2283, %v2287
        %v2292 = vadd.f32 %v2284, %v2288
        %v2293 = vadd.f32 %v2285, %v2289
        %v2294 = vmul.f32 %v2131, %v2290
        %v2295 = vmul.f32 %v2132, %v2291
        %v2296 = vmul.f32 %v2133, %v2292
        %v2297 = vmul.f32 %v2134, %v2293
        %v2298 = vadd.f32 %v2270, %v2294
        %v2299 = vadd.f32 %v2271, %v2295
        %v2300 = vadd.f32 %v2272, %v2296
        %v2301 = vadd.f32 %v2273, %v2297
        %v2302 = vmul.f32 %v219, %v2238
        %v2303 = vmul.f32 %v219, %v2239
        %v2304 = vmul.f32 %v219, %v2240
        %v2305 = vmul.f32 %v219, %v2241
        %v2306 = vmul.f32 %v224, %v2172
        %v2307 = vmul.f32 %v224, %v2176
        %v2308 = vmul.f32 %v224, %v2182
        %v2309 = vmul.f32 %v224, %v2186
        %v2310 = vadd.f32 %v2302, %v2306
        %v2311 = vadd.f32 %v2303, %v2307
        %v2312 = vadd.f32 %v2304, %v2308
        %v2313 = vadd.f32 %v2305, %v2309
        %v2314 = vmul.f32 %v2275, %v2310
        %v2315 = vmul.f32 %v2277, %v2311
        %v2316 = vmul.f32 %v2279, %v2312
        %v2317 = vmul.f32 %v2281, %v2313
        %v2318 = vadd.f32 %v2298, %v2314
        %v2319 = vadd.f32 %v2299, %v2315
        %v2320 = vadd.f32 %v2300, %v2316
        %v2321 = vadd.f32 %v2301, %v2317
        %v2322 = vmul.f32 %v2318, 2.0
        %v2323 = vmul.f32 %v2319, 2.0
        %v2324 = vmul.f32 %v2320, 2.0
        %v2325 = vmul.f32 %v2321, 2.0
        %v2326 = vadd.f32 %v2123, %v2322
        %v2327 = vadd.f32 %v2124, %v2323
        %v2328 = vadd.f32 %v2125, %v2324
        %v2329 = vadd.f32 %v2126, %v2325
        %v2330 = vmul.f32 %v2318, 0.0005
        %v2331 = vmul.f32 %v2319, 0.0005
        %v2332 = vmul.f32 %v2320, 0.0005
        %v2333 = vmul.f32 %v2321, 0.0005
        %v2334 = vadd.f32 %v1931, %v2330
        %v2335 = vadd.f32 %v1932, %v2331
        %v2336 = vadd.f32 %v1933, %v2332
        %v2337 = vadd.f32 %v1934, %v2333
        %v2338 = vpack.c.bf16 %v2335, %v2334
        %v2339 = vpack.c.bf16 %v2337, %v2336
        %2340 = vmatprep.subr.bf16.mxu0 %v296
        %2341 = vmatpush1.bf16.msra.mxu0 %v295
        %2342 = vmatprep.subr.bf16.mxu0 %v298
        %2343 = vmatpush1.bf16.msra.mxu0 %v297
        %2344 = vmatprep.subr.bf16.mxu0 %v300
        %2345 = vmatpush1.bf16.msra.mxu0 %v299
        %2346 = vmatprep.subr.bf16.mxu0 %v302
        %2347 = vmatpush1.bf16.msra.mxu0 %v301
        %2348 = vmatprep.subr.bf16.mxu0 %v304
        %2349 = vmatpush1.bf16.msra.mxu0 %v303
        %2350 = vmatprep.subr.bf16.mxu0 %v306
        %2351 = vmatpush1.bf16.msra.mxu0 %v305
        %2352 = vmatprep.subr.bf16.mxu0 %v308
        %2353 = vmatpush1.bf16.msra.mxu0 %v307
        %2354 = vmatprep.subr.bf16.mxu0 %v310
        %2355 = vmatpush1.bf16.msra.mxu0 %v309
        %2356 = vmatprep.subr.bf16.mxu0 0
        %2357 = vmatpush1.bf16.msra.mxu0 0
        %2358 = vmatprep.subr.bf16.mxu0 0
        %2359 = vmatpush1.bf16.msra.mxu0 0
        %2360 = vmatprep.subr.bf16.mxu0 0
        %2361 = vmatpush1.bf16.msra.mxu0 0
        %2362 = vmatprep.subr.bf16.mxu0 0
        %2363 = vmatpush1.bf16.msra.mxu0 0
        %2364 = vmatprep.subr.bf16.mxu0 0
        %2365 = vmatpush1.bf16.msra.mxu0 0
        %2366 = vmatprep.subr.bf16.mxu0 0
        %2367 = vmatpush1.bf16.msra.mxu0 0
        %2368 = vmatprep.subr.bf16.mxu0 0
        %2369 = vmatpush1.bf16.msra.mxu0 0
        %2370 = vmatprep.subr.bf16.mxu0 0
        %2371 = vmatpush1.bf16.msra.mxu0 0
        %2372 = vmatprep.mubr.bf16.mxu0 0
        %2373 = vmatmul.mubr.bf16.gmra.mrb[0].mxu0 %v2338
        %v2374 = vpop.f32.mrb[0].mxu0
        %v2375 = vadd.f32 0.0, %v2374
        %v2376 = vpop.f32.mrb[0].mxu0
        %v2377 = vadd.f32 0.0, %v2376
        %v2378 = vpop.f32.mrb[0].mxu0
        %v2379 = vadd.f32 0.0, %v2378
        %v2380 = vpop.f32.mrb[0].mxu0
        %v2381 = vadd.f32 0.0, %v2380
        %2382 = vmatprep.mubr.bf16.mxu0 0
        %2383 = vmatmul.mubr.bf16.gmra.mrb[0].mxu0 %v2339
        %v2384 = vpop.f32.mrb[0].mxu0
        %v2385 = vadd.f32 0.0, %v2384
        %v2386 = vpop.f32.mrb[0].mxu0
        %v2387 = vadd.f32 0.0, %v2386
        %v2388 = vpop.f32.mrb[0].mxu0
        %v2389 = vadd.f32 0.0, %v2388
        %v2390 = vpop.f32.mrb[0].mxu0
        %v2391 = vadd.f32 0.0, %v2390
        %2392 = vdwg.mxu0
        %v2393 = vrot.slane %v2334, 7
        %v2394 = vrot.slane %v2335, 7
        %v2395 = vrot.slane %v2336, 7
        %v2396 = vrot.slane %v2337, 7
        %v2397 = vsel %vm386, %v2395, %v2396
        %v2398 = vsel %vm386, %v2394, %v2395
        %v2399 = vsel %vm386, %v2393, %v2394
        %v2400 = vsel %vm386, %v2396, %v2393
        %v2401 = vrot.slane %v2334, 6
        %v2402 = vrot.slane %v2335, 6
        %v2403 = vrot.slane %v2336, 6
        %v2404 = vrot.slane %v2337, 6
        %v2405 = vsel %vm395, %v2403, %v2404
        %v2406 = vsel %vm395, %v2402, %v2403
        %v2407 = vsel %vm395, %v2401, %v2402
        %v2408 = vsel %vm395, %v2404, %v2401
        %v2409 = vrot.slane %v2334, 1
        %v2410 = vrot.slane %v2335, 1
        %v2411 = vrot.slane %v2336, 1
        %v2412 = vrot.slane %v2337, 1
        %v2413 = vsel %vm404, %v2411, %v2412
        %v2414 = vsel %vm404, %v2410, %v2411
        %v2415 = vsel %vm404, %v2409, %v2410
        %v2416 = vsel %vm404, %v2412, %v2409
        %v2417 = vrot.slane %v2334, 2
        %v2418 = vrot.slane %v2335, 2
        %v2419 = vrot.slane %v2336, 2
        %v2420 = vrot.slane %v2337, 2
        %v2421 = vsel %vm413, %v2419, %v2420
        %v2422 = vsel %vm413, %v2418, %v2419
        %v2423 = vsel %vm413, %v2417, %v2418
        %v2424 = vsel %vm413, %v2420, %v2417
        %v2425 = vsub.f32 %v2408, %v2423
        %v2426 = vsub.f32 %v2407, %v2422
        %v2427 = vsub.f32 %v2406, %v2421
        %v2428 = vsub.f32 %v2405, %v2424
        %v2429 = vmul.f32 %v2425, 8.333333
        %v2430 = vmul.f32 %v2426, 8.333333
        %v2431 = vmul.f32 %v2427, 8.333333
        %v2432 = vmul.f32 %v2428, 8.333333
        %v2433 = vsub.f32 %v2415, %v2400
        %v2434 = vsub.f32 %v2414, %v2399
        %v2435 = vsub.f32 %v2413, %v2398
        %v2436 = vsub.f32 %v2416, %v2397
        %v2437 = vmul.f32 %v2433, 66.666664
        %v2438 = vmul.f32 %v2434, 66.666664
        %v2439 = vmul.f32 %v2435, 66.666664
        %v2440 = vmul.f32 %v2436, 66.666664
        %v2441 = vadd.f32 %v2429, %v2437
        %v2442 = vadd.f32 %v2430, %v2438
        %v2443 = vadd.f32 %v2431, %v2439
        %v2444 = vadd.f32 %v2432, %v2440
        %v2445 = vadd.f32 %v2408, %v2423
        %v2446 = vadd.f32 %v2407, %v2422
        %v2447 = vadd.f32 %v2406, %v2421
        %v2448 = vadd.f32 %v2405, %v2424
        %v2449 = vmul.f32 %v2445, -7.8199944
        %v2450 = vmul.f32 %v2446, -7.8199944
        %v2451 = vmul.f32 %v2447, -7.8199944
        %v2452 = vmul.f32 %v2448, -7.8199944
        %v2453 = vadd.f32 %v2400, %v2415
        %v2454 = vadd.f32 %v2399, %v2414
        %v2455 = vadd.f32 %v2398, %v2413
        %v2456 = vadd.f32 %v2397, %v2416
        %v2457 = vmul.f32 %v2453, 125.11991
        %v2458 = vmul.f32 %v2454, 125.11991
        %v2459 = vmul.f32 %v2455, 125.11991
        %v2460 = vmul.f32 %v2456, 125.11991
        %v2461 = vadd.f32 %v2449, %v2457
        %v2462 = vadd.f32 %v2450, %v2458
        %v2463 = vadd.f32 %v2451, %v2459
        %v2464 = vadd.f32 %v2452, %v2460
        %v2465 = vmul.f32 %v2334, -234.59984
        %v2466 = vmul.f32 %v2335, -234.59984
        %v2467 = vmul.f32 %v2336, -234.59984
        %v2468 = vmul.f32 %v2337, -234.59984
        %v2469 = vadd.f32 %v2461, %v2465
        %v2470 = vadd.f32 %v2462, %v2466
        %v2471 = vadd.f32 %v2463, %v2467
        %v2472 = vadd.f32 %v2464, %v2468
        %v2473 = vadd.f32 %v2377, %v2469
        %v2474 = vadd.f32 %v2381, %v2470
        %v2475 = vadd.f32 %v2387, %v2471
        %v2476 = vadd.f32 %v2391, %v2472
        %2477 = vrot.lane.b32.xlu0 %v2334, 64
        %v2478 = vpop.permute.xlu0 %2477
        %2479 = vrot.lane.b32.xlu0 %v2335, 64
        %v2480 = vpop.permute.xlu0 %2479
        %2481 = vrot.lane.b32.xlu0 %v2336, 64
        %v2482 = vpop.permute.xlu0 %2481
        %2483 = vrot.lane.b32.xlu0 %v2337, 64
        %v2484 = vpop.permute.xlu0 %2483
        %v2485 = vmul.f32 %v209, %v2441
        %v2486 = vmul.f32 %v209, %v2442
        %v2487 = vmul.f32 %v209, %v2443
        %v2488 = vmul.f32 %v209, %v2444
        %v2489 = vmul.f32 %v214, %v2375
        %v2490 = vmul.f32 %v214, %v2379
        %v2491 = vmul.f32 %v214, %v2385
        %v2492 = vmul.f32 %v214, %v2389
        %v2493 = vadd.f32 %v2485, %v2489
        %v2494 = vadd.f32 %v2486, %v2490
        %v2495 = vadd.f32 %v2487, %v2491
        %v2496 = vadd.f32 %v2488, %v2492
        %v2497 = vmul.f32 %v2334, %v2493
        %v2498 = vmul.f32 %v2335, %v2494
        %v2499 = vmul.f32 %v2336, %v2495
        %v2500 = vmul.f32 %v2337, %v2496
        %v2501 = vadd.f32 %v2473, %v2497
        %v2502 = vadd.f32 %v2474, %v2498
        %v2503 = vadd.f32 %v2475, %v2499
        %v2504 = vadd.f32 %v2476, %v2500
        %v2505 = vmul.f32 %v219, %v2441
        %v2506 = vmul.f32 %v219, %v2442
        %v2507 = vmul.f32 %v219, %v2443
        %v2508 = vmul.f32 %v219, %v2444
        %v2509 = vmul.f32 %v224, %v2375
        %v2510 = vmul.f32 %v224, %v2379
        %v2511 = vmul.f32 %v224, %v2385
        %v2512 = vmul.f32 %v224, %v2389
        %v2513 = vadd.f32 %v2505, %v2509
        %v2514 = vadd.f32 %v2506, %v2510
        %v2515 = vadd.f32 %v2507, %v2511
        %v2516 = vadd.f32 %v2508, %v2512
        %v2517 = vmul.f32 %v2478, %v2513
        %v2518 = vmul.f32 %v2480, %v2514
        %v2519 = vmul.f32 %v2482, %v2515
        %v2520 = vmul.f32 %v2484, %v2516
        %v2521 = vadd.f32 %v2501, %v2517
        %v2522 = vadd.f32 %v2502, %v2518
        %v2523 = vadd.f32 %v2503, %v2519
        %v2524 = vadd.f32 %v2504, %v2520
        %v2525 = vmul.f32 %v2521, 2.0
        %v2526 = vmul.f32 %v2522, 2.0
        %v2527 = vmul.f32 %v2523, 2.0
        %v2528 = vmul.f32 %v2524, 2.0
        %v2529 = vadd.f32 %v2326, %v2525
        %v2530 = vadd.f32 %v2327, %v2526
        %v2531 = vadd.f32 %v2328, %v2527
        %v2532 = vadd.f32 %v2329, %v2528
        %v2533 = vmul.f32 %v2521, 0.001
        %v2534 = vmul.f32 %v2522, 0.001
        %v2535 = vmul.f32 %v2523, 0.001
        %v2536 = vmul.f32 %v2524, 0.001
        %v2537 = vadd.f32 %v1931, %v2533
        %v2538 = vadd.f32 %v1932, %v2534
        %v2539 = vadd.f32 %v1933, %v2535
        %v2540 = vadd.f32 %v1934, %v2536
        %v2541 = vpack.c.bf16 %v2538, %v2537
        %v2542 = vpack.c.bf16 %v2540, %v2539
        %2543 = vmatprep.subr.bf16.mxu0 %v296
        %2544 = vmatpush1.bf16.msra.mxu0 %v295
        %2545 = vmatprep.subr.bf16.mxu0 %v298
        %2546 = vmatpush1.bf16.msra.mxu0 %v297
        %2547 = vmatprep.subr.bf16.mxu0 %v300
        %2548 = vmatpush1.bf16.msra.mxu0 %v299
        %2549 = vmatprep.subr.bf16.mxu0 %v302
        %2550 = vmatpush1.bf16.msra.mxu0 %v301
        %2551 = vmatprep.subr.bf16.mxu0 %v304
        %2552 = vmatpush1.bf16.msra.mxu0 %v303
        %2553 = vmatprep.subr.bf16.mxu0 %v306
        %2554 = vmatpush1.bf16.msra.mxu0 %v305
        %2555 = vmatprep.subr.bf16.mxu0 %v308
        %2556 = vmatpush1.bf16.msra.mxu0 %v307
        %2557 = vmatprep.subr.bf16.mxu0 %v310
        %2558 = vmatpush1.bf16.msra.mxu0 %v309
        %2559 = vmatprep.subr.bf16.mxu0 0
        %2560 = vmatpush1.bf16.msra.mxu0 0
        %2561 = vmatprep.subr.bf16.mxu0 0
        %2562 = vmatpush1.bf16.msra.mxu0 0
        %2563 = vmatprep.subr.bf16.mxu0 0
        %2564 = vmatpush1.bf16.msra.mxu0 0
        %2565 = vmatprep.subr.bf16.mxu0 0
        %2566 = vmatpush1.bf16.msra.mxu0 0
        %2567 = vmatprep.subr.bf16.mxu0 0
        %2568 = vmatpush1.bf16.msra.mxu0 0
        %2569 = vmatprep.subr.bf16.mxu0 0
        %2570 = vmatpush1.bf16.msra.mxu0 0
        %2571 = vmatprep.subr.bf16.mxu0 0
        %2572 = vmatpush1.bf16.msra.mxu0 0
        %2573 = vmatprep.subr.bf16.mxu0 0
        %2574 = vmatpush1.bf16.msra.mxu0 0
        %2575 = vmatprep.mubr.bf16.mxu0 0
        %2576 = vmatmul.mubr.bf16.gmra.mrb[0].mxu0 %v2541
        %v2577 = vpop.f32.mrb[0].mxu0
        %v2578 = vadd.f32 0.0, %v2577
        %v2579 = vpop.f32.mrb[0].mxu0
        %v2580 = vadd.f32 0.0, %v2579
        %v2581 = vpop.f32.mrb[0].mxu0
        %v2582 = vadd.f32 0.0, %v2581
        %v2583 = vpop.f32.mrb[0].mxu0
        %v2584 = vadd.f32 0.0, %v2583
        %2585 = vmatprep.mubr.bf16.mxu0 0
        %2586 = vmatmul.mubr.bf16.gmra.mrb[0].mxu0 %v2542
        %v2587 = vpop.f32.mrb[0].mxu0
        %v2588 = vadd.f32 0.0, %v2587
        %v2589 = vpop.f32.mrb[0].mxu0
        %v2590 = vadd.f32 0.0, %v2589
        %v2591 = vpop.f32.mrb[0].mxu0
        %v2592 = vadd.f32 0.0, %v2591
        %v2593 = vpop.f32.mrb[0].mxu0
        %v2594 = vadd.f32 0.0, %v2593
        %2595 = vdwg.mxu0
        %v2596 = vrot.slane %v2537, 7
        %v2597 = vrot.slane %v2538, 7
        %v2598 = vrot.slane %v2539, 7
        %v2599 = vrot.slane %v2540, 7
        %v2600 = vsel %vm386, %v2598, %v2599
        %v2601 = vsel %vm386, %v2597, %v2598
        %v2602 = vsel %vm386, %v2596, %v2597
        %v2603 = vsel %vm386, %v2599, %v2596
        %v2604 = vrot.slane %v2537, 6
        %v2605 = vrot.slane %v2538, 6
        %v2606 = vrot.slane %v2539, 6
        %v2607 = vrot.slane %v2540, 6
        %v2608 = vsel %vm395, %v2606, %v2607
        %v2609 = vsel %vm395, %v2605, %v2606
        %v2610 = vsel %vm395, %v2604, %v2605
        %v2611 = vsel %vm395, %v2607, %v2604
        %v2612 = vrot.slane %v2537, 1
        %v2613 = vrot.slane %v2538, 1
        %v2614 = vrot.slane %v2539, 1
        %v2615 = vrot.slane %v2540, 1
        %v2616 = vsel %vm404, %v2614, %v2615
        %v2617 = vsel %vm404, %v2613, %v2614
        %v2618 = vsel %vm404, %v2612, %v2613
        %v2619 = vsel %vm404, %v2615, %v2612
        %v2620 = vrot.slane %v2537, 2
        %v2621 = vrot.slane %v2538, 2
        %v2622 = vrot.slane %v2539, 2
        %v2623 = vrot.slane %v2540, 2
        %v2624 = vsel %vm413, %v2622, %v2623
        %v2625 = vsel %vm413, %v2621, %v2622
        %v2626 = vsel %vm413, %v2620, %v2621
        %v2627 = vsel %vm413, %v2623, %v2620
        %v2628 = vsub.f32 %v2611, %v2626
        %v2629 = vsub.f32 %v2610, %v2625
        %v2630 = vsub.f32 %v2609, %v2624
        %v2631 = vsub.f32 %v2608, %v2627
        %v2632 = vmul.f32 %v2628, 8.333333
        %v2633 = vmul.f32 %v2629, 8.333333
        %v2634 = vmul.f32 %v2630, 8.333333
        %v2635 = vmul.f32 %v2631, 8.333333
        %v2636 = vsub.f32 %v2618, %v2603
        %v2637 = vsub.f32 %v2617, %v2602
        %v2638 = vsub.f32 %v2616, %v2601
        %v2639 = vsub.f32 %v2619, %v2600
        %v2640 = vmul.f32 %v2636, 66.666664
        %v2641 = vmul.f32 %v2637, 66.666664
        %v2642 = vmul.f32 %v2638, 66.666664
        %v2643 = vmul.f32 %v2639, 66.666664
        %v2644 = vadd.f32 %v2632, %v2640
        %v2645 = vadd.f32 %v2633, %v2641
        %v2646 = vadd.f32 %v2634, %v2642
        %v2647 = vadd.f32 %v2635, %v2643
        %v2648 = vadd.f32 %v2611, %v2626
        %v2649 = vadd.f32 %v2610, %v2625
        %v2650 = vadd.f32 %v2609, %v2624
        %v2651 = vadd.f32 %v2608, %v2627
        %v2652 = vmul.f32 %v2648, -7.8199944
        %v2653 = vmul.f32 %v2649, -7.8199944
        %v2654 = vmul.f32 %v2650, -7.8199944
        %v2655 = vmul.f32 %v2651, -7.8199944
        %v2656 = vadd.f32 %v2603, %v2618
        %v2657 = vadd.f32 %v2602, %v2617
        %v2658 = vadd.f32 %v2601, %v2616
        %v2659 = vadd.f32 %v2600, %v2619
        %v2660 = vmul.f32 %v2656, 125.11991
        %v2661 = vmul.f32 %v2657, 125.11991
        %v2662 = vmul.f32 %v2658, 125.11991
        %v2663 = vmul.f32 %v2659, 125.11991
        %v2664 = vadd.f32 %v2652, %v2660
        %v2665 = vadd.f32 %v2653, %v2661
        %v2666 = vadd.f32 %v2654, %v2662
        %v2667 = vadd.f32 %v2655, %v2663
        %v2668 = vmul.f32 %v2537, -234.59984
        %v2669 = vmul.f32 %v2538, -234.59984
        %v2670 = vmul.f32 %v2539, -234.59984
        %v2671 = vmul.f32 %v2540, -234.59984
        %v2672 = vadd.f32 %v2664, %v2668
        %v2673 = vadd.f32 %v2665, %v2669
        %v2674 = vadd.f32 %v2666, %v2670
        %v2675 = vadd.f32 %v2667, %v2671
        %v2676 = vadd.f32 %v2580, %v2672
        %v2677 = vadd.f32 %v2584, %v2673
        %v2678 = vadd.f32 %v2590, %v2674
        %v2679 = vadd.f32 %v2594, %v2675
        %2680 = vrot.lane.b32.xlu0 %v2537, 64
        %v2681 = vpop.permute.xlu0 %2680
        %2682 = vrot.lane.b32.xlu0 %v2538, 64
        %v2683 = vpop.permute.xlu0 %2682
        %2684 = vrot.lane.b32.xlu0 %v2539, 64
        %v2685 = vpop.permute.xlu0 %2684
        %2686 = vrot.lane.b32.xlu0 %v2540, 64
        %v2687 = vpop.permute.xlu0 %2686
        %v2688 = vmul.f32 %v209, %v2644
        %v2689 = vmul.f32 %v209, %v2645
        %v2690 = vmul.f32 %v209, %v2646
        %v2691 = vmul.f32 %v209, %v2647
        %v2692 = vmul.f32 %v214, %v2578
        %v2693 = vmul.f32 %v214, %v2582
        %v2694 = vmul.f32 %v214, %v2588
        %v2695 = vmul.f32 %v214, %v2592
        %v2696 = vadd.f32 %v2688, %v2692
        %v2697 = vadd.f32 %v2689, %v2693
        %v2698 = vadd.f32 %v2690, %v2694
        %v2699 = vadd.f32 %v2691, %v2695
        %v2700 = vmul.f32 %v2537, %v2696
        %v2701 = vmul.f32 %v2538, %v2697
        %v2702 = vmul.f32 %v2539, %v2698
        %v2703 = vmul.f32 %v2540, %v2699
        %v2704 = vadd.f32 %v2676, %v2700
        %v2705 = vadd.f32 %v2677, %v2701
        %v2706 = vadd.f32 %v2678, %v2702
        %v2707 = vadd.f32 %v2679, %v2703
        %v2708 = vmul.f32 %v219, %v2644
        %v2709 = vmul.f32 %v219, %v2645
        %v2710 = vmul.f32 %v219, %v2646
        %v2711 = vmul.f32 %v219, %v2647
        %v2712 = vmul.f32 %v224, %v2578
        %v2713 = vmul.f32 %v224, %v2582
        %v2714 = vmul.f32 %v224, %v2588
        %v2715 = vmul.f32 %v224, %v2592
        %v2716 = vadd.f32 %v2708, %v2712
        %v2717 = vadd.f32 %v2709, %v2713
        %v2718 = vadd.f32 %v2710, %v2714
        %v2719 = vadd.f32 %v2711, %v2715
        %v2720 = vmul.f32 %v2681, %v2716
        %v2721 = vmul.f32 %v2683, %v2717
        %v2722 = vmul.f32 %v2685, %v2718
        %v2723 = vmul.f32 %v2687, %v2719
        %v2724 = vadd.f32 %v2704, %v2720
        %v2725 = vadd.f32 %v2705, %v2721
        %v2726 = vadd.f32 %v2706, %v2722
        %v2727 = vadd.f32 %v2707, %v2723
        %v2728 = vadd.f32 %v2529, %v2724
        %v2729 = vadd.f32 %v2530, %v2725
        %v2730 = vadd.f32 %v2531, %v2726
        %v2731 = vadd.f32 %v2532, %v2727
        %v2732 = vmul.f32 %v2728, 0.00016666666
        %v2733 = vmul.f32 %v2729, 0.00016666666
        %v2734 = vmul.f32 %v2730, 0.00016666666
        %v2735 = vmul.f32 %v2731, 0.00016666666
        %v2736 = vadd.f32 %v1931, %v2732
        %v2737 = vadd.f32 %v1932, %v2733
        %v2738 = vadd.f32 %v1933, %v2734
        %v2739 = vadd.f32 %v1934, %v2735
        %s2740 = scalar_lea.vmem %s190, 64 [#allocation9]
        %2741 = vst [vmem:[%s2740] sm:$0xff] %v2736
        %2742 = vst [vmem:[%s2740 + $0x8] sm:$0xff] %v2737
        %2743 = vst [vmem:[%s2740 + $0x10] sm:$0xff] %v2738
        %2744 = vst [vmem:[%s2740 + $0x18] sm:$0xff] %v2739
        %v2745 = vpack.c.bf16 %v2737, %v2736
        %v2746 = vpack.c.bf16 %v2739, %v2738
        %2747 = vmatprep.subr.bf16.mxu0 %v296
        %2748 = vmatpush1.bf16.msra.mxu0 %v295
        %2749 = vmatprep.subr.bf16.mxu0 %v298
        %2750 = vmatpush1.bf16.msra.mxu0 %v297
        %2751 = vmatprep.subr.bf16.mxu0 %v300
        %2752 = vmatpush1.bf16.msra.mxu0 %v299
        %2753 = vmatprep.subr.bf16.mxu0 %v302
        %2754 = vmatpush1.bf16.msra.mxu0 %v301
        %2755 = vmatprep.subr.bf16.mxu0 %v304
        %2756 = vmatpush1.bf16.msra.mxu0 %v303
        %2757 = vmatprep.subr.bf16.mxu0 %v306
        %2758 = vmatpush1.bf16.msra.mxu0 %v305
        %2759 = vmatprep.subr.bf16.mxu0 %v308
        %2760 = vmatpush1.bf16.msra.mxu0 %v307
        %2761 = vmatprep.subr.bf16.mxu0 %v310
        %2762 = vmatpush1.bf16.msra.mxu0 %v309
        %2763 = vmatprep.subr.bf16.mxu0 0
        %2764 = vmatpush1.bf16.msra.mxu0 0
        %2765 = vmatprep.subr.bf16.mxu0 0
        %2766 = vmatpush1.bf16.msra.mxu0 0
        %2767 = vmatprep.subr.bf16.mxu0 0
        %2768 = vmatpush1.bf16.msra.mxu0 0
        %2769 = vmatprep.subr.bf16.mxu0 0
        %2770 = vmatpush1.bf16.msra.mxu0 0
        %2771 = vmatprep.subr.bf16.mxu0 0
        %2772 = vmatpush1.bf16.msra.mxu0 0
        %2773 = vmatprep.subr.bf16.mxu0 0
        %2774 = vmatpush1.bf16.msra.mxu0 0
        %2775 = vmatprep.subr.bf16.mxu0 0
        %2776 = vmatpush1.bf16.msra.mxu0 0
        %2777 = vmatprep.subr.bf16.mxu0 0
        %2778 = vmatpush1.bf16.msra.mxu0 0
        %2779 = vmatprep.mubr.bf16.mxu0 0
        %2780 = vmatmul.mubr.bf16.gmra.mrb[0].mxu0 %v2745
        %v2781 = vpop.f32.mrb[0].mxu0
        %v2782 = vadd.f32 0.0, %v2781
        %v2783 = vpop.f32.mrb[0].mxu0
        %v2784 = vadd.f32 0.0, %v2783
        %v2785 = vpop.f32.mrb[0].mxu0
        %v2786 = vadd.f32 0.0, %v2785
        %v2787 = vpop.f32.mrb[0].mxu0
        %v2788 = vadd.f32 0.0, %v2787
        %2789 = vmatprep.mubr.bf16.mxu0 0
        %2790 = vmatmul.mubr.bf16.gmra.mrb[0].mxu0 %v2746
        %v2791 = vpop.f32.mrb[0].mxu0
        %v2792 = vadd.f32 0.0, %v2791
        %v2793 = vpop.f32.mrb[0].mxu0
        %v2794 = vadd.f32 0.0, %v2793
        %v2795 = vpop.f32.mrb[0].mxu0
        %v2796 = vadd.f32 0.0, %v2795
        %v2797 = vpop.f32.mrb[0].mxu0
        %v2798 = vadd.f32 0.0, %v2797
        %2799 = vdwg.mxu0
        %v2800 = vrot.slane %v2736, 7
        %v2801 = vrot.slane %v2737, 7
        %v2802 = vrot.slane %v2738, 7
        %v2803 = vrot.slane %v2739, 7
        %v2804 = vsel %vm386, %v2802, %v2803
        %v2805 = vsel %vm386, %v2801, %v2802
        %v2806 = vsel %vm386, %v2800, %v2801
        %v2807 = vsel %vm386, %v2803, %v2800
        %v2808 = vrot.slane %v2736, 6
        %v2809 = vrot.slane %v2737, 6
        %v2810 = vrot.slane %v2738, 6
        %v2811 = vrot.slane %v2739, 6
        %v2812 = vsel %vm395, %v2810, %v2811
        %v2813 = vsel %vm395, %v2809, %v2810
        %v2814 = vsel %vm395, %v2808, %v2809
        %v2815 = vsel %vm395, %v2811, %v2808
        %v2816 = vrot.slane %v2736, 1
        %v2817 = vrot.slane %v2737, 1
        %v2818 = vrot.slane %v2738, 1
        %v2819 = vrot.slane %v2739, 1
        %v2820 = vsel %vm404, %v2818, %v2819
        %v2821 = vsel %vm404, %v2817, %v2818
        %v2822 = vsel %vm404, %v2816, %v2817
        %v2823 = vsel %vm404, %v2819, %v2816
        %v2824 = vrot.slane %v2736, 2
        %v2825 = vrot.slane %v2737, 2
        %v2826 = vrot.slane %v2738, 2
        %v2827 = vrot.slane %v2739, 2
        %v2828 = vsel %vm413, %v2826, %v2827
        %v2829 = vsel %vm413, %v2825, %v2826
        %v2830 = vsel %vm413, %v2824, %v2825
        %v2831 = vsel %vm413, %v2827, %v2824
        %v2832 = vsub.f32 %v2815, %v2830
        %v2833 = vsub.f32 %v2814, %v2829
        %v2834 = vsub.f32 %v2813, %v2828
        %v2835 = vsub.f32 %v2812, %v2831
        %v2836 = vmul.f32 %v2832, 8.333333
        %v2837 = vmul.f32 %v2833, 8.333333
        %v2838 = vmul.f32 %v2834, 8.333333
        %v2839 = vmul.f32 %v2835, 8.333333
        %v2840 = vsub.f32 %v2822, %v2807
        %v2841 = vsub.f32 %v2821, %v2806
        %v2842 = vsub.f32 %v2820, %v2805
        %v2843 = vsub.f32 %v2823, %v2804
        %v2844 = vmul.f32 %v2840, 66.666664
        %v2845 = vmul.f32 %v2841, 66.666664
        %v2846 = vmul.f32 %v2842, 66.666664
        %v2847 = vmul.f32 %v2843, 66.666664
        %v2848 = vadd.f32 %v2836, %v2844
        %v2849 = vadd.f32 %v2837, %v2845
        %v2850 = vadd.f32 %v2838, %v2846
        %v2851 = vadd.f32 %v2839, %v2847
        %v2852 = vadd.f32 %v2815, %v2830
        %v2853 = vadd.f32 %v2814, %v2829
        %v2854 = vadd.f32 %v2813, %v2828
        %v2855 = vadd.f32 %v2812, %v2831
        %v2856 = vmul.f32 %v2852, -7.8199944
        %v2857 = vmul.f32 %v2853, -7.8199944
        %v2858 = vmul.f32 %v2854, -7.8199944
        %v2859 = vmul.f32 %v2855, -7.8199944
        %v2860 = vadd.f32 %v2807, %v2822
        %v2861 = vadd.f32 %v2806, %v2821
        %v2862 = vadd.f32 %v2805, %v2820
        %v2863 = vadd.f32 %v2804, %v2823
        %v2864 = vmul.f32 %v2860, 125.11991
        %v2865 = vmul.f32 %v2861, 125.11991
        %v2866 = vmul.f32 %v2862, 125.11991
        %v2867 = vmul.f32 %v2863, 125.11991
        %v2868 = vadd.f32 %v2856, %v2864
        %v2869 = vadd.f32 %v2857, %v2865
        %v2870 = vadd.f32 %v2858, %v2866
        %v2871 = vadd.f32 %v2859, %v2867
        %v2872 = vmul.f32 %v2736, -234.59984
        %v2873 = vmul.f32 %v2737, -234.59984
        %v2874 = vmul.f32 %v2738, -234.59984
        %v2875 = vmul.f32 %v2739, -234.59984
        %v2876 = vadd.f32 %v2868, %v2872
        %v2877 = vadd.f32 %v2869, %v2873
        %v2878 = vadd.f32 %v2870, %v2874
        %v2879 = vadd.f32 %v2871, %v2875
        %v2880 = vadd.f32 %v2784, %v2876
        %v2881 = vadd.f32 %v2788, %v2877
        %v2882 = vadd.f32 %v2794, %v2878
        %v2883 = vadd.f32 %v2798, %v2879
        %2884 = vrot.lane.b32.xlu0 %v2736, 64
        %v2885 = vpop.permute.xlu0 %2884
        %2886 = vrot.lane.b32.xlu0 %v2737, 64
        %v2887 = vpop.permute.xlu0 %2886
        %2888 = vrot.lane.b32.xlu0 %v2738, 64
        %v2889 = vpop.permute.xlu0 %2888
        %2890 = vrot.lane.b32.xlu0 %v2739, 64
        %v2891 = vpop.permute.xlu0 %2890
        %v2892 = vmul.f32 %v209, %v2848
        %v2893 = vmul.f32 %v209, %v2849
        %v2894 = vmul.f32 %v209, %v2850
        %v2895 = vmul.f32 %v209, %v2851
        %v2896 = vmul.f32 %v214, %v2782
        %v2897 = vmul.f32 %v214, %v2786
        %v2898 = vmul.f32 %v214, %v2792
        %v2899 = vmul.f32 %v214, %v2796
        %v2900 = vadd.f32 %v2892, %v2896
        %v2901 = vadd.f32 %v2893, %v2897
        %v2902 = vadd.f32 %v2894, %v2898
        %v2903 = vadd.f32 %v2895, %v2899
        %v2904 = vmul.f32 %v2736, %v2900
        %v2905 = vmul.f32 %v2737, %v2901
        %v2906 = vmul.f32 %v2738, %v2902
        %v2907 = vmul.f32 %v2739, %v2903
        %v2908 = vadd.f32 %v2880, %v2904
        %v2909 = vadd.f32 %v2881, %v2905
        %v2910 = vadd.f32 %v2882, %v2906
        %v2911 = vadd.f32 %v2883, %v2907
        %v2912 = vmul.f32 %v219, %v2848
        %v2913 = vmul.f32 %v219, %v2849
        %v2914 = vmul.f32 %v219, %v2850
        %v2915 = vmul.f32 %v219, %v2851
        %v2916 = vmul.f32 %v224, %v2782
        %v2917 = vmul.f32 %v224, %v2786
        %v2918 = vmul.f32 %v224, %v2792
        %v2919 = vmul.f32 %v224, %v2796
        %v2920 = vadd.f32 %v2912, %v2916
        %v2921 = vadd.f32 %v2913, %v2917
        %v2922 = vadd.f32 %v2914, %v2918
        %v2923 = vadd.f32 %v2915, %v2919
        %v2924 = vmul.f32 %v2885, %v2920
        %v2925 = vmul.f32 %v2887, %v2921
        %v2926 = vmul.f32 %v2889, %v2922
        %v2927 = vmul.f32 %v2891, %v2923
        %v2928 = vadd.f32 %v2908, %v2924
        %v2929 = vadd.f32 %v2909, %v2925
        %v2930 = vadd.f32 %v2910, %v2926
        %v2931 = vadd.f32 %v2911, %v2927
        %v2932 = vmul.f32 %v2928, 0.0005
        %v2933 = vmul.f32 %v2929, 0.0005
        %v2934 = vmul.f32 %v2930, 0.0005
        %v2935 = vmul.f32 %v2931, 0.0005
        %v2936 = vadd.f32 %v2736, %v2932
        %v2937 = vadd.f32 %v2737, %v2933
        %v2938 = vadd.f32 %v2738, %v2934
        %v2939 = vadd.f32 %v2739, %v2935
        %v2940 = vpack.c.bf16 %v2937, %v2936
        %v2941 = vpack.c.bf16 %v2939, %v2938
        %2942 = vmatprep.subr.bf16.mxu0 %v296
        %2943 = vmatpush1.bf16.msra.mxu0 %v295
        %2944 = vmatprep.subr.bf16.mxu0 %v298
        %2945 = vmatpush1.bf16.msra.mxu0 %v297
        %2946 = vmatprep.subr.bf16.mxu0 %v300
        %2947 = vmatpush1.bf16.msra.mxu0 %v299
        %2948 = vmatprep.subr.bf16.mxu0 %v302
        %2949 = vmatpush1.bf16.msra.mxu0 %v301
        %2950 = vmatprep.subr.bf16.mxu0 %v304
        %2951 = vmatpush1.bf16.msra.mxu0 %v303
        %2952 = vmatprep.subr.bf16.mxu0 %v306
        %2953 = vmatpush1.bf16.msra.mxu0 %v305
        %2954 = vmatprep.subr.bf16.mxu0 %v308
        %2955 = vmatpush1.bf16.msra.mxu0 %v307
        %2956 = vmatprep.subr.bf16.mxu0 %v310
        %2957 = vmatpush1.bf16.msra.mxu0 %v309
        %2958 = vmatprep.subr.bf16.mxu0 0
        %2959 = vmatpush1.bf16.msra.mxu0 0
        %2960 = vmatprep.subr.bf16.mxu0 0
        %2961 = vmatpush1.bf16.msra.mxu0 0
        %2962 = vmatprep.subr.bf16.mxu0 0
        %2963 = vmatpush1.bf16.msra.mxu0 0
        %2964 = vmatprep.subr.bf16.mxu0 0
        %2965 = vmatpush1.bf16.msra.mxu0 0
        %2966 = vmatprep.subr.bf16.mxu0 0
        %2967 = vmatpush1.bf16.msra.mxu0 0
        %2968 = vmatprep.subr.bf16.mxu0 0
        %2969 = vmatpush1.bf16.msra.mxu0 0
        %2970 = vmatprep.subr.bf16.mxu0 0
        %2971 = vmatpush1.bf16.msra.mxu0 0
        %2972 = vmatprep.subr.bf16.mxu0 0
        %2973 = vmatpush1.bf16.msra.mxu0 0
        %2974 = vmatprep.mubr.bf16.mxu0 0
        %2975 = vmatmul.mubr.bf16.gmra.mrb[0].mxu0 %v2940
        %v2976 = vpop.f32.mrb[0].mxu0
        %v2977 = vadd.f32 0.0, %v2976
        %v2978 = vpop.f32.mrb[0].mxu0
        %v2979 = vadd.f32 0.0, %v2978
        %v2980 = vpop.f32.mrb[0].mxu0
        %v2981 = vadd.f32 0.0, %v2980
        %v2982 = vpop.f32.mrb[0].mxu0
        %v2983 = vadd.f32 0.0, %v2982
        %2984 = vmatprep.mubr.bf16.mxu0 0
        %2985 = vmatmul.mubr.bf16.gmra.mrb[0].mxu0 %v2941
        %v2986 = vpop.f32.mrb[0].mxu0
        %v2987 = vadd.f32 0.0, %v2986
        %v2988 = vpop.f32.mrb[0].mxu0
        %v2989 = vadd.f32 0.0, %v2988
        %v2990 = vpop.f32.mrb[0].mxu0
        %v2991 = vadd.f32 0.0, %v2990
        %v2992 = vpop.f32.mrb[0].mxu0
        %v2993 = vadd.f32 0.0, %v2992
        %2994 = vdwg.mxu0
        %v2995 = vrot.slane %v2936, 7
        %v2996 = vrot.slane %v2937, 7
        %v2997 = vrot.slane %v2938, 7
        %v2998 = vrot.slane %v2939, 7
        %v2999 = vsel %vm386, %v2997, %v2998
        %v3000 = vsel %vm386, %v2996, %v2997
        %v3001 = vsel %vm386, %v2995, %v2996
        %v3002 = vsel %vm386, %v2998, %v2995
        %v3003 = vrot.slane %v2936, 6
        %v3004 = vrot.slane %v2937, 6
        %v3005 = vrot.slane %v2938, 6
        %v3006 = vrot.slane %v2939, 6
        %v3007 = vsel %vm395, %v3005, %v3006
        %v3008 = vsel %vm395, %v3004, %v3005
        %v3009 = vsel %vm395, %v3003, %v3004
        %v3010 = vsel %vm395, %v3006, %v3003
        %v3011 = vrot.slane %v2936, 1
        %v3012 = vrot.slane %v2937, 1
        %v3013 = vrot.slane %v2938, 1
        %v3014 = vrot.slane %v2939, 1
        %v3015 = vsel %vm404, %v3013, %v3014
        %v3016 = vsel %vm404, %v3012, %v3013
        %v3017 = vsel %vm404, %v3011, %v3012
        %v3018 = vsel %vm404, %v3014, %v3011
        %v3019 = vrot.slane %v2936, 2
        %v3020 = vrot.slane %v2937, 2
        %v3021 = vrot.slane %v2938, 2
        %v3022 = vrot.slane %v2939, 2
        %v3023 = vsel %vm413, %v3021, %v3022
        %v3024 = vsel %vm413, %v3020, %v3021
        %v3025 = vsel %vm413, %v3019, %v3020
        %v3026 = vsel %vm413, %v3022, %v3019
        %v3027 = vsub.f32 %v3010, %v3025
        %v3028 = vsub.f32 %v3009, %v3024
        %v3029 = vsub.f32 %v3008, %v3023
        %v3030 = vsub.f32 %v3007, %v3026
        %v3031 = vmul.f32 %v3027, 8.333333
        %v3032 = vmul.f32 %v3028, 8.333333
        %v3033 = vmul.f32 %v3029, 8.333333
        %v3034 = vmul.f32 %v3030, 8.333333
        %v3035 = vsub.f32 %v3017, %v3002
        %v3036 = vsub.f32 %v3016, %v3001
        %v3037 = vsub.f32 %v3015, %v3000
        %v3038 = vsub.f32 %v3018, %v2999
        %v3039 = vmul.f32 %v3035, 66.666664
        %v3040 = vmul.f32 %v3036, 66.666664
        %v3041 = vmul.f32 %v3037, 66.666664
        %v3042 = vmul.f32 %v3038, 66.666664
        %v3043 = vadd.f32 %v3031, %v3039
        %v3044 = vadd.f32 %v3032, %v3040
        %v3045 = vadd.f32 %v3033, %v3041
        %v3046 = vadd.f32 %v3034, %v3042
        %v3047 = vadd.f32 %v3010, %v3025
        %v3048 = vadd.f32 %v3009, %v3024
        %v3049 = vadd.f32 %v3008, %v3023
        %v3050 = vadd.f32 %v3007, %v3026
        %v3051 = vmul.f32 %v3047, -7.8199944
        %v3052 = vmul.f32 %v3048, -7.8199944
        %v3053 = vmul.f32 %v3049, -7.8199944
        %v3054 = vmul.f32 %v3050, -7.8199944
        %v3055 = vadd.f32 %v3002, %v3017
        %v3056 = vadd.f32 %v3001, %v3016
        %v3057 = vadd.f32 %v3000, %v3015
        %v3058 = vadd.f32 %v2999, %v3018
        %v3059 = vmul.f32 %v3055, 125.11991
        %v3060 = vmul.f32 %v3056, 125.11991
        %v3061 = vmul.f32 %v3057, 125.11991
        %v3062 = vmul.f32 %v3058, 125.11991
        %v3063 = vadd.f32 %v3051, %v3059
        %v3064 = vadd.f32 %v3052, %v3060
        %v3065 = vadd.f32 %v3053, %v3061
        %v3066 = vadd.f32 %v3054, %v3062
        %v3067 = vmul.f32 %v2936, -234.59984
        %v3068 = vmul.f32 %v2937, -234.59984
        %v3069 = vmul.f32 %v2938, -234.59984
        %v3070 = vmul.f32 %v2939, -234.59984
        %v3071 = vadd.f32 %v3063, %v3067
        %v3072 = vadd.f32 %v3064, %v3068
        %v3073 = vadd.f32 %v3065, %v3069
        %v3074 = vadd.f32 %v3066, %v3070
        %v3075 = vadd.f32 %v2979, %v3071
        %v3076 = vadd.f32 %v2983, %v3072
        %v3077 = vadd.f32 %v2989, %v3073
        %v3078 = vadd.f32 %v2993, %v3074
        %3079 = vrot.lane.b32.xlu0 %v2936, 64
        %v3080 = vpop.permute.xlu0 %3079
        %3081 = vrot.lane.b32.xlu0 %v2937, 64
        %v3082 = vpop.permute.xlu0 %3081
        %3083 = vrot.lane.b32.xlu0 %v2938, 64
        %v3084 = vpop.permute.xlu0 %3083
        %3085 = vrot.lane.b32.xlu0 %v2939, 64
        %v3086 = vpop.permute.xlu0 %3085
        %v3087 = vmul.f32 %v209, %v3043
        %v3088 = vmul.f32 %v209, %v3044
        %v3089 = vmul.f32 %v209, %v3045
        %v3090 = vmul.f32 %v209, %v3046
        %v3091 = vmul.f32 %v214, %v2977
        %v3092 = vmul.f32 %v214, %v2981
        %v3093 = vmul.f32 %v214, %v2987
        %v3094 = vmul.f32 %v214, %v2991
        %v3095 = vadd.f32 %v3087, %v3091
        %v3096 = vadd.f32 %v3088, %v3092
        %v3097 = vadd.f32 %v3089, %v3093
        %v3098 = vadd.f32 %v3090, %v3094
        %v3099 = vmul.f32 %v2936, %v3095
        %v3100 = vmul.f32 %v2937, %v3096
        %v3101 = vmul.f32 %v2938, %v3097
        %v3102 = vmul.f32 %v2939, %v3098
        %v3103 = vadd.f32 %v3075, %v3099
        %v3104 = vadd.f32 %v3076, %v3100
        %v3105 = vadd.f32 %v3077, %v3101
        %v3106 = vadd.f32 %v3078, %v3102
        %v3107 = vmul.f32 %v219, %v3043
        %v3108 = vmul.f32 %v219, %v3044
        %v3109 = vmul.f32 %v219, %v3045
        %v3110 = vmul.f32 %v219, %v3046
        %v3111 = vmul.f32 %v224, %v2977
        %v3112 = vmul.f32 %v224, %v2981
        %v3113 = vmul.f32 %v224, %v2987
        %v3114 = vmul.f32 %v224, %v2991
        %v3115 = vadd.f32 %v3107, %v3111
        %v3116 = vadd.f32 %v3108, %v3112
        %v3117 = vadd.f32 %v3109, %v3113
        %v3118 = vadd.f32 %v3110, %v3114
        %v3119 = vmul.f32 %v3080, %v3115
        %v3120 = vmul.f32 %v3082, %v3116
        %v3121 = vmul.f32 %v3084, %v3117
        %v3122 = vmul.f32 %v3086, %v3118
        %v3123 = vadd.f32 %v3103, %v3119
        %v3124 = vadd.f32 %v3104, %v3120
        %v3125 = vadd.f32 %v3105, %v3121
        %v3126 = vadd.f32 %v3106, %v3122
        %v3127 = vmul.f32 %v3123, 2.0
        %v3128 = vmul.f32 %v3124, 2.0
        %v3129 = vmul.f32 %v3125, 2.0
        %v3130 = vmul.f32 %v3126, 2.0
        %v3131 = vadd.f32 %v2928, %v3127
        %v3132 = vadd.f32 %v2929, %v3128
        %v3133 = vadd.f32 %v2930, %v3129
        %v3134 = vadd.f32 %v2931, %v3130
        %v3135 = vmul.f32 %v3123, 0.0005
        %v3136 = vmul.f32 %v3124, 0.0005
        %v3137 = vmul.f32 %v3125, 0.0005
        %v3138 = vmul.f32 %v3126, 0.0005
        %v3139 = vadd.f32 %v2736, %v3135
        %v3140 = vadd.f32 %v2737, %v3136
        %v3141 = vadd.f32 %v2738, %v3137
        %v3142 = vadd.f32 %v2739, %v3138
        %v3143 = vpack.c.bf16 %v3140, %v3139
        %v3144 = vpack.c.bf16 %v3142, %v3141
        %3145 = vmatprep.subr.bf16.mxu0 %v296
        %3146 = vmatpush1.bf16.msra.mxu0 %v295
        %3147 = vmatprep.subr.bf16.mxu0 %v298
        %3148 = vmatpush1.bf16.msra.mxu0 %v297
        %3149 = vmatprep.subr.bf16.mxu0 %v300
        %3150 = vmatpush1.bf16.msra.mxu0 %v299
        %3151 = vmatprep.subr.bf16.mxu0 %v302
        %3152 = vmatpush1.bf16.msra.mxu0 %v301
        %3153 = vmatprep.subr.bf16.mxu0 %v304
        %3154 = vmatpush1.bf16.msra.mxu0 %v303
        %3155 = vmatprep.subr.bf16.mxu0 %v306
        %3156 = vmatpush1.bf16.msra.mxu0 %v305
        %3157 = vmatprep.subr.bf16.mxu0 %v308
        %3158 = vmatpush1.bf16.msra.mxu0 %v307
        %3159 = vmatprep.subr.bf16.mxu0 %v310
        %3160 = vmatpush1.bf16.msra.mxu0 %v309
        %3161 = vmatprep.subr.bf16.mxu0 0
        %3162 = vmatpush1.bf16.msra.mxu0 0
        %3163 = vmatprep.subr.bf16.mxu0 0
        %3164 = vmatpush1.bf16.msra.mxu0 0
        %3165 = vmatprep.subr.bf16.mxu0 0
        %3166 = vmatpush1.bf16.msra.mxu0 0
        %3167 = vmatprep.subr.bf16.mxu0 0
        %3168 = vmatpush1.bf16.msra.mxu0 0
        %3169 = vmatprep.subr.bf16.mxu0 0
        %3170 = vmatpush1.bf16.msra.mxu0 0
        %3171 = vmatprep.subr.bf16.mxu0 0
        %3172 = vmatpush1.bf16.msra.mxu0 0
        %3173 = vmatprep.subr.bf16.mxu0 0
        %3174 = vmatpush1.bf16.msra.mxu0 0
        %3175 = vmatprep.subr.bf16.mxu0 0
        %3176 = vmatpush1.bf16.msra.mxu0 0
        %3177 = vmatprep.mubr.bf16.mxu0 0
        %3178 = vmatmul.mubr.bf16.gmra.mrb[0].mxu0 %v3143
        %v3179 = vpop.f32.mrb[0].mxu0
        %v3180 = vadd.f32 0.0, %v3179
        %v3181 = vpop.f32.mrb[0].mxu0
        %v3182 = vadd.f32 0.0, %v3181
        %v3183 = vpop.f32.mrb[0].mxu0
        %v3184 = vadd.f32 0.0, %v3183
        %v3185 = vpop.f32.mrb[0].mxu0
        %v3186 = vadd.f32 0.0, %v3185
        %3187 = vmatprep.mubr.bf16.mxu0 0
        %3188 = vmatmul.mubr.bf16.gmra.mrb[0].mxu0 %v3144
        %v3189 = vpop.f32.mrb[0].mxu0
        %v3190 = vadd.f32 0.0, %v3189
        %v3191 = vpop.f32.mrb[0].mxu0
        %v3192 = vadd.f32 0.0, %v3191
        %v3193 = vpop.f32.mrb[0].mxu0
        %v3194 = vadd.f32 0.0, %v3193
        %v3195 = vpop.f32.mrb[0].mxu0
        %v3196 = vadd.f32 0.0, %v3195
        %3197 = vdwg.mxu0
        %v3198 = vrot.slane %v3139, 7
        %v3199 = vrot.slane %v3140, 7
        %v3200 = vrot.slane %v3141, 7
        %v3201 = vrot.slane %v3142, 7
        %v3202 = vsel %vm386, %v3200, %v3201
        %v3203 = vsel %vm386, %v3199, %v3200
        %v3204 = vsel %vm386, %v3198, %v3199
        %v3205 = vsel %vm386, %v3201, %v3198
        %v3206 = vrot.slane %v3139, 6
        %v3207 = vrot.slane %v3140, 6
        %v3208 = vrot.slane %v3141, 6
        %v3209 = vrot.slane %v3142, 6
        %v3210 = vsel %vm395, %v3208, %v3209
        %v3211 = vsel %vm395, %v3207, %v3208
        %v3212 = vsel %vm395, %v3206, %v3207
        %v3213 = vsel %vm395, %v3209, %v3206
        %v3214 = vrot.slane %v3139, 1
        %v3215 = vrot.slane %v3140, 1
        %v3216 = vrot.slane %v3141, 1
        %v3217 = vrot.slane %v3142, 1
        %v3218 = vsel %vm404, %v3216, %v3217
        %v3219 = vsel %vm404, %v3215, %v3216
        %v3220 = vsel %vm404, %v3214, %v3215
        %v3221 = vsel %vm404, %v3217, %v3214
        %v3222 = vrot.slane %v3139, 2
        %v3223 = vrot.slane %v3140, 2
        %v3224 = vrot.slane %v3141, 2
        %v3225 = vrot.slane %v3142, 2
        %v3226 = vsel %vm413, %v3224, %v3225
        %v3227 = vsel %vm413, %v3223, %v3224
        %v3228 = vsel %vm413, %v3222, %v3223
        %v3229 = vsel %vm413, %v3225, %v3222
        %v3230 = vsub.f32 %v3213, %v3228
        %v3231 = vsub.f32 %v3212, %v3227
        %v3232 = vsub.f32 %v3211, %v3226
        %v3233 = vsub.f32 %v3210, %v3229
        %v3234 = vmul.f32 %v3230, 8.333333
        %v3235 = vmul.f32 %v3231, 8.333333
        %v3236 = vmul.f32 %v3232, 8.333333
        %v3237 = vmul.f32 %v3233, 8.333333
        %v3238 = vsub.f32 %v3220, %v3205
        %v3239 = vsub.f32 %v3219, %v3204
        %v3240 = vsub.f32 %v3218, %v3203
        %v3241 = vsub.f32 %v3221, %v3202
        %v3242 = vmul.f32 %v3238, 66.666664
        %v3243 = vmul.f32 %v3239, 66.666664
        %v3244 = vmul.f32 %v3240, 66.666664
        %v3245 = vmul.f32 %v3241, 66.666664
        %v3246 = vadd.f32 %v3234, %v3242
        %v3247 = vadd.f32 %v3235, %v3243
        %v3248 = vadd.f32 %v3236, %v3244
        %v3249 = vadd.f32 %v3237, %v3245
        %v3250 = vadd.f32 %v3213, %v3228
        %v3251 = vadd.f32 %v3212, %v3227
        %v3252 = vadd.f32 %v3211, %v3226
        %v3253 = vadd.f32 %v3210, %v3229
        %v3254 = vmul.f32 %v3250, -7.8199944
        %v3255 = vmul.f32 %v3251, -7.8199944
        %v3256 = vmul.f32 %v3252, -7.8199944
        %v3257 = vmul.f32 %v3253, -7.8199944
        %v3258 = vadd.f32 %v3205, %v3220
        %v3259 = vadd.f32 %v3204, %v3219
        %v3260 = vadd.f32 %v3203, %v3218
        %v3261 = vadd.f32 %v3202, %v3221
        %v3262 = vmul.f32 %v3258, 125.11991
        %v3263 = vmul.f32 %v3259, 125.11991
        %v3264 = vmul.f32 %v3260, 125.11991
        %v3265 = vmul.f32 %v3261, 125.11991
        %v3266 = vadd.f32 %v3254, %v3262
        %v3267 = vadd.f32 %v3255, %v3263
        %v3268 = vadd.f32 %v3256, %v3264
        %v3269 = vadd.f32 %v3257, %v3265
        %v3270 = vmul.f32 %v3139, -234.59984
        %v3271 = vmul.f32 %v3140, -234.59984
        %v3272 = vmul.f32 %v3141, -234.59984
        %v3273 = vmul.f32 %v3142, -234.59984
        %v3274 = vadd.f32 %v3266, %v3270
        %v3275 = vadd.f32 %v3267, %v3271
        %v3276 = vadd.f32 %v3268, %v3272
        %v3277 = vadd.f32 %v3269, %v3273
        %v3278 = vadd.f32 %v3182, %v3274
        %v3279 = vadd.f32 %v3186, %v3275
        %v3280 = vadd.f32 %v3192, %v3276
        %v3281 = vadd.f32 %v3196, %v3277
        %3282 = vrot.lane.b32.xlu0 %v3139, 64
        %v3283 = vpop.permute.xlu0 %3282
        %3284 = vrot.lane.b32.xlu0 %v3140, 64
        %v3285 = vpop.permute.xlu0 %3284
        %3286 = vrot.lane.b32.xlu0 %v3141, 64
        %v3287 = vpop.permute.xlu0 %3286
        %3288 = vrot.lane.b32.xlu0 %v3142, 64
        %v3289 = vpop.permute.xlu0 %3288
        %v3290 = vmul.f32 %v209, %v3246
        %v3291 = vmul.f32 %v209, %v3247
        %v3292 = vmul.f32 %v209, %v3248
        %v3293 = vmul.f32 %v209, %v3249
        %v3294 = vmul.f32 %v214, %v3180
        %v3295 = vmul.f32 %v214, %v3184
        %v3296 = vmul.f32 %v214, %v3190
        %v3297 = vmul.f32 %v214, %v3194
        %v3298 = vadd.f32 %v3290, %v3294
        %v3299 = vadd.f32 %v3291, %v3295
        %v3300 = vadd.f32 %v3292, %v3296
        %v3301 = vadd.f32 %v3293, %v3297
        %v3302 = vmul.f32 %v3139, %v3298
        %v3303 = vmul.f32 %v3140, %v3299
        %v3304 = vmul.f32 %v3141, %v3300
        %v3305 = vmul.f32 %v3142, %v3301
        %v3306 = vadd.f32 %v3278, %v3302
        %v3307 = vadd.f32 %v3279, %v3303
        %v3308 = vadd.f32 %v3280, %v3304
        %v3309 = vadd.f32 %v3281, %v3305
        %v3310 = vmul.f32 %v219, %v3246
        %v3311 = vmul.f32 %v219, %v3247
        %v3312 = vmul.f32 %v219, %v3248
        %v3313 = vmul.f32 %v219, %v3249
        %v3314 = vmul.f32 %v224, %v3180
        %v3315 = vmul.f32 %v224, %v3184
        %v3316 = vmul.f32 %v224, %v3190
        %v3317 = vmul.f32 %v224, %v3194
        %v3318 = vadd.f32 %v3310, %v3314
        %v3319 = vadd.f32 %v3311, %v3315
        %v3320 = vadd.f32 %v3312, %v3316
        %v3321 = vadd.f32 %v3313, %v3317
        %v3322 = vmul.f32 %v3283, %v3318
        %v3323 = vmul.f32 %v3285, %v3319
        %v3324 = vmul.f32 %v3287, %v3320
        %v3325 = vmul.f32 %v3289, %v3321
        %v3326 = vadd.f32 %v3306, %v3322
        %v3327 = vadd.f32 %v3307, %v3323
        %v3328 = vadd.f32 %v3308, %v3324
        %v3329 = vadd.f32 %v3309, %v3325
        %v3330 = vmul.f32 %v3326, 2.0
        %v3331 = vmul.f32 %v3327, 2.0
        %v3332 = vmul.f32 %v3328, 2.0
        %v3333 = vmul.f32 %v3329, 2.0
        %v3334 = vadd.f32 %v3131, %v3330
        %v3335 = vadd.f32 %v3132, %v3331
        %v3336 = vadd.f32 %v3133, %v3332
        %v3337 = vadd.f32 %v3134, %v3333
        %v3338 = vmul.f32 %v3326, 0.001
        %v3339 = vmul.f32 %v3327, 0.001
        %v3340 = vmul.f32 %v3328, 0.001
        %v3341 = vmul.f32 %v3329, 0.001
        %v3342 = vadd.f32 %v2736, %v3338
        %v3343 = vadd.f32 %v2737, %v3339
        %v3344 = vadd.f32 %v2738, %v3340
        %v3345 = vadd.f32 %v2739, %v3341
        %v3346 = vpack.c.bf16 %v3343, %v3342
        %v3347 = vpack.c.bf16 %v3345, %v3344
        %3348 = vmatprep.subr.bf16.mxu0 %v296
        %3349 = vmatpush1.bf16.msra.mxu0 %v295
        %3350 = vmatprep.subr.bf16.mxu0 %v298
        %3351 = vmatpush1.bf16.msra.mxu0 %v297
        %3352 = vmatprep.subr.bf16.mxu0 %v300
        %3353 = vmatpush1.bf16.msra.mxu0 %v299
        %3354 = vmatprep.subr.bf16.mxu0 %v302
        %3355 = vmatpush1.bf16.msra.mxu0 %v301
        %3356 = vmatprep.subr.bf16.mxu0 %v304
        %3357 = vmatpush1.bf16.msra.mxu0 %v303
        %3358 = vmatprep.subr.bf16.mxu0 %v306
        %3359 = vmatpush1.bf16.msra.mxu0 %v305
        %3360 = vmatprep.subr.bf16.mxu0 %v308
        %3361 = vmatpush1.bf16.msra.mxu0 %v307
        %3362 = vmatprep.subr.bf16.mxu0 %v310
        %3363 = vmatpush1.bf16.msra.mxu0 %v309
        %3364 = vmatprep.subr.bf16.mxu0 0
        %3365 = vmatpush1.bf16.msra.mxu0 0
        %3366 = vmatprep.subr.bf16.mxu0 0
        %3367 = vmatpush1.bf16.msra.mxu0 0
        %3368 = vmatprep.subr.bf16.mxu0 0
        %3369 = vmatpush1.bf16.msra.mxu0 0
        %3370 = vmatprep.subr.bf16.mxu0 0
        %3371 = vmatpush1.bf16.msra.mxu0 0
        %3372 = vmatprep.subr.bf16.mxu0 0
        %3373 = vmatpush1.bf16.msra.mxu0 0
        %3374 = vmatprep.subr.bf16.mxu0 0
        %3375 = vmatpush1.bf16.msra.mxu0 0
        %3376 = vmatprep.subr.bf16.mxu0 0
        %3377 = vmatpush1.bf16.msra.mxu0 0
        %3378 = vmatprep.subr.bf16.mxu0 0
        %3379 = vmatpush1.bf16.msra.mxu0 0
        %3380 = vmatprep.mubr.bf16.mxu0 0
        %3381 = vmatmul.mubr.bf16.gmra.mrb[0].mxu0 %v3346
        %v3382 = vpop.f32.mrb[0].mxu0
        %v3383 = vadd.f32 0.0, %v3382
        %v3384 = vpop.f32.mrb[0].mxu0
        %v3385 = vadd.f32 0.0, %v3384
        %v3386 = vpop.f32.mrb[0].mxu0
        %v3387 = vadd.f32 0.0, %v3386
        %v3388 = vpop.f32.mrb[0].mxu0
        %v3389 = vadd.f32 0.0, %v3388
        %3390 = vmatprep.mubr.bf16.mxu0 0
        %3391 = vmatmul.mubr.bf16.gmra.mrb[0].mxu0 %v3347
        %v3392 = vpop.f32.mrb[0].mxu0
        %v3393 = vadd.f32 0.0, %v3392
        %v3394 = vpop.f32.mrb[0].mxu0
        %v3395 = vadd.f32 0.0, %v3394
        %v3396 = vpop.f32.mrb[0].mxu0
        %v3397 = vadd.f32 0.0, %v3396
        %v3398 = vpop.f32.mrb[0].mxu0
        %v3399 = vadd.f32 0.0, %v3398
        %3400 = vdwg.mxu0
        %v3401 = vrot.slane %v3342, 7
        %v3402 = vrot.slane %v3343, 7
        %v3403 = vrot.slane %v3344, 7
        %v3404 = vrot.slane %v3345, 7
        %v3405 = vsel %vm386, %v3403, %v3404
        %v3406 = vsel %vm386, %v3402, %v3403
        %v3407 = vsel %vm386, %v3401, %v3402
        %v3408 = vsel %vm386, %v3404, %v3401
        %v3409 = vrot.slane %v3342, 6
        %v3410 = vrot.slane %v3343, 6
        %v3411 = vrot.slane %v3344, 6
        %v3412 = vrot.slane %v3345, 6
        %v3413 = vsel %vm395, %v3411, %v3412
        %v3414 = vsel %vm395, %v3410, %v3411
        %v3415 = vsel %vm395, %v3409, %v3410
        %v3416 = vsel %vm395, %v3412, %v3409
        %v3417 = vrot.slane %v3342, 1
        %v3418 = vrot.slane %v3343, 1
        %v3419 = vrot.slane %v3344, 1
        %v3420 = vrot.slane %v3345, 1
        %v3421 = vsel %vm404, %v3419, %v3420
        %v3422 = vsel %vm404, %v3418, %v3419
        %v3423 = vsel %vm404, %v3417, %v3418
        %v3424 = vsel %vm404, %v3420, %v3417
        %v3425 = vrot.slane %v3342, 2
        %v3426 = vrot.slane %v3343, 2
        %v3427 = vrot.slane %v3344, 2
        %v3428 = vrot.slane %v3345, 2
        %v3429 = vsel %vm413, %v3427, %v3428
        %v3430 = vsel %vm413, %v3426, %v3427
        %v3431 = vsel %vm413, %v3425, %v3426
        %v3432 = vsel %vm413, %v3428, %v3425
        %v3433 = vsub.f32 %v3416, %v3431
        %v3434 = vsub.f32 %v3415, %v3430
        %v3435 = vsub.f32 %v3414, %v3429
        %v3436 = vsub.f32 %v3413, %v3432
        %v3437 = vmul.f32 %v3433, 8.333333
        %v3438 = vmul.f32 %v3434, 8.333333
        %v3439 = vmul.f32 %v3435, 8.333333
        %v3440 = vmul.f32 %v3436, 8.333333
        %v3441 = vsub.f32 %v3423, %v3408
        %v3442 = vsub.f32 %v3422, %v3407
        %v3443 = vsub.f32 %v3421, %v3406
        %v3444 = vsub.f32 %v3424, %v3405
        %v3445 = vmul.f32 %v3441, 66.666664
        %v3446 = vmul.f32 %v3442, 66.666664
        %v3447 = vmul.f32 %v3443, 66.666664
        %v3448 = vmul.f32 %v3444, 66.666664
        %v3449 = vadd.f32 %v3437, %v3445
        %v3450 = vadd.f32 %v3438, %v3446
        %v3451 = vadd.f32 %v3439, %v3447
        %v3452 = vadd.f32 %v3440, %v3448
        %v3453 = vadd.f32 %v3416, %v3431
        %v3454 = vadd.f32 %v3415, %v3430
        %v3455 = vadd.f32 %v3414, %v3429
        %v3456 = vadd.f32 %v3413, %v3432
        %v3457 = vmul.f32 %v3453, -7.8199944
        %v3458 = vmul.f32 %v3454, -7.8199944
        %v3459 = vmul.f32 %v3455, -7.8199944
        %v3460 = vmul.f32 %v3456, -7.8199944
        %v3461 = vadd.f32 %v3408, %v3423
        %v3462 = vadd.f32 %v3407, %v3422
        %v3463 = vadd.f32 %v3406, %v3421
        %v3464 = vadd.f32 %v3405, %v3424
        %v3465 = vmul.f32 %v3461, 125.11991
        %v3466 = vmul.f32 %v3462, 125.11991
        %v3467 = vmul.f32 %v3463, 125.11991
        %v3468 = vmul.f32 %v3464, 125.11991
        %v3469 = vadd.f32 %v3457, %v3465
        %v3470 = vadd.f32 %v3458, %v3466
        %v3471 = vadd.f32 %v3459, %v3467
        %v3472 = vadd.f32 %v3460, %v3468
        %v3473 = vmul.f32 %v3342, -234.59984
        %v3474 = vmul.f32 %v3343, -234.59984
        %v3475 = vmul.f32 %v3344, -234.59984
        %v3476 = vmul.f32 %v3345, -234.59984
        %v3477 = vadd.f32 %v3469, %v3473
        %v3478 = vadd.f32 %v3470, %v3474
        %v3479 = vadd.f32 %v3471, %v3475
        %v3480 = vadd.f32 %v3472, %v3476
        %v3481 = vadd.f32 %v3385, %v3477
        %v3482 = vadd.f32 %v3389, %v3478
        %v3483 = vadd.f32 %v3395, %v3479
        %v3484 = vadd.f32 %v3399, %v3480
        %3485 = vrot.lane.b32.xlu0 %v3342, 64
        %v3486 = vpop.permute.xlu0 %3485
        %3487 = vrot.lane.b32.xlu0 %v3343, 64
        %v3488 = vpop.permute.xlu0 %3487
        %3489 = vrot.lane.b32.xlu0 %v3344, 64
        %v3490 = vpop.permute.xlu0 %3489
        %3491 = vrot.lane.b32.xlu0 %v3345, 64
        %v3492 = vpop.permute.xlu0 %3491
        %v3493 = vmul.f32 %v209, %v3449
        %v3494 = vmul.f32 %v209, %v3450
        %v3495 = vmul.f32 %v209, %v3451
        %v3496 = vmul.f32 %v209, %v3452
        %v3497 = vmul.f32 %v214, %v3383
        %v3498 = vmul.f32 %v214, %v3387
        %v3499 = vmul.f32 %v214, %v3393
        %v3500 = vmul.f32 %v214, %v3397
        %v3501 = vadd.f32 %v3493, %v3497
        %v3502 = vadd.f32 %v3494, %v3498
        %v3503 = vadd.f32 %v3495, %v3499
        %v3504 = vadd.f32 %v3496, %v3500
        %v3505 = vmul.f32 %v3342, %v3501
        %v3506 = vmul.f32 %v3343, %v3502
        %v3507 = vmul.f32 %v3344, %v3503
        %v3508 = vmul.f32 %v3345, %v3504
        %v3509 = vadd.f32 %v3481, %v3505
        %v3510 = vadd.f32 %v3482, %v3506
        %v3511 = vadd.f32 %v3483, %v3507
        %v3512 = vadd.f32 %v3484, %v3508
        %v3513 = vmul.f32 %v219, %v3449
        %v3514 = vmul.f32 %v219, %v3450
        %v3515 = vmul.f32 %v219, %v3451
        %v3516 = vmul.f32 %v219, %v3452
        %v3517 = vmul.f32 %v224, %v3383
        %v3518 = vmul.f32 %v224, %v3387
        %v3519 = vmul.f32 %v224, %v3393
        %v3520 = vmul.f32 %v224, %v3397
        %v3521 = vadd.f32 %v3513, %v3517
        %v3522 = vadd.f32 %v3514, %v3518
        %v3523 = vadd.f32 %v3515, %v3519
        %v3524 = vadd.f32 %v3516, %v3520
        %v3525 = vmul.f32 %v3486, %v3521
        %v3526 = vmul.f32 %v3488, %v3522
        %v3527 = vmul.f32 %v3490, %v3523
        %v3528 = vmul.f32 %v3492, %v3524
        %v3529 = vadd.f32 %v3509, %v3525
        %v3530 = vadd.f32 %v3510, %v3526
        %v3531 = vadd.f32 %v3511, %v3527
        %v3532 = vadd.f32 %v3512, %v3528
        %v3533 = vadd.f32 %v3334, %v3529
        %v3534 = vadd.f32 %v3335, %v3530
        %v3535 = vadd.f32 %v3336, %v3531
        %v3536 = vadd.f32 %v3337, %v3532
        %v3537 = vmul.f32 %v3533, 0.00016666666
        %v3538 = vmul.f32 %v3534, 0.00016666666
        %v3539 = vmul.f32 %v3535, 0.00016666666
        %v3540 = vmul.f32 %v3536, 0.00016666666
        %v3541 = vadd.f32 %v2736, %v3537
        %v3542 = vadd.f32 %v2737, %v3538
        %v3543 = vadd.f32 %v2738, %v3539
        %v3544 = vadd.f32 %v2739, %v3540
        %s3545 = scalar_lea.vmem %s190, 96 [#allocation9]
        %3546 = vst [vmem:[%s3545] sm:$0xff] %v3541
        %3547 = vst [vmem:[%s3545 + $0x8] sm:$0xff] %v3542
        %3548 = vst [vmem:[%s3545 + $0x10] sm:$0xff] %v3543
        %3549 = vst [vmem:[%s3545 + $0x18] sm:$0xff] %v3544
        %v3550 = vpack.c.bf16 %v3542, %v3541
        %v3551 = vpack.c.bf16 %v3544, %v3543
        %3552 = vmatprep.subr.bf16.mxu0 %v296
        %3553 = vmatpush1.bf16.msra.mxu0 %v295
        %3554 = vmatprep.subr.bf16.mxu0 %v298
        %3555 = vmatpush1.bf16.msra.mxu0 %v297
        %3556 = vmatprep.subr.bf16.mxu0 %v300
        %3557 = vmatpush1.bf16.msra.mxu0 %v299
        %3558 = vmatprep.subr.bf16.mxu0 %v302
        %3559 = vmatpush1.bf16.msra.mxu0 %v301
        %3560 = vmatprep.subr.bf16.mxu0 %v304
        %3561 = vmatpush1.bf16.msra.mxu0 %v303
        %3562 = vmatprep.subr.bf16.mxu0 %v306
        %3563 = vmatpush1.bf16.msra.mxu0 %v305
        %3564 = vmatprep.subr.bf16.mxu0 %v308
        %3565 = vmatpush1.bf16.msra.mxu0 %v307
        %3566 = vmatprep.subr.bf16.mxu0 %v310
        %3567 = vmatpush1.bf16.msra.mxu0 %v309
        %3568 = vmatprep.subr.bf16.mxu0 0
        %3569 = vmatpush1.bf16.msra.mxu0 0
        %3570 = vmatprep.subr.bf16.mxu0 0
        %3571 = vmatpush1.bf16.msra.mxu0 0
        %3572 = vmatprep.subr.bf16.mxu0 0
        %3573 = vmatpush1.bf16.msra.mxu0 0
        %3574 = vmatprep.subr.bf16.mxu0 0
        %3575 = vmatpush1.bf16.msra.mxu0 0
        %3576 = vmatprep.subr.bf16.mxu0 0
        %3577 = vmatpush1.bf16.msra.mxu0 0
        %3578 = vmatprep.subr.bf16.mxu0 0
        %3579 = vmatpush1.bf16.msra.mxu0 0
        %3580 = vmatprep.subr.bf16.mxu0 0
        %3581 = vmatpush1.bf16.msra.mxu0 0
        %3582 = vmatprep.subr.bf16.mxu0 0
        %3583 = vmatpush1.bf16.msra.mxu0 0
        %3584 = vmatprep.mubr.bf16.mxu0 0
        %3585 = vmatmul.mubr.bf16.gmra.mrb[0].mxu0 %v3550
        %v3586 = vpop.f32.mrb[0].mxu0
        %v3587 = vadd.f32 0.0, %v3586
        %v3588 = vpop.f32.mrb[0].mxu0
        %v3589 = vadd.f32 0.0, %v3588
        %v3590 = vpop.f32.mrb[0].mxu0
        %v3591 = vadd.f32 0.0, %v3590
        %v3592 = vpop.f32.mrb[0].mxu0
        %v3593 = vadd.f32 0.0, %v3592
        %3594 = vmatprep.mubr.bf16.mxu0 0
        %3595 = vmatmul.mubr.bf16.gmra.mrb[0].mxu0 %v3551
        %v3596 = vpop.f32.mrb[0].mxu0
        %v3597 = vadd.f32 0.0, %v3596
        %v3598 = vpop.f32.mrb[0].mxu0
        %v3599 = vadd.f32 0.0, %v3598
        %v3600 = vpop.f32.mrb[0].mxu0
        %v3601 = vadd.f32 0.0, %v3600
        %v3602 = vpop.f32.mrb[0].mxu0
        %v3603 = vadd.f32 0.0, %v3602
        %3604 = vdwg.mxu0
        %v3605 = vrot.slane %v3541, 7
        %v3606 = vrot.slane %v3542, 7
        %v3607 = vrot.slane %v3543, 7
        %v3608 = vrot.slane %v3544, 7
        %v3609 = vsel %vm386, %v3607, %v3608
        %v3610 = vsel %vm386, %v3606, %v3607
        %v3611 = vsel %vm386, %v3605, %v3606
        %v3612 = vsel %vm386, %v3608, %v3605
        %v3613 = vrot.slane %v3541, 6
        %v3614 = vrot.slane %v3542, 6
        %v3615 = vrot.slane %v3543, 6
        %v3616 = vrot.slane %v3544, 6
        %v3617 = vsel %vm395, %v3615, %v3616
        %v3618 = vsel %vm395, %v3614, %v3615
        %v3619 = vsel %vm395, %v3613, %v3614
        %v3620 = vsel %vm395, %v3616, %v3613
        %v3621 = vrot.slane %v3541, 1
        %v3622 = vrot.slane %v3542, 1
        %v3623 = vrot.slane %v3543, 1
        %v3624 = vrot.slane %v3544, 1
        %v3625 = vsel %vm404, %v3623, %v3624
        %v3626 = vsel %vm404, %v3622, %v3623
        %v3627 = vsel %vm404, %v3621, %v3622
        %v3628 = vsel %vm404, %v3624, %v3621
        %v3629 = vrot.slane %v3541, 2
        %v3630 = vrot.slane %v3542, 2
        %v3631 = vrot.slane %v3543, 2
        %v3632 = vrot.slane %v3544, 2
        %v3633 = vsel %vm413, %v3631, %v3632
        %v3634 = vsel %vm413, %v3630, %v3631
        %v3635 = vsel %vm413, %v3629, %v3630
        %v3636 = vsel %vm413, %v3632, %v3629
        %v3637 = vsub.f32 %v3620, %v3635
        %v3638 = vsub.f32 %v3619, %v3634
        %v3639 = vsub.f32 %v3618, %v3633
        %v3640 = vsub.f32 %v3617, %v3636
        %v3641 = vmul.f32 %v3637, 8.333333
        %v3642 = vmul.f32 %v3638, 8.333333
        %v3643 = vmul.f32 %v3639, 8.333333
        %v3644 = vmul.f32 %v3640, 8.333333
        %v3645 = vsub.f32 %v3627, %v3612
        %v3646 = vsub.f32 %v3626, %v3611
        %v3647 = vsub.f32 %v3625, %v3610
        %v3648 = vsub.f32 %v3628, %v3609
        %v3649 = vmul.f32 %v3645, 66.666664
        %v3650 = vmul.f32 %v3646, 66.666664
        %v3651 = vmul.f32 %v3647, 66.666664
        %v3652 = vmul.f32 %v3648, 66.666664
        %v3653 = vadd.f32 %v3641, %v3649
        %v3654 = vadd.f32 %v3642, %v3650
        %v3655 = vadd.f32 %v3643, %v3651
        %v3656 = vadd.f32 %v3644, %v3652
        %v3657 = vadd.f32 %v3620, %v3635
        %v3658 = vadd.f32 %v3619, %v3634
        %v3659 = vadd.f32 %v3618, %v3633
        %v3660 = vadd.f32 %v3617, %v3636
        %v3661 = vmul.f32 %v3657, -7.8199944
        %v3662 = vmul.f32 %v3658, -7.8199944
        %v3663 = vmul.f32 %v3659, -7.8199944
        %v3664 = vmul.f32 %v3660, -7.8199944
        %v3665 = vadd.f32 %v3612, %v3627
        %v3666 = vadd.f32 %v3611, %v3626
        %v3667 = vadd.f32 %v3610, %v3625
        %v3668 = vadd.f32 %v3609, %v3628
        %v3669 = vmul.f32 %v3665, 125.11991
        %v3670 = vmul.f32 %v3666, 125.11991
        %v3671 = vmul.f32 %v3667, 125.11991
        %v3672 = vmul.f32 %v3668, 125.11991
        %v3673 = vadd.f32 %v3661, %v3669
        %v3674 = vadd.f32 %v3662, %v3670
        %v3675 = vadd.f32 %v3663, %v3671
        %v3676 = vadd.f32 %v3664, %v3672
        %v3677 = vmul.f32 %v3541, -234.59984
        %v3678 = vmul.f32 %v3542, -234.59984
        %v3679 = vmul.f32 %v3543, -234.59984
        %v3680 = vmul.f32 %v3544, -234.59984
        %v3681 = vadd.f32 %v3673, %v3677
        %v3682 = vadd.f32 %v3674, %v3678
        %v3683 = vadd.f32 %v3675, %v3679
        %v3684 = vadd.f32 %v3676, %v3680
        %v3685 = vadd.f32 %v3589, %v3681
        %v3686 = vadd.f32 %v3593, %v3682
        %v3687 = vadd.f32 %v3599, %v3683
        %v3688 = vadd.f32 %v3603, %v3684
        %3689 = vrot.lane.b32.xlu0 %v3541, 64
        %v3690 = vpop.permute.xlu0 %3689
        %3691 = vrot.lane.b32.xlu0 %v3542, 64
        %v3692 = vpop.permute.xlu0 %3691
        %3693 = vrot.lane.b32.xlu0 %v3543, 64
        %v3694 = vpop.permute.xlu0 %3693
        %3695 = vrot.lane.b32.xlu0 %v3544, 64
        %v3696 = vpop.permute.xlu0 %3695
        %v3697 = vmul.f32 %v209, %v3653
        %v3698 = vmul.f32 %v209, %v3654
        %v3699 = vmul.f32 %v209, %v3655
        %v3700 = vmul.f32 %v209, %v3656
        %v3701 = vmul.f32 %v214, %v3587
        %v3702 = vmul.f32 %v214, %v3591
        %v3703 = vmul.f32 %v214, %v3597
        %v3704 = vmul.f32 %v214, %v3601
        %v3705 = vadd.f32 %v3697, %v3701
        %v3706 = vadd.f32 %v3698, %v3702
        %v3707 = vadd.f32 %v3699, %v3703
        %v3708 = vadd.f32 %v3700, %v3704
        %v3709 = vmul.f32 %v3541, %v3705
        %v3710 = vmul.f32 %v3542, %v3706
        %v3711 = vmul.f32 %v3543, %v3707
        %v3712 = vmul.f32 %v3544, %v3708
        %v3713 = vadd.f32 %v3685, %v3709
        %v3714 = vadd.f32 %v3686, %v3710
        %v3715 = vadd.f32 %v3687, %v3711
        %v3716 = vadd.f32 %v3688, %v3712
        %v3717 = vmul.f32 %v219, %v3653
        %v3718 = vmul.f32 %v219, %v3654
        %v3719 = vmul.f32 %v219, %v3655
        %v3720 = vmul.f32 %v219, %v3656
        %v3721 = vmul.f32 %v224, %v3587
        %v3722 = vmul.f32 %v224, %v3591
        %v3723 = vmul.f32 %v224, %v3597
        %v3724 = vmul.f32 %v224, %v3601
        %v3725 = vadd.f32 %v3717, %v3721
        %v3726 = vadd.f32 %v3718, %v3722
        %v3727 = vadd.f32 %v3719, %v3723
        %v3728 = vadd.f32 %v3720, %v3724
        %v3729 = vmul.f32 %v3690, %v3725
        %v3730 = vmul.f32 %v3692, %v3726
        %v3731 = vmul.f32 %v3694, %v3727
        %v3732 = vmul.f32 %v3696, %v3728
        %v3733 = vadd.f32 %v3713, %v3729
        %v3734 = vadd.f32 %v3714, %v3730
        %v3735 = vadd.f32 %v3715, %v3731
        %v3736 = vadd.f32 %v3716, %v3732
        %v3737 = vmul.f32 %v3733, 0.0005
        %v3738 = vmul.f32 %v3734, 0.0005
        %v3739 = vmul.f32 %v3735, 0.0005
        %v3740 = vmul.f32 %v3736, 0.0005
        %v3741 = vadd.f32 %v3541, %v3737
        %v3742 = vadd.f32 %v3542, %v3738
        %v3743 = vadd.f32 %v3543, %v3739
        %v3744 = vadd.f32 %v3544, %v3740
        %v3745 = vpack.c.bf16 %v3742, %v3741
        %v3746 = vpack.c.bf16 %v3744, %v3743
        %3747 = vmatprep.subr.bf16.mxu0 %v296
        %3748 = vmatpush1.bf16.msra.mxu0 %v295
        %3749 = vmatprep.subr.bf16.mxu0 %v298
        %3750 = vmatpush1.bf16.msra.mxu0 %v297
        %3751 = vmatprep.subr.bf16.mxu0 %v300
        %3752 = vmatpush1.bf16.msra.mxu0 %v299
        %3753 = vmatprep.subr.bf16.mxu0 %v302
        %3754 = vmatpush1.bf16.msra.mxu0 %v301
        %3755 = vmatprep.subr.bf16.mxu0 %v304
        %3756 = vmatpush1.bf16.msra.mxu0 %v303
        %3757 = vmatprep.subr.bf16.mxu0 %v306
        %3758 = vmatpush1.bf16.msra.mxu0 %v305
        %3759 = vmatprep.subr.bf16.mxu0 %v308
        %3760 = vmatpush1.bf16.msra.mxu0 %v307
        %3761 = vmatprep.subr.bf16.mxu0 %v310
        %3762 = vmatpush1.bf16.msra.mxu0 %v309
        %3763 = vmatprep.subr.bf16.mxu0 0
        %3764 = vmatpush1.bf16.msra.mxu0 0
        %3765 = vmatprep.subr.bf16.mxu0 0
        %3766 = vmatpush1.bf16.msra.mxu0 0
        %3767 = vmatprep.subr.bf16.mxu0 0
        %3768 = vmatpush1.bf16.msra.mxu0 0
        %3769 = vmatprep.subr.bf16.mxu0 0
        %3770 = vmatpush1.bf16.msra.mxu0 0
        %3771 = vmatprep.subr.bf16.mxu0 0
        %3772 = vmatpush1.bf16.msra.mxu0 0
        %3773 = vmatprep.subr.bf16.mxu0 0
        %3774 = vmatpush1.bf16.msra.mxu0 0
        %3775 = vmatprep.subr.bf16.mxu0 0
        %3776 = vmatpush1.bf16.msra.mxu0 0
        %3777 = vmatprep.subr.bf16.mxu0 0
        %3778 = vmatpush1.bf16.msra.mxu0 0
        %3779 = vmatprep.mubr.bf16.mxu0 0
        %3780 = vmatmul.mubr.bf16.gmra.mrb[0].mxu0 %v3745
        %v3781 = vpop.f32.mrb[0].mxu0
        %v3782 = vadd.f32 0.0, %v3781
        %v3783 = vpop.f32.mrb[0].mxu0
        %v3784 = vadd.f32 0.0, %v3783
        %v3785 = vpop.f32.mrb[0].mxu0
        %v3786 = vadd.f32 0.0, %v3785
        %v3787 = vpop.f32.mrb[0].mxu0
        %v3788 = vadd.f32 0.0, %v3787
        %3789 = vmatprep.mubr.bf16.mxu0 0
        %3790 = vmatmul.mubr.bf16.gmra.mrb[0].mxu0 %v3746
        %v3791 = vpop.f32.mrb[0].mxu0
        %v3792 = vadd.f32 0.0, %v3791
        %v3793 = vpop.f32.mrb[0].mxu0
        %v3794 = vadd.f32 0.0, %v3793
        %v3795 = vpop.f32.mrb[0].mxu0
        %v3796 = vadd.f32 0.0, %v3795
        %v3797 = vpop.f32.mrb[0].mxu0
        %v3798 = vadd.f32 0.0, %v3797
        %3799 = vdwg.mxu0
        %v3800 = vrot.slane %v3741, 7
        %v3801 = vrot.slane %v3742, 7
        %v3802 = vrot.slane %v3743, 7
        %v3803 = vrot.slane %v3744, 7
        %v3804 = vsel %vm386, %v3802, %v3803
        %v3805 = vsel %vm386, %v3801, %v3802
        %v3806 = vsel %vm386, %v3800, %v3801
        %v3807 = vsel %vm386, %v3803, %v3800
        %v3808 = vrot.slane %v3741, 6
        %v3809 = vrot.slane %v3742, 6
        %v3810 = vrot.slane %v3743, 6
        %v3811 = vrot.slane %v3744, 6
        %v3812 = vsel %vm395, %v3810, %v3811
        %v3813 = vsel %vm395, %v3809, %v3810
        %v3814 = vsel %vm395, %v3808, %v3809
        %v3815 = vsel %vm395, %v3811, %v3808
        %v3816 = vrot.slane %v3741, 1
        %v3817 = vrot.slane %v3742, 1
        %v3818 = vrot.slane %v3743, 1
        %v3819 = vrot.slane %v3744, 1
        %v3820 = vsel %vm404, %v3818, %v3819
        %v3821 = vsel %vm404, %v3817, %v3818
        %v3822 = vsel %vm404, %v3816, %v3817
        %v3823 = vsel %vm404, %v3819, %v3816
        %v3824 = vrot.slane %v3741, 2
        %v3825 = vrot.slane %v3742, 2
        %v3826 = vrot.slane %v3743, 2
        %v3827 = vrot.slane %v3744, 2
        %v3828 = vsel %vm413, %v3826, %v3827
        %v3829 = vsel %vm413, %v3825, %v3826
        %v3830 = vsel %vm413, %v3824, %v3825
        %v3831 = vsel %vm413, %v3827, %v3824
        %v3832 = vsub.f32 %v3815, %v3830
        %v3833 = vsub.f32 %v3814, %v3829
        %v3834 = vsub.f32 %v3813, %v3828
        %v3835 = vsub.f32 %v3812, %v3831
        %v3836 = vmul.f32 %v3832, 8.333333
        %v3837 = vmul.f32 %v3833, 8.333333
        %v3838 = vmul.f32 %v3834, 8.333333
        %v3839 = vmul.f32 %v3835, 8.333333
        %v3840 = vsub.f32 %v3822, %v3807
        %v3841 = vsub.f32 %v3821, %v3806
        %v3842 = vsub.f32 %v3820, %v3805
        %v3843 = vsub.f32 %v3823, %v3804
        %v3844 = vmul.f32 %v3840, 66.666664
        %v3845 = vmul.f32 %v3841, 66.666664
        %v3846 = vmul.f32 %v3842, 66.666664
        %v3847 = vmul.f32 %v3843, 66.666664
        %v3848 = vadd.f32 %v3836, %v3844
        %v3849 = vadd.f32 %v3837, %v3845
        %v3850 = vadd.f32 %v3838, %v3846
        %v3851 = vadd.f32 %v3839, %v3847
        %v3852 = vadd.f32 %v3815, %v3830
        %v3853 = vadd.f32 %v3814, %v3829
        %v3854 = vadd.f32 %v3813, %v3828
        %v3855 = vadd.f32 %v3812, %v3831
        %v3856 = vmul.f32 %v3852, -7.8199944
        %v3857 = vmul.f32 %v3853, -7.8199944
        %v3858 = vmul.f32 %v3854, -7.8199944
        %v3859 = vmul.f32 %v3855, -7.8199944
        %v3860 = vadd.f32 %v3807, %v3822
        %v3861 = vadd.f32 %v3806, %v3821
        %v3862 = vadd.f32 %v3805, %v3820
        %v3863 = vadd.f32 %v3804, %v3823
        %v3864 = vmul.f32 %v3860, 125.11991
        %v3865 = vmul.f32 %v3861, 125.11991
        %v3866 = vmul.f32 %v3862, 125.11991
        %v3867 = vmul.f32 %v3863, 125.11991
        %v3868 = vadd.f32 %v3856, %v3864
        %v3869 = vadd.f32 %v3857, %v3865
        %v3870 = vadd.f32 %v3858, %v3866
        %v3871 = vadd.f32 %v3859, %v3867
        %v3872 = vmul.f32 %v3741, -234.59984
        %v3873 = vmul.f32 %v3742, -234.59984
        %v3874 = vmul.f32 %v3743, -234.59984
        %v3875 = vmul.f32 %v3744, -234.59984
        %v3876 = vadd.f32 %v3868, %v3872
        %v3877 = vadd.f32 %v3869, %v3873
        %v3878 = vadd.f32 %v3870, %v3874
        %v3879 = vadd.f32 %v3871, %v3875
        %v3880 = vadd.f32 %v3784, %v3876
        %v3881 = vadd.f32 %v3788, %v3877
        %v3882 = vadd.f32 %v3794, %v3878
        %v3883 = vadd.f32 %v3798, %v3879
        %3884 = vrot.lane.b32.xlu0 %v3741, 64
        %v3885 = vpop.permute.xlu0 %3884
        %3886 = vrot.lane.b32.xlu0 %v3742, 64
        %v3887 = vpop.permute.xlu0 %3886
        %3888 = vrot.lane.b32.xlu0 %v3743, 64
        %v3889 = vpop.permute.xlu0 %3888
        %3890 = vrot.lane.b32.xlu0 %v3744, 64
        %v3891 = vpop.permute.xlu0 %3890
        %v3892 = vmul.f32 %v209, %v3848
        %v3893 = vmul.f32 %v209, %v3849
        %v3894 = vmul.f32 %v209, %v3850
        %v3895 = vmul.f32 %v209, %v3851
        %v3896 = vmul.f32 %v214, %v3782
        %v3897 = vmul.f32 %v214, %v3786
        %v3898 = vmul.f32 %v214, %v3792
        %v3899 = vmul.f32 %v214, %v3796
        %v3900 = vadd.f32 %v3892, %v3896
        %v3901 = vadd.f32 %v3893, %v3897
        %v3902 = vadd.f32 %v3894, %v3898
        %v3903 = vadd.f32 %v3895, %v3899
        %v3904 = vmul.f32 %v3741, %v3900
        %v3905 = vmul.f32 %v3742, %v3901
        %v3906 = vmul.f32 %v3743, %v3902
        %v3907 = vmul.f32 %v3744, %v3903
        %v3908 = vadd.f32 %v3880, %v3904
        %v3909 = vadd.f32 %v3881, %v3905
        %v3910 = vadd.f32 %v3882, %v3906
        %v3911 = vadd.f32 %v3883, %v3907
        %v3912 = vmul.f32 %v219, %v3848
        %v3913 = vmul.f32 %v219, %v3849
        %v3914 = vmul.f32 %v219, %v3850
        %v3915 = vmul.f32 %v219, %v3851
        %v3916 = vmul.f32 %v224, %v3782
        %v3917 = vmul.f32 %v224, %v3786
        %v3918 = vmul.f32 %v224, %v3792
        %v3919 = vmul.f32 %v224, %v3796
        %v3920 = vadd.f32 %v3912, %v3916
        %v3921 = vadd.f32 %v3913, %v3917
        %v3922 = vadd.f32 %v3914, %v3918
        %v3923 = vadd.f32 %v3915, %v3919
        %v3924 = vmul.f32 %v3885, %v3920
        %v3925 = vmul.f32 %v3887, %v3921
        %v3926 = vmul.f32 %v3889, %v3922
        %v3927 = vmul.f32 %v3891, %v3923
        %v3928 = vadd.f32 %v3908, %v3924
        %v3929 = vadd.f32 %v3909, %v3925
        %v3930 = vadd.f32 %v3910, %v3926
        %v3931 = vadd.f32 %v3911, %v3927
        %v3932 = vmul.f32 %v3928, 2.0
        %v3933 = vmul.f32 %v3929, 2.0
        %v3934 = vmul.f32 %v3930, 2.0
        %v3935 = vmul.f32 %v3931, 2.0
        %v3936 = vadd.f32 %v3733, %v3932
        %v3937 = vadd.f32 %v3734, %v3933
        %v3938 = vadd.f32 %v3735, %v3934
        %v3939 = vadd.f32 %v3736, %v3935
        %v3940 = vmul.f32 %v3928, 0.0005
        %v3941 = vmul.f32 %v3929, 0.0005
        %v3942 = vmul.f32 %v3930, 0.0005
        %v3943 = vmul.f32 %v3931, 0.0005
        %v3944 = vadd.f32 %v3541, %v3940
        %v3945 = vadd.f32 %v3542, %v3941
        %v3946 = vadd.f32 %v3543, %v3942
        %v3947 = vadd.f32 %v3544, %v3943
        %v3948 = vpack.c.bf16 %v3945, %v3944
        %v3949 = vpack.c.bf16 %v3947, %v3946
        %3950 = vmatprep.subr.bf16.mxu0 %v296
        %3951 = vmatpush1.bf16.msra.mxu0 %v295
        %3952 = vmatprep.subr.bf16.mxu0 %v298
        %3953 = vmatpush1.bf16.msra.mxu0 %v297
        %3954 = vmatprep.subr.bf16.mxu0 %v300
        %3955 = vmatpush1.bf16.msra.mxu0 %v299
        %3956 = vmatprep.subr.bf16.mxu0 %v302
        %3957 = vmatpush1.bf16.msra.mxu0 %v301
        %3958 = vmatprep.subr.bf16.mxu0 %v304
        %3959 = vmatpush1.bf16.msra.mxu0 %v303
        %3960 = vmatprep.subr.bf16.mxu0 %v306
        %3961 = vmatpush1.bf16.msra.mxu0 %v305
        %3962 = vmatprep.subr.bf16.mxu0 %v308
        %3963 = vmatpush1.bf16.msra.mxu0 %v307
        %3964 = vmatprep.subr.bf16.mxu0 %v310
        %3965 = vmatpush1.bf16.msra.mxu0 %v309
        %3966 = vmatprep.subr.bf16.mxu0 0
        %3967 = vmatpush1.bf16.msra.mxu0 0
        %3968 = vmatprep.subr.bf16.mxu0 0
        %3969 = vmatpush1.bf16.msra.mxu0 0
        %3970 = vmatprep.subr.bf16.mxu0 0
        %3971 = vmatpush1.bf16.msra.mxu0 0
        %3972 = vmatprep.subr.bf16.mxu0 0
        %3973 = vmatpush1.bf16.msra.mxu0 0
        %3974 = vmatprep.subr.bf16.mxu0 0
        %3975 = vmatpush1.bf16.msra.mxu0 0
        %3976 = vmatprep.subr.bf16.mxu0 0
        %3977 = vmatpush1.bf16.msra.mxu0 0
        %3978 = vmatprep.subr.bf16.mxu0 0
        %3979 = vmatpush1.bf16.msra.mxu0 0
        %3980 = vmatprep.subr.bf16.mxu0 0
        %3981 = vmatpush1.bf16.msra.mxu0 0
        %3982 = vmatprep.mubr.bf16.mxu0 0
        %3983 = vmatmul.mubr.bf16.gmra.mrb[0].mxu0 %v3948
        %v3984 = vpop.f32.mrb[0].mxu0
        %v3985 = vadd.f32 0.0, %v3984
        %v3986 = vpop.f32.mrb[0].mxu0
        %v3987 = vadd.f32 0.0, %v3986
        %v3988 = vpop.f32.mrb[0].mxu0
        %v3989 = vadd.f32 0.0, %v3988
        %v3990 = vpop.f32.mrb[0].mxu0
        %v3991 = vadd.f32 0.0, %v3990
        %3992 = vmatprep.mubr.bf16.mxu0 0
        %3993 = vmatmul.mubr.bf16.gmra.mrb[0].mxu0 %v3949
        %v3994 = vpop.f32.mrb[0].mxu0
        %v3995 = vadd.f32 0.0, %v3994
        %v3996 = vpop.f32.mrb[0].mxu0
        %v3997 = vadd.f32 0.0, %v3996
        %v3998 = vpop.f32.mrb[0].mxu0
        %v3999 = vadd.f32 0.0, %v3998
        %v4000 = vpop.f32.mrb[0].mxu0
        %v4001 = vadd.f32 0.0, %v4000
        %4002 = vdwg.mxu0
        %v4003 = vrot.slane %v3944, 7
        %v4004 = vrot.slane %v3945, 7
        %v4005 = vrot.slane %v3946, 7
        %v4006 = vrot.slane %v3947, 7
        %v4007 = vsel %vm386, %v4005, %v4006
        %v4008 = vsel %vm386, %v4004, %v4005
        %v4009 = vsel %vm386, %v4003, %v4004
        %v4010 = vsel %vm386, %v4006, %v4003
        %v4011 = vrot.slane %v3944, 6
        %v4012 = vrot.slane %v3945, 6
        %v4013 = vrot.slane %v3946, 6
        %v4014 = vrot.slane %v3947, 6
        %v4015 = vsel %vm395, %v4013, %v4014
        %v4016 = vsel %vm395, %v4012, %v4013
        %v4017 = vsel %vm395, %v4011, %v4012
        %v4018 = vsel %vm395, %v4014, %v4011
        %v4019 = vrot.slane %v3944, 1
        %v4020 = vrot.slane %v3945, 1
        %v4021 = vrot.slane %v3946, 1
        %v4022 = vrot.slane %v3947, 1
        %v4023 = vsel %vm404, %v4021, %v4022
        %v4024 = vsel %vm404, %v4020, %v4021
        %v4025 = vsel %vm404, %v4019, %v4020
        %v4026 = vsel %vm404, %v4022, %v4019
        %v4027 = vrot.slane %v3944, 2
        %v4028 = vrot.slane %v3945, 2
        %v4029 = vrot.slane %v3946, 2
        %v4030 = vrot.slane %v3947, 2
        %v4031 = vsel %vm413, %v4029, %v4030
        %v4032 = vsel %vm413, %v4028, %v4029
        %v4033 = vsel %vm413, %v4027, %v4028
        %v4034 = vsel %vm413, %v4030, %v4027
        %v4035 = vsub.f32 %v4018, %v4033
        %v4036 = vsub.f32 %v4017, %v4032
        %v4037 = vsub.f32 %v4016, %v4031
        %v4038 = vsub.f32 %v4015, %v4034
        %v4039 = vmul.f32 %v4035, 8.333333
        %v4040 = vmul.f32 %v4036, 8.333333
        %v4041 = vmul.f32 %v4037, 8.333333
        %v4042 = vmul.f32 %v4038, 8.333333
        %v4043 = vsub.f32 %v4025, %v4010
        %v4044 = vsub.f32 %v4024, %v4009
        %v4045 = vsub.f32 %v4023, %v4008
        %v4046 = vsub.f32 %v4026, %v4007
        %v4047 = vmul.f32 %v4043, 66.666664
        %v4048 = vmul.f32 %v4044, 66.666664
        %v4049 = vmul.f32 %v4045, 66.666664
        %v4050 = vmul.f32 %v4046, 66.666664
        %v4051 = vadd.f32 %v4039, %v4047
        %v4052 = vadd.f32 %v4040, %v4048
        %v4053 = vadd.f32 %v4041, %v4049
        %v4054 = vadd.f32 %v4042, %v4050
        %v4055 = vadd.f32 %v4018, %v4033
        %v4056 = vadd.f32 %v4017, %v4032
        %v4057 = vadd.f32 %v4016, %v4031
        %v4058 = vadd.f32 %v4015, %v4034
        %v4059 = vmul.f32 %v4055, -7.8199944
        %v4060 = vmul.f32 %v4056, -7.8199944
        %v4061 = vmul.f32 %v4057, -7.8199944
        %v4062 = vmul.f32 %v4058, -7.8199944
        %v4063 = vadd.f32 %v4010, %v4025
        %v4064 = vadd.f32 %v4009, %v4024
        %v4065 = vadd.f32 %v4008, %v4023
        %v4066 = vadd.f32 %v4007, %v4026
        %v4067 = vmul.f32 %v4063, 125.11991
        %v4068 = vmul.f32 %v4064, 125.11991
        %v4069 = vmul.f32 %v4065, 125.11991
        %v4070 = vmul.f32 %v4066, 125.11991
        %v4071 = vadd.f32 %v4059, %v4067
        %v4072 = vadd.f32 %v4060, %v4068
        %v4073 = vadd.f32 %v4061, %v4069
        %v4074 = vadd.f32 %v4062, %v4070
        %v4075 = vmul.f32 %v3944, -234.59984
        %v4076 = vmul.f32 %v3945, -234.59984
        %v4077 = vmul.f32 %v3946, -234.59984
        %v4078 = vmul.f32 %v3947, -234.59984
        %v4079 = vadd.f32 %v4071, %v4075
        %v4080 = vadd.f32 %v4072, %v4076
        %v4081 = vadd.f32 %v4073, %v4077
        %v4082 = vadd.f32 %v4074, %v4078
        %v4083 = vadd.f32 %v3987, %v4079
        %v4084 = vadd.f32 %v3991, %v4080
        %v4085 = vadd.f32 %v3997, %v4081
        %v4086 = vadd.f32 %v4001, %v4082
        %4087 = vrot.lane.b32.xlu0 %v3944, 64
        %v4088 = vpop.permute.xlu0 %4087
        %4089 = vrot.lane.b32.xlu0 %v3945, 64
        %v4090 = vpop.permute.xlu0 %4089
        %4091 = vrot.lane.b32.xlu0 %v3946, 64
        %v4092 = vpop.permute.xlu0 %4091
        %4093 = vrot.lane.b32.xlu0 %v3947, 64
        %v4094 = vpop.permute.xlu0 %4093
        %v4095 = vmul.f32 %v209, %v4051
        %v4096 = vmul.f32 %v209, %v4052
        %v4097 = vmul.f32 %v209, %v4053
        %v4098 = vmul.f32 %v209, %v4054
        %v4099 = vmul.f32 %v214, %v3985
        %v4100 = vmul.f32 %v214, %v3989
        %v4101 = vmul.f32 %v214, %v3995
        %v4102 = vmul.f32 %v214, %v3999
        %v4103 = vadd.f32 %v4095, %v4099
        %v4104 = vadd.f32 %v4096, %v4100
        %v4105 = vadd.f32 %v4097, %v4101
        %v4106 = vadd.f32 %v4098, %v4102
        %v4107 = vmul.f32 %v3944, %v4103
        %v4108 = vmul.f32 %v3945, %v4104
        %v4109 = vmul.f32 %v3946, %v4105
        %v4110 = vmul.f32 %v3947, %v4106
        %v4111 = vadd.f32 %v4083, %v4107
        %v4112 = vadd.f32 %v4084, %v4108
        %v4113 = vadd.f32 %v4085, %v4109
        %v4114 = vadd.f32 %v4086, %v4110
        %v4115 = vmul.f32 %v219, %v4051
        %v4116 = vmul.f32 %v219, %v4052
        %v4117 = vmul.f32 %v219, %v4053
        %v4118 = vmul.f32 %v219, %v4054
        %v4119 = vmul.f32 %v224, %v3985
        %v4120 = vmul.f32 %v224, %v3989
        %v4121 = vmul.f32 %v224, %v3995
        %v4122 = vmul.f32 %v224, %v3999
        %v4123 = vadd.f32 %v4115, %v4119
        %v4124 = vadd.f32 %v4116, %v4120
        %v4125 = vadd.f32 %v4117, %v4121
        %v4126 = vadd.f32 %v4118, %v4122
        %v4127 = vmul.f32 %v4088, %v4123
        %v4128 = vmul.f32 %v4090, %v4124
        %v4129 = vmul.f32 %v4092, %v4125
        %v4130 = vmul.f32 %v4094, %v4126
        %v4131 = vadd.f32 %v4111, %v4127
        %v4132 = vadd.f32 %v4112, %v4128
        %v4133 = vadd.f32 %v4113, %v4129
        %v4134 = vadd.f32 %v4114, %v4130
        %v4135 = vmul.f32 %v4131, 2.0
        %v4136 = vmul.f32 %v4132, 2.0
        %v4137 = vmul.f32 %v4133, 2.0
        %v4138 = vmul.f32 %v4134, 2.0
        %v4139 = vadd.f32 %v3936, %v4135
        %v4140 = vadd.f32 %v3937, %v4136
        %v4141 = vadd.f32 %v3938, %v4137
        %v4142 = vadd.f32 %v3939, %v4138
        %v4143 = vmul.f32 %v4131, 0.001
        %v4144 = vmul.f32 %v4132, 0.001
        %v4145 = vmul.f32 %v4133, 0.001
        %v4146 = vmul.f32 %v4134, 0.001
        %v4147 = vadd.f32 %v3541, %v4143
        %v4148 = vadd.f32 %v3542, %v4144
        %v4149 = vadd.f32 %v3543, %v4145
        %v4150 = vadd.f32 %v3544, %v4146
        %v4151 = vpack.c.bf16 %v4148, %v4147
        %v4152 = vpack.c.bf16 %v4150, %v4149
        %4153 = vmatprep.subr.bf16.mxu0 %v296
        %4154 = vmatpush1.bf16.msra.mxu0 %v295
        %4155 = vmatprep.subr.bf16.mxu0 %v298
        %4156 = vmatpush1.bf16.msra.mxu0 %v297
        %4157 = vmatprep.subr.bf16.mxu0 %v300
        %4158 = vmatpush1.bf16.msra.mxu0 %v299
        %4159 = vmatprep.subr.bf16.mxu0 %v302
        %4160 = vmatpush1.bf16.msra.mxu0 %v301
        %4161 = vmatprep.subr.bf16.mxu0 %v304
        %4162 = vmatpush1.bf16.msra.mxu0 %v303
        %4163 = vmatprep.subr.bf16.mxu0 %v306
        %4164 = vmatpush1.bf16.msra.mxu0 %v305
        %4165 = vmatprep.subr.bf16.mxu0 %v308
        %4166 = vmatpush1.bf16.msra.mxu0 %v307
        %4167 = vmatprep.subr.bf16.mxu0 %v310
        %4168 = vmatpush1.bf16.msra.mxu0 %v309
        %4169 = vmatprep.subr.bf16.mxu0 0
        %4170 = vmatpush1.bf16.msra.mxu0 0
        %4171 = vmatprep.subr.bf16.mxu0 0
        %4172 = vmatpush1.bf16.msra.mxu0 0
        %4173 = vmatprep.subr.bf16.mxu0 0
        %4174 = vmatpush1.bf16.msra.mxu0 0
        %4175 = vmatprep.subr.bf16.mxu0 0
        %4176 = vmatpush1.bf16.msra.mxu0 0
        %4177 = vmatprep.subr.bf16.mxu0 0
        %4178 = vmatpush1.bf16.msra.mxu0 0
        %4179 = vmatprep.subr.bf16.mxu0 0
        %4180 = vmatpush1.bf16.msra.mxu0 0
        %4181 = vmatprep.subr.bf16.mxu0 0
        %4182 = vmatpush1.bf16.msra.mxu0 0
        %4183 = vmatprep.subr.bf16.mxu0 0
        %4184 = vmatpush1.bf16.msra.mxu0 0
        %4185 = vmatprep.mubr.bf16.mxu0 0
        %4186 = vmatmul.mubr.bf16.gmra.mrb[0].mxu0 %v4151
        %v4187 = vpop.f32.mrb[0].mxu0
        %v4188 = vadd.f32 0.0, %v4187
        %v4189 = vpop.f32.mrb[0].mxu0
        %v4190 = vadd.f32 0.0, %v4189
        %v4191 = vpop.f32.mrb[0].mxu0
        %v4192 = vadd.f32 0.0, %v4191
        %v4193 = vpop.f32.mrb[0].mxu0
        %v4194 = vadd.f32 0.0, %v4193
        %4195 = vmatprep.mubr.bf16.mxu0 0
        %4196 = vmatmul.mubr.bf16.gmra.mrb[0].mxu0 %v4152
        %v4197 = vpop.f32.mrb[0].mxu0
        %v4198 = vadd.f32 0.0, %v4197
        %v4199 = vpop.f32.mrb[0].mxu0
        %v4200 = vadd.f32 0.0, %v4199
        %v4201 = vpop.f32.mrb[0].mxu0
        %v4202 = vadd.f32 0.0, %v4201
        %v4203 = vpop.f32.mrb[0].mxu0
        %v4204 = vadd.f32 0.0, %v4203
        %4205 = vdwg.mxu0
        %v4206 = vrot.slane %v4147, 7
        %v4207 = vrot.slane %v4148, 7
        %v4208 = vrot.slane %v4149, 7
        %v4209 = vrot.slane %v4150, 7
        %v4210 = vsel %vm386, %v4208, %v4209
        %v4211 = vsel %vm386, %v4207, %v4208
        %v4212 = vsel %vm386, %v4206, %v4207
        %v4213 = vsel %vm386, %v4209, %v4206
        %v4214 = vrot.slane %v4147, 6
        %v4215 = vrot.slane %v4148, 6
        %v4216 = vrot.slane %v4149, 6
        %v4217 = vrot.slane %v4150, 6
        %v4218 = vsel %vm395, %v4216, %v4217
        %v4219 = vsel %vm395, %v4215, %v4216
        %v4220 = vsel %vm395, %v4214, %v4215
        %v4221 = vsel %vm395, %v4217, %v4214
        %v4222 = vrot.slane %v4147, 1
        %v4223 = vrot.slane %v4148, 1
        %v4224 = vrot.slane %v4149, 1
        %v4225 = vrot.slane %v4150, 1
        %v4226 = vsel %vm404, %v4224, %v4225
        %v4227 = vsel %vm404, %v4223, %v4224
        %v4228 = vsel %vm404, %v4222, %v4223
        %v4229 = vsel %vm404, %v4225, %v4222
        %v4230 = vrot.slane %v4147, 2
        %v4231 = vrot.slane %v4148, 2
        %v4232 = vrot.slane %v4149, 2
        %v4233 = vrot.slane %v4150, 2
        %v4234 = vsel %vm413, %v4232, %v4233
        %v4235 = vsel %vm413, %v4231, %v4232
        %v4236 = vsel %vm413, %v4230, %v4231
        %v4237 = vsel %vm413, %v4233, %v4230
        %v4238 = vsub.f32 %v4221, %v4236
        %v4239 = vsub.f32 %v4220, %v4235
        %v4240 = vsub.f32 %v4219, %v4234
        %v4241 = vsub.f32 %v4218, %v4237
        %v4242 = vmul.f32 %v4238, 8.333333
        %v4243 = vmul.f32 %v4239, 8.333333
        %v4244 = vmul.f32 %v4240, 8.333333
        %v4245 = vmul.f32 %v4241, 8.333333
        %v4246 = vsub.f32 %v4228, %v4213
        %v4247 = vsub.f32 %v4227, %v4212
        %v4248 = vsub.f32 %v4226, %v4211
        %v4249 = vsub.f32 %v4229, %v4210
        %v4250 = vmul.f32 %v4246, 66.666664
        %v4251 = vmul.f32 %v4247, 66.666664
        %v4252 = vmul.f32 %v4248, 66.666664
        %v4253 = vmul.f32 %v4249, 66.666664
        %v4254 = vadd.f32 %v4242, %v4250
        %v4255 = vadd.f32 %v4243, %v4251
        %v4256 = vadd.f32 %v4244, %v4252
        %v4257 = vadd.f32 %v4245, %v4253
        %v4258 = vadd.f32 %v4221, %v4236
        %v4259 = vadd.f32 %v4220, %v4235
        %v4260 = vadd.f32 %v4219, %v4234
        %v4261 = vadd.f32 %v4218, %v4237
        %v4262 = vmul.f32 %v4258, -7.8199944
        %v4263 = vmul.f32 %v4259, -7.8199944
        %v4264 = vmul.f32 %v4260, -7.8199944
        %v4265 = vmul.f32 %v4261, -7.8199944
        %v4266 = vadd.f32 %v4213, %v4228
        %v4267 = vadd.f32 %v4212, %v4227
        %v4268 = vadd.f32 %v4211, %v4226
        %v4269 = vadd.f32 %v4210, %v4229
        %v4270 = vmul.f32 %v4266, 125.11991
        %v4271 = vmul.f32 %v4267, 125.11991
        %v4272 = vmul.f32 %v4268, 125.11991
        %v4273 = vmul.f32 %v4269, 125.11991
        %v4274 = vadd.f32 %v4262, %v4270
        %v4275 = vadd.f32 %v4263, %v4271
        %v4276 = vadd.f32 %v4264, %v4272
        %v4277 = vadd.f32 %v4265, %v4273
        %v4278 = vmul.f32 %v4147, -234.59984
        %v4279 = vmul.f32 %v4148, -234.59984
        %v4280 = vmul.f32 %v4149, -234.59984
        %v4281 = vmul.f32 %v4150, -234.59984
        %v4282 = vadd.f32 %v4274, %v4278
        %v4283 = vadd.f32 %v4275, %v4279
        %v4284 = vadd.f32 %v4276, %v4280
        %v4285 = vadd.f32 %v4277, %v4281
        %v4286 = vadd.f32 %v4190, %v4282
        %v4287 = vadd.f32 %v4194, %v4283
        %v4288 = vadd.f32 %v4200, %v4284
        %v4289 = vadd.f32 %v4204, %v4285
        %4290 = vrot.lane.b32.xlu0 %v4147, 64
        %v4291 = vpop.permute.xlu0 %4290
        %4292 = vrot.lane.b32.xlu0 %v4148, 64
        %v4293 = vpop.permute.xlu0 %4292
        %4294 = vrot.lane.b32.xlu0 %v4149, 64
        %v4295 = vpop.permute.xlu0 %4294
        %4296 = vrot.lane.b32.xlu0 %v4150, 64
        %v4297 = vpop.permute.xlu0 %4296
        %v4298 = vmul.f32 %v209, %v4254
        %v4299 = vmul.f32 %v209, %v4255
        %v4300 = vmul.f32 %v209, %v4256
        %v4301 = vmul.f32 %v209, %v4257
        %v4302 = vmul.f32 %v214, %v4188
        %v4303 = vmul.f32 %v214, %v4192
        %v4304 = vmul.f32 %v214, %v4198
        %v4305 = vmul.f32 %v214, %v4202
        %v4306 = vadd.f32 %v4298, %v4302
        %v4307 = vadd.f32 %v4299, %v4303
        %v4308 = vadd.f32 %v4300, %v4304
        %v4309 = vadd.f32 %v4301, %v4305
        %v4310 = vmul.f32 %v4147, %v4306
        %v4311 = vmul.f32 %v4148, %v4307
        %v4312 = vmul.f32 %v4149, %v4308
        %v4313 = vmul.f32 %v4150, %v4309
        %v4314 = vadd.f32 %v4286, %v4310
        %v4315 = vadd.f32 %v4287, %v4311
        %v4316 = vadd.f32 %v4288, %v4312
        %v4317 = vadd.f32 %v4289, %v4313
        %v4318 = vmul.f32 %v219, %v4254
        %v4319 = vmul.f32 %v219, %v4255
        %v4320 = vmul.f32 %v219, %v4256
        %v4321 = vmul.f32 %v219, %v4257
        %v4322 = vmul.f32 %v224, %v4188
        %v4323 = vmul.f32 %v224, %v4192
        %v4324 = vmul.f32 %v224, %v4198
        %v4325 = vmul.f32 %v224, %v4202
        %v4326 = vadd.f32 %v4318, %v4322
        %v4327 = vadd.f32 %v4319, %v4323
        %v4328 = vadd.f32 %v4320, %v4324
        %v4329 = vadd.f32 %v4321, %v4325
        %v4330 = vmul.f32 %v4291, %v4326
        %v4331 = vmul.f32 %v4293, %v4327
        %v4332 = vmul.f32 %v4295, %v4328
        %v4333 = vmul.f32 %v4297, %v4329
        %v4334 = vadd.f32 %v4314, %v4330
        %v4335 = vadd.f32 %v4315, %v4331
        %v4336 = vadd.f32 %v4316, %v4332
        %v4337 = vadd.f32 %v4317, %v4333
        %v4338 = vadd.f32 %v4139, %v4334
        %v4339 = vadd.f32 %v4140, %v4335
        %v4340 = vadd.f32 %v4141, %v4336
        %v4341 = vadd.f32 %v4142, %v4337
        %v4342 = vmul.f32 %v4338, 0.00016666666
        %v4343 = vmul.f32 %v4339, 0.00016666666
        %v4344 = vmul.f32 %v4340, 0.00016666666
        %v4345 = vmul.f32 %v4341, 0.00016666666
        %v4346 = vadd.f32 %v3541, %v4342
        %v4347 = vadd.f32 %v3542, %v4343
        %v4348 = vadd.f32 %v3543, %v4344
        %v4349 = vadd.f32 %v3544, %v4345
        %s4350 = scalar_lea.vmem %s190, 128 [#allocation9]
        %4351 = vst [vmem:[%s4350] sm:$0xff] %v4346
        %4352 = vst [vmem:[%s4350 + $0x8] sm:$0xff] %v4347
        %4353 = vst [vmem:[%s4350 + $0x10] sm:$0xff] %v4348
        %4354 = vst [vmem:[%s4350 + $0x18] sm:$0xff] %v4349
        %v4355 = vpack.c.bf16 %v4347, %v4346
        %v4356 = vpack.c.bf16 %v4349, %v4348
        %4357 = vmatprep.subr.bf16.mxu0 %v296
        %4358 = vmatpush1.bf16.msra.mxu0 %v295
        %4359 = vmatprep.subr.bf16.mxu0 %v298
        %4360 = vmatpush1.bf16.msra.mxu0 %v297
        %4361 = vmatprep.subr.bf16.mxu0 %v300
        %4362 = vmatpush1.bf16.msra.mxu0 %v299
        %4363 = vmatprep.subr.bf16.mxu0 %v302
        %4364 = vmatpush1.bf16.msra.mxu0 %v301
        %4365 = vmatprep.subr.bf16.mxu0 %v304
        %4366 = vmatpush1.bf16.msra.mxu0 %v303
        %4367 = vmatprep.subr.bf16.mxu0 %v306
        %4368 = vmatpush1.bf16.msra.mxu0 %v305
        %4369 = vmatprep.subr.bf16.mxu0 %v308
        %4370 = vmatpush1.bf16.msra.mxu0 %v307
        %4371 = vmatprep.subr.bf16.mxu0 %v310
        %4372 = vmatpush1.bf16.msra.mxu0 %v309
        %4373 = vmatprep.subr.bf16.mxu0 0
        %4374 = vmatpush1.bf16.msra.mxu0 0
        %4375 = vmatprep.subr.bf16.mxu0 0
        %4376 = vmatpush1.bf16.msra.mxu0 0
        %4377 = vmatprep.subr.bf16.mxu0 0
        %4378 = vmatpush1.bf16.msra.mxu0 0
        %4379 = vmatprep.subr.bf16.mxu0 0
        %4380 = vmatpush1.bf16.msra.mxu0 0
        %4381 = vmatprep.subr.bf16.mxu0 0
        %4382 = vmatpush1.bf16.msra.mxu0 0
        %4383 = vmatprep.subr.bf16.mxu0 0
        %4384 = vmatpush1.bf16.msra.mxu0 0
        %4385 = vmatprep.subr.bf16.mxu0 0
        %4386 = vmatpush1.bf16.msra.mxu0 0
        %4387 = vmatprep.subr.bf16.mxu0 0
        %4388 = vmatpush1.bf16.msra.mxu0 0
        %4389 = vmatprep.mubr.bf16.mxu0 0
        %4390 = vmatmul.mubr.bf16.gmra.mrb[0].mxu0 %v4355
        %v4391 = vpop.f32.mrb[0].mxu0
        %v4392 = vadd.f32 0.0, %v4391
        %v4393 = vpop.f32.mrb[0].mxu0
        %v4394 = vadd.f32 0.0, %v4393
        %v4395 = vpop.f32.mrb[0].mxu0
        %v4396 = vadd.f32 0.0, %v4395
        %v4397 = vpop.f32.mrb[0].mxu0
        %v4398 = vadd.f32 0.0, %v4397
        %4399 = vmatprep.mubr.bf16.mxu0 0
        %4400 = vmatmul.mubr.bf16.gmra.mrb[0].mxu0 %v4356
        %v4401 = vpop.f32.mrb[0].mxu0
        %v4402 = vadd.f32 0.0, %v4401
        %v4403 = vpop.f32.mrb[0].mxu0
        %v4404 = vadd.f32 0.0, %v4403
        %v4405 = vpop.f32.mrb[0].mxu0
        %v4406 = vadd.f32 0.0, %v4405
        %v4407 = vpop.f32.mrb[0].mxu0
        %v4408 = vadd.f32 0.0, %v4407
        %4409 = vdwg.mxu0
        %v4410 = vrot.slane %v4346, 7
        %v4411 = vrot.slane %v4347, 7
        %v4412 = vrot.slane %v4348, 7
        %v4413 = vrot.slane %v4349, 7
        %v4414 = vsel %vm386, %v4412, %v4413
        %v4415 = vsel %vm386, %v4411, %v4412
        %v4416 = vsel %vm386, %v4410, %v4411
        %v4417 = vsel %vm386, %v4413, %v4410
        %v4418 = vrot.slane %v4346, 6
        %v4419 = vrot.slane %v4347, 6
        %v4420 = vrot.slane %v4348, 6
        %v4421 = vrot.slane %v4349, 6
        %v4422 = vsel %vm395, %v4420, %v4421
        %v4423 = vsel %vm395, %v4419, %v4420
        %v4424 = vsel %vm395, %v4418, %v4419
        %v4425 = vsel %vm395, %v4421, %v4418
        %v4426 = vrot.slane %v4346, 1
        %v4427 = vrot.slane %v4347, 1
        %v4428 = vrot.slane %v4348, 1
        %v4429 = vrot.slane %v4349, 1
        %v4430 = vsel %vm404, %v4428, %v4429
        %v4431 = vsel %vm404, %v4427, %v4428
        %v4432 = vsel %vm404, %v4426, %v4427
        %v4433 = vsel %vm404, %v4429, %v4426
        %v4434 = vrot.slane %v4346, 2
        %v4435 = vrot.slane %v4347, 2
        %v4436 = vrot.slane %v4348, 2
        %v4437 = vrot.slane %v4349, 2
        %v4438 = vsel %vm413, %v4436, %v4437
        %v4439 = vsel %vm413, %v4435, %v4436
        %v4440 = vsel %vm413, %v4434, %v4435
        %v4441 = vsel %vm413, %v4437, %v4434
        %v4442 = vsub.f32 %v4425, %v4440
        %v4443 = vsub.f32 %v4424, %v4439
        %v4444 = vsub.f32 %v4423, %v4438
        %v4445 = vsub.f32 %v4422, %v4441
        %v4446 = vmul.f32 %v4442, 8.333333
        %v4447 = vmul.f32 %v4443, 8.333333
        %v4448 = vmul.f32 %v4444, 8.333333
        %v4449 = vmul.f32 %v4445, 8.333333
        %v4450 = vsub.f32 %v4432, %v4417
        %v4451 = vsub.f32 %v4431, %v4416
        %v4452 = vsub.f32 %v4430, %v4415
        %v4453 = vsub.f32 %v4433, %v4414
        %v4454 = vmul.f32 %v4450, 66.666664
        %v4455 = vmul.f32 %v4451, 66.666664
        %v4456 = vmul.f32 %v4452, 66.666664
        %v4457 = vmul.f32 %v4453, 66.666664
        %v4458 = vadd.f32 %v4446, %v4454
        %v4459 = vadd.f32 %v4447, %v4455
        %v4460 = vadd.f32 %v4448, %v4456
        %v4461 = vadd.f32 %v4449, %v4457
        %v4462 = vadd.f32 %v4425, %v4440
        %v4463 = vadd.f32 %v4424, %v4439
        %v4464 = vadd.f32 %v4423, %v4438
        %v4465 = vadd.f32 %v4422, %v4441
        %v4466 = vmul.f32 %v4462, -7.8199944
        %v4467 = vmul.f32 %v4463, -7.8199944
        %v4468 = vmul.f32 %v4464, -7.8199944
        %v4469 = vmul.f32 %v4465, -7.8199944
        %v4470 = vadd.f32 %v4417, %v4432
        %v4471 = vadd.f32 %v4416, %v4431
        %v4472 = vadd.f32 %v4415, %v4430
        %v4473 = vadd.f32 %v4414, %v4433
        %v4474 = vmul.f32 %v4470, 125.11991
        %v4475 = vmul.f32 %v4471, 125.11991
        %v4476 = vmul.f32 %v4472, 125.11991
        %v4477 = vmul.f32 %v4473, 125.11991
        %v4478 = vadd.f32 %v4466, %v4474
        %v4479 = vadd.f32 %v4467, %v4475
        %v4480 = vadd.f32 %v4468, %v4476
        %v4481 = vadd.f32 %v4469, %v4477
        %v4482 = vmul.f32 %v4346, -234.59984
        %v4483 = vmul.f32 %v4347, -234.59984
        %v4484 = vmul.f32 %v4348, -234.59984
        %v4485 = vmul.f32 %v4349, -234.59984
        %v4486 = vadd.f32 %v4478, %v4482
        %v4487 = vadd.f32 %v4479, %v4483
        %v4488 = vadd.f32 %v4480, %v4484
        %v4489 = vadd.f32 %v4481, %v4485
        %v4490 = vadd.f32 %v4394, %v4486
        %v4491 = vadd.f32 %v4398, %v4487
        %v4492 = vadd.f32 %v4404, %v4488
        %v4493 = vadd.f32 %v4408, %v4489
        %4494 = vrot.lane.b32.xlu0 %v4346, 64
        %v4495 = vpop.permute.xlu0 %4494
        %4496 = vrot.lane.b32.xlu0 %v4347, 64
        %v4497 = vpop.permute.xlu0 %4496
        %4498 = vrot.lane.b32.xlu0 %v4348, 64
        %v4499 = vpop.permute.xlu0 %4498
        %4500 = vrot.lane.b32.xlu0 %v4349, 64
        %v4501 = vpop.permute.xlu0 %4500
        %v4502 = vmul.f32 %v209, %v4458
        %v4503 = vmul.f32 %v209, %v4459
        %v4504 = vmul.f32 %v209, %v4460
        %v4505 = vmul.f32 %v209, %v4461
        %v4506 = vmul.f32 %v214, %v4392
        %v4507 = vmul.f32 %v214, %v4396
        %v4508 = vmul.f32 %v214, %v4402
        %v4509 = vmul.f32 %v214, %v4406
        %v4510 = vadd.f32 %v4502, %v4506
        %v4511 = vadd.f32 %v4503, %v4507
        %v4512 = vadd.f32 %v4504, %v4508
        %v4513 = vadd.f32 %v4505, %v4509
        %v4514 = vmul.f32 %v4346, %v4510
        %v4515 = vmul.f32 %v4347, %v4511
        %v4516 = vmul.f32 %v4348, %v4512
        %v4517 = vmul.f32 %v4349, %v4513
        %v4518 = vadd.f32 %v4490, %v4514
        %v4519 = vadd.f32 %v4491, %v4515
        %v4520 = vadd.f32 %v4492, %v4516
        %v4521 = vadd.f32 %v4493, %v4517
        %v4522 = vmul.f32 %v219, %v4458
        %v4523 = vmul.f32 %v219, %v4459
        %v4524 = vmul.f32 %v219, %v4460
        %v4525 = vmul.f32 %v219, %v4461
        %v4526 = vmul.f32 %v224, %v4392
        %v4527 = vmul.f32 %v224, %v4396
        %v4528 = vmul.f32 %v224, %v4402
        %v4529 = vmul.f32 %v224, %v4406
        %v4530 = vadd.f32 %v4522, %v4526
        %v4531 = vadd.f32 %v4523, %v4527
        %v4532 = vadd.f32 %v4524, %v4528
        %v4533 = vadd.f32 %v4525, %v4529
        %v4534 = vmul.f32 %v4495, %v4530
        %v4535 = vmul.f32 %v4497, %v4531
        %v4536 = vmul.f32 %v4499, %v4532
        %v4537 = vmul.f32 %v4501, %v4533
        %v4538 = vadd.f32 %v4518, %v4534
        %v4539 = vadd.f32 %v4519, %v4535
        %v4540 = vadd.f32 %v4520, %v4536
        %v4541 = vadd.f32 %v4521, %v4537
        %v4542 = vmul.f32 %v4538, 0.0005
        %v4543 = vmul.f32 %v4539, 0.0005
        %v4544 = vmul.f32 %v4540, 0.0005
        %v4545 = vmul.f32 %v4541, 0.0005
        %v4546 = vadd.f32 %v4346, %v4542
        %v4547 = vadd.f32 %v4347, %v4543
        %v4548 = vadd.f32 %v4348, %v4544
        %v4549 = vadd.f32 %v4349, %v4545
        %v4550 = vpack.c.bf16 %v4547, %v4546
        %v4551 = vpack.c.bf16 %v4549, %v4548
        %4552 = vmatprep.subr.bf16.mxu0 %v296
        %4553 = vmatpush1.bf16.msra.mxu0 %v295
        %4554 = vmatprep.subr.bf16.mxu0 %v298
        %4555 = vmatpush1.bf16.msra.mxu0 %v297
        %4556 = vmatprep.subr.bf16.mxu0 %v300
        %4557 = vmatpush1.bf16.msra.mxu0 %v299
        %4558 = vmatprep.subr.bf16.mxu0 %v302
        %4559 = vmatpush1.bf16.msra.mxu0 %v301
        %4560 = vmatprep.subr.bf16.mxu0 %v304
        %4561 = vmatpush1.bf16.msra.mxu0 %v303
        %4562 = vmatprep.subr.bf16.mxu0 %v306
        %4563 = vmatpush1.bf16.msra.mxu0 %v305
        %4564 = vmatprep.subr.bf16.mxu0 %v308
        %4565 = vmatpush1.bf16.msra.mxu0 %v307
        %4566 = vmatprep.subr.bf16.mxu0 %v310
        %4567 = vmatpush1.bf16.msra.mxu0 %v309
        %4568 = vmatprep.subr.bf16.mxu0 0
        %4569 = vmatpush1.bf16.msra.mxu0 0
        %4570 = vmatprep.subr.bf16.mxu0 0
        %4571 = vmatpush1.bf16.msra.mxu0 0
        %4572 = vmatprep.subr.bf16.mxu0 0
        %4573 = vmatpush1.bf16.msra.mxu0 0
        %4574 = vmatprep.subr.bf16.mxu0 0
        %4575 = vmatpush1.bf16.msra.mxu0 0
        %4576 = vmatprep.subr.bf16.mxu0 0
        %4577 = vmatpush1.bf16.msra.mxu0 0
        %4578 = vmatprep.subr.bf16.mxu0 0
        %4579 = vmatpush1.bf16.msra.mxu0 0
        %4580 = vmatprep.subr.bf16.mxu0 0
        %4581 = vmatpush1.bf16.msra.mxu0 0
        %4582 = vmatprep.subr.bf16.mxu0 0
        %4583 = vmatpush1.bf16.msra.mxu0 0
        %4584 = vmatprep.mubr.bf16.mxu0 0
        %4585 = vmatmul.mubr.bf16.gmra.mrb[0].mxu0 %v4550
        %v4586 = vpop.f32.mrb[0].mxu0
        %v4587 = vadd.f32 0.0, %v4586
        %v4588 = vpop.f32.mrb[0].mxu0
        %v4589 = vadd.f32 0.0, %v4588
        %v4590 = vpop.f32.mrb[0].mxu0
        %v4591 = vadd.f32 0.0, %v4590
        %v4592 = vpop.f32.mrb[0].mxu0
        %v4593 = vadd.f32 0.0, %v4592
        %4594 = vmatprep.mubr.bf16.mxu0 0
        %4595 = vmatmul.mubr.bf16.gmra.mrb[0].mxu0 %v4551
        %v4596 = vpop.f32.mrb[0].mxu0
        %v4597 = vadd.f32 0.0, %v4596
        %v4598 = vpop.f32.mrb[0].mxu0
        %v4599 = vadd.f32 0.0, %v4598
        %v4600 = vpop.f32.mrb[0].mxu0
        %v4601 = vadd.f32 0.0, %v4600
        %v4602 = vpop.f32.mrb[0].mxu0
        %v4603 = vadd.f32 0.0, %v4602
        %4604 = vdwg.mxu0
        %v4605 = vrot.slane %v4546, 7
        %v4606 = vrot.slane %v4547, 7
        %v4607 = vrot.slane %v4548, 7
        %v4608 = vrot.slane %v4549, 7
        %v4609 = vsel %vm386, %v4607, %v4608
        %v4610 = vsel %vm386, %v4606, %v4607
        %v4611 = vsel %vm386, %v4605, %v4606
        %v4612 = vsel %vm386, %v4608, %v4605
        %v4613 = vrot.slane %v4546, 6
        %v4614 = vrot.slane %v4547, 6
        %v4615 = vrot.slane %v4548, 6
        %v4616 = vrot.slane %v4549, 6
        %v4617 = vsel %vm395, %v4615, %v4616
        %v4618 = vsel %vm395, %v4614, %v4615
        %v4619 = vsel %vm395, %v4613, %v4614
        %v4620 = vsel %vm395, %v4616, %v4613
        %v4621 = vrot.slane %v4546, 1
        %v4622 = vrot.slane %v4547, 1
        %v4623 = vrot.slane %v4548, 1
        %v4624 = vrot.slane %v4549, 1
        %v4625 = vsel %vm404, %v4623, %v4624
        %v4626 = vsel %vm404, %v4622, %v4623
        %v4627 = vsel %vm404, %v4621, %v4622
        %v4628 = vsel %vm404, %v4624, %v4621
        %v4629 = vrot.slane %v4546, 2
        %v4630 = vrot.slane %v4547, 2
        %v4631 = vrot.slane %v4548, 2
        %v4632 = vrot.slane %v4549, 2
        %v4633 = vsel %vm413, %v4631, %v4632
        %v4634 = vsel %vm413, %v4630, %v4631
        %v4635 = vsel %vm413, %v4629, %v4630
        %v4636 = vsel %vm413, %v4632, %v4629
        %v4637 = vsub.f32 %v4620, %v4635
        %v4638 = vsub.f32 %v4619, %v4634
        %v4639 = vsub.f32 %v4618, %v4633
        %v4640 = vsub.f32 %v4617, %v4636
        %v4641 = vmul.f32 %v4637, 8.333333
        %v4642 = vmul.f32 %v4638, 8.333333
        %v4643 = vmul.f32 %v4639, 8.333333
        %v4644 = vmul.f32 %v4640, 8.333333
        %v4645 = vsub.f32 %v4627, %v4612
        %v4646 = vsub.f32 %v4626, %v4611
        %v4647 = vsub.f32 %v4625, %v4610
        %v4648 = vsub.f32 %v4628, %v4609
        %v4649 = vmul.f32 %v4645, 66.666664
        %v4650 = vmul.f32 %v4646, 66.666664
        %v4651 = vmul.f32 %v4647, 66.666664
        %v4652 = vmul.f32 %v4648, 66.666664
        %v4653 = vadd.f32 %v4641, %v4649
        %v4654 = vadd.f32 %v4642, %v4650
        %v4655 = vadd.f32 %v4643, %v4651
        %v4656 = vadd.f32 %v4644, %v4652
        %v4657 = vadd.f32 %v4620, %v4635
        %v4658 = vadd.f32 %v4619, %v4634
        %v4659 = vadd.f32 %v4618, %v4633
        %v4660 = vadd.f32 %v4617, %v4636
        %v4661 = vmul.f32 %v4657, -7.8199944
        %v4662 = vmul.f32 %v4658, -7.8199944
        %v4663 = vmul.f32 %v4659, -7.8199944
        %v4664 = vmul.f32 %v4660, -7.8199944
        %v4665 = vadd.f32 %v4612, %v4627
        %v4666 = vadd.f32 %v4611, %v4626
        %v4667 = vadd.f32 %v4610, %v4625
        %v4668 = vadd.f32 %v4609, %v4628
        %v4669 = vmul.f32 %v4665, 125.11991
        %v4670 = vmul.f32 %v4666, 125.11991
        %v4671 = vmul.f32 %v4667, 125.11991
        %v4672 = vmul.f32 %v4668, 125.11991
        %v4673 = vadd.f32 %v4661, %v4669
        %v4674 = vadd.f32 %v4662, %v4670
        %v4675 = vadd.f32 %v4663, %v4671
        %v4676 = vadd.f32 %v4664, %v4672
        %v4677 = vmul.f32 %v4546, -234.59984
        %v4678 = vmul.f32 %v4547, -234.59984
        %v4679 = vmul.f32 %v4548, -234.59984
        %v4680 = vmul.f32 %v4549, -234.59984
        %v4681 = vadd.f32 %v4673, %v4677
        %v4682 = vadd.f32 %v4674, %v4678
        %v4683 = vadd.f32 %v4675, %v4679
        %v4684 = vadd.f32 %v4676, %v4680
        %v4685 = vadd.f32 %v4589, %v4681
        %v4686 = vadd.f32 %v4593, %v4682
        %v4687 = vadd.f32 %v4599, %v4683
        %v4688 = vadd.f32 %v4603, %v4684
        %4689 = vrot.lane.b32.xlu0 %v4546, 64
        %v4690 = vpop.permute.xlu0 %4689
        %4691 = vrot.lane.b32.xlu0 %v4547, 64
        %v4692 = vpop.permute.xlu0 %4691
        %4693 = vrot.lane.b32.xlu0 %v4548, 64
        %v4694 = vpop.permute.xlu0 %4693
        %4695 = vrot.lane.b32.xlu0 %v4549, 64
        %v4696 = vpop.permute.xlu0 %4695
        %v4697 = vmul.f32 %v209, %v4653
        %v4698 = vmul.f32 %v209, %v4654
        %v4699 = vmul.f32 %v209, %v4655
        %v4700 = vmul.f32 %v209, %v4656
        %v4701 = vmul.f32 %v214, %v4587
        %v4702 = vmul.f32 %v214, %v4591
        %v4703 = vmul.f32 %v214, %v4597
        %v4704 = vmul.f32 %v214, %v4601
        %v4705 = vadd.f32 %v4697, %v4701
        %v4706 = vadd.f32 %v4698, %v4702
        %v4707 = vadd.f32 %v4699, %v4703
        %v4708 = vadd.f32 %v4700, %v4704
        %v4709 = vmul.f32 %v4546, %v4705
        %v4710 = vmul.f32 %v4547, %v4706
        %v4711 = vmul.f32 %v4548, %v4707
        %v4712 = vmul.f32 %v4549, %v4708
        %v4713 = vadd.f32 %v4685, %v4709
        %v4714 = vadd.f32 %v4686, %v4710
        %v4715 = vadd.f32 %v4687, %v4711
        %v4716 = vadd.f32 %v4688, %v4712
        %v4717 = vmul.f32 %v219, %v4653
        %v4718 = vmul.f32 %v219, %v4654
        %v4719 = vmul.f32 %v219, %v4655
        %v4720 = vmul.f32 %v219, %v4656
        %v4721 = vmul.f32 %v224, %v4587
        %v4722 = vmul.f32 %v224, %v4591
        %v4723 = vmul.f32 %v224, %v4597
        %v4724 = vmul.f32 %v224, %v4601
        %v4725 = vadd.f32 %v4717, %v4721
        %v4726 = vadd.f32 %v4718, %v4722
        %v4727 = vadd.f32 %v4719, %v4723
        %v4728 = vadd.f32 %v4720, %v4724
        %v4729 = vmul.f32 %v4690, %v4725
        %v4730 = vmul.f32 %v4692, %v4726
        %v4731 = vmul.f32 %v4694, %v4727
        %v4732 = vmul.f32 %v4696, %v4728
        %v4733 = vadd.f32 %v4713, %v4729
        %v4734 = vadd.f32 %v4714, %v4730
        %v4735 = vadd.f32 %v4715, %v4731
        %v4736 = vadd.f32 %v4716, %v4732
        %v4737 = vmul.f32 %v4733, 2.0
        %v4738 = vmul.f32 %v4734, 2.0
        %v4739 = vmul.f32 %v4735, 2.0
        %v4740 = vmul.f32 %v4736, 2.0
        %v4741 = vadd.f32 %v4538, %v4737
        %v4742 = vadd.f32 %v4539, %v4738
        %v4743 = vadd.f32 %v4540, %v4739
        %v4744 = vadd.f32 %v4541, %v4740
        %v4745 = vmul.f32 %v4733, 0.0005
        %v4746 = vmul.f32 %v4734, 0.0005
        %v4747 = vmul.f32 %v4735, 0.0005
        %v4748 = vmul.f32 %v4736, 0.0005
        %v4749 = vadd.f32 %v4346, %v4745
        %v4750 = vadd.f32 %v4347, %v4746
        %v4751 = vadd.f32 %v4348, %v4747
        %v4752 = vadd.f32 %v4349, %v4748
        %v4753 = vpack.c.bf16 %v4750, %v4749
        %v4754 = vpack.c.bf16 %v4752, %v4751
        %4755 = vmatprep.subr.bf16.mxu0 %v296
        %4756 = vmatpush1.bf16.msra.mxu0 %v295
        %4757 = vmatprep.subr.bf16.mxu0 %v298
        %4758 = vmatpush1.bf16.msra.mxu0 %v297
        %4759 = vmatprep.subr.bf16.mxu0 %v300
        %4760 = vmatpush1.bf16.msra.mxu0 %v299
        %4761 = vmatprep.subr.bf16.mxu0 %v302
        %4762 = vmatpush1.bf16.msra.mxu0 %v301
        %4763 = vmatprep.subr.bf16.mxu0 %v304
        %4764 = vmatpush1.bf16.msra.mxu0 %v303
        %4765 = vmatprep.subr.bf16.mxu0 %v306
        %4766 = vmatpush1.bf16.msra.mxu0 %v305
        %4767 = vmatprep.subr.bf16.mxu0 %v308
        %4768 = vmatpush1.bf16.msra.mxu0 %v307
        %4769 = vmatprep.subr.bf16.mxu0 %v310
        %4770 = vmatpush1.bf16.msra.mxu0 %v309
        %4771 = vmatprep.subr.bf16.mxu0 0
        %4772 = vmatpush1.bf16.msra.mxu0 0
        %4773 = vmatprep.subr.bf16.mxu0 0
        %4774 = vmatpush1.bf16.msra.mxu0 0
        %4775 = vmatprep.subr.bf16.mxu0 0
        %4776 = vmatpush1.bf16.msra.mxu0 0
        %4777 = vmatprep.subr.bf16.mxu0 0
        %4778 = vmatpush1.bf16.msra.mxu0 0
        %4779 = vmatprep.subr.bf16.mxu0 0
        %4780 = vmatpush1.bf16.msra.mxu0 0
        %4781 = vmatprep.subr.bf16.mxu0 0
        %4782 = vmatpush1.bf16.msra.mxu0 0
        %4783 = vmatprep.subr.bf16.mxu0 0
        %4784 = vmatpush1.bf16.msra.mxu0 0
        %4785 = vmatprep.subr.bf16.mxu0 0
        %4786 = vmatpush1.bf16.msra.mxu0 0
        %4787 = vmatprep.mubr.bf16.mxu0 0
        %4788 = vmatmul.mubr.bf16.gmra.mrb[0].mxu0 %v4753
        %v4789 = vpop.f32.mrb[0].mxu0
        %v4790 = vadd.f32 0.0, %v4789
        %v4791 = vpop.f32.mrb[0].mxu0
        %v4792 = vadd.f32 0.0, %v4791
        %v4793 = vpop.f32.mrb[0].mxu0
        %v4794 = vadd.f32 0.0, %v4793
        %v4795 = vpop.f32.mrb[0].mxu0
        %v4796 = vadd.f32 0.0, %v4795
        %4797 = vmatprep.mubr.bf16.mxu0 0
        %4798 = vmatmul.mubr.bf16.gmra.mrb[0].mxu0 %v4754
        %v4799 = vpop.f32.mrb[0].mxu0
        %v4800 = vadd.f32 0.0, %v4799
        %v4801 = vpop.f32.mrb[0].mxu0
        %v4802 = vadd.f32 0.0, %v4801
        %v4803 = vpop.f32.mrb[0].mxu0
        %v4804 = vadd.f32 0.0, %v4803
        %v4805 = vpop.f32.mrb[0].mxu0
        %v4806 = vadd.f32 0.0, %v4805
        %4807 = vdwg.mxu0
        %v4808 = vrot.slane %v4749, 7
        %v4809 = vrot.slane %v4750, 7
        %v4810 = vrot.slane %v4751, 7
        %v4811 = vrot.slane %v4752, 7
        %v4812 = vsel %vm386, %v4810, %v4811
        %v4813 = vsel %vm386, %v4809, %v4810
        %v4814 = vsel %vm386, %v4808, %v4809
        %v4815 = vsel %vm386, %v4811, %v4808
        %v4816 = vrot.slane %v4749, 6
        %v4817 = vrot.slane %v4750, 6
        %v4818 = vrot.slane %v4751, 6
        %v4819 = vrot.slane %v4752, 6
        %v4820 = vsel %vm395, %v4818, %v4819
        %v4821 = vsel %vm395, %v4817, %v4818
        %v4822 = vsel %vm395, %v4816, %v4817
        %v4823 = vsel %vm395, %v4819, %v4816
        %v4824 = vrot.slane %v4749, 1
        %v4825 = vrot.slane %v4750, 1
        %v4826 = vrot.slane %v4751, 1
        %v4827 = vrot.slane %v4752, 1
        %v4828 = vsel %vm404, %v4826, %v4827
        %v4829 = vsel %vm404, %v4825, %v4826
        %v4830 = vsel %vm404, %v4824, %v4825
        %v4831 = vsel %vm404, %v4827, %v4824
        %v4832 = vrot.slane %v4749, 2
        %v4833 = vrot.slane %v4750, 2
        %v4834 = vrot.slane %v4751, 2
        %v4835 = vrot.slane %v4752, 2
        %v4836 = vsel %vm413, %v4834, %v4835
        %v4837 = vsel %vm413, %v4833, %v4834
        %v4838 = vsel %vm413, %v4832, %v4833
        %v4839 = vsel %vm413, %v4835, %v4832
        %v4840 = vsub.f32 %v4823, %v4838
        %v4841 = vsub.f32 %v4822, %v4837
        %v4842 = vsub.f32 %v4821, %v4836
        %v4843 = vsub.f32 %v4820, %v4839
        %v4844 = vmul.f32 %v4840, 8.333333
        %v4845 = vmul.f32 %v4841, 8.333333
        %v4846 = vmul.f32 %v4842, 8.333333
        %v4847 = vmul.f32 %v4843, 8.333333
        %v4848 = vsub.f32 %v4830, %v4815
        %v4849 = vsub.f32 %v4829, %v4814
        %v4850 = vsub.f32 %v4828, %v4813
        %v4851 = vsub.f32 %v4831, %v4812
        %v4852 = vmul.f32 %v4848, 66.666664
        %v4853 = vmul.f32 %v4849, 66.666664
        %v4854 = vmul.f32 %v4850, 66.666664
        %v4855 = vmul.f32 %v4851, 66.666664
        %v4856 = vadd.f32 %v4844, %v4852
        %v4857 = vadd.f32 %v4845, %v4853
        %v4858 = vadd.f32 %v4846, %v4854
        %v4859 = vadd.f32 %v4847, %v4855
        %v4860 = vadd.f32 %v4823, %v4838
        %v4861 = vadd.f32 %v4822, %v4837
        %v4862 = vadd.f32 %v4821, %v4836
        %v4863 = vadd.f32 %v4820, %v4839
        %v4864 = vmul.f32 %v4860, -7.8199944
        %v4865 = vmul.f32 %v4861, -7.8199944
        %v4866 = vmul.f32 %v4862, -7.8199944
        %v4867 = vmul.f32 %v4863, -7.8199944
        %v4868 = vadd.f32 %v4815, %v4830
        %v4869 = vadd.f32 %v4814, %v4829
        %v4870 = vadd.f32 %v4813, %v4828
        %v4871 = vadd.f32 %v4812, %v4831
        %v4872 = vmul.f32 %v4868, 125.11991
        %v4873 = vmul.f32 %v4869, 125.11991
        %v4874 = vmul.f32 %v4870, 125.11991
        %v4875 = vmul.f32 %v4871, 125.11991
        %v4876 = vadd.f32 %v4864, %v4872
        %v4877 = vadd.f32 %v4865, %v4873
        %v4878 = vadd.f32 %v4866, %v4874
        %v4879 = vadd.f32 %v4867, %v4875
        %v4880 = vmul.f32 %v4749, -234.59984
        %v4881 = vmul.f32 %v4750, -234.59984
        %v4882 = vmul.f32 %v4751, -234.59984
        %v4883 = vmul.f32 %v4752, -234.59984
        %v4884 = vadd.f32 %v4876, %v4880
        %v4885 = vadd.f32 %v4877, %v4881
        %v4886 = vadd.f32 %v4878, %v4882
        %v4887 = vadd.f32 %v4879, %v4883
        %v4888 = vadd.f32 %v4792, %v4884
        %v4889 = vadd.f32 %v4796, %v4885
        %v4890 = vadd.f32 %v4802, %v4886
        %v4891 = vadd.f32 %v4806, %v4887
        %4892 = vrot.lane.b32.xlu0 %v4749, 64
        %v4893 = vpop.permute.xlu0 %4892
        %4894 = vrot.lane.b32.xlu0 %v4750, 64
        %v4895 = vpop.permute.xlu0 %4894
        %4896 = vrot.lane.b32.xlu0 %v4751, 64
        %v4897 = vpop.permute.xlu0 %4896
        %4898 = vrot.lane.b32.xlu0 %v4752, 64
        %v4899 = vpop.permute.xlu0 %4898
        %v4900 = vmul.f32 %v209, %v4856
        %v4901 = vmul.f32 %v209, %v4857
        %v4902 = vmul.f32 %v209, %v4858
        %v4903 = vmul.f32 %v209, %v4859
        %v4904 = vmul.f32 %v214, %v4790
        %v4905 = vmul.f32 %v214, %v4794
        %v4906 = vmul.f32 %v214, %v4800
        %v4907 = vmul.f32 %v214, %v4804
        %v4908 = vadd.f32 %v4900, %v4904
        %v4909 = vadd.f32 %v4901, %v4905
        %v4910 = vadd.f32 %v4902, %v4906
        %v4911 = vadd.f32 %v4903, %v4907
        %v4912 = vmul.f32 %v4749, %v4908
        %v4913 = vmul.f32 %v4750, %v4909
        %v4914 = vmul.f32 %v4751, %v4910
        %v4915 = vmul.f32 %v4752, %v4911
        %v4916 = vadd.f32 %v4888, %v4912
        %v4917 = vadd.f32 %v4889, %v4913
        %v4918 = vadd.f32 %v4890, %v4914
        %v4919 = vadd.f32 %v4891, %v4915
        %v4920 = vmul.f32 %v219, %v4856
        %v4921 = vmul.f32 %v219, %v4857
        %v4922 = vmul.f32 %v219, %v4858
        %v4923 = vmul.f32 %v219, %v4859
        %v4924 = vmul.f32 %v224, %v4790
        %v4925 = vmul.f32 %v224, %v4794
        %v4926 = vmul.f32 %v224, %v4800
        %v4927 = vmul.f32 %v224, %v4804
        %v4928 = vadd.f32 %v4920, %v4924
        %v4929 = vadd.f32 %v4921, %v4925
        %v4930 = vadd.f32 %v4922, %v4926
        %v4931 = vadd.f32 %v4923, %v4927
        %v4932 = vmul.f32 %v4893, %v4928
        %v4933 = vmul.f32 %v4895, %v4929
        %v4934 = vmul.f32 %v4897, %v4930
        %v4935 = vmul.f32 %v4899, %v4931
        %v4936 = vadd.f32 %v4916, %v4932
        %v4937 = vadd.f32 %v4917, %v4933
        %v4938 = vadd.f32 %v4918, %v4934
        %v4939 = vadd.f32 %v4919, %v4935
        %v4940 = vmul.f32 %v4936, 2.0
        %v4941 = vmul.f32 %v4937, 2.0
        %v4942 = vmul.f32 %v4938, 2.0
        %v4943 = vmul.f32 %v4939, 2.0
        %v4944 = vadd.f32 %v4741, %v4940
        %v4945 = vadd.f32 %v4742, %v4941
        %v4946 = vadd.f32 %v4743, %v4942
        %v4947 = vadd.f32 %v4744, %v4943
        %v4948 = vmul.f32 %v4936, 0.001
        %v4949 = vmul.f32 %v4937, 0.001
        %v4950 = vmul.f32 %v4938, 0.001
        %v4951 = vmul.f32 %v4939, 0.001
        %v4952 = vadd.f32 %v4346, %v4948
        %v4953 = vadd.f32 %v4347, %v4949
        %v4954 = vadd.f32 %v4348, %v4950
        %v4955 = vadd.f32 %v4349, %v4951
        %v4956 = vpack.c.bf16 %v4953, %v4952
        %v4957 = vpack.c.bf16 %v4955, %v4954
        %4958 = vmatprep.subr.bf16.mxu0 %v296
        %4959 = vmatpush1.bf16.msra.mxu0 %v295
        %4960 = vmatprep.subr.bf16.mxu0 %v298
        %4961 = vmatpush1.bf16.msra.mxu0 %v297
        %4962 = vmatprep.subr.bf16.mxu0 %v300
        %4963 = vmatpush1.bf16.msra.mxu0 %v299
        %4964 = vmatprep.subr.bf16.mxu0 %v302
        %4965 = vmatpush1.bf16.msra.mxu0 %v301
        %4966 = vmatprep.subr.bf16.mxu0 %v304
        %4967 = vmatpush1.bf16.msra.mxu0 %v303
        %4968 = vmatprep.subr.bf16.mxu0 %v306
        %4969 = vmatpush1.bf16.msra.mxu0 %v305
        %4970 = vmatprep.subr.bf16.mxu0 %v308
        %4971 = vmatpush1.bf16.msra.mxu0 %v307
        %4972 = vmatprep.subr.bf16.mxu0 %v310
        %4973 = vmatpush1.bf16.msra.mxu0 %v309
        %4974 = vmatprep.subr.bf16.mxu0 0
        %4975 = vmatpush1.bf16.msra.mxu0 0
        %4976 = vmatprep.subr.bf16.mxu0 0
        %4977 = vmatpush1.bf16.msra.mxu0 0
        %4978 = vmatprep.subr.bf16.mxu0 0
        %4979 = vmatpush1.bf16.msra.mxu0 0
        %4980 = vmatprep.subr.bf16.mxu0 0
        %4981 = vmatpush1.bf16.msra.mxu0 0
        %4982 = vmatprep.subr.bf16.mxu0 0
        %4983 = vmatpush1.bf16.msra.mxu0 0
        %4984 = vmatprep.subr.bf16.mxu0 0
        %4985 = vmatpush1.bf16.msra.mxu0 0
        %4986 = vmatprep.subr.bf16.mxu0 0
        %4987 = vmatpush1.bf16.msra.mxu0 0
        %4988 = vmatprep.subr.bf16.mxu0 0
        %4989 = vmatpush1.bf16.msra.mxu0 0
        %4990 = vmatprep.mubr.bf16.mxu0 0
        %4991 = vmatmul.mubr.bf16.gmra.mrb[0].mxu0 %v4956
        %v4992 = vpop.f32.mrb[0].mxu0
        %v4993 = vadd.f32 0.0, %v4992
        %v4994 = vpop.f32.mrb[0].mxu0
        %v4995 = vadd.f32 0.0, %v4994
        %v4996 = vpop.f32.mrb[0].mxu0
        %v4997 = vadd.f32 0.0, %v4996
        %v4998 = vpop.f32.mrb[0].mxu0
        %v4999 = vadd.f32 0.0, %v4998
        %5000 = vmatprep.mubr.bf16.mxu0 0
        %5001 = vmatmul.mubr.bf16.gmra.mrb[0].mxu0 %v4957
        %v5002 = vpop.f32.mrb[0].mxu0
        %v5003 = vadd.f32 0.0, %v5002
        %v5004 = vpop.f32.mrb[0].mxu0
        %v5005 = vadd.f32 0.0, %v5004
        %v5006 = vpop.f32.mrb[0].mxu0
        %v5007 = vadd.f32 0.0, %v5006
        %v5008 = vpop.f32.mrb[0].mxu0
        %v5009 = vadd.f32 0.0, %v5008
        %5010 = vdwg.mxu0
        %v5011 = vrot.slane %v4952, 7
        %v5012 = vrot.slane %v4953, 7
        %v5013 = vrot.slane %v4954, 7
        %v5014 = vrot.slane %v4955, 7
        %v5015 = vsel %vm386, %v5013, %v5014
        %v5016 = vsel %vm386, %v5012, %v5013
        %v5017 = vsel %vm386, %v5011, %v5012
        %v5018 = vsel %vm386, %v5014, %v5011
        %v5019 = vrot.slane %v4952, 6
        %v5020 = vrot.slane %v4953, 6
        %v5021 = vrot.slane %v4954, 6
        %v5022 = vrot.slane %v4955, 6
        %v5023 = vsel %vm395, %v5021, %v5022
        %v5024 = vsel %vm395, %v5020, %v5021
        %v5025 = vsel %vm395, %v5019, %v5020
        %v5026 = vsel %vm395, %v5022, %v5019
        %v5027 = vrot.slane %v4952, 1
        %v5028 = vrot.slane %v4953, 1
        %v5029 = vrot.slane %v4954, 1
        %v5030 = vrot.slane %v4955, 1
        %v5031 = vsel %vm404, %v5029, %v5030
        %v5032 = vsel %vm404, %v5028, %v5029
        %v5033 = vsel %vm404, %v5027, %v5028
        %v5034 = vsel %vm404, %v5030, %v5027
        %v5035 = vrot.slane %v4952, 2
        %v5036 = vrot.slane %v4953, 2
        %v5037 = vrot.slane %v4954, 2
        %v5038 = vrot.slane %v4955, 2
        %v5039 = vsel %vm413, %v5037, %v5038
        %v5040 = vsel %vm413, %v5036, %v5037
        %v5041 = vsel %vm413, %v5035, %v5036
        %v5042 = vsel %vm413, %v5038, %v5035
        %v5043 = vsub.f32 %v5026, %v5041
        %v5044 = vsub.f32 %v5025, %v5040
        %v5045 = vsub.f32 %v5024, %v5039
        %v5046 = vsub.f32 %v5023, %v5042
        %v5047 = vmul.f32 %v5043, 8.333333
        %v5048 = vmul.f32 %v5044, 8.333333
        %v5049 = vmul.f32 %v5045, 8.333333
        %v5050 = vmul.f32 %v5046, 8.333333
        %v5051 = vsub.f32 %v5033, %v5018
        %v5052 = vsub.f32 %v5032, %v5017
        %v5053 = vsub.f32 %v5031, %v5016
        %v5054 = vsub.f32 %v5034, %v5015
        %v5055 = vmul.f32 %v5051, 66.666664
        %v5056 = vmul.f32 %v5052, 66.666664
        %v5057 = vmul.f32 %v5053, 66.666664
        %v5058 = vmul.f32 %v5054, 66.666664
        %v5059 = vadd.f32 %v5047, %v5055
        %v5060 = vadd.f32 %v5048, %v5056
        %v5061 = vadd.f32 %v5049, %v5057
        %v5062 = vadd.f32 %v5050, %v5058
        %v5063 = vadd.f32 %v5026, %v5041
        %v5064 = vadd.f32 %v5025, %v5040
        %v5065 = vadd.f32 %v5024, %v5039
        %v5066 = vadd.f32 %v5023, %v5042
        %v5067 = vmul.f32 %v5063, -7.8199944
        %v5068 = vmul.f32 %v5064, -7.8199944
        %v5069 = vmul.f32 %v5065, -7.8199944
        %v5070 = vmul.f32 %v5066, -7.8199944
        %v5071 = vadd.f32 %v5018, %v5033
        %v5072 = vadd.f32 %v5017, %v5032
        %v5073 = vadd.f32 %v5016, %v5031
        %v5074 = vadd.f32 %v5015, %v5034
        %v5075 = vmul.f32 %v5071, 125.11991
        %v5076 = vmul.f32 %v5072, 125.11991
        %v5077 = vmul.f32 %v5073, 125.11991
        %v5078 = vmul.f32 %v5074, 125.11991
        %v5079 = vadd.f32 %v5067, %v5075
        %v5080 = vadd.f32 %v5068, %v5076
        %v5081 = vadd.f32 %v5069, %v5077
        %v5082 = vadd.f32 %v5070, %v5078
        %v5083 = vmul.f32 %v4952, -234.59984
        %v5084 = vmul.f32 %v4953, -234.59984
        %v5085 = vmul.f32 %v4954, -234.59984
        %v5086 = vmul.f32 %v4955, -234.59984
        %v5087 = vadd.f32 %v5079, %v5083
        %v5088 = vadd.f32 %v5080, %v5084
        %v5089 = vadd.f32 %v5081, %v5085
        %v5090 = vadd.f32 %v5082, %v5086
        %v5091 = vadd.f32 %v4995, %v5087
        %v5092 = vadd.f32 %v4999, %v5088
        %v5093 = vadd.f32 %v5005, %v5089
        %v5094 = vadd.f32 %v5009, %v5090
        %5095 = vrot.lane.b32.xlu0 %v4952, 64
        %v5096 = vpop.permute.xlu0 %5095
        %5097 = vrot.lane.b32.xlu0 %v4953, 64
        %v5098 = vpop.permute.xlu0 %5097
        %5099 = vrot.lane.b32.xlu0 %v4954, 64
        %v5100 = vpop.permute.xlu0 %5099
        %5101 = vrot.lane.b32.xlu0 %v4955, 64
        %v5102 = vpop.permute.xlu0 %5101
        %v5103 = vmul.f32 %v209, %v5059
        %v5104 = vmul.f32 %v209, %v5060
        %v5105 = vmul.f32 %v209, %v5061
        %v5106 = vmul.f32 %v209, %v5062
        %v5107 = vmul.f32 %v214, %v4993
        %v5108 = vmul.f32 %v214, %v4997
        %v5109 = vmul.f32 %v214, %v5003
        %v5110 = vmul.f32 %v214, %v5007
        %v5111 = vadd.f32 %v5103, %v5107
        %v5112 = vadd.f32 %v5104, %v5108
        %v5113 = vadd.f32 %v5105, %v5109
        %v5114 = vadd.f32 %v5106, %v5110
        %v5115 = vmul.f32 %v4952, %v5111
        %v5116 = vmul.f32 %v4953, %v5112
        %v5117 = vmul.f32 %v4954, %v5113
        %v5118 = vmul.f32 %v4955, %v5114
        %v5119 = vadd.f32 %v5091, %v5115
        %v5120 = vadd.f32 %v5092, %v5116
        %v5121 = vadd.f32 %v5093, %v5117
        %v5122 = vadd.f32 %v5094, %v5118
        %v5123 = vmul.f32 %v219, %v5059
        %v5124 = vmul.f32 %v219, %v5060
        %v5125 = vmul.f32 %v219, %v5061
        %v5126 = vmul.f32 %v219, %v5062
        %v5127 = vmul.f32 %v224, %v4993
        %v5128 = vmul.f32 %v224, %v4997
        %v5129 = vmul.f32 %v224, %v5003
        %v5130 = vmul.f32 %v224, %v5007
        %v5131 = vadd.f32 %v5123, %v5127
        %v5132 = vadd.f32 %v5124, %v5128
        %v5133 = vadd.f32 %v5125, %v5129
        %v5134 = vadd.f32 %v5126, %v5130
        %v5135 = vmul.f32 %v5096, %v5131
        %v5136 = vmul.f32 %v5098, %v5132
        %v5137 = vmul.f32 %v5100, %v5133
        %v5138 = vmul.f32 %v5102, %v5134
        %v5139 = vadd.f32 %v5119, %v5135
        %v5140 = vadd.f32 %v5120, %v5136
        %v5141 = vadd.f32 %v5121, %v5137
        %v5142 = vadd.f32 %v5122, %v5138
        %v5143 = vadd.f32 %v4944, %v5139
        %v5144 = vadd.f32 %v4945, %v5140
        %v5145 = vadd.f32 %v4946, %v5141
        %v5146 = vadd.f32 %v4947, %v5142
        %v5147 = vmul.f32 %v5143, 0.00016666666
        %v5148 = vmul.f32 %v5144, 0.00016666666
        %v5149 = vmul.f32 %v5145, 0.00016666666
        %v5150 = vmul.f32 %v5146, 0.00016666666
        %v5151 = vadd.f32 %v4346, %v5147
        %v5152 = vadd.f32 %v4347, %v5148
        %v5153 = vadd.f32 %v4348, %v5149
        %v5154 = vadd.f32 %v4349, %v5150
        %s5155 = scalar_lea.vmem %s190, 160 [#allocation9]
        %5156 = vst [vmem:[%s5155] sm:$0xff] %v5151
        %5157 = vst [vmem:[%s5155 + $0x8] sm:$0xff] %v5152
        %5158 = vst [vmem:[%s5155 + $0x10] sm:$0xff] %v5153
        %5159 = vst [vmem:[%s5155 + $0x18] sm:$0xff] %v5154
        %v5160 = vpack.c.bf16 %v5152, %v5151
        %v5161 = vpack.c.bf16 %v5154, %v5153
        %5162 = vmatprep.subr.bf16.mxu0 %v296
        %5163 = vmatpush1.bf16.msra.mxu0 %v295
        %5164 = vmatprep.subr.bf16.mxu0 %v298
        %5165 = vmatpush1.bf16.msra.mxu0 %v297
        %5166 = vmatprep.subr.bf16.mxu0 %v300
        %5167 = vmatpush1.bf16.msra.mxu0 %v299
        %5168 = vmatprep.subr.bf16.mxu0 %v302
        %5169 = vmatpush1.bf16.msra.mxu0 %v301
        %5170 = vmatprep.subr.bf16.mxu0 %v304
        %5171 = vmatpush1.bf16.msra.mxu0 %v303
        %5172 = vmatprep.subr.bf16.mxu0 %v306
        %5173 = vmatpush1.bf16.msra.mxu0 %v305
        %5174 = vmatprep.subr.bf16.mxu0 %v308
        %5175 = vmatpush1.bf16.msra.mxu0 %v307
        %5176 = vmatprep.subr.bf16.mxu0 %v310
        %5177 = vmatpush1.bf16.msra.mxu0 %v309
        %5178 = vmatprep.subr.bf16.mxu0 0
        %5179 = vmatpush1.bf16.msra.mxu0 0
        %5180 = vmatprep.subr.bf16.mxu0 0
        %5181 = vmatpush1.bf16.msra.mxu0 0
        %5182 = vmatprep.subr.bf16.mxu0 0
        %5183 = vmatpush1.bf16.msra.mxu0 0
        %5184 = vmatprep.subr.bf16.mxu0 0
        %5185 = vmatpush1.bf16.msra.mxu0 0
        %5186 = vmatprep.subr.bf16.mxu0 0
        %5187 = vmatpush1.bf16.msra.mxu0 0
        %5188 = vmatprep.subr.bf16.mxu0 0
        %5189 = vmatpush1.bf16.msra.mxu0 0
        %5190 = vmatprep.subr.bf16.mxu0 0
        %5191 = vmatpush1.bf16.msra.mxu0 0
        %5192 = vmatprep.subr.bf16.mxu0 0
        %5193 = vmatpush1.bf16.msra.mxu0 0
        %5194 = vmatprep.mubr.bf16.mxu0 0
        %5195 = vmatmul.mubr.bf16.gmra.mrb[0].mxu0 %v5160
        %v5196 = vpop.f32.mrb[0].mxu0
        %v5197 = vadd.f32 0.0, %v5196
        %v5198 = vpop.f32.mrb[0].mxu0
        %v5199 = vadd.f32 0.0, %v5198
        %v5200 = vpop.f32.mrb[0].mxu0
        %v5201 = vadd.f32 0.0, %v5200
        %v5202 = vpop.f32.mrb[0].mxu0
        %v5203 = vadd.f32 0.0, %v5202
        %5204 = vmatprep.mubr.bf16.mxu0 0
        %5205 = vmatmul.mubr.bf16.gmra.mrb[0].mxu0 %v5161
        %v5206 = vpop.f32.mrb[0].mxu0
        %v5207 = vadd.f32 0.0, %v5206
        %v5208 = vpop.f32.mrb[0].mxu0
        %v5209 = vadd.f32 0.0, %v5208
        %v5210 = vpop.f32.mrb[0].mxu0
        %v5211 = vadd.f32 0.0, %v5210
        %v5212 = vpop.f32.mrb[0].mxu0
        %v5213 = vadd.f32 0.0, %v5212
        %5214 = vdwg.mxu0
        %v5215 = vrot.slane %v5151, 7
        %v5216 = vrot.slane %v5152, 7
        %v5217 = vrot.slane %v5153, 7
        %v5218 = vrot.slane %v5154, 7
        %v5219 = vsel %vm386, %v5217, %v5218
        %v5220 = vsel %vm386, %v5216, %v5217
        %v5221 = vsel %vm386, %v5215, %v5216
        %v5222 = vsel %vm386, %v5218, %v5215
        %v5223 = vrot.slane %v5151, 6
        %v5224 = vrot.slane %v5152, 6
        %v5225 = vrot.slane %v5153, 6
        %v5226 = vrot.slane %v5154, 6
        %v5227 = vsel %vm395, %v5225, %v5226
        %v5228 = vsel %vm395, %v5224, %v5225
        %v5229 = vsel %vm395, %v5223, %v5224
        %v5230 = vsel %vm395, %v5226, %v5223
        %v5231 = vrot.slane %v5151, 1
        %v5232 = vrot.slane %v5152, 1
        %v5233 = vrot.slane %v5153, 1
        %v5234 = vrot.slane %v5154, 1
        %v5235 = vsel %vm404, %v5233, %v5234
        %v5236 = vsel %vm404, %v5232, %v5233
        %v5237 = vsel %vm404, %v5231, %v5232
        %v5238 = vsel %vm404, %v5234, %v5231
        %v5239 = vrot.slane %v5151, 2
        %v5240 = vrot.slane %v5152, 2
        %v5241 = vrot.slane %v5153, 2
        %v5242 = vrot.slane %v5154, 2
        %v5243 = vsel %vm413, %v5241, %v5242
        %v5244 = vsel %vm413, %v5240, %v5241
        %v5245 = vsel %vm413, %v5239, %v5240
        %v5246 = vsel %vm413, %v5242, %v5239
        %v5247 = vsub.f32 %v5230, %v5245
        %v5248 = vsub.f32 %v5229, %v5244
        %v5249 = vsub.f32 %v5228, %v5243
        %v5250 = vsub.f32 %v5227, %v5246
        %v5251 = vmul.f32 %v5247, 8.333333
        %v5252 = vmul.f32 %v5248, 8.333333
        %v5253 = vmul.f32 %v5249, 8.333333
        %v5254 = vmul.f32 %v5250, 8.333333
        %v5255 = vsub.f32 %v5237, %v5222
        %v5256 = vsub.f32 %v5236, %v5221
        %v5257 = vsub.f32 %v5235, %v5220
        %v5258 = vsub.f32 %v5238, %v5219
        %v5259 = vmul.f32 %v5255, 66.666664
        %v5260 = vmul.f32 %v5256, 66.666664
        %v5261 = vmul.f32 %v5257, 66.666664
        %v5262 = vmul.f32 %v5258, 66.666664
        %v5263 = vadd.f32 %v5251, %v5259
        %v5264 = vadd.f32 %v5252, %v5260
        %v5265 = vadd.f32 %v5253, %v5261
        %v5266 = vadd.f32 %v5254, %v5262
        %v5267 = vadd.f32 %v5230, %v5245
        %v5268 = vadd.f32 %v5229, %v5244
        %v5269 = vadd.f32 %v5228, %v5243
        %v5270 = vadd.f32 %v5227, %v5246
        %v5271 = vmul.f32 %v5267, -7.8199944
        %v5272 = vmul.f32 %v5268, -7.8199944
        %v5273 = vmul.f32 %v5269, -7.8199944
        %v5274 = vmul.f32 %v5270, -7.8199944
        %v5275 = vadd.f32 %v5222, %v5237
        %v5276 = vadd.f32 %v5221, %v5236
        %v5277 = vadd.f32 %v5220, %v5235
        %v5278 = vadd.f32 %v5219, %v5238
        %v5279 = vmul.f32 %v5275, 125.11991
        %v5280 = vmul.f32 %v5276, 125.11991
        %v5281 = vmul.f32 %v5277, 125.11991
        %v5282 = vmul.f32 %v5278, 125.11991
        %v5283 = vadd.f32 %v5271, %v5279
        %v5284 = vadd.f32 %v5272, %v5280
        %v5285 = vadd.f32 %v5273, %v5281
        %v5286 = vadd.f32 %v5274, %v5282
        %v5287 = vmul.f32 %v5151, -234.59984
        %v5288 = vmul.f32 %v5152, -234.59984
        %v5289 = vmul.f32 %v5153, -234.59984
        %v5290 = vmul.f32 %v5154, -234.59984
        %v5291 = vadd.f32 %v5283, %v5287
        %v5292 = vadd.f32 %v5284, %v5288
        %v5293 = vadd.f32 %v5285, %v5289
        %v5294 = vadd.f32 %v5286, %v5290
        %v5295 = vadd.f32 %v5199, %v5291
        %v5296 = vadd.f32 %v5203, %v5292
        %v5297 = vadd.f32 %v5209, %v5293
        %v5298 = vadd.f32 %v5213, %v5294
        %5299 = vrot.lane.b32.xlu0 %v5151, 64
        %v5300 = vpop.permute.xlu0 %5299
        %5301 = vrot.lane.b32.xlu0 %v5152, 64
        %v5302 = vpop.permute.xlu0 %5301
        %5303 = vrot.lane.b32.xlu0 %v5153, 64
        %v5304 = vpop.permute.xlu0 %5303
        %5305 = vrot.lane.b32.xlu0 %v5154, 64
        %v5306 = vpop.permute.xlu0 %5305
        %v5307 = vmul.f32 %v209, %v5263
        %v5308 = vmul.f32 %v209, %v5264
        %v5309 = vmul.f32 %v209, %v5265
        %v5310 = vmul.f32 %v209, %v5266
        %v5311 = vmul.f32 %v214, %v5197
        %v5312 = vmul.f32 %v214, %v5201
        %v5313 = vmul.f32 %v214, %v5207
        %v5314 = vmul.f32 %v214, %v5211
        %v5315 = vadd.f32 %v5307, %v5311
        %v5316 = vadd.f32 %v5308, %v5312
        %v5317 = vadd.f32 %v5309, %v5313
        %v5318 = vadd.f32 %v5310, %v5314
        %v5319 = vmul.f32 %v5151, %v5315
        %v5320 = vmul.f32 %v5152, %v5316
        %v5321 = vmul.f32 %v5153, %v5317
        %v5322 = vmul.f32 %v5154, %v5318
        %v5323 = vadd.f32 %v5295, %v5319
        %v5324 = vadd.f32 %v5296, %v5320
        %v5325 = vadd.f32 %v5297, %v5321
        %v5326 = vadd.f32 %v5298, %v5322
        %v5327 = vmul.f32 %v219, %v5263
        %v5328 = vmul.f32 %v219, %v5264
        %v5329 = vmul.f32 %v219, %v5265
        %v5330 = vmul.f32 %v219, %v5266
        %v5331 = vmul.f32 %v224, %v5197
        %v5332 = vmul.f32 %v224, %v5201
        %v5333 = vmul.f32 %v224, %v5207
        %v5334 = vmul.f32 %v224, %v5211
        %v5335 = vadd.f32 %v5327, %v5331
        %v5336 = vadd.f32 %v5328, %v5332
        %v5337 = vadd.f32 %v5329, %v5333
        %v5338 = vadd.f32 %v5330, %v5334
        %v5339 = vmul.f32 %v5300, %v5335
        %v5340 = vmul.f32 %v5302, %v5336
        %v5341 = vmul.f32 %v5304, %v5337
        %v5342 = vmul.f32 %v5306, %v5338
        %v5343 = vadd.f32 %v5323, %v5339
        %v5344 = vadd.f32 %v5324, %v5340
        %v5345 = vadd.f32 %v5325, %v5341
        %v5346 = vadd.f32 %v5326, %v5342
        %v5347 = vmul.f32 %v5343, 0.0005
        %v5348 = vmul.f32 %v5344, 0.0005
        %v5349 = vmul.f32 %v5345, 0.0005
        %v5350 = vmul.f32 %v5346, 0.0005
        %v5351 = vadd.f32 %v5151, %v5347
        %v5352 = vadd.f32 %v5152, %v5348
        %v5353 = vadd.f32 %v5153, %v5349
        %v5354 = vadd.f32 %v5154, %v5350
        %v5355 = vpack.c.bf16 %v5352, %v5351
        %v5356 = vpack.c.bf16 %v5354, %v5353
        %5357 = vmatprep.subr.bf16.mxu0 %v296
        %5358 = vmatpush1.bf16.msra.mxu0 %v295
        %5359 = vmatprep.subr.bf16.mxu0 %v298
        %5360 = vmatpush1.bf16.msra.mxu0 %v297
        %5361 = vmatprep.subr.bf16.mxu0 %v300
        %5362 = vmatpush1.bf16.msra.mxu0 %v299
        %5363 = vmatprep.subr.bf16.mxu0 %v302
        %5364 = vmatpush1.bf16.msra.mxu0 %v301
        %5365 = vmatprep.subr.bf16.mxu0 %v304
        %5366 = vmatpush1.bf16.msra.mxu0 %v303
        %5367 = vmatprep.subr.bf16.mxu0 %v306
        %5368 = vmatpush1.bf16.msra.mxu0 %v305
        %5369 = vmatprep.subr.bf16.mxu0 %v308
        %5370 = vmatpush1.bf16.msra.mxu0 %v307
        %5371 = vmatprep.subr.bf16.mxu0 %v310
        %5372 = vmatpush1.bf16.msra.mxu0 %v309
        %5373 = vmatprep.subr.bf16.mxu0 0
        %5374 = vmatpush1.bf16.msra.mxu0 0
        %5375 = vmatprep.subr.bf16.mxu0 0
        %5376 = vmatpush1.bf16.msra.mxu0 0
        %5377 = vmatprep.subr.bf16.mxu0 0
        %5378 = vmatpush1.bf16.msra.mxu0 0
        %5379 = vmatprep.subr.bf16.mxu0 0
        %5380 = vmatpush1.bf16.msra.mxu0 0
        %5381 = vmatprep.subr.bf16.mxu0 0
        %5382 = vmatpush1.bf16.msra.mxu0 0
        %5383 = vmatprep.subr.bf16.mxu0 0
        %5384 = vmatpush1.bf16.msra.mxu0 0
        %5385 = vmatprep.subr.bf16.mxu0 0
        %5386 = vmatpush1.bf16.msra.mxu0 0
        %5387 = vmatprep.subr.bf16.mxu0 0
        %5388 = vmatpush1.bf16.msra.mxu0 0
        %5389 = vmatprep.mubr.bf16.mxu0 0
        %5390 = vmatmul.mubr.bf16.gmra.mrb[0].mxu0 %v5355
        %v5391 = vpop.f32.mrb[0].mxu0
        %v5392 = vadd.f32 0.0, %v5391
        %v5393 = vpop.f32.mrb[0].mxu0
        %v5394 = vadd.f32 0.0, %v5393
        %v5395 = vpop.f32.mrb[0].mxu0
        %v5396 = vadd.f32 0.0, %v5395
        %v5397 = vpop.f32.mrb[0].mxu0
        %v5398 = vadd.f32 0.0, %v5397
        %5399 = vmatprep.mubr.bf16.mxu0 0
        %5400 = vmatmul.mubr.bf16.gmra.mrb[0].mxu0 %v5356
        %v5401 = vpop.f32.mrb[0].mxu0
        %v5402 = vadd.f32 0.0, %v5401
        %v5403 = vpop.f32.mrb[0].mxu0
        %v5404 = vadd.f32 0.0, %v5403
        %v5405 = vpop.f32.mrb[0].mxu0
        %v5406 = vadd.f32 0.0, %v5405
        %v5407 = vpop.f32.mrb[0].mxu0
        %v5408 = vadd.f32 0.0, %v5407
        %5409 = vdwg.mxu0
        %v5410 = vrot.slane %v5351, 7
        %v5411 = vrot.slane %v5352, 7
        %v5412 = vrot.slane %v5353, 7
        %v5413 = vrot.slane %v5354, 7
        %v5414 = vsel %vm386, %v5412, %v5413
        %v5415 = vsel %vm386, %v5411, %v5412
        %v5416 = vsel %vm386, %v5410, %v5411
        %v5417 = vsel %vm386, %v5413, %v5410
        %v5418 = vrot.slane %v5351, 6
        %v5419 = vrot.slane %v5352, 6
        %v5420 = vrot.slane %v5353, 6
        %v5421 = vrot.slane %v5354, 6
        %v5422 = vsel %vm395, %v5420, %v5421
        %v5423 = vsel %vm395, %v5419, %v5420
        %v5424 = vsel %vm395, %v5418, %v5419
        %v5425 = vsel %vm395, %v5421, %v5418
        %v5426 = vrot.slane %v5351, 1
        %v5427 = vrot.slane %v5352, 1
        %v5428 = vrot.slane %v5353, 1
        %v5429 = vrot.slane %v5354, 1
        %v5430 = vsel %vm404, %v5428, %v5429
        %v5431 = vsel %vm404, %v5427, %v5428
        %v5432 = vsel %vm404, %v5426, %v5427
        %v5433 = vsel %vm404, %v5429, %v5426
        %v5434 = vrot.slane %v5351, 2
        %v5435 = vrot.slane %v5352, 2
        %v5436 = vrot.slane %v5353, 2
        %v5437 = vrot.slane %v5354, 2
        %v5438 = vsel %vm413, %v5436, %v5437
        %v5439 = vsel %vm413, %v5435, %v5436
        %v5440 = vsel %vm413, %v5434, %v5435
        %v5441 = vsel %vm413, %v5437, %v5434
        %v5442 = vsub.f32 %v5425, %v5440
        %v5443 = vsub.f32 %v5424, %v5439
        %v5444 = vsub.f32 %v5423, %v5438
        %v5445 = vsub.f32 %v5422, %v5441
        %v5446 = vmul.f32 %v5442, 8.333333
        %v5447 = vmul.f32 %v5443, 8.333333
        %v5448 = vmul.f32 %v5444, 8.333333
        %v5449 = vmul.f32 %v5445, 8.333333
        %v5450 = vsub.f32 %v5432, %v5417
        %v5451 = vsub.f32 %v5431, %v5416
        %v5452 = vsub.f32 %v5430, %v5415
        %v5453 = vsub.f32 %v5433, %v5414
        %v5454 = vmul.f32 %v5450, 66.666664
        %v5455 = vmul.f32 %v5451, 66.666664
        %v5456 = vmul.f32 %v5452, 66.666664
        %v5457 = vmul.f32 %v5453, 66.666664
        %v5458 = vadd.f32 %v5446, %v5454
        %v5459 = vadd.f32 %v5447, %v5455
        %v5460 = vadd.f32 %v5448, %v5456
        %v5461 = vadd.f32 %v5449, %v5457
        %v5462 = vadd.f32 %v5425, %v5440
        %v5463 = vadd.f32 %v5424, %v5439
        %v5464 = vadd.f32 %v5423, %v5438
        %v5465 = vadd.f32 %v5422, %v5441
        %v5466 = vmul.f32 %v5462, -7.8199944
        %v5467 = vmul.f32 %v5463, -7.8199944
        %v5468 = vmul.f32 %v5464, -7.8199944
        %v5469 = vmul.f32 %v5465, -7.8199944
        %v5470 = vadd.f32 %v5417, %v5432
        %v5471 = vadd.f32 %v5416, %v5431
        %v5472 = vadd.f32 %v5415, %v5430
        %v5473 = vadd.f32 %v5414, %v5433
        %v5474 = vmul.f32 %v5470, 125.11991
        %v5475 = vmul.f32 %v5471, 125.11991
        %v5476 = vmul.f32 %v5472, 125.11991
        %v5477 = vmul.f32 %v5473, 125.11991
        %v5478 = vadd.f32 %v5466, %v5474
        %v5479 = vadd.f32 %v5467, %v5475
        %v5480 = vadd.f32 %v5468, %v5476
        %v5481 = vadd.f32 %v5469, %v5477
        %v5482 = vmul.f32 %v5351, -234.59984
        %v5483 = vmul.f32 %v5352, -234.59984
        %v5484 = vmul.f32 %v5353, -234.59984
        %v5485 = vmul.f32 %v5354, -234.59984
        %v5486 = vadd.f32 %v5478, %v5482
        %v5487 = vadd.f32 %v5479, %v5483
        %v5488 = vadd.f32 %v5480, %v5484
        %v5489 = vadd.f32 %v5481, %v5485
        %v5490 = vadd.f32 %v5394, %v5486
        %v5491 = vadd.f32 %v5398, %v5487
        %v5492 = vadd.f32 %v5404, %v5488
        %v5493 = vadd.f32 %v5408, %v5489
        %5494 = vrot.lane.b32.xlu0 %v5351, 64
        %v5495 = vpop.permute.xlu0 %5494
        %5496 = vrot.lane.b32.xlu0 %v5352, 64
        %v5497 = vpop.permute.xlu0 %5496
        %5498 = vrot.lane.b32.xlu0 %v5353, 64
        %v5499 = vpop.permute.xlu0 %5498
        %5500 = vrot.lane.b32.xlu0 %v5354, 64
        %v5501 = vpop.permute.xlu0 %5500
        %v5502 = vmul.f32 %v209, %v5458
        %v5503 = vmul.f32 %v209, %v5459
        %v5504 = vmul.f32 %v209, %v5460
        %v5505 = vmul.f32 %v209, %v5461
        %v5506 = vmul.f32 %v214, %v5392
        %v5507 = vmul.f32 %v214, %v5396
        %v5508 = vmul.f32 %v214, %v5402
        %v5509 = vmul.f32 %v214, %v5406
        %v5510 = vadd.f32 %v5502, %v5506
        %v5511 = vadd.f32 %v5503, %v5507
        %v5512 = vadd.f32 %v5504, %v5508
        %v5513 = vadd.f32 %v5505, %v5509
        %v5514 = vmul.f32 %v5351, %v5510
        %v5515 = vmul.f32 %v5352, %v5511
        %v5516 = vmul.f32 %v5353, %v5512
        %v5517 = vmul.f32 %v5354, %v5513
        %v5518 = vadd.f32 %v5490, %v5514
        %v5519 = vadd.f32 %v5491, %v5515
        %v5520 = vadd.f32 %v5492, %v5516
        %v5521 = vadd.f32 %v5493, %v5517
        %v5522 = vmul.f32 %v219, %v5458
        %v5523 = vmul.f32 %v219, %v5459
        %v5524 = vmul.f32 %v219, %v5460
        %v5525 = vmul.f32 %v219, %v5461
        %v5526 = vmul.f32 %v224, %v5392
        %v5527 = vmul.f32 %v224, %v5396
        %v5528 = vmul.f32 %v224, %v5402
        %v5529 = vmul.f32 %v224, %v5406
        %v5530 = vadd.f32 %v5522, %v5526
        %v5531 = vadd.f32 %v5523, %v5527
        %v5532 = vadd.f32 %v5524, %v5528
        %v5533 = vadd.f32 %v5525, %v5529
        %v5534 = vmul.f32 %v5495, %v5530
        %v5535 = vmul.f32 %v5497, %v5531
        %v5536 = vmul.f32 %v5499, %v5532
        %v5537 = vmul.f32 %v5501, %v5533
        %v5538 = vadd.f32 %v5518, %v5534
        %v5539 = vadd.f32 %v5519, %v5535
        %v5540 = vadd.f32 %v5520, %v5536
        %v5541 = vadd.f32 %v5521, %v5537
        %v5542 = vmul.f32 %v5538, 2.0
        %v5543 = vmul.f32 %v5539, 2.0
        %v5544 = vmul.f32 %v5540, 2.0
        %v5545 = vmul.f32 %v5541, 2.0
        %v5546 = vadd.f32 %v5343, %v5542
        %v5547 = vadd.f32 %v5344, %v5543
        %v5548 = vadd.f32 %v5345, %v5544
        %v5549 = vadd.f32 %v5346, %v5545
        %v5550 = vmul.f32 %v5538, 0.0005
        %v5551 = vmul.f32 %v5539, 0.0005
        %v5552 = vmul.f32 %v5540, 0.0005
        %v5553 = vmul.f32 %v5541, 0.0005
        %v5554 = vadd.f32 %v5151, %v5550
        %v5555 = vadd.f32 %v5152, %v5551
        %v5556 = vadd.f32 %v5153, %v5552
        %v5557 = vadd.f32 %v5154, %v5553
        %v5558 = vpack.c.bf16 %v5555, %v5554
        %v5559 = vpack.c.bf16 %v5557, %v5556
        %5560 = vmatprep.subr.bf16.mxu0 %v296
        %5561 = vmatpush1.bf16.msra.mxu0 %v295
        %5562 = vmatprep.subr.bf16.mxu0 %v298
        %5563 = vmatpush1.bf16.msra.mxu0 %v297
        %5564 = vmatprep.subr.bf16.mxu0 %v300
        %5565 = vmatpush1.bf16.msra.mxu0 %v299
        %5566 = vmatprep.subr.bf16.mxu0 %v302
        %5567 = vmatpush1.bf16.msra.mxu0 %v301
        %5568 = vmatprep.subr.bf16.mxu0 %v304
        %5569 = vmatpush1.bf16.msra.mxu0 %v303
        %5570 = vmatprep.subr.bf16.mxu0 %v306
        %5571 = vmatpush1.bf16.msra.mxu0 %v305
        %5572 = vmatprep.subr.bf16.mxu0 %v308
        %5573 = vmatpush1.bf16.msra.mxu0 %v307
        %5574 = vmatprep.subr.bf16.mxu0 %v310
        %5575 = vmatpush1.bf16.msra.mxu0 %v309
        %5576 = vmatprep.subr.bf16.mxu0 0
        %5577 = vmatpush1.bf16.msra.mxu0 0
        %5578 = vmatprep.subr.bf16.mxu0 0
        %5579 = vmatpush1.bf16.msra.mxu0 0
        %5580 = vmatprep.subr.bf16.mxu0 0
        %5581 = vmatpush1.bf16.msra.mxu0 0
        %5582 = vmatprep.subr.bf16.mxu0 0
        %5583 = vmatpush1.bf16.msra.mxu0 0
        %5584 = vmatprep.subr.bf16.mxu0 0
        %5585 = vmatpush1.bf16.msra.mxu0 0
        %5586 = vmatprep.subr.bf16.mxu0 0
        %5587 = vmatpush1.bf16.msra.mxu0 0
        %5588 = vmatprep.subr.bf16.mxu0 0
        %5589 = vmatpush1.bf16.msra.mxu0 0
        %5590 = vmatprep.subr.bf16.mxu0 0
        %5591 = vmatpush1.bf16.msra.mxu0 0
        %5592 = vmatprep.mubr.bf16.mxu0 0
        %5593 = vmatmul.mubr.bf16.gmra.mrb[0].mxu0 %v5558
        %v5594 = vpop.f32.mrb[0].mxu0
        %v5595 = vadd.f32 0.0, %v5594
        %v5596 = vpop.f32.mrb[0].mxu0
        %v5597 = vadd.f32 0.0, %v5596
        %v5598 = vpop.f32.mrb[0].mxu0
        %v5599 = vadd.f32 0.0, %v5598
        %v5600 = vpop.f32.mrb[0].mxu0
        %v5601 = vadd.f32 0.0, %v5600
        %5602 = vmatprep.mubr.bf16.mxu0 0
        %5603 = vmatmul.mubr.bf16.gmra.mrb[0].mxu0 %v5559
        %v5604 = vpop.f32.mrb[0].mxu0
        %v5605 = vadd.f32 0.0, %v5604
        %v5606 = vpop.f32.mrb[0].mxu0
        %v5607 = vadd.f32 0.0, %v5606
        %v5608 = vpop.f32.mrb[0].mxu0
        %v5609 = vadd.f32 0.0, %v5608
        %v5610 = vpop.f32.mrb[0].mxu0
        %v5611 = vadd.f32 0.0, %v5610
        %5612 = vdwg.mxu0
        %v5613 = vrot.slane %v5554, 7
        %v5614 = vrot.slane %v5555, 7
        %v5615 = vrot.slane %v5556, 7
        %v5616 = vrot.slane %v5557, 7
        %v5617 = vsel %vm386, %v5615, %v5616
        %v5618 = vsel %vm386, %v5614, %v5615
        %v5619 = vsel %vm386, %v5613, %v5614
        %v5620 = vsel %vm386, %v5616, %v5613
        %v5621 = vrot.slane %v5554, 6
        %v5622 = vrot.slane %v5555, 6
        %v5623 = vrot.slane %v5556, 6
        %v5624 = vrot.slane %v5557, 6
        %v5625 = vsel %vm395, %v5623, %v5624
        %v5626 = vsel %vm395, %v5622, %v5623
        %v5627 = vsel %vm395, %v5621, %v5622
        %v5628 = vsel %vm395, %v5624, %v5621
        %v5629 = vrot.slane %v5554, 1
        %v5630 = vrot.slane %v5555, 1
        %v5631 = vrot.slane %v5556, 1
        %v5632 = vrot.slane %v5557, 1
        %v5633 = vsel %vm404, %v5631, %v5632
        %v5634 = vsel %vm404, %v5630, %v5631
        %v5635 = vsel %vm404, %v5629, %v5630
        %v5636 = vsel %vm404, %v5632, %v5629
        %v5637 = vrot.slane %v5554, 2
        %v5638 = vrot.slane %v5555, 2
        %v5639 = vrot.slane %v5556, 2
        %v5640 = vrot.slane %v5557, 2
        %v5641 = vsel %vm413, %v5639, %v5640
        %v5642 = vsel %vm413, %v5638, %v5639
        %v5643 = vsel %vm413, %v5637, %v5638
        %v5644 = vsel %vm413, %v5640, %v5637
        %v5645 = vsub.f32 %v5628, %v5643
        %v5646 = vsub.f32 %v5627, %v5642
        %v5647 = vsub.f32 %v5626, %v5641
        %v5648 = vsub.f32 %v5625, %v5644
        %v5649 = vmul.f32 %v5645, 8.333333
        %v5650 = vmul.f32 %v5646, 8.333333
        %v5651 = vmul.f32 %v5647, 8.333333
        %v5652 = vmul.f32 %v5648, 8.333333
        %v5653 = vsub.f32 %v5635, %v5620
        %v5654 = vsub.f32 %v5634, %v5619
        %v5655 = vsub.f32 %v5633, %v5618
        %v5656 = vsub.f32 %v5636, %v5617
        %v5657 = vmul.f32 %v5653, 66.666664
        %v5658 = vmul.f32 %v5654, 66.666664
        %v5659 = vmul.f32 %v5655, 66.666664
        %v5660 = vmul.f32 %v5656, 66.666664
        %v5661 = vadd.f32 %v5649, %v5657
        %v5662 = vadd.f32 %v5650, %v5658
        %v5663 = vadd.f32 %v5651, %v5659
        %v5664 = vadd.f32 %v5652, %v5660
        %v5665 = vadd.f32 %v5628, %v5643
        %v5666 = vadd.f32 %v5627, %v5642
        %v5667 = vadd.f32 %v5626, %v5641
        %v5668 = vadd.f32 %v5625, %v5644
        %v5669 = vmul.f32 %v5665, -7.8199944
        %v5670 = vmul.f32 %v5666, -7.8199944
        %v5671 = vmul.f32 %v5667, -7.8199944
        %v5672 = vmul.f32 %v5668, -7.8199944
        %v5673 = vadd.f32 %v5620, %v5635
        %v5674 = vadd.f32 %v5619, %v5634
        %v5675 = vadd.f32 %v5618, %v5633
        %v5676 = vadd.f32 %v5617, %v5636
        %v5677 = vmul.f32 %v5673, 125.11991
        %v5678 = vmul.f32 %v5674, 125.11991
        %v5679 = vmul.f32 %v5675, 125.11991
        %v5680 = vmul.f32 %v5676, 125.11991
        %v5681 = vadd.f32 %v5669, %v5677
        %v5682 = vadd.f32 %v5670, %v5678
        %v5683 = vadd.f32 %v5671, %v5679
        %v5684 = vadd.f32 %v5672, %v5680
        %v5685 = vmul.f32 %v5554, -234.59984
        %v5686 = vmul.f32 %v5555, -234.59984
        %v5687 = vmul.f32 %v5556, -234.59984
        %v5688 = vmul.f32 %v5557, -234.59984
        %v5689 = vadd.f32 %v5681, %v5685
        %v5690 = vadd.f32 %v5682, %v5686
        %v5691 = vadd.f32 %v5683, %v5687
        %v5692 = vadd.f32 %v5684, %v5688
        %v5693 = vadd.f32 %v5597, %v5689
        %v5694 = vadd.f32 %v5601, %v5690
        %v5695 = vadd.f32 %v5607, %v5691
        %v5696 = vadd.f32 %v5611, %v5692
        %5697 = vrot.lane.b32.xlu0 %v5554, 64
        %v5698 = vpop.permute.xlu0 %5697
        %5699 = vrot.lane.b32.xlu0 %v5555, 64
        %v5700 = vpop.permute.xlu0 %5699
        %5701 = vrot.lane.b32.xlu0 %v5556, 64
        %v5702 = vpop.permute.xlu0 %5701
        %5703 = vrot.lane.b32.xlu0 %v5557, 64
        %v5704 = vpop.permute.xlu0 %5703
        %v5705 = vmul.f32 %v209, %v5661
        %v5706 = vmul.f32 %v209, %v5662
        %v5707 = vmul.f32 %v209, %v5663
        %v5708 = vmul.f32 %v209, %v5664
        %v5709 = vmul.f32 %v214, %v5595
        %v5710 = vmul.f32 %v214, %v5599
        %v5711 = vmul.f32 %v214, %v5605
        %v5712 = vmul.f32 %v214, %v5609
        %v5713 = vadd.f32 %v5705, %v5709
        %v5714 = vadd.f32 %v5706, %v5710
        %v5715 = vadd.f32 %v5707, %v5711
        %v5716 = vadd.f32 %v5708, %v5712
        %v5717 = vmul.f32 %v5554, %v5713
        %v5718 = vmul.f32 %v5555, %v5714
        %v5719 = vmul.f32 %v5556, %v5715
        %v5720 = vmul.f32 %v5557, %v5716
        %v5721 = vadd.f32 %v5693, %v5717
        %v5722 = vadd.f32 %v5694, %v5718
        %v5723 = vadd.f32 %v5695, %v5719
        %v5724 = vadd.f32 %v5696, %v5720
        %v5725 = vmul.f32 %v219, %v5661
        %v5726 = vmul.f32 %v219, %v5662
        %v5727 = vmul.f32 %v219, %v5663
        %v5728 = vmul.f32 %v219, %v5664
        %v5729 = vmul.f32 %v224, %v5595
        %v5730 = vmul.f32 %v224, %v5599
        %v5731 = vmul.f32 %v224, %v5605
        %v5732 = vmul.f32 %v224, %v5609
        %v5733 = vadd.f32 %v5725, %v5729
        %v5734 = vadd.f32 %v5726, %v5730
        %v5735 = vadd.f32 %v5727, %v5731
        %v5736 = vadd.f32 %v5728, %v5732
        %v5737 = vmul.f32 %v5698, %v5733
        %v5738 = vmul.f32 %v5700, %v5734
        %v5739 = vmul.f32 %v5702, %v5735
        %v5740 = vmul.f32 %v5704, %v5736
        %v5741 = vadd.f32 %v5721, %v5737
        %v5742 = vadd.f32 %v5722, %v5738
        %v5743 = vadd.f32 %v5723, %v5739
        %v5744 = vadd.f32 %v5724, %v5740
        %v5745 = vmul.f32 %v5741, 2.0
        %v5746 = vmul.f32 %v5742, 2.0
        %v5747 = vmul.f32 %v5743, 2.0
        %v5748 = vmul.f32 %v5744, 2.0
        %v5749 = vadd.f32 %v5546, %v5745
        %v5750 = vadd.f32 %v5547, %v5746
        %v5751 = vadd.f32 %v5548, %v5747
        %v5752 = vadd.f32 %v5549, %v5748
        %v5753 = vmul.f32 %v5741, 0.001
        %v5754 = vmul.f32 %v5742, 0.001
        %v5755 = vmul.f32 %v5743, 0.001
        %v5756 = vmul.f32 %v5744, 0.001
        %v5757 = vadd.f32 %v5151, %v5753
        %v5758 = vadd.f32 %v5152, %v5754
        %v5759 = vadd.f32 %v5153, %v5755
        %v5760 = vadd.f32 %v5154, %v5756
        %v5761 = vpack.c.bf16 %v5758, %v5757
        %v5762 = vpack.c.bf16 %v5760, %v5759
        %5763 = vmatprep.subr.bf16.mxu0 %v296
        %5764 = vmatpush1.bf16.msra.mxu0 %v295
        %5765 = vmatprep.subr.bf16.mxu0 %v298
        %5766 = vmatpush1.bf16.msra.mxu0 %v297
        %5767 = vmatprep.subr.bf16.mxu0 %v300
        %5768 = vmatpush1.bf16.msra.mxu0 %v299
        %5769 = vmatprep.subr.bf16.mxu0 %v302
        %5770 = vmatpush1.bf16.msra.mxu0 %v301
        %5771 = vmatprep.subr.bf16.mxu0 %v304
        %5772 = vmatpush1.bf16.msra.mxu0 %v303
        %5773 = vmatprep.subr.bf16.mxu0 %v306
        %5774 = vmatpush1.bf16.msra.mxu0 %v305
        %5775 = vmatprep.subr.bf16.mxu0 %v308
        %5776 = vmatpush1.bf16.msra.mxu0 %v307
        %5777 = vmatprep.subr.bf16.mxu0 %v310
        %5778 = vmatpush1.bf16.msra.mxu0 %v309
        %5779 = vmatprep.subr.bf16.mxu0 0
        %5780 = vmatpush1.bf16.msra.mxu0 0
        %5781 = vmatprep.subr.bf16.mxu0 0
        %5782 = vmatpush1.bf16.msra.mxu0 0
        %5783 = vmatprep.subr.bf16.mxu0 0
        %5784 = vmatpush1.bf16.msra.mxu0 0
        %5785 = vmatprep.subr.bf16.mxu0 0
        %5786 = vmatpush1.bf16.msra.mxu0 0
        %5787 = vmatprep.subr.bf16.mxu0 0
        %5788 = vmatpush1.bf16.msra.mxu0 0
        %5789 = vmatprep.subr.bf16.mxu0 0
        %5790 = vmatpush1.bf16.msra.mxu0 0
        %5791 = vmatprep.subr.bf16.mxu0 0
        %5792 = vmatpush1.bf16.msra.mxu0 0
        %5793 = vmatprep.subr.bf16.mxu0 0
        %5794 = vmatpush1.bf16.msra.mxu0 0
        %5795 = vmatprep.mubr.bf16.mxu0 0
        %5796 = vmatmul.mubr.bf16.gmra.mrb[0].mxu0 %v5761
        %v5797 = vpop.f32.mrb[0].mxu0
        %v5798 = vadd.f32 0.0, %v5797
        %v5799 = vpop.f32.mrb[0].mxu0
        %v5800 = vadd.f32 0.0, %v5799
        %v5801 = vpop.f32.mrb[0].mxu0
        %v5802 = vadd.f32 0.0, %v5801
        %v5803 = vpop.f32.mrb[0].mxu0
        %v5804 = vadd.f32 0.0, %v5803
        %5805 = vmatprep.mubr.bf16.mxu0 0
        %5806 = vmatmul.mubr.bf16.gmra.mrb[0].mxu0 %v5762
        %v5807 = vpop.f32.mrb[0].mxu0
        %v5808 = vadd.f32 0.0, %v5807
        %v5809 = vpop.f32.mrb[0].mxu0
        %v5810 = vadd.f32 0.0, %v5809
        %v5811 = vpop.f32.mrb[0].mxu0
        %v5812 = vadd.f32 0.0, %v5811
        %v5813 = vpop.f32.mrb[0].mxu0
        %v5814 = vadd.f32 0.0, %v5813
        %5815 = vdwg.mxu0
        %v5816 = vrot.slane %v5757, 7
        %v5817 = vrot.slane %v5758, 7
        %v5818 = vrot.slane %v5759, 7
        %v5819 = vrot.slane %v5760, 7
        %v5820 = vsel %vm386, %v5818, %v5819
        %v5821 = vsel %vm386, %v5817, %v5818
        %v5822 = vsel %vm386, %v5816, %v5817
        %v5823 = vsel %vm386, %v5819, %v5816
        %v5824 = vrot.slane %v5757, 6
        %v5825 = vrot.slane %v5758, 6
        %v5826 = vrot.slane %v5759, 6
        %v5827 = vrot.slane %v5760, 6
        %v5828 = vsel %vm395, %v5826, %v5827
        %v5829 = vsel %vm395, %v5825, %v5826
        %v5830 = vsel %vm395, %v5824, %v5825
        %v5831 = vsel %vm395, %v5827, %v5824
        %v5832 = vrot.slane %v5757, 1
        %v5833 = vrot.slane %v5758, 1
        %v5834 = vrot.slane %v5759, 1
        %v5835 = vrot.slane %v5760, 1
        %v5836 = vsel %vm404, %v5834, %v5835
        %v5837 = vsel %vm404, %v5833, %v5834
        %v5838 = vsel %vm404, %v5832, %v5833
        %v5839 = vsel %vm404, %v5835, %v5832
        %v5840 = vrot.slane %v5757, 2
        %v5841 = vrot.slane %v5758, 2
        %v5842 = vrot.slane %v5759, 2
        %v5843 = vrot.slane %v5760, 2
        %v5844 = vsel %vm413, %v5842, %v5843
        %v5845 = vsel %vm413, %v5841, %v5842
        %v5846 = vsel %vm413, %v5840, %v5841
        %v5847 = vsel %vm413, %v5843, %v5840
        %v5848 = vsub.f32 %v5831, %v5846
        %v5849 = vsub.f32 %v5830, %v5845
        %v5850 = vsub.f32 %v5829, %v5844
        %v5851 = vsub.f32 %v5828, %v5847
        %v5852 = vmul.f32 %v5848, 8.333333
        %v5853 = vmul.f32 %v5849, 8.333333
        %v5854 = vmul.f32 %v5850, 8.333333
        %v5855 = vmul.f32 %v5851, 8.333333
        %v5856 = vsub.f32 %v5838, %v5823
        %v5857 = vsub.f32 %v5837, %v5822
        %v5858 = vsub.f32 %v5836, %v5821
        %v5859 = vsub.f32 %v5839, %v5820
        %v5860 = vmul.f32 %v5856, 66.666664
        %v5861 = vmul.f32 %v5857, 66.666664
        %v5862 = vmul.f32 %v5858, 66.666664
        %v5863 = vmul.f32 %v5859, 66.666664
        %v5864 = vadd.f32 %v5852, %v5860
        %v5865 = vadd.f32 %v5853, %v5861
        %v5866 = vadd.f32 %v5854, %v5862
        %v5867 = vadd.f32 %v5855, %v5863
        %v5868 = vadd.f32 %v5831, %v5846
        %v5869 = vadd.f32 %v5830, %v5845
        %v5870 = vadd.f32 %v5829, %v5844
        %v5871 = vadd.f32 %v5828, %v5847
        %v5872 = vmul.f32 %v5868, -7.8199944
        %v5873 = vmul.f32 %v5869, -7.8199944
        %v5874 = vmul.f32 %v5870, -7.8199944
        %v5875 = vmul.f32 %v5871, -7.8199944
        %v5876 = vadd.f32 %v5823, %v5838
        %v5877 = vadd.f32 %v5822, %v5837
        %v5878 = vadd.f32 %v5821, %v5836
        %v5879 = vadd.f32 %v5820, %v5839
        %v5880 = vmul.f32 %v5876, 125.11991
        %v5881 = vmul.f32 %v5877, 125.11991
        %v5882 = vmul.f32 %v5878, 125.11991
        %v5883 = vmul.f32 %v5879, 125.11991
        %v5884 = vadd.f32 %v5872, %v5880
        %v5885 = vadd.f32 %v5873, %v5881
        %v5886 = vadd.f32 %v5874, %v5882
        %v5887 = vadd.f32 %v5875, %v5883
        %v5888 = vmul.f32 %v5757, -234.59984
        %v5889 = vmul.f32 %v5758, -234.59984
        %v5890 = vmul.f32 %v5759, -234.59984
        %v5891 = vmul.f32 %v5760, -234.59984
        %v5892 = vadd.f32 %v5884, %v5888
        %v5893 = vadd.f32 %v5885, %v5889
        %v5894 = vadd.f32 %v5886, %v5890
        %v5895 = vadd.f32 %v5887, %v5891
        %v5896 = vadd.f32 %v5800, %v5892
        %v5897 = vadd.f32 %v5804, %v5893
        %v5898 = vadd.f32 %v5810, %v5894
        %v5899 = vadd.f32 %v5814, %v5895
        %5900 = vrot.lane.b32.xlu0 %v5757, 64
        %v5901 = vpop.permute.xlu0 %5900
        %5902 = vrot.lane.b32.xlu0 %v5758, 64
        %v5903 = vpop.permute.xlu0 %5902
        %5904 = vrot.lane.b32.xlu0 %v5759, 64
        %v5905 = vpop.permute.xlu0 %5904
        %5906 = vrot.lane.b32.xlu0 %v5760, 64
        %v5907 = vpop.permute.xlu0 %5906
        %v5908 = vmul.f32 %v209, %v5864
        %v5909 = vmul.f32 %v209, %v5865
        %v5910 = vmul.f32 %v209, %v5866
        %v5911 = vmul.f32 %v209, %v5867
        %v5912 = vmul.f32 %v214, %v5798
        %v5913 = vmul.f32 %v214, %v5802
        %v5914 = vmul.f32 %v214, %v5808
        %v5915 = vmul.f32 %v214, %v5812
        %v5916 = vadd.f32 %v5908, %v5912
        %v5917 = vadd.f32 %v5909, %v5913
        %v5918 = vadd.f32 %v5910, %v5914
        %v5919 = vadd.f32 %v5911, %v5915
        %v5920 = vmul.f32 %v5757, %v5916
        %v5921 = vmul.f32 %v5758, %v5917
        %v5922 = vmul.f32 %v5759, %v5918
        %v5923 = vmul.f32 %v5760, %v5919
        %v5924 = vadd.f32 %v5896, %v5920
        %v5925 = vadd.f32 %v5897, %v5921
        %v5926 = vadd.f32 %v5898, %v5922
        %v5927 = vadd.f32 %v5899, %v5923
        %v5928 = vmul.f32 %v219, %v5864
        %v5929 = vmul.f32 %v219, %v5865
        %v5930 = vmul.f32 %v219, %v5866
        %v5931 = vmul.f32 %v219, %v5867
        %v5932 = vmul.f32 %v224, %v5798
        %v5933 = vmul.f32 %v224, %v5802
        %v5934 = vmul.f32 %v224, %v5808
        %v5935 = vmul.f32 %v224, %v5812
        %v5936 = vadd.f32 %v5928, %v5932
        %v5937 = vadd.f32 %v5929, %v5933
        %v5938 = vadd.f32 %v5930, %v5934
        %v5939 = vadd.f32 %v5931, %v5935
        %v5940 = vmul.f32 %v5901, %v5936
        %v5941 = vmul.f32 %v5903, %v5937
        %v5942 = vmul.f32 %v5905, %v5938
        %v5943 = vmul.f32 %v5907, %v5939
        %v5944 = vadd.f32 %v5924, %v5940
        %v5945 = vadd.f32 %v5925, %v5941
        %v5946 = vadd.f32 %v5926, %v5942
        %v5947 = vadd.f32 %v5927, %v5943
        %v5948 = vadd.f32 %v5749, %v5944
        %v5949 = vadd.f32 %v5750, %v5945
        %v5950 = vadd.f32 %v5751, %v5946
        %v5951 = vadd.f32 %v5752, %v5947
        %v5952 = vmul.f32 %v5948, 0.00016666666
        %v5953 = vmul.f32 %v5949, 0.00016666666
        %v5954 = vmul.f32 %v5950, 0.00016666666
        %v5955 = vmul.f32 %v5951, 0.00016666666
        %v5956 = vadd.f32 %v5151, %v5952
        %v5957 = vadd.f32 %v5152, %v5953
        %v5958 = vadd.f32 %v5153, %v5954
        %v5959 = vadd.f32 %v5154, %v5955
        %s5960 = scalar_lea.vmem %s190, 192 [#allocation9]
        %5961 = vst [vmem:[%s5960] sm:$0xff] %v5956
        %5962 = vst [vmem:[%s5960 + $0x8] sm:$0xff] %v5957
        %5963 = vst [vmem:[%s5960 + $0x10] sm:$0xff] %v5958
        %5964 = vst [vmem:[%s5960 + $0x18] sm:$0xff] %v5959
        %v5965 = vpack.c.bf16 %v5957, %v5956
        %v5966 = vpack.c.bf16 %v5959, %v5958
        %5967 = vmatprep.subr.bf16.mxu0 %v296
        %5968 = vmatpush1.bf16.msra.mxu0 %v295
        %5969 = vmatprep.subr.bf16.mxu0 %v298
        %5970 = vmatpush1.bf16.msra.mxu0 %v297
        %5971 = vmatprep.subr.bf16.mxu0 %v300
        %5972 = vmatpush1.bf16.msra.mxu0 %v299
        %5973 = vmatprep.subr.bf16.mxu0 %v302
        %5974 = vmatpush1.bf16.msra.mxu0 %v301
        %5975 = vmatprep.subr.bf16.mxu0 %v304
        %5976 = vmatpush1.bf16.msra.mxu0 %v303
        %5977 = vmatprep.subr.bf16.mxu0 %v306
        %5978 = vmatpush1.bf16.msra.mxu0 %v305
        %5979 = vmatprep.subr.bf16.mxu0 %v308
        %5980 = vmatpush1.bf16.msra.mxu0 %v307
        %5981 = vmatprep.subr.bf16.mxu0 %v310
        %5982 = vmatpush1.bf16.msra.mxu0 %v309
        %5983 = vmatprep.subr.bf16.mxu0 0
        %5984 = vmatpush1.bf16.msra.mxu0 0
        %5985 = vmatprep.subr.bf16.mxu0 0
        %5986 = vmatpush1.bf16.msra.mxu0 0
        %5987 = vmatprep.subr.bf16.mxu0 0
        %5988 = vmatpush1.bf16.msra.mxu0 0
        %5989 = vmatprep.subr.bf16.mxu0 0
        %5990 = vmatpush1.bf16.msra.mxu0 0
        %5991 = vmatprep.subr.bf16.mxu0 0
        %5992 = vmatpush1.bf16.msra.mxu0 0
        %5993 = vmatprep.subr.bf16.mxu0 0
        %5994 = vmatpush1.bf16.msra.mxu0 0
        %5995 = vmatprep.subr.bf16.mxu0 0
        %5996 = vmatpush1.bf16.msra.mxu0 0
        %5997 = vmatprep.subr.bf16.mxu0 0
        %5998 = vmatpush1.bf16.msra.mxu0 0
        %5999 = vmatprep.mubr.bf16.mxu0 0
        %6000 = vmatmul.mubr.bf16.gmra.mrb[0].mxu0 %v5965
        %v6001 = vpop.f32.mrb[0].mxu0
        %v6002 = vadd.f32 0.0, %v6001
        %v6003 = vpop.f32.mrb[0].mxu0
        %v6004 = vadd.f32 0.0, %v6003
        %v6005 = vpop.f32.mrb[0].mxu0
        %v6006 = vadd.f32 0.0, %v6005
        %v6007 = vpop.f32.mrb[0].mxu0
        %v6008 = vadd.f32 0.0, %v6007
        %6009 = vmatprep.mubr.bf16.mxu0 0
        %6010 = vmatmul.mubr.bf16.gmra.mrb[0].mxu0 %v5966
        %v6011 = vpop.f32.mrb[0].mxu0
        %v6012 = vadd.f32 0.0, %v6011
        %v6013 = vpop.f32.mrb[0].mxu0
        %v6014 = vadd.f32 0.0, %v6013
        %v6015 = vpop.f32.mrb[0].mxu0
        %v6016 = vadd.f32 0.0, %v6015
        %v6017 = vpop.f32.mrb[0].mxu0
        %v6018 = vadd.f32 0.0, %v6017
        %6019 = vdwg.mxu0
        %v6020 = vrot.slane %v5956, 7
        %v6021 = vrot.slane %v5957, 7
        %v6022 = vrot.slane %v5958, 7
        %v6023 = vrot.slane %v5959, 7
        %v6024 = vsel %vm386, %v6022, %v6023
        %v6025 = vsel %vm386, %v6021, %v6022
        %v6026 = vsel %vm386, %v6020, %v6021
        %v6027 = vsel %vm386, %v6023, %v6020
        %v6028 = vrot.slane %v5956, 6
        %v6029 = vrot.slane %v5957, 6
        %v6030 = vrot.slane %v5958, 6
        %v6031 = vrot.slane %v5959, 6
        %v6032 = vsel %vm395, %v6030, %v6031
        %v6033 = vsel %vm395, %v6029, %v6030
        %v6034 = vsel %vm395, %v6028, %v6029
        %v6035 = vsel %vm395, %v6031, %v6028
        %v6036 = vrot.slane %v5956, 1
        %v6037 = vrot.slane %v5957, 1
        %v6038 = vrot.slane %v5958, 1
        %v6039 = vrot.slane %v5959, 1
        %v6040 = vsel %vm404, %v6038, %v6039
        %v6041 = vsel %vm404, %v6037, %v6038
        %v6042 = vsel %vm404, %v6036, %v6037
        %v6043 = vsel %vm404, %v6039, %v6036
        %v6044 = vrot.slane %v5956, 2
        %v6045 = vrot.slane %v5957, 2
        %v6046 = vrot.slane %v5958, 2
        %v6047 = vrot.slane %v5959, 2
        %v6048 = vsel %vm413, %v6046, %v6047
        %v6049 = vsel %vm413, %v6045, %v6046
        %v6050 = vsel %vm413, %v6044, %v6045
        %v6051 = vsel %vm413, %v6047, %v6044
        %v6052 = vsub.f32 %v6035, %v6050
        %v6053 = vsub.f32 %v6034, %v6049
        %v6054 = vsub.f32 %v6033, %v6048
        %v6055 = vsub.f32 %v6032, %v6051
        %v6056 = vmul.f32 %v6052, 8.333333
        %v6057 = vmul.f32 %v6053, 8.333333
        %v6058 = vmul.f32 %v6054, 8.333333
        %v6059 = vmul.f32 %v6055, 8.333333
        %v6060 = vsub.f32 %v6042, %v6027
        %v6061 = vsub.f32 %v6041, %v6026
        %v6062 = vsub.f32 %v6040, %v6025
        %v6063 = vsub.f32 %v6043, %v6024
        %v6064 = vmul.f32 %v6060, 66.666664
        %v6065 = vmul.f32 %v6061, 66.666664
        %v6066 = vmul.f32 %v6062, 66.666664
        %v6067 = vmul.f32 %v6063, 66.666664
        %v6068 = vadd.f32 %v6056, %v6064
        %v6069 = vadd.f32 %v6057, %v6065
        %v6070 = vadd.f32 %v6058, %v6066
        %v6071 = vadd.f32 %v6059, %v6067
        %v6072 = vadd.f32 %v6035, %v6050
        %v6073 = vadd.f32 %v6034, %v6049
        %v6074 = vadd.f32 %v6033, %v6048
        %v6075 = vadd.f32 %v6032, %v6051
        %v6076 = vmul.f32 %v6072, -7.8199944
        %v6077 = vmul.f32 %v6073, -7.8199944
        %v6078 = vmul.f32 %v6074, -7.8199944
        %v6079 = vmul.f32 %v6075, -7.8199944
        %v6080 = vadd.f32 %v6027, %v6042
        %v6081 = vadd.f32 %v6026, %v6041
        %v6082 = vadd.f32 %v6025, %v6040
        %v6083 = vadd.f32 %v6024, %v6043
        %v6084 = vmul.f32 %v6080, 125.11991
        %v6085 = vmul.f32 %v6081, 125.11991
        %v6086 = vmul.f32 %v6082, 125.11991
        %v6087 = vmul.f32 %v6083, 125.11991
        %v6088 = vadd.f32 %v6076, %v6084
        %v6089 = vadd.f32 %v6077, %v6085
        %v6090 = vadd.f32 %v6078, %v6086
        %v6091 = vadd.f32 %v6079, %v6087
        %v6092 = vmul.f32 %v5956, -234.59984
        %v6093 = vmul.f32 %v5957, -234.59984
        %v6094 = vmul.f32 %v5958, -234.59984
        %v6095 = vmul.f32 %v5959, -234.59984
        %v6096 = vadd.f32 %v6088, %v6092
        %v6097 = vadd.f32 %v6089, %v6093
        %v6098 = vadd.f32 %v6090, %v6094
        %v6099 = vadd.f32 %v6091, %v6095
        %v6100 = vadd.f32 %v6004, %v6096
        %v6101 = vadd.f32 %v6008, %v6097
        %v6102 = vadd.f32 %v6014, %v6098
        %v6103 = vadd.f32 %v6018, %v6099
        %6104 = vrot.lane.b32.xlu0 %v5956, 64
        %v6105 = vpop.permute.xlu0 %6104
        %6106 = vrot.lane.b32.xlu0 %v5957, 64
        %v6107 = vpop.permute.xlu0 %6106
        %6108 = vrot.lane.b32.xlu0 %v5958, 64
        %v6109 = vpop.permute.xlu0 %6108
        %6110 = vrot.lane.b32.xlu0 %v5959, 64
        %v6111 = vpop.permute.xlu0 %6110
        %v6112 = vmul.f32 %v209, %v6068
        %v6113 = vmul.f32 %v209, %v6069
        %v6114 = vmul.f32 %v209, %v6070
        %v6115 = vmul.f32 %v209, %v6071
        %v6116 = vmul.f32 %v214, %v6002
        %v6117 = vmul.f32 %v214, %v6006
        %v6118 = vmul.f32 %v214, %v6012
        %v6119 = vmul.f32 %v214, %v6016
        %v6120 = vadd.f32 %v6112, %v6116
        %v6121 = vadd.f32 %v6113, %v6117
        %v6122 = vadd.f32 %v6114, %v6118
        %v6123 = vadd.f32 %v6115, %v6119
        %v6124 = vmul.f32 %v5956, %v6120
        %v6125 = vmul.f32 %v5957, %v6121
        %v6126 = vmul.f32 %v5958, %v6122
        %v6127 = vmul.f32 %v5959, %v6123
        %v6128 = vadd.f32 %v6100, %v6124
        %v6129 = vadd.f32 %v6101, %v6125
        %v6130 = vadd.f32 %v6102, %v6126
        %v6131 = vadd.f32 %v6103, %v6127
        %v6132 = vmul.f32 %v219, %v6068
        %v6133 = vmul.f32 %v219, %v6069
        %v6134 = vmul.f32 %v219, %v6070
        %v6135 = vmul.f32 %v219, %v6071
        %v6136 = vmul.f32 %v224, %v6002
        %v6137 = vmul.f32 %v224, %v6006
        %v6138 = vmul.f32 %v224, %v6012
        %v6139 = vmul.f32 %v224, %v6016
        %v6140 = vadd.f32 %v6132, %v6136
        %v6141 = vadd.f32 %v6133, %v6137
        %v6142 = vadd.f32 %v6134, %v6138
        %v6143 = vadd.f32 %v6135, %v6139
        %v6144 = vmul.f32 %v6105, %v6140
        %v6145 = vmul.f32 %v6107, %v6141
        %v6146 = vmul.f32 %v6109, %v6142
        %v6147 = vmul.f32 %v6111, %v6143
        %v6148 = vadd.f32 %v6128, %v6144
        %v6149 = vadd.f32 %v6129, %v6145
        %v6150 = vadd.f32 %v6130, %v6146
        %v6151 = vadd.f32 %v6131, %v6147
        %v6152 = vmul.f32 %v6148, 0.0005
        %v6153 = vmul.f32 %v6149, 0.0005
        %v6154 = vmul.f32 %v6150, 0.0005
        %v6155 = vmul.f32 %v6151, 0.0005
        %v6156 = vadd.f32 %v5956, %v6152
        %v6157 = vadd.f32 %v5957, %v6153
        %v6158 = vadd.f32 %v5958, %v6154
        %v6159 = vadd.f32 %v5959, %v6155
        %v6160 = vpack.c.bf16 %v6157, %v6156
        %v6161 = vpack.c.bf16 %v6159, %v6158
        %6162 = vmatprep.subr.bf16.mxu0 %v296
        %6163 = vmatpush1.bf16.msra.mxu0 %v295
        %6164 = vmatprep.subr.bf16.mxu0 %v298
        %6165 = vmatpush1.bf16.msra.mxu0 %v297
        %6166 = vmatprep.subr.bf16.mxu0 %v300
        %6167 = vmatpush1.bf16.msra.mxu0 %v299
        %6168 = vmatprep.subr.bf16.mxu0 %v302
        %6169 = vmatpush1.bf16.msra.mxu0 %v301
        %6170 = vmatprep.subr.bf16.mxu0 %v304
        %6171 = vmatpush1.bf16.msra.mxu0 %v303
        %6172 = vmatprep.subr.bf16.mxu0 %v306
        %6173 = vmatpush1.bf16.msra.mxu0 %v305
        %6174 = vmatprep.subr.bf16.mxu0 %v308
        %6175 = vmatpush1.bf16.msra.mxu0 %v307
        %6176 = vmatprep.subr.bf16.mxu0 %v310
        %6177 = vmatpush1.bf16.msra.mxu0 %v309
        %6178 = vmatprep.subr.bf16.mxu0 0
        %6179 = vmatpush1.bf16.msra.mxu0 0
        %6180 = vmatprep.subr.bf16.mxu0 0
        %6181 = vmatpush1.bf16.msra.mxu0 0
        %6182 = vmatprep.subr.bf16.mxu0 0
        %6183 = vmatpush1.bf16.msra.mxu0 0
        %6184 = vmatprep.subr.bf16.mxu0 0
        %6185 = vmatpush1.bf16.msra.mxu0 0
        %6186 = vmatprep.subr.bf16.mxu0 0
        %6187 = vmatpush1.bf16.msra.mxu0 0
        %6188 = vmatprep.subr.bf16.mxu0 0
        %6189 = vmatpush1.bf16.msra.mxu0 0
        %6190 = vmatprep.subr.bf16.mxu0 0
        %6191 = vmatpush1.bf16.msra.mxu0 0
        %6192 = vmatprep.subr.bf16.mxu0 0
        %6193 = vmatpush1.bf16.msra.mxu0 0
        %6194 = vmatprep.mubr.bf16.mxu0 0
        %6195 = vmatmul.mubr.bf16.gmra.mrb[0].mxu0 %v6160
        %v6196 = vpop.f32.mrb[0].mxu0
        %v6197 = vadd.f32 0.0, %v6196
        %v6198 = vpop.f32.mrb[0].mxu0
        %v6199 = vadd.f32 0.0, %v6198
        %v6200 = vpop.f32.mrb[0].mxu0
        %v6201 = vadd.f32 0.0, %v6200
        %v6202 = vpop.f32.mrb[0].mxu0
        %v6203 = vadd.f32 0.0, %v6202
        %6204 = vmatprep.mubr.bf16.mxu0 0
        %6205 = vmatmul.mubr.bf16.gmra.mrb[0].mxu0 %v6161
        %v6206 = vpop.f32.mrb[0].mxu0
        %v6207 = vadd.f32 0.0, %v6206
        %v6208 = vpop.f32.mrb[0].mxu0
        %v6209 = vadd.f32 0.0, %v6208
        %v6210 = vpop.f32.mrb[0].mxu0
        %v6211 = vadd.f32 0.0, %v6210
        %v6212 = vpop.f32.mrb[0].mxu0
        %v6213 = vadd.f32 0.0, %v6212
        %6214 = vdwg.mxu0
        %v6215 = vrot.slane %v6156, 7
        %v6216 = vrot.slane %v6157, 7
        %v6217 = vrot.slane %v6158, 7
        %v6218 = vrot.slane %v6159, 7
        %v6219 = vsel %vm386, %v6217, %v6218
        %v6220 = vsel %vm386, %v6216, %v6217
        %v6221 = vsel %vm386, %v6215, %v6216
        %v6222 = vsel %vm386, %v6218, %v6215
        %v6223 = vrot.slane %v6156, 6
        %v6224 = vrot.slane %v6157, 6
        %v6225 = vrot.slane %v6158, 6
        %v6226 = vrot.slane %v6159, 6
        %v6227 = vsel %vm395, %v6225, %v6226
        %v6228 = vsel %vm395, %v6224, %v6225
        %v6229 = vsel %vm395, %v6223, %v6224
        %v6230 = vsel %vm395, %v6226, %v6223
        %v6231 = vrot.slane %v6156, 1
        %v6232 = vrot.slane %v6157, 1
        %v6233 = vrot.slane %v6158, 1
        %v6234 = vrot.slane %v6159, 1
        %v6235 = vsel %vm404, %v6233, %v6234
        %v6236 = vsel %vm404, %v6232, %v6233
        %v6237 = vsel %vm404, %v6231, %v6232
        %v6238 = vsel %vm404, %v6234, %v6231
        %v6239 = vrot.slane %v6156, 2
        %v6240 = vrot.slane %v6157, 2
        %v6241 = vrot.slane %v6158, 2
        %v6242 = vrot.slane %v6159, 2
        %v6243 = vsel %vm413, %v6241, %v6242
        %v6244 = vsel %vm413, %v6240, %v6241
        %v6245 = vsel %vm413, %v6239, %v6240
        %v6246 = vsel %vm413, %v6242, %v6239
        %v6247 = vsub.f32 %v6230, %v6245
        %v6248 = vsub.f32 %v6229, %v6244
        %v6249 = vsub.f32 %v6228, %v6243
        %v6250 = vsub.f32 %v6227, %v6246
        %v6251 = vmul.f32 %v6247, 8.333333
        %v6252 = vmul.f32 %v6248, 8.333333
        %v6253 = vmul.f32 %v6249, 8.333333
        %v6254 = vmul.f32 %v6250, 8.333333
        %v6255 = vsub.f32 %v6237, %v6222
        %v6256 = vsub.f32 %v6236, %v6221
        %v6257 = vsub.f32 %v6235, %v6220
        %v6258 = vsub.f32 %v6238, %v6219
        %v6259 = vmul.f32 %v6255, 66.666664
        %v6260 = vmul.f32 %v6256, 66.666664
        %v6261 = vmul.f32 %v6257, 66.666664
        %v6262 = vmul.f32 %v6258, 66.666664
        %v6263 = vadd.f32 %v6251, %v6259
        %v6264 = vadd.f32 %v6252, %v6260
        %v6265 = vadd.f32 %v6253, %v6261
        %v6266 = vadd.f32 %v6254, %v6262
        %v6267 = vadd.f32 %v6230, %v6245
        %v6268 = vadd.f32 %v6229, %v6244
        %v6269 = vadd.f32 %v6228, %v6243
        %v6270 = vadd.f32 %v6227, %v6246
        %v6271 = vmul.f32 %v6267, -7.8199944
        %v6272 = vmul.f32 %v6268, -7.8199944
        %v6273 = vmul.f32 %v6269, -7.8199944
        %v6274 = vmul.f32 %v6270, -7.8199944
        %v6275 = vadd.f32 %v6222, %v6237
        %v6276 = vadd.f32 %v6221, %v6236
        %v6277 = vadd.f32 %v6220, %v6235
        %v6278 = vadd.f32 %v6219, %v6238
        %v6279 = vmul.f32 %v6275, 125.11991
        %v6280 = vmul.f32 %v6276, 125.11991
        %v6281 = vmul.f32 %v6277, 125.11991
        %v6282 = vmul.f32 %v6278, 125.11991
        %v6283 = vadd.f32 %v6271, %v6279
        %v6284 = vadd.f32 %v6272, %v6280
        %v6285 = vadd.f32 %v6273, %v6281
        %v6286 = vadd.f32 %v6274, %v6282
        %v6287 = vmul.f32 %v6156, -234.59984
        %v6288 = vmul.f32 %v6157, -234.59984
        %v6289 = vmul.f32 %v6158, -234.59984
        %v6290 = vmul.f32 %v6159, -234.59984
        %v6291 = vadd.f32 %v6283, %v6287
        %v6292 = vadd.f32 %v6284, %v6288
        %v6293 = vadd.f32 %v6285, %v6289
        %v6294 = vadd.f32 %v6286, %v6290
        %v6295 = vadd.f32 %v6199, %v6291
        %v6296 = vadd.f32 %v6203, %v6292
        %v6297 = vadd.f32 %v6209, %v6293
        %v6298 = vadd.f32 %v6213, %v6294
        %6299 = vrot.lane.b32.xlu0 %v6156, 64
        %v6300 = vpop.permute.xlu0 %6299
        %6301 = vrot.lane.b32.xlu0 %v6157, 64
        %v6302 = vpop.permute.xlu0 %6301
        %6303 = vrot.lane.b32.xlu0 %v6158, 64
        %v6304 = vpop.permute.xlu0 %6303
        %6305 = vrot.lane.b32.xlu0 %v6159, 64
        %v6306 = vpop.permute.xlu0 %6305
        %v6307 = vmul.f32 %v209, %v6263
        %v6308 = vmul.f32 %v209, %v6264
        %v6309 = vmul.f32 %v209, %v6265
        %v6310 = vmul.f32 %v209, %v6266
        %v6311 = vmul.f32 %v214, %v6197
        %v6312 = vmul.f32 %v214, %v6201
        %v6313 = vmul.f32 %v214, %v6207
        %v6314 = vmul.f32 %v214, %v6211
        %v6315 = vadd.f32 %v6307, %v6311
        %v6316 = vadd.f32 %v6308, %v6312
        %v6317 = vadd.f32 %v6309, %v6313
        %v6318 = vadd.f32 %v6310, %v6314
        %v6319 = vmul.f32 %v6156, %v6315
        %v6320 = vmul.f32 %v6157, %v6316
        %v6321 = vmul.f32 %v6158, %v6317
        %v6322 = vmul.f32 %v6159, %v6318
        %v6323 = vadd.f32 %v6295, %v6319
        %v6324 = vadd.f32 %v6296, %v6320
        %v6325 = vadd.f32 %v6297, %v6321
        %v6326 = vadd.f32 %v6298, %v6322
        %v6327 = vmul.f32 %v219, %v6263
        %v6328 = vmul.f32 %v219, %v6264
        %v6329 = vmul.f32 %v219, %v6265
        %v6330 = vmul.f32 %v219, %v6266
        %v6331 = vmul.f32 %v224, %v6197
        %v6332 = vmul.f32 %v224, %v6201
        %v6333 = vmul.f32 %v224, %v6207
        %v6334 = vmul.f32 %v224, %v6211
        %v6335 = vadd.f32 %v6327, %v6331
        %v6336 = vadd.f32 %v6328, %v6332
        %v6337 = vadd.f32 %v6329, %v6333
        %v6338 = vadd.f32 %v6330, %v6334
        %v6339 = vmul.f32 %v6300, %v6335
        %v6340 = vmul.f32 %v6302, %v6336
        %v6341 = vmul.f32 %v6304, %v6337
        %v6342 = vmul.f32 %v6306, %v6338
        %v6343 = vadd.f32 %v6323, %v6339
        %v6344 = vadd.f32 %v6324, %v6340
        %v6345 = vadd.f32 %v6325, %v6341
        %v6346 = vadd.f32 %v6326, %v6342
        %v6347 = vmul.f32 %v6343, 2.0
        %v6348 = vmul.f32 %v6344, 2.0
        %v6349 = vmul.f32 %v6345, 2.0
        %v6350 = vmul.f32 %v6346, 2.0
        %v6351 = vadd.f32 %v6148, %v6347
        %v6352 = vadd.f32 %v6149, %v6348
        %v6353 = vadd.f32 %v6150, %v6349
        %v6354 = vadd.f32 %v6151, %v6350
        %v6355 = vmul.f32 %v6343, 0.0005
        %v6356 = vmul.f32 %v6344, 0.0005
        %v6357 = vmul.f32 %v6345, 0.0005
        %v6358 = vmul.f32 %v6346, 0.0005
        %v6359 = vadd.f32 %v5956, %v6355
        %v6360 = vadd.f32 %v5957, %v6356
        %v6361 = vadd.f32 %v5958, %v6357
        %v6362 = vadd.f32 %v5959, %v6358
        %v6363 = vpack.c.bf16 %v6360, %v6359
        %v6364 = vpack.c.bf16 %v6362, %v6361
        %6365 = vmatprep.subr.bf16.mxu0 %v296
        %6366 = vmatpush1.bf16.msra.mxu0 %v295
        %6367 = vmatprep.subr.bf16.mxu0 %v298
        %6368 = vmatpush1.bf16.msra.mxu0 %v297
        %6369 = vmatprep.subr.bf16.mxu0 %v300
        %6370 = vmatpush1.bf16.msra.mxu0 %v299
        %6371 = vmatprep.subr.bf16.mxu0 %v302
        %6372 = vmatpush1.bf16.msra.mxu0 %v301
        %6373 = vmatprep.subr.bf16.mxu0 %v304
        %6374 = vmatpush1.bf16.msra.mxu0 %v303
        %6375 = vmatprep.subr.bf16.mxu0 %v306
        %6376 = vmatpush1.bf16.msra.mxu0 %v305
        %6377 = vmatprep.subr.bf16.mxu0 %v308
        %6378 = vmatpush1.bf16.msra.mxu0 %v307
        %6379 = vmatprep.subr.bf16.mxu0 %v310
        %6380 = vmatpush1.bf16.msra.mxu0 %v309
        %6381 = vmatprep.subr.bf16.mxu0 0
        %6382 = vmatpush1.bf16.msra.mxu0 0
        %6383 = vmatprep.subr.bf16.mxu0 0
        %6384 = vmatpush1.bf16.msra.mxu0 0
        %6385 = vmatprep.subr.bf16.mxu0 0
        %6386 = vmatpush1.bf16.msra.mxu0 0
        %6387 = vmatprep.subr.bf16.mxu0 0
        %6388 = vmatpush1.bf16.msra.mxu0 0
        %6389 = vmatprep.subr.bf16.mxu0 0
        %6390 = vmatpush1.bf16.msra.mxu0 0
        %6391 = vmatprep.subr.bf16.mxu0 0
        %6392 = vmatpush1.bf16.msra.mxu0 0
        %6393 = vmatprep.subr.bf16.mxu0 0
        %6394 = vmatpush1.bf16.msra.mxu0 0
        %6395 = vmatprep.subr.bf16.mxu0 0
        %6396 = vmatpush1.bf16.msra.mxu0 0
        %6397 = vmatprep.mubr.bf16.mxu0 0
        %6398 = vmatmul.mubr.bf16.gmra.mrb[0].mxu0 %v6363
        %v6399 = vpop.f32.mrb[0].mxu0
        %v6400 = vadd.f32 0.0, %v6399
        %v6401 = vpop.f32.mrb[0].mxu0
        %v6402 = vadd.f32 0.0, %v6401
        %v6403 = vpop.f32.mrb[0].mxu0
        %v6404 = vadd.f32 0.0, %v6403
        %v6405 = vpop.f32.mrb[0].mxu0
        %v6406 = vadd.f32 0.0, %v6405
        %6407 = vmatprep.mubr.bf16.mxu0 0
        %6408 = vmatmul.mubr.bf16.gmra.mrb[0].mxu0 %v6364
        %v6409 = vpop.f32.mrb[0].mxu0
        %v6410 = vadd.f32 0.0, %v6409
        %v6411 = vpop.f32.mrb[0].mxu0
        %v6412 = vadd.f32 0.0, %v6411
        %v6413 = vpop.f32.mrb[0].mxu0
        %v6414 = vadd.f32 0.0, %v6413
        %v6415 = vpop.f32.mrb[0].mxu0
        %v6416 = vadd.f32 0.0, %v6415
        %6417 = vdwg.mxu0
        %v6418 = vrot.slane %v6359, 7
        %v6419 = vrot.slane %v6360, 7
        %v6420 = vrot.slane %v6361, 7
        %v6421 = vrot.slane %v6362, 7
        %v6422 = vsel %vm386, %v6420, %v6421
        %v6423 = vsel %vm386, %v6419, %v6420
        %v6424 = vsel %vm386, %v6418, %v6419
        %v6425 = vsel %vm386, %v6421, %v6418
        %v6426 = vrot.slane %v6359, 6
        %v6427 = vrot.slane %v6360, 6
        %v6428 = vrot.slane %v6361, 6
        %v6429 = vrot.slane %v6362, 6
        %v6430 = vsel %vm395, %v6428, %v6429
        %v6431 = vsel %vm395, %v6427, %v6428
        %v6432 = vsel %vm395, %v6426, %v6427
        %v6433 = vsel %vm395, %v6429, %v6426
        %v6434 = vrot.slane %v6359, 1
        %v6435 = vrot.slane %v6360, 1
        %v6436 = vrot.slane %v6361, 1
        %v6437 = vrot.slane %v6362, 1
        %v6438 = vsel %vm404, %v6436, %v6437
        %v6439 = vsel %vm404, %v6435, %v6436
        %v6440 = vsel %vm404, %v6434, %v6435
        %v6441 = vsel %vm404, %v6437, %v6434
        %v6442 = vrot.slane %v6359, 2
        %v6443 = vrot.slane %v6360, 2
        %v6444 = vrot.slane %v6361, 2
        %v6445 = vrot.slane %v6362, 2
        %v6446 = vsel %vm413, %v6444, %v6445
        %v6447 = vsel %vm413, %v6443, %v6444
        %v6448 = vsel %vm413, %v6442, %v6443
        %v6449 = vsel %vm413, %v6445, %v6442
        %v6450 = vsub.f32 %v6433, %v6448
        %v6451 = vsub.f32 %v6432, %v6447
        %v6452 = vsub.f32 %v6431, %v6446
        %v6453 = vsub.f32 %v6430, %v6449
        %v6454 = vmul.f32 %v6450, 8.333333
        %v6455 = vmul.f32 %v6451, 8.333333
        %v6456 = vmul.f32 %v6452, 8.333333
        %v6457 = vmul.f32 %v6453, 8.333333
        %v6458 = vsub.f32 %v6440, %v6425
        %v6459 = vsub.f32 %v6439, %v6424
        %v6460 = vsub.f32 %v6438, %v6423
        %v6461 = vsub.f32 %v6441, %v6422
        %v6462 = vmul.f32 %v6458, 66.666664
        %v6463 = vmul.f32 %v6459, 66.666664
        %v6464 = vmul.f32 %v6460, 66.666664
        %v6465 = vmul.f32 %v6461, 66.666664
        %v6466 = vadd.f32 %v6454, %v6462
        %v6467 = vadd.f32 %v6455, %v6463
        %v6468 = vadd.f32 %v6456, %v6464
        %v6469 = vadd.f32 %v6457, %v6465
        %v6470 = vadd.f32 %v6433, %v6448
        %v6471 = vadd.f32 %v6432, %v6447
        %v6472 = vadd.f32 %v6431, %v6446
        %v6473 = vadd.f32 %v6430, %v6449
        %v6474 = vmul.f32 %v6470, -7.8199944
        %v6475 = vmul.f32 %v6471, -7.8199944
        %v6476 = vmul.f32 %v6472, -7.8199944
        %v6477 = vmul.f32 %v6473, -7.8199944
        %v6478 = vadd.f32 %v6425, %v6440
        %v6479 = vadd.f32 %v6424, %v6439
        %v6480 = vadd.f32 %v6423, %v6438
        %v6481 = vadd.f32 %v6422, %v6441
        %v6482 = vmul.f32 %v6478, 125.11991
        %v6483 = vmul.f32 %v6479, 125.11991
        %v6484 = vmul.f32 %v6480, 125.11991
        %v6485 = vmul.f32 %v6481, 125.11991
        %v6486 = vadd.f32 %v6474, %v6482
        %v6487 = vadd.f32 %v6475, %v6483
        %v6488 = vadd.f32 %v6476, %v6484
        %v6489 = vadd.f32 %v6477, %v6485
        %v6490 = vmul.f32 %v6359, -234.59984
        %v6491 = vmul.f32 %v6360, -234.59984
        %v6492 = vmul.f32 %v6361, -234.59984
        %v6493 = vmul.f32 %v6362, -234.59984
        %v6494 = vadd.f32 %v6486, %v6490
        %v6495 = vadd.f32 %v6487, %v6491
        %v6496 = vadd.f32 %v6488, %v6492
        %v6497 = vadd.f32 %v6489, %v6493
        %v6498 = vadd.f32 %v6402, %v6494
        %v6499 = vadd.f32 %v6406, %v6495
        %v6500 = vadd.f32 %v6412, %v6496
        %v6501 = vadd.f32 %v6416, %v6497
        %6502 = vrot.lane.b32.xlu0 %v6359, 64
        %v6503 = vpop.permute.xlu0 %6502
        %6504 = vrot.lane.b32.xlu0 %v6360, 64
        %v6505 = vpop.permute.xlu0 %6504
        %6506 = vrot.lane.b32.xlu0 %v6361, 64
        %v6507 = vpop.permute.xlu0 %6506
        %6508 = vrot.lane.b32.xlu0 %v6362, 64
        %v6509 = vpop.permute.xlu0 %6508
        %v6510 = vmul.f32 %v209, %v6466
        %v6511 = vmul.f32 %v209, %v6467
        %v6512 = vmul.f32 %v209, %v6468
        %v6513 = vmul.f32 %v209, %v6469
        %v6514 = vmul.f32 %v214, %v6400
        %v6515 = vmul.f32 %v214, %v6404
        %v6516 = vmul.f32 %v214, %v6410
        %v6517 = vmul.f32 %v214, %v6414
        %v6518 = vadd.f32 %v6510, %v6514
        %v6519 = vadd.f32 %v6511, %v6515
        %v6520 = vadd.f32 %v6512, %v6516
        %v6521 = vadd.f32 %v6513, %v6517
        %v6522 = vmul.f32 %v6359, %v6518
        %v6523 = vmul.f32 %v6360, %v6519
        %v6524 = vmul.f32 %v6361, %v6520
        %v6525 = vmul.f32 %v6362, %v6521
        %v6526 = vadd.f32 %v6498, %v6522
        %v6527 = vadd.f32 %v6499, %v6523
        %v6528 = vadd.f32 %v6500, %v6524
        %v6529 = vadd.f32 %v6501, %v6525
        %v6530 = vmul.f32 %v219, %v6466
        %v6531 = vmul.f32 %v219, %v6467
        %v6532 = vmul.f32 %v219, %v6468
        %v6533 = vmul.f32 %v219, %v6469
        %v6534 = vmul.f32 %v224, %v6400
        %v6535 = vmul.f32 %v224, %v6404
        %v6536 = vmul.f32 %v224, %v6410
        %v6537 = vmul.f32 %v224, %v6414
        %v6538 = vadd.f32 %v6530, %v6534
        %v6539 = vadd.f32 %v6531, %v6535
        %v6540 = vadd.f32 %v6532, %v6536
        %v6541 = vadd.f32 %v6533, %v6537
        %v6542 = vmul.f32 %v6503, %v6538
        %v6543 = vmul.f32 %v6505, %v6539
        %v6544 = vmul.f32 %v6507, %v6540
        %v6545 = vmul.f32 %v6509, %v6541
        %v6546 = vadd.f32 %v6526, %v6542
        %v6547 = vadd.f32 %v6527, %v6543
        %v6548 = vadd.f32 %v6528, %v6544
        %v6549 = vadd.f32 %v6529, %v6545
        %v6550 = vmul.f32 %v6546, 2.0
        %v6551 = vmul.f32 %v6547, 2.0
        %v6552 = vmul.f32 %v6548, 2.0
        %v6553 = vmul.f32 %v6549, 2.0
        %v6554 = vadd.f32 %v6351, %v6550
        %v6555 = vadd.f32 %v6352, %v6551
        %v6556 = vadd.f32 %v6353, %v6552
        %v6557 = vadd.f32 %v6354, %v6553
        %v6558 = vmul.f32 %v6546, 0.001
        %v6559 = vmul.f32 %v6547, 0.001
        %v6560 = vmul.f32 %v6548, 0.001
        %v6561 = vmul.f32 %v6549, 0.001
        %v6562 = vadd.f32 %v5956, %v6558
        %v6563 = vadd.f32 %v5957, %v6559
        %v6564 = vadd.f32 %v5958, %v6560
        %v6565 = vadd.f32 %v5959, %v6561
        %v6566 = vpack.c.bf16 %v6563, %v6562
        %v6567 = vpack.c.bf16 %v6565, %v6564
        %6568 = vmatprep.subr.bf16.mxu0 %v296
        %6569 = vmatpush1.bf16.msra.mxu0 %v295
        %6570 = vmatprep.subr.bf16.mxu0 %v298
        %6571 = vmatpush1.bf16.msra.mxu0 %v297
        %6572 = vmatprep.subr.bf16.mxu0 %v300
        %6573 = vmatpush1.bf16.msra.mxu0 %v299
        %6574 = vmatprep.subr.bf16.mxu0 %v302
        %6575 = vmatpush1.bf16.msra.mxu0 %v301
        %6576 = vmatprep.subr.bf16.mxu0 %v304
        %6577 = vmatpush1.bf16.msra.mxu0 %v303
        %6578 = vmatprep.subr.bf16.mxu0 %v306
        %6579 = vmatpush1.bf16.msra.mxu0 %v305
        %6580 = vmatprep.subr.bf16.mxu0 %v308
        %6581 = vmatpush1.bf16.msra.mxu0 %v307
        %6582 = vmatprep.subr.bf16.mxu0 %v310
        %6583 = vmatpush1.bf16.msra.mxu0 %v309
        %6584 = vmatprep.subr.bf16.mxu0 0
        %6585 = vmatpush1.bf16.msra.mxu0 0
        %6586 = vmatprep.subr.bf16.mxu0 0
        %6587 = vmatpush1.bf16.msra.mxu0 0
        %6588 = vmatprep.subr.bf16.mxu0 0
        %6589 = vmatpush1.bf16.msra.mxu0 0
        %6590 = vmatprep.subr.bf16.mxu0 0
        %6591 = vmatpush1.bf16.msra.mxu0 0
        %6592 = vmatprep.subr.bf16.mxu0 0
        %6593 = vmatpush1.bf16.msra.mxu0 0
        %6594 = vmatprep.subr.bf16.mxu0 0
        %6595 = vmatpush1.bf16.msra.mxu0 0
        %6596 = vmatprep.subr.bf16.mxu0 0
        %6597 = vmatpush1.bf16.msra.mxu0 0
        %6598 = vmatprep.subr.bf16.mxu0 0
        %6599 = vmatpush1.bf16.msra.mxu0 0
        %6600 = vmatprep.mubr.bf16.mxu0 0
        %6601 = vmatmul.mubr.bf16.gmra.mrb[0].mxu0 %v6566
        %v6602 = vpop.f32.mrb[0].mxu0
        %v6603 = vadd.f32 0.0, %v6602
        %v6604 = vpop.f32.mrb[0].mxu0
        %v6605 = vadd.f32 0.0, %v6604
        %v6606 = vpop.f32.mrb[0].mxu0
        %v6607 = vadd.f32 0.0, %v6606
        %v6608 = vpop.f32.mrb[0].mxu0
        %v6609 = vadd.f32 0.0, %v6608
        %6610 = vmatprep.mubr.bf16.mxu0 0
        %6611 = vmatmul.mubr.bf16.gmra.mrb[0].mxu0 %v6567
        %v6612 = vpop.f32.mrb[0].mxu0
        %v6613 = vadd.f32 0.0, %v6612
        %v6614 = vpop.f32.mrb[0].mxu0
        %v6615 = vadd.f32 0.0, %v6614
        %v6616 = vpop.f32.mrb[0].mxu0
        %v6617 = vadd.f32 0.0, %v6616
        %v6618 = vpop.f32.mrb[0].mxu0
        %v6619 = vadd.f32 0.0, %v6618
        %6620 = vdwg.mxu0
        %v6621 = vrot.slane %v6562, 7
        %v6622 = vrot.slane %v6563, 7
        %v6623 = vrot.slane %v6564, 7
        %v6624 = vrot.slane %v6565, 7
        %v6625 = vsel %vm386, %v6623, %v6624
        %v6626 = vsel %vm386, %v6622, %v6623
        %v6627 = vsel %vm386, %v6621, %v6622
        %v6628 = vsel %vm386, %v6624, %v6621
        %v6629 = vrot.slane %v6562, 6
        %v6630 = vrot.slane %v6563, 6
        %v6631 = vrot.slane %v6564, 6
        %v6632 = vrot.slane %v6565, 6
        %v6633 = vsel %vm395, %v6631, %v6632
        %v6634 = vsel %vm395, %v6630, %v6631
        %v6635 = vsel %vm395, %v6629, %v6630
        %v6636 = vsel %vm395, %v6632, %v6629
        %v6637 = vrot.slane %v6562, 1
        %v6638 = vrot.slane %v6563, 1
        %v6639 = vrot.slane %v6564, 1
        %v6640 = vrot.slane %v6565, 1
        %v6641 = vsel %vm404, %v6639, %v6640
        %v6642 = vsel %vm404, %v6638, %v6639
        %v6643 = vsel %vm404, %v6637, %v6638
        %v6644 = vsel %vm404, %v6640, %v6637
        %v6645 = vrot.slane %v6562, 2
        %v6646 = vrot.slane %v6563, 2
        %v6647 = vrot.slane %v6564, 2
        %v6648 = vrot.slane %v6565, 2
        %v6649 = vsel %vm413, %v6647, %v6648
        %v6650 = vsel %vm413, %v6646, %v6647
        %v6651 = vsel %vm413, %v6645, %v6646
        %v6652 = vsel %vm413, %v6648, %v6645
        %v6653 = vsub.f32 %v6636, %v6651
        %v6654 = vsub.f32 %v6635, %v6650
        %v6655 = vsub.f32 %v6634, %v6649
        %v6656 = vsub.f32 %v6633, %v6652
        %v6657 = vmul.f32 %v6653, 8.333333
        %v6658 = vmul.f32 %v6654, 8.333333
        %v6659 = vmul.f32 %v6655, 8.333333
        %v6660 = vmul.f32 %v6656, 8.333333
        %v6661 = vsub.f32 %v6643, %v6628
        %v6662 = vsub.f32 %v6642, %v6627
        %v6663 = vsub.f32 %v6641, %v6626
        %v6664 = vsub.f32 %v6644, %v6625
        %v6665 = vmul.f32 %v6661, 66.666664
        %v6666 = vmul.f32 %v6662, 66.666664
        %v6667 = vmul.f32 %v6663, 66.666664
        %v6668 = vmul.f32 %v6664, 66.666664
        %v6669 = vadd.f32 %v6657, %v6665
        %v6670 = vadd.f32 %v6658, %v6666
        %v6671 = vadd.f32 %v6659, %v6667
        %v6672 = vadd.f32 %v6660, %v6668
        %v6673 = vadd.f32 %v6636, %v6651
        %v6674 = vadd.f32 %v6635, %v6650
        %v6675 = vadd.f32 %v6634, %v6649
        %v6676 = vadd.f32 %v6633, %v6652
        %v6677 = vmul.f32 %v6673, -7.8199944
        %v6678 = vmul.f32 %v6674, -7.8199944
        %v6679 = vmul.f32 %v6675, -7.8199944
        %v6680 = vmul.f32 %v6676, -7.8199944
        %v6681 = vadd.f32 %v6628, %v6643
        %v6682 = vadd.f32 %v6627, %v6642
        %v6683 = vadd.f32 %v6626, %v6641
        %v6684 = vadd.f32 %v6625, %v6644
        %v6685 = vmul.f32 %v6681, 125.11991
        %v6686 = vmul.f32 %v6682, 125.11991
        %v6687 = vmul.f32 %v6683, 125.11991
        %v6688 = vmul.f32 %v6684, 125.11991
        %v6689 = vadd.f32 %v6677, %v6685
        %v6690 = vadd.f32 %v6678, %v6686
        %v6691 = vadd.f32 %v6679, %v6687
        %v6692 = vadd.f32 %v6680, %v6688
        %v6693 = vmul.f32 %v6562, -234.59984
        %v6694 = vmul.f32 %v6563, -234.59984
        %v6695 = vmul.f32 %v6564, -234.59984
        %v6696 = vmul.f32 %v6565, -234.59984
        %v6697 = vadd.f32 %v6689, %v6693
        %v6698 = vadd.f32 %v6690, %v6694
        %v6699 = vadd.f32 %v6691, %v6695
        %v6700 = vadd.f32 %v6692, %v6696
        %v6701 = vadd.f32 %v6605, %v6697
        %v6702 = vadd.f32 %v6609, %v6698
        %v6703 = vadd.f32 %v6615, %v6699
        %v6704 = vadd.f32 %v6619, %v6700
        %6705 = vrot.lane.b32.xlu0 %v6562, 64
        %v6706 = vpop.permute.xlu0 %6705
        %6707 = vrot.lane.b32.xlu0 %v6563, 64
        %v6708 = vpop.permute.xlu0 %6707
        %6709 = vrot.lane.b32.xlu0 %v6564, 64
        %v6710 = vpop.permute.xlu0 %6709
        %6711 = vrot.lane.b32.xlu0 %v6565, 64
        %v6712 = vpop.permute.xlu0 %6711
        %v6713 = vmul.f32 %v209, %v6669
        %v6714 = vmul.f32 %v209, %v6670
        %v6715 = vmul.f32 %v209, %v6671
        %v6716 = vmul.f32 %v209, %v6672
        %v6717 = vmul.f32 %v214, %v6603
        %v6718 = vmul.f32 %v214, %v6607
        %v6719 = vmul.f32 %v214, %v6613
        %v6720 = vmul.f32 %v214, %v6617
        %v6721 = vadd.f32 %v6713, %v6717
        %v6722 = vadd.f32 %v6714, %v6718
        %v6723 = vadd.f32 %v6715, %v6719
        %v6724 = vadd.f32 %v6716, %v6720
        %v6725 = vmul.f32 %v6562, %v6721
        %v6726 = vmul.f32 %v6563, %v6722
        %v6727 = vmul.f32 %v6564, %v6723
        %v6728 = vmul.f32 %v6565, %v6724
        %v6729 = vadd.f32 %v6701, %v6725
        %v6730 = vadd.f32 %v6702, %v6726
        %v6731 = vadd.f32 %v6703, %v6727
        %v6732 = vadd.f32 %v6704, %v6728
        %v6733 = vmul.f32 %v219, %v6669
        %v6734 = vmul.f32 %v219, %v6670
        %v6735 = vmul.f32 %v219, %v6671
        %v6736 = vmul.f32 %v219, %v6672
        %v6737 = vmul.f32 %v224, %v6603
        %v6738 = vmul.f32 %v224, %v6607
        %v6739 = vmul.f32 %v224, %v6613
        %v6740 = vmul.f32 %v224, %v6617
        %v6741 = vadd.f32 %v6733, %v6737
        %v6742 = vadd.f32 %v6734, %v6738
        %v6743 = vadd.f32 %v6735, %v6739
        %v6744 = vadd.f32 %v6736, %v6740
        %v6745 = vmul.f32 %v6706, %v6741
        %v6746 = vmul.f32 %v6708, %v6742
        %v6747 = vmul.f32 %v6710, %v6743
        %v6748 = vmul.f32 %v6712, %v6744
        %v6749 = vadd.f32 %v6729, %v6745
        %v6750 = vadd.f32 %v6730, %v6746
        %v6751 = vadd.f32 %v6731, %v6747
        %v6752 = vadd.f32 %v6732, %v6748
        %v6753 = vadd.f32 %v6554, %v6749
        %v6754 = vadd.f32 %v6555, %v6750
        %v6755 = vadd.f32 %v6556, %v6751
        %v6756 = vadd.f32 %v6557, %v6752
        %v6757 = vmul.f32 %v6753, 0.00016666666
        %v6758 = vmul.f32 %v6754, 0.00016666666
        %v6759 = vmul.f32 %v6755, 0.00016666666
        %v6760 = vmul.f32 %v6756, 0.00016666666
        %v6761 = vadd.f32 %v5956, %v6757
        %v6762 = vadd.f32 %v5957, %v6758
        %v6763 = vadd.f32 %v5958, %v6759
        %v6764 = vadd.f32 %v5959, %v6760
        %s6765 = scalar_lea.vmem %s190, 224 [#allocation9]
        %6766 = vst [vmem:[%s6765] sm:$0xff] %v6761
        %6767 = vst [vmem:[%s6765 + $0x8] sm:$0xff] %v6762
        %6768 = vst [vmem:[%s6765 + $0x10] sm:$0xff] %v6763
        %6769 = vst [vmem:[%s6765 + $0x18] sm:$0xff] %v6764
        %6770 = vst [vmem:[#allocation2] sm:$0xff] %v6761
        %6771 = vst [vmem:[#allocation2 + $0x8] sm:$0xff] %v6762
        %6772 = vst [vmem:[#allocation2 + $0x10] sm:$0xff] %v6763
        %6773 = vst [vmem:[#allocation2 + $0x18] sm:$0xff] %v6764
        %s6774 = sand.u32 %s90, 1
        %s6775 = scalar_lea.sflag [#allocation5], %s6774
        %s6776 = sand.u32 %s90, 1
        %s6777 = smul.addr %s6776, 256
        %s6778 = scalar_lea.vmem [#allocation9], %s6777
        // Predicated region
        $region49: #{tpu_custom_call.1} parent=31 // pred_check
          %p6779 = pneg %p100
        $region50: #{tpu_custom_call.1} parent=31 // pred_check_branch
          %6781 = sbr.rel (%p6779) target = $region52
        $region51: #{tpu_custom_call.1} parent=31 // pred_region
          %s6782 = smul.u32 8, %s19
          %s6784 = ssub.s32 4096, 4096
          %6785 = vsyncadd %s6775, %s6784
          %s6786 = smul.addr %s6782, 4
          %s6787 = smul.addr %s6786, 128
          %s6788 = scalar_lea.hbm %s3, %s6787
          %s6789 = sshll.u32 %s6778, 4
          %s6790 = int_to_ptr.vmem [resolvable:$true] %s6789
          %6795 = dma.vmem_to_hbm [thread:$0]  %s6790, 4096, %s6788, %s6775, 128, 128, 8
        $region52: #{tpu_custom_call.1} parent=31 // pred_fallthru
          _
      $region32: #{tpu_custom_call.1} parent=5 // pred_fallthru
        _
      %p6796 = scmp.le.s32.totalorder 2, %s14
      // Predicated region
      $region53: #{tpu_custom_call.1} parent=5 // pred_check
        %p6797 = pneg %p6796
      $region54: #{tpu_custom_call.1} parent=5 // pred_check_branch
        %6799 = sbr.rel (%p6797) target = $region56
      $region55: #{tpu_custom_call.1} parent=5 // pred_region
        %s6800 = ssub.s32 %s14, 2
        // Predicated region
        $region57: #{tpu_custom_call.1} parent=55 // pred_check
          %p6801 = pneg %p106
        $region58: #{tpu_custom_call.1} parent=55 // pred_check_branch
          %6803 = sbr.rel (%p6801) target = $region60
        $region59: #{tpu_custom_call.1} parent=55 // pred_region
          %s6804 = sand.u32 %s91, 1
          %s6805 = scalar_lea.sflag [#allocation5], %s6804
          %s6806 = sand.u32 %s91, 1
          %s6807 = smul.addr %s6806, 256
          %s6808 = scalar_lea.vmem [#allocation9], %s6807
          %6809 = dma.done %s6805, 4096
        $region60: #{tpu_custom_call.1} parent=55 // pred_fallthru
          _
      $region56: #{tpu_custom_call.1} parent=5 // pred_fallthru
        _
    $region6: #{tpu_custom_call.1} parent=1 // loop_footer
      %s18 = sadd.s32 1, %s14
    $region7: #{tpu_custom_call.1} parent=1 // loop_footer_branch
      %13 = sbr.rel target = $region3
    $region8: #{tpu_custom_call.1} parent=1 // loop_exit
      _
    %6810 = vsyncpa [#allocation4], 1
    %s6811 = scalar_lea.sflag [#allocation4], 1
    %6812 = vsyncpa %s6811, 1
    %6813 = vsyncpa [#allocation7], 1
    %6814 = vsyncpa [#allocation5], 1
    %s6815 = scalar_lea.sflag [#allocation5], 1
    %6816 = vsyncpa %s6815, 1

</llo_original>
